<compile_context>
chip_gen: v5e
topology: v5e:2x2
jax: 0.10.0
libtpu: 0.0.40
codegen_flags: <defaults>
</compile_context>

<pallas_src>
import functools

import jax
import jax.numpy as jnp
from jax.experimental import pallas as pl
from jax.experimental.pallas import tpu as pltpu


# --------------------------------------------------------------------------
# Kernel 1: per-point conv stack (k -> 64 -> 128 -> 1024) + global max pool,
# optionally fused with the FC head (small B).
# --------------------------------------------------------------------------
def _conv_pool_kernel(fuse_head, x_ref, w1_ref, b1_ref, w2_ref, b2_ref,
                      w3_ref, b3_ref, *rest):
    if fuse_head:
        (w4_ref, b4_ref, w5_ref, b5_ref, w6_ref, b6_ref, o_ref, acc_ref) = rest
    else:
        o_ref, acc_ref = rest

    n = pl.program_id(1)

    @pl.when(n == 0)
    def _():
        acc_ref[...] = jnp.full(acc_ref.shape, -jnp.inf, dtype=acc_ref.dtype)

    # x tile comes straight from the NCW layout: (k, tile_n), lane-dense.
    x = x_ref[0].astype(jnp.bfloat16)                               # (k, tile_n)
    # conv1 + bn1 + relu (BN folded): contract the k (sublane) axis directly.
    h = jax.lax.dot_general(
        x, w1_ref[...],
        dimension_numbers=(((0,), (0,)), ((), ())),
        preferred_element_type=jnp.float32) + b1_ref[...]           # (tile_n, 64)
    h = jnp.maximum(h, 0.0).astype(jnp.bfloat16)
    # conv2 + bn2 + relu
    h = jnp.dot(h, w2_ref[...], preferred_element_type=jnp.float32) + b2_ref[...]
    h = jnp.maximum(h, 0.0).astype(jnp.bfloat16)                    # (tile_n, 128)
    # conv3 WITHOUT bias / ReLU: both are deferred past the max pool (exact:
    # the per-channel bias add commutes with max, and ReLU is monotone).
    h = jnp.dot(h, w3_ref[...], preferred_element_type=jnp.float32)  # (tile_n, 1024)

    # Partial max down to 8 sublanes only (pure VPU, sublane-aligned reshape);
    # the cross-sublane XLU reduce is paid once per batch in the finalize.
    tn, c = h.shape
    part = jnp.max(h.reshape(tn // 8, 8, c), axis=0)                # (8, 1024)
    acc_ref[...] = jnp.maximum(acc_ref[...], part)

    @pl.when(n == pl.num_programs(1) - 1)
    def _():
        pooled = jnp.max(acc_ref[...], axis=0, keepdims=True)       # (1, 1024)
        g = jnp.maximum(pooled + b3_ref[...], 0.0)                  # deferred bn3+relu
        if fuse_head:
            g = g.astype(jnp.bfloat16)
            # fc1 + bn4 + relu
            f = jnp.dot(g, w4_ref[...], preferred_element_type=jnp.float32) + b4_ref[...]
            f = jnp.maximum(f, 0.0).astype(jnp.bfloat16)            # (1, 512)
            # fc2 + dropout + bn5 + relu
            # TODO(synk): Dropout(p=0.3) uses inference semantics (identity) here.
            f = jnp.dot(f, w5_ref[...], preferred_element_type=jnp.float32) + b5_ref[...]
            f = jnp.maximum(f, 0.0).astype(jnp.bfloat16)            # (1, 256)
            # fc3 (flattened identity already folded into b6 in glue)
            o_ref[0] = (jnp.dot(f, w6_ref[...], preferred_element_type=jnp.float32)
                        + b6_ref[...])                              # (1, k*k)
        else:
            o_ref[0] = g.astype(o_ref.dtype)                        # (1, 1024) bf16


# --------------------------------------------------------------------------
# Kernel 2 (large-B path): FC head tiled over the batch axis.
# --------------------------------------------------------------------------
def _head_kernel(g_ref, w4_ref, b4_ref, w5_ref, b5_ref, w6_ref, b6_ref, o_ref):
    g = g_ref[...]                                                  # (tile_b, 1024) bf16
    # fc1 + bn4 + relu
    f = jnp.dot(g, w4_ref[...], preferred_element_type=jnp.float32) + b4_ref[...]
    f = jnp.maximum(f, 0.0).astype(jnp.bfloat16)                    # (tile_b, 512)
    # fc2 + dropout(identity in eval) + bn5 + relu
    f = jnp.dot(f, w5_ref[...], preferred_element_type=jnp.float32) + b5_ref[...]
    f = jnp.maximum(f, 0.0).astype(jnp.bfloat16)                    # (tile_b, 256)
    # fc3 (identity folded into bias)
    o_ref[...] = jnp.dot(f, w6_ref[...], preferred_element_type=jnp.float32) + b6_ref[...]


def tnet_forward(x_bkn, params, *, k, tile_n=1024, fuse_head_max_batch=512,
                 tile_b=256):
    """x_bkn: (B, k, N) float32 (PyTorch NCW layout). Returns (B, k, k) f32."""
    B, kk, N = x_bkn.shape
    assert kk == k
    fuse_head = B <= fuse_head_max_batch

    # Pad the point axis with edge replication: duplicated points never change
    # the max, so the kernel needs no masking (exact, even with the deferred
    # conv3 bias, since padded columns equal the last real column pre-bias).
    n_pad = pl.cdiv(N, tile_n) * tile_n
    x = x_bkn
    if n_pad != N:
        x = jnp.pad(x, ((0, 0), (0, 0), (0, n_pad - N)), mode="edge")
    n_tiles = n_pad // tile_n

    (w1, b1), (w2, b2), (w3, b3), (w4, b4), (w5, b5), (w6, b6) = params
    # Fold the flattened identity add into the fc3 bias (exact, zero kernel cost).
    b6_eff = b6 + jnp.eye(k, dtype=jnp.float32).reshape(1, k * k)

    conv_args = [w1, b1, w2, b2, w3, b3]
    head_args = [w4, b4, w5, b5, w6, b6_eff]
    k1_args = conv_args + (head_args if fuse_head else [])

    def full_spec2(arr):  # kernel-1 constant (weight/bias) blocks
        nd = arr.ndim
        return pl.BlockSpec(arr.shape, lambda b, n, _nd=nd: (0,) * _nd)

    in_specs = [pl.BlockSpec((1, k, tile_n), lambda b, n: (b, 0, n))]
    in_specs += [full_spec2(a) for a in k1_args]

    out_width = k * k if fuse_head else 1024
    out_dtype = jnp.float32 if fuse_head else jnp.bfloat16

    out1 = pl.pallas_call(
        functools.partial(_conv_pool_kernel, fuse_head),
        out_shape=jax.ShapeDtypeStruct((B, 1, out_width), out_dtype),
        grid=(B, n_tiles),
        in_specs=in_specs,
        out_specs=pl.BlockSpec((1, 1, out_width), lambda b, n: (b, 0, 0)),
        scratch_shapes=[pltpu.VMEM((8, 1024), jnp.float32)],
        compiler_params=pltpu.CompilerParams(
            dimension_semantics=("parallel", "arbitrary")),
    )(x, *k1_args)

    if fuse_head:
        return out1.reshape(B, k, k)

    # Large-B path: bf16 pooled feature -> head kernel tiled over B.
    pooled = out1.reshape(B, 1024)
    tb = tile_b if B >= tile_b else ((B + 15) // 16) * 16
    b_pad = pl.cdiv(B, tb) * tb
    if b_pad != B:
        pooled = jnp.pad(pooled, ((0, b_pad - B), (0, 0)))

    def full_spec1(arr):  # kernel-2 constant blocks
        nd = arr.ndim
        return pl.BlockSpec(arr.shape, lambda i, _nd=nd: (0,) * _nd)

    out2 = pl.pallas_call(
        _head_kernel,
        out_shape=jax.ShapeDtypeStruct((b_pad, k * k), jnp.float32),
        grid=(b_pad // tb,),
        in_specs=[pl.BlockSpec((tb, 1024), lambda i: (i, 0))]
                 + [full_spec1(a) for a in head_args],
        out_specs=pl.BlockSpec((tb, k * k), lambda i: (i, 0)),
        compiler_params=pltpu.CompilerParams(dimension_semantics=("parallel",)),
    )(pooled, *head_args)
    return out2[:B].reshape(B, k, k)


# --------------------------------------------------------------------------
# Parameter construction (deterministic synthetic params, BN folded, bf16 W).
# --------------------------------------------------------------------------
def _fold_bn(w, b, gamma, beta, mean, var, eps=1e-5):
    """Fold eval-mode BatchNorm1d into the preceding (Cout, Cin) weight/bias.

    Returns (W_eff^T : (Cin, Cout) bf16, b_eff : (1, Cout) f32) so kernels do
    y = x @ W_eff^T + b_eff with bf16 MXU inputs and f32 accumulation.
    """
    s = gamma * jax.lax.rsqrt(var + eps)
    w_t = (w.T * s[None, :]).astype(jnp.bfloat16)          # (Cin, Cout) bf16
    b_eff = ((b - mean) * s + beta).astype(jnp.float32)    # (Cout,) f32
    return w_t, b_eff[None, :]


def make_params(key, k):
    """Deterministic synthetic parameters matching TNet.__init__ shapes."""
    layer_dims = [(k, 64), (64, 128), (128, 1024), (1024, 512), (512, 256)]
    params = []
    for i, (cin, cout) in enumerate(layer_dims):
        ks = jax.random.split(jax.random.fold_in(key, i), 6)
        w = jax.random.normal(ks[0], (cout, cin), jnp.float32) / jnp.sqrt(float(cin))
        b = 0.02 * jax.random.normal(ks[1], (cout,), jnp.float32)
        gamma = 1.0 + 0.1 * jax.random.normal(ks[2], (cout,), jnp.float32)
        beta = 0.1 * jax.random.normal(ks[3], (cout,), jnp.float32)
        mean = 0.1 * jax.random.normal(ks[4], (cout,), jnp.float32)
        var = 1.0 + 0.1 * jax.random.uniform(ks[5], (cout,), jnp.float32)
        params.append(_fold_bn(w, b, gamma, beta, mean, var))
    # fc3: 256 -> k*k, no BN
    ks = jax.random.split(jax.random.fold_in(key, 99), 2)
    w6 = jax.random.normal(ks[0], (k * k, 256), jnp.float32) / jnp.sqrt(256.0)
    b6 = 0.02 * jax.random.normal(ks[1], (k * k,), jnp.float32)
    params.append((w6.T.astype(jnp.bfloat16), b6[None, :].astype(jnp.float32)))
    return params


# --------------------------------------------------------------------------
# Pure-JAX reference (same bf16-in / f32-accumulate recipe) for validation.
# --------------------------------------------------------------------------
def tnet_reference(x_bkn, params, *, k):
    x = jnp.transpose(x_bkn, (0, 2, 1))                          # (B, N, k) f32
    (w1, b1), (w2, b2), (w3, b3), (w4, b4), (w5, b5), (w6, b6) = params

    def mm(a, w):
        return jnp.dot(a.astype(jnp.bfloat16), w, preferred_element_type=jnp.float32)

    h = jax.nn.relu(mm(x, w1) + b1)
    h = jax.nn.relu(mm(h, w2) + b2)
    h = jax.nn.relu(mm(h, w3) + b3)
    g = jnp.max(h, axis=1)                                       # (B, 1024)
    f = jax.nn.relu(mm(g, w4) + b4)
    f = jax.nn.relu(mm(f, w5) + b5)
    out = mm(f, w6) + b6                                         # (B, k*k)
    out = out + jnp.eye(k, dtype=out.dtype).reshape(1, k * k)
    return out.reshape(-1, k, k)


if __name__ == "__main__":
    # N=2500 with tile_n=1024 exercises multi-tile accumulation + edge padding.
    B, k, N = 4, 3, 2500
    key = jax.random.PRNGKey(0)
    kx, kp = jax.random.split(key)

    x = jax.random.normal(kx, (B, k, N), jnp.float32)   # PyTorch NCW input
    params = make_params(kp, k)

    ref = tnet_reference(x, params, k=k)

    # Default (small-B) path: head fused into kernel 1's finalize.
    out_fused = jax.block_until_ready(tnet_forward(x, params, k=k))
    assert out_fused.shape == (B, k, k)
    assert jnp.allclose(out_fused, ref, atol=1e-2, rtol=1e-2), "fused-head mismatch"

    # Large-B path (separate head kernel tiled over B), forced for coverage.
    out_split = jax.block_until_ready(
        tnet_forward(x, params, k=k, fuse_head_max_batch=0))
    assert out_split.shape == (B, k, k)
    assert jnp.allclose(out_split, ref, atol=1e-2, rtol=1e-2), "split-head mismatch"

    print("KERNEL_OK")
</pallas_src>

<mosaic_0001>
module attributes {stable_mosaic.version = 11 : i64} {
  func.func @_conv_pool_kernel(%arg0: i32, %arg1: i32, %arg2: memref<1x3x1024xf32, #tpu.memory_space<vmem>>, %arg3: memref<3x64xbf16, #tpu.memory_space<vmem>>, %arg4: memref<1x64xf32, #tpu.memory_space<vmem>>, %arg5: memref<64x128xbf16, #tpu.memory_space<vmem>>, %arg6: memref<1x128xf32, #tpu.memory_space<vmem>>, %arg7: memref<128x1024xbf16, #tpu.memory_space<vmem>>, %arg8: memref<1x1024xf32, #tpu.memory_space<vmem>>, %arg9: memref<1024x512xbf16, #tpu.memory_space<vmem>>, %arg10: memref<1x512xf32, #tpu.memory_space<vmem>>, %arg11: memref<512x256xbf16, #tpu.memory_space<vmem>>, %arg12: memref<1x256xf32, #tpu.memory_space<vmem>>, %arg13: memref<256x9xbf16, #tpu.memory_space<vmem>>, %arg14: memref<1x9xf32, #tpu.memory_space<vmem>>, %arg15: memref<1x1x9xf32, #tpu.memory_space<vmem>>, %arg16: memref<8x1024xf32, #tpu.memory_space<vmem>>) attributes {dimension_semantics = [#tpu.dimension_semantics<parallel>, #tpu.dimension_semantics<arbitrary>], iteration_bounds = array<i64: 4, 3>, scalar_prefetch = 0 : i64, scratch_operands = 1 : i64, tpu.core_type = #tpu.core_type<tc>, window_params = [{transform_indices = @transform_0, window_bounds = array<i64: 1, 3, 1024>}, {pipeline_mode = #tpu.pipeline_mode<synchronous>, transform_indices = @transform_1, window_bounds = array<i64: 3, 64>}, {pipeline_mode = #tpu.pipeline_mode<synchronous>, transform_indices = @transform_2, window_bounds = array<i64: 1, 64>}, {pipeline_mode = #tpu.pipeline_mode<synchronous>, transform_indices = @transform_3, window_bounds = array<i64: 64, 128>}, {pipeline_mode = #tpu.pipeline_mode<synchronous>, transform_indices = @transform_4, window_bounds = array<i64: 1, 128>}, {pipeline_mode = #tpu.pipeline_mode<synchronous>, transform_indices = @transform_5, window_bounds = array<i64: 128, 1024>}, {pipeline_mode = #tpu.pipeline_mode<synchronous>, transform_indices = @transform_6, window_bounds = array<i64: 1, 1024>}, {pipeline_mode = #tpu.pipeline_mode<synchronous>, transform_indices = @transform_7, window_bounds = array<i64: 1024, 512>}, {pipeline_mode = #tpu.pipeline_mode<synchronous>, transform_indices = @transform_8, window_bounds = array<i64: 1, 512>}, {pipeline_mode = #tpu.pipeline_mode<synchronous>, transform_indices = @transform_9, window_bounds = array<i64: 512, 256>}, {pipeline_mode = #tpu.pipeline_mode<synchronous>, transform_indices = @transform_10, window_bounds = array<i64: 1, 256>}, {pipeline_mode = #tpu.pipeline_mode<synchronous>, transform_indices = @transform_11, window_bounds = array<i64: 256, 9>}, {pipeline_mode = #tpu.pipeline_mode<synchronous>, transform_indices = @transform_12, window_bounds = array<i64: 1, 9>}, {transform_indices = @transform_13, window_bounds = array<i64: 1, 1, 9>}]} {
    %c0_i32 = arith.constant 0 : i32
    %0 = arith.cmpi eq, %arg1, %c0_i32 : i32
    %1 = arith.extui %0 : i1 to i32
    %c0_i32_0 = arith.constant 0 : i32
    %2 = arith.cmpi ne, %1, %c0_i32_0 : i32
    scf.if %2 {
      %cst_23 = arith.constant 0xFF800000 : f32
      %32 = vector.broadcast %cst_23 : f32 to vector<8x1024xf32>
      %c0_24 = arith.constant 0 : index
      %c0_25 = arith.constant 0 : index
      %33 = vector.load %arg16[%c0_24, %c0_25] : memref<8x1024xf32, #tpu.memory_space<vmem>>, vector<8x1024xf32>
      tpu.vector_store %arg16[%c0_24, %c0_25], %32 {strides = array<i32>} : memref<8x1024xf32, #tpu.memory_space<vmem>>, vector<8x1024xf32>,
    } else {
    }
    %c0 = arith.constant 0 : index
    %c0_1 = arith.constant 0 : index
    %c0_2 = arith.constant 0 : index
    %3 = vector.load %arg2[%c0, %c0_1, %c0_2] : memref<1x3x1024xf32, #tpu.memory_space<vmem>>, vector<1x3x1024xf32>
    %4 = vector.shape_cast %3 : vector<1x3x1024xf32> to vector<3x1024xf32>
    %5 = arith.truncf %4 : vector<3x1024xf32> to vector<3x1024xbf16>
    %c0_3 = arith.constant 0 : index
    %c0_4 = arith.constant 0 : index
    %6 = vector.load %arg3[%c0_3, %c0_4] : memref<3x64xbf16, #tpu.memory_space<vmem>>, vector<3x64xbf16>
    %cst = arith.constant dense<0.000000e+00> : vector<1024x64xf32>
    %7 = tpu.matmul %5, %6, %cst {dimension_numbers = #tpu.dot_dimension_numbers<[0], [0], [1], [1], [0, 1, 1, 1], [], []>} : vector<3x1024xbf16>, vector<3x64xbf16>, vector<1024x64xf32> -> vector<1024x64xf32>
    %c0_5 = arith.constant 0 : index
    %c0_6 = arith.constant 0 : index
    %8 = vector.load %arg4[%c0_5, %c0_6] : memref<1x64xf32, #tpu.memory_space<vmem>>, vector<1x64xf32>
    %9 = vector.broadcast %8 : vector<1x64xf32> to vector<1024x64xf32>
    %10 = arith.addf %7, %9 : vector<1024x64xf32>
    %cst_7 = arith.constant 0.000000e+00 : f32
    %11 = vector.broadcast %cst_7 : f32 to vector<1024x64xf32>
    %12 = arith.maximumf %10, %11 : vector<1024x64xf32>
    %13 = arith.truncf %12 : vector<1024x64xf32> to vector<1024x64xbf16>
    %c0_8 = arith.constant 0 : index
    %c0_9 = arith.constant 0 : index
    %14 = vector.load %arg5[%c0_8, %c0_9] : memref<64x128xbf16, #tpu.memory_space<vmem>>, vector<64x128xbf16>
    %cst_10 = arith.constant dense<0.000000e+00> : vector<1024x128xf32>
    %15 = tpu.matmul %13, %14, %cst_10 {dimension_numbers = #tpu.dot_dimension_numbers<[1], [0], [0], [1], [0, 0, 1, 1], [], []>} : vector<1024x64xbf16>, vector<64x128xbf16>, vector<1024x128xf32> -> vector<1024x128xf32>
    %c0_11 = arith.constant 0 : index
    %c0_12 = arith.constant 0 : index
    %16 = vector.load %arg6[%c0_11, %c0_12] : memref<1x128xf32, #tpu.memory_space<vmem>>, vector<1x128xf32>
    %17 = vector.broadcast %16 : vector<1x128xf32> to vector<1024x128xf32>
    %18 = arith.addf %15, %17 : vector<1024x128xf32>
    %cst_13 = arith.constant 0.000000e+00 : f32
    %19 = vector.broadcast %cst_13 : f32 to vector<1024x128xf32>
    %20 = arith.maximumf %18, %19 : vector<1024x128xf32>
    %21 = arith.truncf %20 : vector<1024x128xf32> to vector<1024x128xbf16>
    %c0_14 = arith.constant 0 : index
    %c0_15 = arith.constant 0 : index
    %22 = vector.load %arg7[%c0_14, %c0_15] : memref<128x1024xbf16, #tpu.memory_space<vmem>>, vector<128x1024xbf16>
    %cst_16 = arith.constant dense<0.000000e+00> : vector<1024x1024xf32>
    %23 = tpu.matmul %21, %22, %cst_16 {dimension_numbers = #tpu.dot_dimension_numbers<[1], [0], [0], [1], [0, 0, 1, 1], [], []>} : vector<1024x128xbf16>, vector<128x1024xbf16>, vector<1024x1024xf32> -> vector<1024x1024xf32>
    %24 = vector.shape_cast %23 : vector<1024x1024xf32> to vector<128x8x1024xf32>
    %cst_17 = arith.constant dense<0xFF800000> : vector<8x1024xf32>
    %25 = vector.multi_reduction <maximumf>, %24, %cst_17 [0] : vector<128x8x1024xf32> to vector<8x1024xf32>
    %c0_18 = arith.constant 0 : index
    %c0_19 = arith.constant 0 : index
    %26 = vector.load %arg16[%c0_18, %c0_19] : memref<8x1024xf32, #tpu.memory_space<vmem>>, vector<8x1024xf32>
    %27 = arith.maximumf %26, %25 : vector<8x1024xf32>
    %c0_20 = arith.constant 0 : index
    %c0_21 = arith.constant 0 : index
    %28 = vector.load %arg16[%c0_20, %c0_21] : memref<8x1024xf32, #tpu.memory_space<vmem>>, vector<8x1024xf32>
    tpu.vector_store %arg16[%c0_20, %c0_21], %27 {strides = array<i32>} : memref<8x1024xf32, #tpu.memory_space<vmem>>, vector<8x1024xf32>,
    %c2_i32 = arith.constant 2 : i32
    %29 = arith.cmpi eq, %arg1, %c2_i32 : i32
    %30 = arith.extui %29 : i1 to i32
    %c0_i32_22 = arith.constant 0 : i32
    %31 = arith.cmpi ne, %30, %c0_i32_22 : i32
    scf.if %31 {
      %c0_23 = arith.constant 0 : index
      %c0_24 = arith.constant 0 : index
      %32 = vector.load %arg16[%c0_23, %c0_24] : memref<8x1024xf32, #tpu.memory_space<vmem>>, vector<8x1024xf32>
      %cst_25 = arith.constant dense<0xFF800000> : vector<1024xf32>
      %33 = vector.multi_reduction <maximumf>, %32, %cst_25 [0] : vector<8x1024xf32> to vector<1024xf32>
      %34 = vector.shape_cast %33 : vector<1024xf32> to vector<1x1024xf32>
      %c0_26 = arith.constant 0 : index
      %c0_27 = arith.constant 0 : index
      %35 = vector.load %arg8[%c0_26, %c0_27] : memref<1x1024xf32, #tpu.memory_space<vmem>>, vector<1x1024xf32>
      %36 = arith.addf %34, %35 : vector<1x1024xf32>
      %cst_28 = arith.constant 0.000000e+00 : f32
      %37 = vector.broadcast %cst_28 : f32 to vector<1x1024xf32>
      %38 = arith.maximumf %36, %37 : vector<1x1024xf32>
      %39 = arith.truncf %38 : vector<1x1024xf32> to vector<1x1024xbf16>
      %c0_29 = arith.constant 0 : index
      %c0_30 = arith.constant 0 : index
      %40 = vector.load %arg9[%c0_29, %c0_30] : memref<1024x512xbf16, #tpu.memory_space<vmem>>, vector<1024x512xbf16>
      %cst_31 = arith.constant dense<0.000000e+00> : vector<1x512xf32>
      %41 = tpu.matmul %39, %40, %cst_31 {dimension_numbers = #tpu.dot_dimension_numbers<[1], [0], [0], [1], [0, 0, 1, 1], [], []>} : vector<1x1024xbf16>, vector<1024x512xbf16>, vector<1x512xf32> -> vector<1x512xf32>
      %c0_32 = arith.constant 0 : index
      %c0_33 = arith.constant 0 : index
      %42 = vector.load %arg10[%c0_32, %c0_33] : memref<1x512xf32, #tpu.memory_space<vmem>>, vector<1x512xf32>
      %43 = arith.addf %41, %42 : vector<1x512xf32>
      %cst_34 = arith.constant 0.000000e+00 : f32
      %44 = vector.broadcast %cst_34 : f32 to vector<1x512xf32>
      %45 = arith.maximumf %43, %44 : vector<1x512xf32>
      %46 = arith.truncf %45 : vector<1x512xf32> to vector<1x512xbf16>
      %c0_35 = arith.constant 0 : index
      %c0_36 = arith.constant 0 : index
      %47 = vector.load %arg11[%c0_35, %c0_36] : memref<512x256xbf16, #tpu.memory_space<vmem>>, vector<512x256xbf16>
      %cst_37 = arith.constant dense<0.000000e+00> : vector<1x256xf32>
      %48 = tpu.matmul %46, %47, %cst_37 {dimension_numbers = #tpu.dot_dimension_numbers<[1], [0], [0], [1], [0, 0, 1, 1], [], []>} : vector<1x512xbf16>, vector<512x256xbf16>, vector<1x256xf32> -> vector<1x256xf32>
      %c0_38 = arith.constant 0 : index
      %c0_39 = arith.constant 0 : index
      %49 = vector.load %arg12[%c0_38, %c0_39] : memref<1x256xf32, #tpu.memory_space<vmem>>, vector<1x256xf32>
      %50 = arith.addf %48, %49 : vector<1x256xf32>
      %cst_40 = arith.constant 0.000000e+00 : f32
      %51 = vector.broadcast %cst_40 : f32 to vector<1x256xf32>
      %52 = arith.maximumf %50, %51 : vector<1x256xf32>
      %53 = arith.truncf %52 : vector<1x256xf32> to vector<1x256xbf16>
      %c0_41 = arith.constant 0 : index
      %c0_42 = arith.constant 0 : index
      %54 = vector.load %arg13[%c0_41, %c0_42] : memref<256x9xbf16, #tpu.memory_space<vmem>>, vector<256x9xbf16>
      %cst_43 = arith.constant dense<0.000000e+00> : vector<1x9xf32>
      %55 = tpu.matmul %53, %54, %cst_43 {dimension_numbers = #tpu.dot_dimension_numbers<[1], [0], [0], [1], [0, 0, 1, 1], [], []>} : vector<1x256xbf16>, vector<256x9xbf16>, vector<1x9xf32> -> vector<1x9xf32>
      %c0_44 = arith.constant 0 : index
      %c0_45 = arith.constant 0 : index
      %56 = vector.load %arg14[%c0_44, %c0_45] : memref<1x9xf32, #tpu.memory_space<vmem>>, vector<1x9xf32>
      %57 = arith.addf %55, %56 : vector<1x9xf32>
      %c0_46 = arith.constant 0 : index
      %c0_47 = arith.constant 0 : index
      %c0_48 = arith.constant 0 : index
      %58 = vector.load %arg15[%c0_46, %c0_47, %c0_48] : memref<1x1x9xf32, #tpu.memory_space<vmem>>, vector<1x1x9xf32>
      %59 = vector.shape_cast %58 : vector<1x1x9xf32> to vector<1x9xf32>
      %60 = vector.shape_cast %57 : vector<1x9xf32> to vector<1x1x9xf32>
      tpu.vector_store %arg15[%c0_46, %c0_47, %c0_48], %60 {strides = array<i32>} : memref<1x1x9xf32, #tpu.memory_space<vmem>>, vector<1x1x9xf32>,
    } else {
    }
    return
  }
  func.func @transform_0(%arg0: i32, %arg1: i32) -> (i32, i32, i32) {
    %c0_i32 = arith.constant 0 : i32
    %c0_i32_0 = arith.constant 0 : i32
    return %arg0, %c0_i32, %arg1 : i32, i32, i32
  }
  func.func @transform_1(%arg0: i32, %arg1: i32) -> (i32, i32) {
    %c0_i32 = arith.constant 0 : i32
    %c0_i32_0 = arith.constant 0 : i32
    %c0_i32_1 = arith.constant 0 : i32
    return %c0_i32, %c0_i32_0 : i32, i32
  }
  func.func @transform_2(%arg0: i32, %arg1: i32) -> (i32, i32) {
    %c0_i32 = arith.constant 0 : i32
    %c0_i32_0 = arith.constant 0 : i32
    %c0_i32_1 = arith.constant 0 : i32
    return %c0_i32, %c0_i32_0 : i32, i32
  }
  func.func @transform_3(%arg0: i32, %arg1: i32) -> (i32, i32) {
    %c0_i32 = arith.constant 0 : i32
    %c0_i32_0 = arith.constant 0 : i32
    %c0_i32_1 = arith.constant 0 : i32
    return %c0_i32, %c0_i32_0 : i32, i32
  }
  func.func @transform_4(%arg0: i32, %arg1: i32) -> (i32, i32) {
    %c0_i32 = arith.constant 0 : i32
    %c0_i32_0 = arith.constant 0 : i32
    %c0_i32_1 = arith.constant 0 : i32
    return %c0_i32, %c0_i32_0 : i32, i32
  }
  func.func @transform_5(%arg0: i32, %arg1: i32) -> (i32, i32) {
    %c0_i32 = arith.constant 0 : i32
    %c0_i32_0 = arith.constant 0 : i32
    %c0_i32_1 = arith.constant 0 : i32
    return %c0_i32, %c0_i32_0 : i32, i32
  }
  func.func @transform_6(%arg0: i32, %arg1: i32) -> (i32, i32) {
    %c0_i32 = arith.constant 0 : i32
    %c0_i32_0 = arith.constant 0 : i32
    %c0_i32_1 = arith.constant 0 : i32
    return %c0_i32, %c0_i32_0 : i32, i32
  }
  func.func @transform_7(%arg0: i32, %arg1: i32) -> (i32, i32) {
    %c0_i32 = arith.constant 0 : i32
    %c0_i32_0 = arith.constant 0 : i32
    %c0_i32_1 = arith.constant 0 : i32
    return %c0_i32, %c0_i32_0 : i32, i32
  }
  func.func @transform_8(%arg0: i32, %arg1: i32) -> (i32, i32) {
    %c0_i32 = arith.constant 0 : i32
    %c0_i32_0 = arith.constant 0 : i32
    %c0_i32_1 = arith.constant 0 : i32
    return %c0_i32, %c0_i32_0 : i32, i32
  }
  func.func @transform_9(%arg0: i32, %arg1: i32) -> (i32, i32) {
    %c0_i32 = arith.constant 0 : i32
    %c0_i32_0 = arith.constant 0 : i32
    %c0_i32_1 = arith.constant 0 : i32
    return %c0_i32, %c0_i32_0 : i32, i32
  }
  func.func @transform_10(%arg0: i32, %arg1: i32) -> (i32, i32) {
    %c0_i32 = arith.constant 0 : i32
    %c0_i32_0 = arith.constant 0 : i32
    %c0_i32_1 = arith.constant 0 : i32
    return %c0_i32, %c0_i32_0 : i32, i32
  }
  func.func @transform_11(%arg0: i32, %arg1: i32) -> (i32, i32) {
    %c0_i32 = arith.constant 0 : i32
    %c0_i32_0 = arith.constant 0 : i32
    %c0_i32_1 = arith.constant 0 : i32
    return %c0_i32, %c0_i32_0 : i32, i32
  }
  func.func @transform_12(%arg0: i32, %arg1: i32) -> (i32, i32) {
    %c0_i32 = arith.constant 0 : i32
    %c0_i32_0 = arith.constant 0 : i32
    %c0_i32_1 = arith.constant 0 : i32
    return %c0_i32, %c0_i32_0 : i32, i32
  }
  func.func @transform_13(%arg0: i32, %arg1: i32) -> (i32, i32, i32) {
    %c0_i32 = arith.constant 0 : i32
    %c0_i32_0 = arith.constant 0 : i32
    %c0_i32_1 = arith.constant 0 : i32
    return %arg0, %c0_i32, %c0_i32_0 : i32, i32, i32
  }
}

</mosaic_0001>

<llo_original>
// kernel: tpu_custom_call.1
$region0: #{tpu_custom_call.1}
  #allocation0 [shape = 'u32[]', space=smem, size = 0x4, offset = 0x4, fixed_abs, tag = 'smem constant byte address 0x4 - core index']
  #allocation1 [shape = 'u32[72,128]{1,0:T(1,128)}', space=vmem, size = 0x9000, scoped, tag = 'internal scratch']
  #allocation2 [shape = 'f32[8,1024]{1,0:T(8,128)}', space=vmem, size = 0x8000, scoped, tag = 'scratch operand']
  %s0 = inlined_call_operand.vmem [shape: f32[4,3,3072], index: 0, kind: input, shape index: {}]
  %s1 = inlined_call_operand.vmem [shape: bf16[3,64], index: 1, kind: input, shape index: {}]
  %s2 = inlined_call_operand.vmem [shape: f32[1,64], index: 2, kind: input, shape index: {}]
  %s3 = inlined_call_operand.vmem [shape: bf16[64,128], index: 3, kind: input, shape index: {}]
  %s4 = inlined_call_operand.vmem [shape: f32[1,128], index: 4, kind: input, shape index: {}]
  %s5 = inlined_call_operand.vmem [shape: bf16[128,1024], index: 5, kind: input, shape index: {}]
  %s6 = inlined_call_operand.vmem [shape: f32[1,1024], index: 6, kind: input, shape index: {}]
  %s7 = inlined_call_operand.hbm [shape: bf16[1024,512], index: 7, kind: input, shape index: {}]
  %s8 = inlined_call_operand.vmem [shape: f32[1,512], index: 8, kind: input, shape index: {}]
  %s9 = inlined_call_operand.hbm [shape: bf16[512,256], index: 9, kind: input, shape index: {}]
  %s10 = inlined_call_operand.vmem [shape: f32[1,256], index: 10, kind: input, shape index: {}]
  %s11 = inlined_call_operand.vmem [shape: bf16[256,9], index: 11, kind: input, shape index: {}]
  %s12 = inlined_call_operand.vmem [shape: f32[1,9], index: 12, kind: input, shape index: {}]
  %s13 = inlined_call_operand.hbm [shape: f32[4,1,9], index: 13, kind: output, shape index: {}]
  %s14 = sld [smem:[#allocation0]]
  $region101: #{tpu_custom_call.1} parent=0
    _
  %s16 = ssub.s32 1, %s14
  %s17 = scalar_select 0, %s16, %s14
  $region1: #{tpu_custom_call.1} parent=0
    #allocation3 [shape = 'u8[1048576]{0}', space=vmem, size = 0x100000, scoped, tag = 'input window, operand 7, single buffered']
    #allocation4 [shape = 's32[2]{0}', space=sflag, size = 0x8, scoped, tag = 'scoped memory for tpu_custom_call.1']
    #allocation5 [shape = 's32[2]{0}', space=sflag, size = 0x8, scoped, tag = 'scoped memory for tpu_custom_call.1']
    #allocation6 [shape = 'u8[262144]{0}', space=vmem, size = 0x40000, scoped, tag = 'input window, operand 9, single buffered']
    #allocation7 [shape = 's32[1]{0}', space=sflag, size = 0x4, scoped, tag = 'scoped memory for tpu_custom_call.1']
    #allocation8 [shape = 'u8[1024]{0}', space=vmem, size = 0x400, scoped, tag = 'output window, operand 0']
    %18 = vsyncpa [#allocation4], 0
    %19 = vsyncpa [#allocation7], 0
    %20 = vsyncpa [#allocation5], 0
    %s21 = scalar_lea.sflag [#allocation5], 1
    %22 = vsyncpa %s21, 0
    loop: start=0, step=1, limit=14
    $region2: #{tpu_custom_call.1} parent=1 // loop_pre_header
      _
    $region3: #{tpu_custom_call.1} parent=1 // loop_header
      %s24 = sphi 0, %s28
      %p25 = scmp.ge.s32.totalorder %s24, 14
      %s31 = sphi 0, %s43
      %s32 = sphi 0, %s39
      %s33 = sphi 0, %s31
      %s34 = sphi 0, %s32
      %s35 = sphi 0, %s33
      %s36 = sphi 0, %s34
      %s48 = sphi 0, %s50
      %s51 = sphi 0, %s48
      %s52 = sphi 0, %s51
      %s68 = sphi 0, %s52
      %s72 = sphi 0, %s72
      %s74 = sphi 0, %s72
      %s75 = sphi 0, %s74
      %s89 = sphi 0, %s75
      %s93 = sphi 0, %s93
      %s95 = sphi 0, %s93
      %s96 = sphi 0, %s95
      %s110 = sphi 0, %s96
      %s114 = sphi 0, %s114
      %s116 = sphi 0, %s114
      %s117 = sphi 0, %s116
      %s131 = sphi 0, %s117
      %s135 = sphi 0, %s135
      %s137 = sphi 0, %s135
      %s138 = sphi 0, %s137
      %s152 = sphi 0, %s138
      %s156 = sphi 0, %s156
      %s158 = sphi 0, %s156
      %s159 = sphi 0, %s158
      %s173 = sphi 0, %s159
      %s177 = sphi 0, %s177
      %s179 = sphi 0, %s177
      %s180 = sphi 0, %s179
      %s194 = sphi 0, %s180
      %s198 = sphi 0, %s198
      %s200 = sphi 0, %s198
      %s201 = sphi 0, %s200
      %s215 = sphi 0, %s201
      %s219 = sphi 0, %s219
      %s221 = sphi 0, %s219
      %s222 = sphi 0, %s221
      %s236 = sphi 0, %s222
      %s240 = sphi 0, %s240
      %s242 = sphi 0, %s240
      %s243 = sphi 0, %s242
      %s257 = sphi 0, %s243
      %s261 = sphi 0, %s261
      %s263 = sphi 0, %s261
      %s264 = sphi 0, %s263
      %s278 = sphi 0, %s264
      %s282 = sphi 0, %s282
      %s284 = sphi 0, %s282
      %s285 = sphi 0, %s284
      %s299 = sphi 0, %s285
      %s303 = sphi 0, %s303
      %s305 = sphi 0, %s303
      %s306 = sphi 0, %s305
      %s320 = sphi 0, %s306
      %s326 = sphi 0, %s328
      %s329 = sphi 0, %s326
      %s330 = sphi 0, %s329
      %s346 = sphi 0, %s330
    $region4: #{tpu_custom_call.1} parent=1 // loop_header_branch
      %27 = sbr.rel (%p25) target = $region8
    $region5: #{tpu_custom_call.1} parent=1 // loop_body
      %s29 = ssub.s32 %s24, 1
      %s30 = ssub.s32 %s24, 2
      %s37 = sadd.s32 1, %s32
      %p38 = scmp.ge.s32.totalorder %s37, 3
      %s39 = scalar_select %p38, 0, %s37
      %s40 = sadd.s32 1, %s31
      %s41 = scalar_select %p38, %s40, %s31
      %p42 = scmp.ge.s32.totalorder %s41, 4
      %s43 = scalar_select %p42, 0, %s41
      %s44 = ssub.s32 %s31, %s43
      %s45 = ssub.s32 %s32, %s39
      %s46 = sor.u32 %s44, %s45
      %p47 = scmp.eq.s32.totalorder %s46, 0
      %s49 = sadd.s32 %s48, 1
      %s50 = scalar_select %p47, %s48, %s49
      %p53 = pneg %p47
      %p54 = scmp.eq.s32.totalorder %s24, 11
      %p55 = por %p53, %p54
      %p56 = scmp.ne.s32.totalorder %s48, %s51
      %p57 = scmp.eq.s32.totalorder %s24, 0
      %p58 = por %p56, %p57
      %p59 = scmp.ne.s32.totalorder %s48, %s51
      %p60 = scmp.eq.s32.totalorder %s29, 11
      %p61 = por %p59, %p60
      %p62 = scmp.ne.s32.totalorder %s51, %s52
      %p63 = scmp.eq.s32.totalorder %s29, 0
      %p64 = por %p62, %p63
      %p65 = scmp.ne.s32.totalorder %s51, %s52
      %p66 = scmp.eq.s32.totalorder %s30, 11
      %p67 = por %p65, %p66
      %p69 = scmp.ne.s32.totalorder %s52, %s68
      %p70 = scmp.eq.s32.totalorder %s30, 0
      %p71 = por %p69, %p70
      %s73 = sadd.s32 %s72, 1
      %p76 = scmp.eq.s32.totalorder %s24, 11
      %p77 = scmp.ne.s32.totalorder %s72, %s74
      %p78 = scmp.eq.s32.totalorder %s24, 0
      %p79 = por %p77, %p78
      %p80 = scmp.ne.s32.totalorder %s72, %s74
      %p81 = scmp.eq.s32.totalorder %s29, 11
      %p82 = por %p80, %p81
      %p83 = scmp.ne.s32.totalorder %s74, %s75
      %p84 = scmp.eq.s32.totalorder %s29, 0
      %p85 = por %p83, %p84
      %p86 = scmp.ne.s32.totalorder %s74, %s75
      %p87 = scmp.eq.s32.totalorder %s30, 11
      %p88 = por %p86, %p87
      %p90 = scmp.ne.s32.totalorder %s75, %s89
      %p91 = scmp.eq.s32.totalorder %s30, 0
      %p92 = por %p90, %p91
      %s94 = sadd.s32 %s93, 1
      %p97 = scmp.eq.s32.totalorder %s24, 11
      %p98 = scmp.ne.s32.totalorder %s93, %s95
      %p99 = scmp.eq.s32.totalorder %s24, 0
      %p100 = por %p98, %p99
      %p101 = scmp.ne.s32.totalorder %s93, %s95
      %p102 = scmp.eq.s32.totalorder %s29, 11
      %p103 = por %p101, %p102
      %p104 = scmp.ne.s32.totalorder %s95, %s96
      %p105 = scmp.eq.s32.totalorder %s29, 0
      %p106 = por %p104, %p105
      %p107 = scmp.ne.s32.totalorder %s95, %s96
      %p108 = scmp.eq.s32.totalorder %s30, 11
      %p109 = por %p107, %p108
      %p111 = scmp.ne.s32.totalorder %s96, %s110
      %p112 = scmp.eq.s32.totalorder %s30, 0
      %p113 = por %p111, %p112
      %s115 = sadd.s32 %s114, 1
      %p118 = scmp.eq.s32.totalorder %s24, 11
      %p119 = scmp.ne.s32.totalorder %s114, %s116
      %p120 = scmp.eq.s32.totalorder %s24, 0
      %p121 = por %p119, %p120
      %p122 = scmp.ne.s32.totalorder %s114, %s116
      %p123 = scmp.eq.s32.totalorder %s29, 11
      %p124 = por %p122, %p123
      %p125 = scmp.ne.s32.totalorder %s116, %s117
      %p126 = scmp.eq.s32.totalorder %s29, 0
      %p127 = por %p125, %p126
      %p128 = scmp.ne.s32.totalorder %s116, %s117
      %p129 = scmp.eq.s32.totalorder %s30, 11
      %p130 = por %p128, %p129
      %p132 = scmp.ne.s32.totalorder %s117, %s131
      %p133 = scmp.eq.s32.totalorder %s30, 0
      %p134 = por %p132, %p133
      %s136 = sadd.s32 %s135, 1
      %p139 = scmp.eq.s32.totalorder %s24, 11
      %p140 = scmp.ne.s32.totalorder %s135, %s137
      %p141 = scmp.eq.s32.totalorder %s24, 0
      %p142 = por %p140, %p141
      %p143 = scmp.ne.s32.totalorder %s135, %s137
      %p144 = scmp.eq.s32.totalorder %s29, 11
      %p145 = por %p143, %p144
      %p146 = scmp.ne.s32.totalorder %s137, %s138
      %p147 = scmp.eq.s32.totalorder %s29, 0
      %p148 = por %p146, %p147
      %p149 = scmp.ne.s32.totalorder %s137, %s138
      %p150 = scmp.eq.s32.totalorder %s30, 11
      %p151 = por %p149, %p150
      %p153 = scmp.ne.s32.totalorder %s138, %s152
      %p154 = scmp.eq.s32.totalorder %s30, 0
      %p155 = por %p153, %p154
      %s157 = sadd.s32 %s156, 1
      %p160 = scmp.eq.s32.totalorder %s24, 11
      %p161 = scmp.ne.s32.totalorder %s156, %s158
      %p162 = scmp.eq.s32.totalorder %s24, 0
      %p163 = por %p161, %p162
      %p164 = scmp.ne.s32.totalorder %s156, %s158
      %p165 = scmp.eq.s32.totalorder %s29, 11
      %p166 = por %p164, %p165
      %p167 = scmp.ne.s32.totalorder %s158, %s159
      %p168 = scmp.eq.s32.totalorder %s29, 0
      %p169 = por %p167, %p168
      %p170 = scmp.ne.s32.totalorder %s158, %s159
      %p171 = scmp.eq.s32.totalorder %s30, 11
      %p172 = por %p170, %p171
      %p174 = scmp.ne.s32.totalorder %s159, %s173
      %p175 = scmp.eq.s32.totalorder %s30, 0
      %p176 = por %p174, %p175
      %s178 = sadd.s32 %s177, 1
      %p181 = scmp.eq.s32.totalorder %s24, 11
      %p182 = scmp.ne.s32.totalorder %s177, %s179
      %p183 = scmp.eq.s32.totalorder %s24, 0
      %p184 = por %p182, %p183
      %p185 = scmp.ne.s32.totalorder %s177, %s179
      %p186 = scmp.eq.s32.totalorder %s29, 11
      %p187 = por %p185, %p186
      %p188 = scmp.ne.s32.totalorder %s179, %s180
      %p189 = scmp.eq.s32.totalorder %s29, 0
      %p190 = por %p188, %p189
      %p191 = scmp.ne.s32.totalorder %s179, %s180
      %p192 = scmp.eq.s32.totalorder %s30, 11
      %p193 = por %p191, %p192
      %p195 = scmp.ne.s32.totalorder %s180, %s194
      %p196 = scmp.eq.s32.totalorder %s30, 0
      %p197 = por %p195, %p196
      %s199 = sadd.s32 %s198, 1
      %p202 = scmp.eq.s32.totalorder %s24, 11
      %p203 = scmp.ne.s32.totalorder %s198, %s200
      %p204 = scmp.eq.s32.totalorder %s24, 0
      %p205 = por %p203, %p204
      %p206 = scmp.ne.s32.totalorder %s198, %s200
      %p207 = scmp.eq.s32.totalorder %s29, 11
      %p208 = por %p206, %p207
      %p209 = scmp.ne.s32.totalorder %s200, %s201
      %p210 = scmp.eq.s32.totalorder %s29, 0
      %p211 = por %p209, %p210
      %p212 = scmp.ne.s32.totalorder %s200, %s201
      %p213 = scmp.eq.s32.totalorder %s30, 11
      %p214 = por %p212, %p213
      %p216 = scmp.ne.s32.totalorder %s201, %s215
      %p217 = scmp.eq.s32.totalorder %s30, 0
      %p218 = por %p216, %p217
      %s220 = sadd.s32 %s219, 1
      %p223 = scmp.eq.s32.totalorder %s24, 11
      %p224 = scmp.ne.s32.totalorder %s219, %s221
      %p225 = scmp.eq.s32.totalorder %s24, 0
      %p226 = por %p224, %p225
      %p227 = scmp.ne.s32.totalorder %s219, %s221
      %p228 = scmp.eq.s32.totalorder %s29, 11
      %p229 = por %p227, %p228
      %p230 = scmp.ne.s32.totalorder %s221, %s222
      %p231 = scmp.eq.s32.totalorder %s29, 0
      %p232 = por %p230, %p231
      %p233 = scmp.ne.s32.totalorder %s221, %s222
      %p234 = scmp.eq.s32.totalorder %s30, 11
      %p235 = por %p233, %p234
      %p237 = scmp.ne.s32.totalorder %s222, %s236
      %p238 = scmp.eq.s32.totalorder %s30, 0
      %p239 = por %p237, %p238
      %s241 = sadd.s32 %s240, 1
      %p244 = scmp.eq.s32.totalorder %s24, 11
      %p245 = scmp.ne.s32.totalorder %s240, %s242
      %p246 = scmp.eq.s32.totalorder %s24, 0
      %p247 = por %p245, %p246
      %p248 = scmp.ne.s32.totalorder %s240, %s242
      %p249 = scmp.eq.s32.totalorder %s29, 11
      %p250 = por %p248, %p249
      %p251 = scmp.ne.s32.totalorder %s242, %s243
      %p252 = scmp.eq.s32.totalorder %s29, 0
      %p253 = por %p251, %p252
      %p254 = scmp.ne.s32.totalorder %s242, %s243
      %p255 = scmp.eq.s32.totalorder %s30, 11
      %p256 = por %p254, %p255
      %p258 = scmp.ne.s32.totalorder %s243, %s257
      %p259 = scmp.eq.s32.totalorder %s30, 0
      %p260 = por %p258, %p259
      %s262 = sadd.s32 %s261, 1
      %p265 = scmp.eq.s32.totalorder %s24, 11
      %p266 = scmp.ne.s32.totalorder %s261, %s263
      %p267 = scmp.eq.s32.totalorder %s24, 0
      %p268 = por %p266, %p267
      %p269 = scmp.ne.s32.totalorder %s261, %s263
      %p270 = scmp.eq.s32.totalorder %s29, 11
      %p271 = por %p269, %p270
      %p272 = scmp.ne.s32.totalorder %s263, %s264
      %p273 = scmp.eq.s32.totalorder %s29, 0
      %p274 = por %p272, %p273
      %p275 = scmp.ne.s32.totalorder %s263, %s264
      %p276 = scmp.eq.s32.totalorder %s30, 11
      %p277 = por %p275, %p276
      %p279 = scmp.ne.s32.totalorder %s264, %s278
      %p280 = scmp.eq.s32.totalorder %s30, 0
      %p281 = por %p279, %p280
      %s283 = sadd.s32 %s282, 1
      %p286 = scmp.eq.s32.totalorder %s24, 11
      %p287 = scmp.ne.s32.totalorder %s282, %s284
      %p288 = scmp.eq.s32.totalorder %s24, 0
      %p289 = por %p287, %p288
      %p290 = scmp.ne.s32.totalorder %s282, %s284
      %p291 = scmp.eq.s32.totalorder %s29, 11
      %p292 = por %p290, %p291
      %p293 = scmp.ne.s32.totalorder %s284, %s285
      %p294 = scmp.eq.s32.totalorder %s29, 0
      %p295 = por %p293, %p294
      %p296 = scmp.ne.s32.totalorder %s284, %s285
      %p297 = scmp.eq.s32.totalorder %s30, 11
      %p298 = por %p296, %p297
      %p300 = scmp.ne.s32.totalorder %s285, %s299
      %p301 = scmp.eq.s32.totalorder %s30, 0
      %p302 = por %p300, %p301
      %s304 = sadd.s32 %s303, 1
      %p307 = scmp.eq.s32.totalorder %s24, 11
      %p308 = scmp.ne.s32.totalorder %s303, %s305
      %p309 = scmp.eq.s32.totalorder %s24, 0
      %p310 = por %p308, %p309
      %p311 = scmp.ne.s32.totalorder %s303, %s305
      %p312 = scmp.eq.s32.totalorder %s29, 11
      %p313 = por %p311, %p312
      %p314 = scmp.ne.s32.totalorder %s305, %s306
      %p315 = scmp.eq.s32.totalorder %s29, 0
      %p316 = por %p314, %p315
      %p317 = scmp.ne.s32.totalorder %s305, %s306
      %p318 = scmp.eq.s32.totalorder %s30, 11
      %p319 = por %p317, %p318
      %p321 = scmp.ne.s32.totalorder %s306, %s320
      %p322 = scmp.eq.s32.totalorder %s30, 0
      %p323 = por %p321, %p322
      %s324 = ssub.s32 %s31, %s43
      %p325 = scmp.eq.s32.totalorder %s324, 0
      %s327 = sadd.s32 %s326, 1
      %s328 = scalar_select %p325, %s326, %s327
      %p331 = pneg %p325
      %p332 = scmp.eq.s32.totalorder %s24, 11
      %p333 = por %p331, %p332
      %p334 = scmp.ne.s32.totalorder %s326, %s329
      %p335 = scmp.eq.s32.totalorder %s24, 0
      %p336 = por %p334, %p335
      %p337 = scmp.ne.s32.totalorder %s326, %s329
      %p338 = scmp.eq.s32.totalorder %s29, 11
      %p339 = por %p337, %p338
      %p340 = scmp.ne.s32.totalorder %s329, %s330
      %p341 = scmp.eq.s32.totalorder %s29, 0
      %p342 = por %p340, %p341
      %p343 = scmp.ne.s32.totalorder %s329, %s330
      %p344 = scmp.eq.s32.totalorder %s30, 11
      %p345 = por %p343, %p344
      %p347 = scmp.ne.s32.totalorder %s330, %s346
      %p348 = scmp.eq.s32.totalorder %s30, 0
      %p349 = por %p347, %p348
      %p350 = scmp.le.s32.totalorder 1, %s24
      %p351 = scmp.lt.s32.totalorder %s24, 13
      %p352 = pnand %p350, %p351
      %p353 = pneg %p352
      // Predicated region
      $region9: #{tpu_custom_call.1} parent=5 // pred_check
        _
      $region10: #{tpu_custom_call.1} parent=5 // pred_check_branch
        %355 = sbr.rel (%p352) target = $region12
      $region11: #{tpu_custom_call.1} parent=5 // pred_region
        %s356 = ssub.s32 %s24, 1
        // Predicated region
        $region13: #{tpu_custom_call.1} parent=11 // pred_check
          %p357 = pneg %p85
        $region14: #{tpu_custom_call.1} parent=11 // pred_check_branch
          %359 = sbr.rel (%p357) target = $region16
        $region15: #{tpu_custom_call.1} parent=11 // pred_region
          _
        $region16: #{tpu_custom_call.1} parent=11 // pred_fallthru
          _
        // Predicated region
        $region17: #{tpu_custom_call.1} parent=11 // pred_check
          %p360 = pneg %p106
        $region18: #{tpu_custom_call.1} parent=11 // pred_check_branch
          %362 = sbr.rel (%p360) target = $region20
        $region19: #{tpu_custom_call.1} parent=11 // pred_region
          _
        $region20: #{tpu_custom_call.1} parent=11 // pred_fallthru
          _
        // Predicated region
        $region21: #{tpu_custom_call.1} parent=11 // pred_check
          %p363 = pneg %p127
        $region22: #{tpu_custom_call.1} parent=11 // pred_check_branch
          %365 = sbr.rel (%p363) target = $region24
        $region23: #{tpu_custom_call.1} parent=11 // pred_region
          _
        $region24: #{tpu_custom_call.1} parent=11 // pred_fallthru
          _
        // Predicated region
        $region25: #{tpu_custom_call.1} parent=11 // pred_check
          %p366 = pneg %p148
        $region26: #{tpu_custom_call.1} parent=11 // pred_check_branch
          %368 = sbr.rel (%p366) target = $region28
        $region27: #{tpu_custom_call.1} parent=11 // pred_region
          _
        $region28: #{tpu_custom_call.1} parent=11 // pred_fallthru
          _
        // Predicated region
        $region29: #{tpu_custom_call.1} parent=11 // pred_check
          %p369 = pneg %p169
        $region30: #{tpu_custom_call.1} parent=11 // pred_check_branch
          %371 = sbr.rel (%p369) target = $region32
        $region31: #{tpu_custom_call.1} parent=11 // pred_region
          _
        $region32: #{tpu_custom_call.1} parent=11 // pred_fallthru
          _
        // Predicated region
        $region33: #{tpu_custom_call.1} parent=11 // pred_check
          %p372 = pneg %p190
        $region34: #{tpu_custom_call.1} parent=11 // pred_check_branch
          %374 = sbr.rel (%p372) target = $region36
        $region35: #{tpu_custom_call.1} parent=11 // pred_region
          _
        $region36: #{tpu_custom_call.1} parent=11 // pred_fallthru
          _
        // Predicated region
        $region37: #{tpu_custom_call.1} parent=11 // pred_check
          %p375 = pneg %p211
        $region38: #{tpu_custom_call.1} parent=11 // pred_check_branch
          %377 = sbr.rel (%p375) target = $region40
        $region39: #{tpu_custom_call.1} parent=11 // pred_region
          %379 = vsyncadd [#allocation4], 0
          %s380 = sshll.u32 %s7, 4
          %s381 = int_to_ptr.hbm [resolvable:$true] %s380
          %s382 = sshll.u32 [#allocation3], 4
          %s383 = int_to_ptr.vmem [resolvable:$true] %s382
          %388 = dma.hbm_to_vmem [thread:$0]  %s381, 32768, %s383, [#allocation4], 256, 256, 16
        $region40: #{tpu_custom_call.1} parent=11 // pred_fallthru
          _
        // Predicated region
        $region41: #{tpu_custom_call.1} parent=11 // pred_check
          %p389 = pneg %p232
        $region42: #{tpu_custom_call.1} parent=11 // pred_check_branch
          %391 = sbr.rel (%p389) target = $region44
        $region43: #{tpu_custom_call.1} parent=11 // pred_region
          _
        $region44: #{tpu_custom_call.1} parent=11 // pred_fallthru
          _
        // Predicated region
        $region45: #{tpu_custom_call.1} parent=11 // pred_check
          %p392 = pneg %p253
        $region46: #{tpu_custom_call.1} parent=11 // pred_check_branch
          %394 = sbr.rel (%p392) target = $region48
        $region47: #{tpu_custom_call.1} parent=11 // pred_region
          %396 = vsyncadd [#allocation7], 0
          %s397 = sshll.u32 %s9, 4
          %s398 = int_to_ptr.hbm [resolvable:$true] %s397
          %s399 = sshll.u32 [#allocation6], 4
          %s400 = int_to_ptr.vmem [resolvable:$true] %s399
          %405 = dma.hbm_to_vmem [thread:$0]  %s398, 8192, %s400, [#allocation7], 128, 128, 8
        $region48: #{tpu_custom_call.1} parent=11 // pred_fallthru
          _
        // Predicated region
        $region49: #{tpu_custom_call.1} parent=11 // pred_check
          %p406 = pneg %p274
        $region50: #{tpu_custom_call.1} parent=11 // pred_check_branch
          %408 = sbr.rel (%p406) target = $region52
        $region51: #{tpu_custom_call.1} parent=11 // pred_region
          _
        $region52: #{tpu_custom_call.1} parent=11 // pred_fallthru
          _
        // Predicated region
        $region53: #{tpu_custom_call.1} parent=11 // pred_check
          %p409 = pneg %p295
        $region54: #{tpu_custom_call.1} parent=11 // pred_check_branch
          %411 = sbr.rel (%p409) target = $region56
        $region55: #{tpu_custom_call.1} parent=11 // pred_region
          _
        $region56: #{tpu_custom_call.1} parent=11 // pred_fallthru
          _
        // Predicated region
        $region57: #{tpu_custom_call.1} parent=11 // pred_check
          %p412 = pneg %p316
        $region58: #{tpu_custom_call.1} parent=11 // pred_check_branch
          %414 = sbr.rel (%p412) target = $region60
        $region59: #{tpu_custom_call.1} parent=11 // pred_region
          _
        $region60: #{tpu_custom_call.1} parent=11 // pred_fallthru
          _
      $region12: #{tpu_custom_call.1} parent=5 // pred_fallthru
        _
      %p415 = scmp.lt.s32.totalorder %s24, 12
      // Predicated region
      $region61: #{tpu_custom_call.1} parent=5 // pred_check
        %p416 = pneg %p415
      $region62: #{tpu_custom_call.1} parent=5 // pred_check_branch
        %418 = sbr.rel (%p416) target = $region64
      $region63: #{tpu_custom_call.1} parent=5 // pred_region
        // Predicated region
        $region65: #{tpu_custom_call.1} parent=63 // pred_check
          %p419 = pneg %p58
        $region66: #{tpu_custom_call.1} parent=63 // pred_check_branch
          %421 = sbr.rel (%p419) target = $region68
        $region67: #{tpu_custom_call.1} parent=63 // pred_region
          %s422 = smul.u32 8, %s32
          %p423 = scmp.lt.s32.totalorder %s31, 3
          %s424 = scalar_select %p423, %s31, 3
          %p425 = scmp.lt.s32.totalorder %s422, 23
          %s426 = scalar_select %p425, %s422, 23
          %s427 = smul.addr %s424, 24
          %s428 = sadd.s32 %s426, %s427
          %s429 = smul.addr %s428, 4
          %s430 = scalar_lea.vmem %s0, %s429
          %s431 = smul.u32 8, %s32
        $region68: #{tpu_custom_call.1} parent=63 // pred_fallthru
          _
      $region64: #{tpu_custom_call.1} parent=5 // pred_fallthru
        _
      %p432 = scmp.le.s32.totalorder 1, %s24
      %p433 = scmp.lt.s32.totalorder %s24, 13
      %p434 = pnand %p432, %p433
      %p435 = pneg %p434
      // Predicated region
      $region69: #{tpu_custom_call.1} parent=5 // pred_check
        _
      $region70: #{tpu_custom_call.1} parent=5 // pred_check_branch
        %437 = sbr.rel (%p434) target = $region72
      $region71: #{tpu_custom_call.1} parent=5 // pred_region
        %s438 = ssub.s32 %s24, 1
        // Predicated region
        $region73: #{tpu_custom_call.1} parent=71 // pred_check
          %p439 = pneg %p211
        $region74: #{tpu_custom_call.1} parent=71 // pred_check_branch
          %441 = sbr.rel (%p439) target = $region76
        $region75: #{tpu_custom_call.1} parent=71 // pred_region
          %443 = dma.done [#allocation4], 32768
        $region76: #{tpu_custom_call.1} parent=71 // pred_fallthru
          _
        // Predicated region
        $region77: #{tpu_custom_call.1} parent=71 // pred_check
          %p444 = pneg %p253
        $region78: #{tpu_custom_call.1} parent=71 // pred_check_branch
          %446 = sbr.rel (%p444) target = $region80
        $region79: #{tpu_custom_call.1} parent=71 // pred_region
          %448 = dma.done [#allocation7], 8192
        $region80: #{tpu_custom_call.1} parent=71 // pred_fallthru
          _
        %s449 = smul.u32 8, %s34
        %p450 = scmp.lt.s32.totalorder %s33, 3
        %s451 = scalar_select %p450, %s33, 3
        %p452 = scmp.lt.s32.totalorder %s449, 23
        %s453 = scalar_select %p452, %s449, 23
        %s454 = smul.addr %s451, 24
        %s455 = sadd.s32 %s453, %s454
        %s456 = smul.addr %s455, 4
        %s457 = scalar_lea.vmem %s0, %s456
        %p458 = pneg %p64
        %p459 = pneg %p61
        %p460 = pneg %p85
        %p461 = pneg %p82
        %p462 = pneg %p106
        %p463 = pneg %p103
        %p464 = pneg %p127
        %p465 = pneg %p124
        %p466 = pneg %p148
        %p467 = pneg %p145
        %p468 = pneg %p169
        %p469 = pneg %p166
        %p470 = pneg %p190
        %p471 = pneg %p187
        %p472 = pneg %p211
        %p473 = pneg %p208
        %p474 = pneg %p232
        %p475 = pneg %p229
        %p476 = pneg %p253
        %p477 = pneg %p250
        %p478 = pneg %p274
        %p479 = pneg %p271
        %p480 = pneg %p295
        %p481 = pneg %p292
        %p482 = pneg %p316
        %p483 = pneg %p313
        %p484 = pneg %p342
        %p485 = pneg %p339
        %s486 = sand.u32 %s329, 1
        %s487 = scalar_lea.sflag [#allocation5], %s486
        %s488 = sand.u32 %s329, 1
        %s489 = scalar_lea.vmem [#allocation8], %s488
        %s490 = smul.u32 8, %s34
        %p491 = scmp.lt.s32.totalorder %s33, 3
        %s492 = scalar_select %p491, %s33, 3
        %p493 = scmp.lt.s32.totalorder %s490, 23
        %s494 = scalar_select %p493, %s490, 23
        %s495 = smul.addr %s492, 24
        %s496 = sadd.s32 %s494, %s495
        %s497 = smul.addr %s496, 4
        %s498 = scalar_lea.vmem %s0, %s497
        %s499 = smul.u32 8, %s34
        %p501 = scmp.eq.s32.totalorder %s34, 0
        // Predicated region
        $region81: #{tpu_custom_call.1} parent=71 // pred_check
          %p502 = pneg %p501
        $region82: #{tpu_custom_call.1} parent=71 // pred_check_branch
          %504 = sbr.rel (%p502) target = $region84
        $region83: #{tpu_custom_call.1} parent=71 // pred_region
          %505 = vst [vmem:[#allocation2] sm:$0xff] -inf
          %506 = vst [vmem:[#allocation2 + $0x8] sm:$0xff] -inf
          %507 = vst [vmem:[#allocation2 + $0x10] sm:$0xff] -inf
          %508 = vst [vmem:[#allocation2 + $0x18] sm:$0xff] -inf
          %509 = vst [vmem:[#allocation2 + $0x20] sm:$0xff] -inf
          %510 = vst [vmem:[#allocation2 + $0x28] sm:$0xff] -inf
          %511 = vst [vmem:[#allocation2 + $0x30] sm:$0xff] -inf
          %512 = vst [vmem:[#allocation2 + $0x38] sm:$0xff] -inf
        $region84: #{tpu_custom_call.1} parent=71 // pred_fallthru
          _
        %v513 = vld [vmem:[%s498] sm:$0x77]
        %v514 = vld [vmem:[%s498 + $0x8] sm:$0x77]
        %v515 = vld [vmem:[%s498 + $0x10] sm:$0x77]
        %v516 = vld [vmem:[%s498 + $0x18] sm:$0x77]
        %521 = vst [vmem:[#allocation1] ss:$2 sm:$0xff] %v513
        %s522 = scalar_lea.vmem [#allocation1], 16
        %523 = vst [vmem:[%s522] ss:$2 sm:$0xff] %v514
        %s524 = scalar_lea.vmem [#allocation1], 32
        %525 = vst [vmem:[%s524] ss:$2 sm:$0xff] %v515
        %s526 = scalar_lea.vmem [#allocation1], 48
        %527 = vst [vmem:[%s526] ss:$2 sm:$0xff] %v516
        %v528 = vld.sshfl [vmem:[#allocation1] sm:$0xff pattern:$0x75316420]
        %v529 = vld.sshfl [vmem:[#allocation1 + $0x8] sm:$0xff pattern:$0x75316420]
        %v530 = vld.sshfl [vmem:[#allocation1 + $0x10] sm:$0xff pattern:$0x75316420]
        %v531 = vld.sshfl [vmem:[#allocation1 + $0x18] sm:$0xff pattern:$0x75316420]
        %v532 = vld.sshfl [vmem:[#allocation1 + $0x20] sm:$0xff pattern:$0x75316420]
        %v533 = vld.sshfl [vmem:[#allocation1 + $0x28] sm:$0xff pattern:$0x75316420]
        %v534 = vld.sshfl [vmem:[#allocation1 + $0x30] sm:$0xff pattern:$0x75316420]
        %v535 = vld.sshfl [vmem:[#allocation1 + $0x38] sm:$0xff pattern:$0x75316420]
        %v544 = vpack.c.bf16 %v528, %v528
        %v545 = vpack.c.bf16 %v529, %v529
        %v546 = vpack.c.bf16 %v530, %v530
        %v547 = vpack.c.bf16 %v531, %v531
        %v548 = vpack.c.bf16 %v532, %v532
        %v549 = vpack.c.bf16 %v533, %v533
        %v550 = vpack.c.bf16 %v534, %v534
        %v551 = vpack.c.bf16 %v535, %v535
        %v552 = vld [vmem:[%s1] sm:$0x3]
        %v553 = vld [vmem:[%s2] sm:$0x1]
        %v555 = vperm.slane %v553, 0
        %557 = vxpose.binary.xlu0.c.b16.start [1/16] %v545, %v544, 128
        %558 = vxpose.binary.xlu0.c.b16.cont [2/16] 0, 0, 128
        %559 = vxpose.binary.xlu0.c.b16.cont [3/16] 0, 0, 128
        %560 = vxpose.binary.xlu0.c.b16.cont [4/16] 0, 0, 128
        %561 = vxpose.binary.xlu0.c.b16.cont [5/16] 0, 0, 128
        %562 = vxpose.binary.xlu0.c.b16.cont [6/16] 0, 0, 128
        %563 = vxpose.binary.xlu0.c.b16.cont [7/16] 0, 0, 128
        %564 = vxpose.binary.xlu0.c.b16.end [8/16] 0, 0, 128
        %v565 = vpop.trf.xlu0
        %v566 = vpop.trf.xlu0
        %v567 = vpop.trf.xlu0
        %v568 = vpop.trf.xlu0
        %v569 = vpop.trf.xlu0
        %v570 = vpop.trf.xlu0
        %v571 = vpop.trf.xlu0
        %v572 = vpop.trf.xlu0
        %v573 = vpop.trf.xlu0
        %v574 = vpop.trf.xlu0
        %v575 = vpop.trf.xlu0
        %v576 = vpop.trf.xlu0
        %v577 = vpop.trf.xlu0
        %v578 = vpop.trf.xlu0
        %v579 = vpop.trf.xlu0
        %v580 = vpop.trf.xlu0
        %581 = vxpose.binary.xlu0.c.b16.start [1/16] %v547, %v546, 128
        %582 = vxpose.binary.xlu0.c.b16.cont [2/16] 0, 0, 128
        %583 = vxpose.binary.xlu0.c.b16.cont [3/16] 0, 0, 128
        %584 = vxpose.binary.xlu0.c.b16.cont [4/16] 0, 0, 128
        %585 = vxpose.binary.xlu0.c.b16.cont [5/16] 0, 0, 128
        %586 = vxpose.binary.xlu0.c.b16.cont [6/16] 0, 0, 128
        %587 = vxpose.binary.xlu0.c.b16.cont [7/16] 0, 0, 128
        %588 = vxpose.binary.xlu0.c.b16.end [8/16] 0, 0, 128
        %v589 = vpop.trf.xlu0
        %v590 = vpop.trf.xlu0
        %v591 = vpop.trf.xlu0
        %v592 = vpop.trf.xlu0
        %v593 = vpop.trf.xlu0
        %v594 = vpop.trf.xlu0
        %v595 = vpop.trf.xlu0
        %v596 = vpop.trf.xlu0
        %v597 = vpop.trf.xlu0
        %v598 = vpop.trf.xlu0
        %v599 = vpop.trf.xlu0
        %v600 = vpop.trf.xlu0
        %v601 = vpop.trf.xlu0
        %v602 = vpop.trf.xlu0
        %v603 = vpop.trf.xlu0
        %v604 = vpop.trf.xlu0
        %605 = vxpose.binary.xlu0.c.b16.start [1/16] %v549, %v548, 128
        %606 = vxpose.binary.xlu0.c.b16.cont [2/16] 0, 0, 128
        %607 = vxpose.binary.xlu0.c.b16.cont [3/16] 0, 0, 128
        %608 = vxpose.binary.xlu0.c.b16.cont [4/16] 0, 0, 128
        %609 = vxpose.binary.xlu0.c.b16.cont [5/16] 0, 0, 128
        %610 = vxpose.binary.xlu0.c.b16.cont [6/16] 0, 0, 128
        %611 = vxpose.binary.xlu0.c.b16.cont [7/16] 0, 0, 128
        %612 = vxpose.binary.xlu0.c.b16.end [8/16] 0, 0, 128
        %v613 = vpop.trf.xlu0
        %v614 = vpop.trf.xlu0
        %v615 = vpop.trf.xlu0
        %v616 = vpop.trf.xlu0
        %v617 = vpop.trf.xlu0
        %v618 = vpop.trf.xlu0
        %v619 = vpop.trf.xlu0
        %v620 = vpop.trf.xlu0
        %v621 = vpop.trf.xlu0
        %v622 = vpop.trf.xlu0
        %v623 = vpop.trf.xlu0
        %v624 = vpop.trf.xlu0
        %v625 = vpop.trf.xlu0
        %v626 = vpop.trf.xlu0
        %v627 = vpop.trf.xlu0
        %v628 = vpop.trf.xlu0
        %629 = vxpose.binary.xlu0.c.b16.start [1/16] %v551, %v550, 128
        %630 = vxpose.binary.xlu0.c.b16.cont [2/16] 0, 0, 128
        %631 = vxpose.binary.xlu0.c.b16.cont [3/16] 0, 0, 128
        %632 = vxpose.binary.xlu0.c.b16.cont [4/16] 0, 0, 128
        %633 = vxpose.binary.xlu0.c.b16.cont [5/16] 0, 0, 128
        %634 = vxpose.binary.xlu0.c.b16.cont [6/16] 0, 0, 128
        %635 = vxpose.binary.xlu0.c.b16.cont [7/16] 0, 0, 128
        %636 = vxpose.binary.xlu0.c.b16.end [8/16] 0, 0, 128
        %v637 = vpop.trf.xlu0
        %v638 = vpop.trf.xlu0
        %v639 = vpop.trf.xlu0
        %v640 = vpop.trf.xlu0
        %v641 = vpop.trf.xlu0
        %v642 = vpop.trf.xlu0
        %v643 = vpop.trf.xlu0
        %v644 = vpop.trf.xlu0
        %v645 = vpop.trf.xlu0
        %v646 = vpop.trf.xlu0
        %v647 = vpop.trf.xlu0
        %v648 = vpop.trf.xlu0
        %v649 = vpop.trf.xlu0
        %v650 = vpop.trf.xlu0
        %v651 = vpop.trf.xlu0
        %v652 = vpop.trf.xlu0
        %vm653 = vcmask 23552
        %v655 = vsel %vm653, %v565, 0
        %v658 = vsel %vm653, %v567, 0
        %v661 = vsel %vm653, %v569, 0
        %v664 = vsel %vm653, %v571, 0
        %v667 = vsel %vm653, %v573, 0
        %v670 = vsel %vm653, %v575, 0
        %v673 = vsel %vm653, %v577, 0
        %v676 = vsel %vm653, %v579, 0
        %v679 = vsel %vm653, %v566, 0
        %v682 = vsel %vm653, %v568, 0
        %v685 = vsel %vm653, %v570, 0
        %v688 = vsel %vm653, %v572, 0
        %v691 = vsel %vm653, %v574, 0
        %v694 = vsel %vm653, %v576, 0
        %v697 = vsel %vm653, %v578, 0
        %v700 = vsel %vm653, %v580, 0
        %v703 = vsel %vm653, %v589, 0
        %v706 = vsel %vm653, %v591, 0
        %v709 = vsel %vm653, %v593, 0
        %v712 = vsel %vm653, %v595, 0
        %v715 = vsel %vm653, %v597, 0
        %v718 = vsel %vm653, %v599, 0
        %v721 = vsel %vm653, %v601, 0
        %v724 = vsel %vm653, %v603, 0
        %v727 = vsel %vm653, %v590, 0
        %v730 = vsel %vm653, %v592, 0
        %v733 = vsel %vm653, %v594, 0
        %v736 = vsel %vm653, %v596, 0
        %v739 = vsel %vm653, %v598, 0
        %v742 = vsel %vm653, %v600, 0
        %v745 = vsel %vm653, %v602, 0
        %v748 = vsel %vm653, %v604, 0
        %v751 = vsel %vm653, %v613, 0
        %v754 = vsel %vm653, %v615, 0
        %v757 = vsel %vm653, %v617, 0
        %v760 = vsel %vm653, %v619, 0
        %v763 = vsel %vm653, %v621, 0
        %v766 = vsel %vm653, %v623, 0
        %v769 = vsel %vm653, %v625, 0
        %v772 = vsel %vm653, %v627, 0
        %v775 = vsel %vm653, %v614, 0
        %v778 = vsel %vm653, %v616, 0
        %v781 = vsel %vm653, %v618, 0
        %v784 = vsel %vm653, %v620, 0
        %v787 = vsel %vm653, %v622, 0
        %v790 = vsel %vm653, %v624, 0
        %v793 = vsel %vm653, %v626, 0
        %v796 = vsel %vm653, %v628, 0
        %v799 = vsel %vm653, %v637, 0
        %v802 = vsel %vm653, %v639, 0
        %v805 = vsel %vm653, %v641, 0
        %v808 = vsel %vm653, %v643, 0
        %v811 = vsel %vm653, %v645, 0
        %v814 = vsel %vm653, %v647, 0
        %v817 = vsel %vm653, %v649, 0
        %v820 = vsel %vm653, %v651, 0
        %v823 = vsel %vm653, %v638, 0
        %v826 = vsel %vm653, %v640, 0
        %v829 = vsel %vm653, %v642, 0
        %v832 = vsel %vm653, %v644, 0
        %v835 = vsel %vm653, %v646, 0
        %v838 = vsel %vm653, %v648, 0
        %v841 = vsel %vm653, %v650, 0
        %v844 = vsel %vm653, %v652, 0
        %vm846 = vcmask 1040384
        %vm847 = vcmask 1041408
        %v848 = vsel %vm846, 4294967295, 65535
        %v849 = vsel %vm847, %v848, 0
        %v851 = vand.u32 %v552, %v849
        %853 = vmatpush.bf16.msra.mxu0 0
        %854 = vmatpush.bf16.msra.mxu0 0
        %855 = vmatpush.bf16.msra.mxu0 0
        %856 = vmatpush.bf16.msra.mxu0 0
        %857 = vmatpush.bf16.msra.mxu0 0
        %858 = vmatpush.bf16.msra.mxu0 0
        %859 = vmatpush.bf16.msra.mxu0 0
        %860 = vmatpush.bf16.msra.mxu0 %v851
        %861 = vmatmul.bf16.gmra.mxu0 %v655
        %v862 = vpop.f32.mrf.mxu0
        %v863 = vadd.f32 %v555, %v862
        %v864 = vpop.f32.mrf.mxu0
        %v865 = vadd.f32 %v555, %v864
        %866 = vmatmul.bf16.gmra.mxu0 %v658
        %v867 = vpop.f32.mrf.mxu0
        %v868 = vadd.f32 %v555, %v867
        %v869 = vpop.f32.mrf.mxu0
        %v870 = vadd.f32 %v555, %v869
        %871 = vmatmul.bf16.gmra.mxu0 %v661
        %v872 = vpop.f32.mrf.mxu0
        %v873 = vadd.f32 %v555, %v872
        %v874 = vpop.f32.mrf.mxu0
        %v875 = vadd.f32 %v555, %v874
        %876 = vmatmul.bf16.gmra.mxu0 %v664
        %v877 = vpop.f32.mrf.mxu0
        %v878 = vadd.f32 %v555, %v877
        %v879 = vpop.f32.mrf.mxu0
        %v880 = vadd.f32 %v555, %v879
        %881 = vmatmul.bf16.gmra.mxu0 %v667
        %v882 = vpop.f32.mrf.mxu0
        %v883 = vadd.f32 %v555, %v882
        %v884 = vpop.f32.mrf.mxu0
        %v885 = vadd.f32 %v555, %v884
        %886 = vmatmul.bf16.gmra.mxu0 %v670
        %v887 = vpop.f32.mrf.mxu0
        %v888 = vadd.f32 %v555, %v887
        %v889 = vpop.f32.mrf.mxu0
        %v890 = vadd.f32 %v555, %v889
        %891 = vmatmul.bf16.gmra.mxu0 %v673
        %v892 = vpop.f32.mrf.mxu0
        %v893 = vadd.f32 %v555, %v892
        %v894 = vpop.f32.mrf.mxu0
        %v895 = vadd.f32 %v555, %v894
        %896 = vmatmul.bf16.gmra.mxu0 %v676
        %v897 = vpop.f32.mrf.mxu0
        %v898 = vadd.f32 %v555, %v897
        %v899 = vpop.f32.mrf.mxu0
        %v900 = vadd.f32 %v555, %v899
        %901 = vmatmul.bf16.gmra.mxu0 %v679
        %v902 = vpop.f32.mrf.mxu0
        %v903 = vadd.f32 %v555, %v902
        %v904 = vpop.f32.mrf.mxu0
        %v905 = vadd.f32 %v555, %v904
        %906 = vmatmul.bf16.gmra.mxu0 %v682
        %v907 = vpop.f32.mrf.mxu0
        %v908 = vadd.f32 %v555, %v907
        %v909 = vpop.f32.mrf.mxu0
        %v910 = vadd.f32 %v555, %v909
        %911 = vmatmul.bf16.gmra.mxu0 %v685
        %v912 = vpop.f32.mrf.mxu0
        %v913 = vadd.f32 %v555, %v912
        %v914 = vpop.f32.mrf.mxu0
        %v915 = vadd.f32 %v555, %v914
        %916 = vmatmul.bf16.gmra.mxu0 %v688
        %v917 = vpop.f32.mrf.mxu0
        %v918 = vadd.f32 %v555, %v917
        %v919 = vpop.f32.mrf.mxu0
        %v920 = vadd.f32 %v555, %v919
        %921 = vmatmul.bf16.gmra.mxu0 %v691
        %v922 = vpop.f32.mrf.mxu0
        %v923 = vadd.f32 %v555, %v922
        %v924 = vpop.f32.mrf.mxu0
        %v925 = vadd.f32 %v555, %v924
        %926 = vmatmul.bf16.gmra.mxu0 %v694
        %v927 = vpop.f32.mrf.mxu0
        %v928 = vadd.f32 %v555, %v927
        %v929 = vpop.f32.mrf.mxu0
        %v930 = vadd.f32 %v555, %v929
        %931 = vmatmul.bf16.gmra.mxu0 %v697
        %v932 = vpop.f32.mrf.mxu0
        %v933 = vadd.f32 %v555, %v932
        %v934 = vpop.f32.mrf.mxu0
        %v935 = vadd.f32 %v555, %v934
        %936 = vmatmul.bf16.gmra.mxu0 %v700
        %v937 = vpop.f32.mrf.mxu0
        %v938 = vadd.f32 %v555, %v937
        %v939 = vpop.f32.mrf.mxu0
        %v940 = vadd.f32 %v555, %v939
        %941 = vmatmul.bf16.gmra.mxu0 %v703
        %v942 = vpop.f32.mrf.mxu0
        %v943 = vadd.f32 %v555, %v942
        %v944 = vpop.f32.mrf.mxu0
        %v945 = vadd.f32 %v555, %v944
        %946 = vmatmul.bf16.gmra.mxu0 %v706
        %v947 = vpop.f32.mrf.mxu0
        %v948 = vadd.f32 %v555, %v947
        %v949 = vpop.f32.mrf.mxu0
        %v950 = vadd.f32 %v555, %v949
        %951 = vmatmul.bf16.gmra.mxu0 %v709
        %v952 = vpop.f32.mrf.mxu0
        %v953 = vadd.f32 %v555, %v952
        %v954 = vpop.f32.mrf.mxu0
        %v955 = vadd.f32 %v555, %v954
        %956 = vmatmul.bf16.gmra.mxu0 %v712
        %v957 = vpop.f32.mrf.mxu0
        %v958 = vadd.f32 %v555, %v957
        %v959 = vpop.f32.mrf.mxu0
        %v960 = vadd.f32 %v555, %v959
        %961 = vmatmul.bf16.gmra.mxu0 %v715
        %v962 = vpop.f32.mrf.mxu0
        %v963 = vadd.f32 %v555, %v962
        %v964 = vpop.f32.mrf.mxu0
        %v965 = vadd.f32 %v555, %v964
        %966 = vmatmul.bf16.gmra.mxu0 %v718
        %v967 = vpop.f32.mrf.mxu0
        %v968 = vadd.f32 %v555, %v967
        %v969 = vpop.f32.mrf.mxu0
        %v970 = vadd.f32 %v555, %v969
        %971 = vmatmul.bf16.gmra.mxu0 %v721
        %v972 = vpop.f32.mrf.mxu0
        %v973 = vadd.f32 %v555, %v972
        %v974 = vpop.f32.mrf.mxu0
        %v975 = vadd.f32 %v555, %v974
        %976 = vmatmul.bf16.gmra.mxu0 %v724
        %v977 = vpop.f32.mrf.mxu0
        %v978 = vadd.f32 %v555, %v977
        %v979 = vpop.f32.mrf.mxu0
        %v980 = vadd.f32 %v555, %v979
        %981 = vmatmul.bf16.gmra.mxu0 %v727
        %v982 = vpop.f32.mrf.mxu0
        %v983 = vadd.f32 %v555, %v982
        %v984 = vpop.f32.mrf.mxu0
        %v985 = vadd.f32 %v555, %v984
        %986 = vmatmul.bf16.gmra.mxu0 %v730
        %v987 = vpop.f32.mrf.mxu0
        %v988 = vadd.f32 %v555, %v987
        %v989 = vpop.f32.mrf.mxu0
        %v990 = vadd.f32 %v555, %v989
        %991 = vmatmul.bf16.gmra.mxu0 %v733
        %v992 = vpop.f32.mrf.mxu0
        %v993 = vadd.f32 %v555, %v992
        %v994 = vpop.f32.mrf.mxu0
        %v995 = vadd.f32 %v555, %v994
        %996 = vmatmul.bf16.gmra.mxu0 %v736
        %v997 = vpop.f32.mrf.mxu0
        %v998 = vadd.f32 %v555, %v997
        %v999 = vpop.f32.mrf.mxu0
        %v1000 = vadd.f32 %v555, %v999
        %1001 = vmatmul.bf16.gmra.mxu0 %v739
        %v1002 = vpop.f32.mrf.mxu0
        %v1003 = vadd.f32 %v555, %v1002
        %v1004 = vpop.f32.mrf.mxu0
        %v1005 = vadd.f32 %v555, %v1004
        %1006 = vmatmul.bf16.gmra.mxu0 %v742
        %v1007 = vpop.f32.mrf.mxu0
        %v1008 = vadd.f32 %v555, %v1007
        %v1009 = vpop.f32.mrf.mxu0
        %v1010 = vadd.f32 %v555, %v1009
        %1011 = vmatmul.bf16.gmra.mxu0 %v745
        %v1012 = vpop.f32.mrf.mxu0
        %v1013 = vadd.f32 %v555, %v1012
        %v1014 = vpop.f32.mrf.mxu0
        %v1015 = vadd.f32 %v555, %v1014
        %1016 = vmatmul.bf16.gmra.mxu0 %v748
        %v1017 = vpop.f32.mrf.mxu0
        %v1018 = vadd.f32 %v555, %v1017
        %v1019 = vpop.f32.mrf.mxu0
        %v1020 = vadd.f32 %v555, %v1019
        %1021 = vmatmul.bf16.gmra.mxu0 %v751
        %v1022 = vpop.f32.mrf.mxu0
        %v1023 = vadd.f32 %v555, %v1022
        %v1024 = vpop.f32.mrf.mxu0
        %v1025 = vadd.f32 %v555, %v1024
        %1026 = vmatmul.bf16.gmra.mxu0 %v754
        %v1027 = vpop.f32.mrf.mxu0
        %v1028 = vadd.f32 %v555, %v1027
        %v1029 = vpop.f32.mrf.mxu0
        %v1030 = vadd.f32 %v555, %v1029
        %1031 = vmatmul.bf16.gmra.mxu0 %v757
        %v1032 = vpop.f32.mrf.mxu0
        %v1033 = vadd.f32 %v555, %v1032
        %v1034 = vpop.f32.mrf.mxu0
        %v1035 = vadd.f32 %v555, %v1034
        %1036 = vmatmul.bf16.gmra.mxu0 %v760
        %v1037 = vpop.f32.mrf.mxu0
        %v1038 = vadd.f32 %v555, %v1037
        %v1039 = vpop.f32.mrf.mxu0
        %v1040 = vadd.f32 %v555, %v1039
        %1041 = vmatmul.bf16.gmra.mxu0 %v763
        %v1042 = vpop.f32.mrf.mxu0
        %v1043 = vadd.f32 %v555, %v1042
        %v1044 = vpop.f32.mrf.mxu0
        %v1045 = vadd.f32 %v555, %v1044
        %1046 = vmatmul.bf16.gmra.mxu0 %v766
        %v1047 = vpop.f32.mrf.mxu0
        %v1048 = vadd.f32 %v555, %v1047
        %v1049 = vpop.f32.mrf.mxu0
        %v1050 = vadd.f32 %v555, %v1049
        %1051 = vmatmul.bf16.gmra.mxu0 %v769
        %v1052 = vpop.f32.mrf.mxu0
        %v1053 = vadd.f32 %v555, %v1052
        %v1054 = vpop.f32.mrf.mxu0
        %v1055 = vadd.f32 %v555, %v1054
        %1056 = vmatmul.bf16.gmra.mxu0 %v772
        %v1057 = vpop.f32.mrf.mxu0
        %v1058 = vadd.f32 %v555, %v1057
        %v1059 = vpop.f32.mrf.mxu0
        %v1060 = vadd.f32 %v555, %v1059
        %1061 = vmatmul.bf16.gmra.mxu0 %v775
        %v1062 = vpop.f32.mrf.mxu0
        %v1063 = vadd.f32 %v555, %v1062
        %v1064 = vpop.f32.mrf.mxu0
        %v1065 = vadd.f32 %v555, %v1064
        %1066 = vmatmul.bf16.gmra.mxu0 %v778
        %v1067 = vpop.f32.mrf.mxu0
        %v1068 = vadd.f32 %v555, %v1067
        %v1069 = vpop.f32.mrf.mxu0
        %v1070 = vadd.f32 %v555, %v1069
        %1071 = vmatmul.bf16.gmra.mxu0 %v781
        %v1072 = vpop.f32.mrf.mxu0
        %v1073 = vadd.f32 %v555, %v1072
        %v1074 = vpop.f32.mrf.mxu0
        %v1075 = vadd.f32 %v555, %v1074
        %1076 = vmatmul.bf16.gmra.mxu0 %v784
        %v1077 = vpop.f32.mrf.mxu0
        %v1078 = vadd.f32 %v555, %v1077
        %v1079 = vpop.f32.mrf.mxu0
        %v1080 = vadd.f32 %v555, %v1079
        %1081 = vmatmul.bf16.gmra.mxu0 %v787
        %v1082 = vpop.f32.mrf.mxu0
        %v1083 = vadd.f32 %v555, %v1082
        %v1084 = vpop.f32.mrf.mxu0
        %v1085 = vadd.f32 %v555, %v1084
        %1086 = vmatmul.bf16.gmra.mxu0 %v790
        %v1087 = vpop.f32.mrf.mxu0
        %v1088 = vadd.f32 %v555, %v1087
        %v1089 = vpop.f32.mrf.mxu0
        %v1090 = vadd.f32 %v555, %v1089
        %1091 = vmatmul.bf16.gmra.mxu0 %v793
        %v1092 = vpop.f32.mrf.mxu0
        %v1093 = vadd.f32 %v555, %v1092
        %v1094 = vpop.f32.mrf.mxu0
        %v1095 = vadd.f32 %v555, %v1094
        %1096 = vmatmul.bf16.gmra.mxu0 %v796
        %v1097 = vpop.f32.mrf.mxu0
        %v1098 = vadd.f32 %v555, %v1097
        %v1099 = vpop.f32.mrf.mxu0
        %v1100 = vadd.f32 %v555, %v1099
        %1101 = vmatmul.bf16.gmra.mxu0 %v799
        %v1102 = vpop.f32.mrf.mxu0
        %v1103 = vadd.f32 %v555, %v1102
        %v1104 = vpop.f32.mrf.mxu0
        %v1105 = vadd.f32 %v555, %v1104
        %1106 = vmatmul.bf16.gmra.mxu0 %v802
        %v1107 = vpop.f32.mrf.mxu0
        %v1108 = vadd.f32 %v555, %v1107
        %v1109 = vpop.f32.mrf.mxu0
        %v1110 = vadd.f32 %v555, %v1109
        %1111 = vmatmul.bf16.gmra.mxu0 %v805
        %v1112 = vpop.f32.mrf.mxu0
        %v1113 = vadd.f32 %v555, %v1112
        %v1114 = vpop.f32.mrf.mxu0
        %v1115 = vadd.f32 %v555, %v1114
        %1116 = vmatmul.bf16.gmra.mxu0 %v808
        %v1117 = vpop.f32.mrf.mxu0
        %v1118 = vadd.f32 %v555, %v1117
        %v1119 = vpop.f32.mrf.mxu0
        %v1120 = vadd.f32 %v555, %v1119
        %1121 = vmatmul.bf16.gmra.mxu0 %v811
        %v1122 = vpop.f32.mrf.mxu0
        %v1123 = vadd.f32 %v555, %v1122
        %v1124 = vpop.f32.mrf.mxu0
        %v1125 = vadd.f32 %v555, %v1124
        %1126 = vmatmul.bf16.gmra.mxu0 %v814
        %v1127 = vpop.f32.mrf.mxu0
        %v1128 = vadd.f32 %v555, %v1127
        %v1129 = vpop.f32.mrf.mxu0
        %v1130 = vadd.f32 %v555, %v1129
        %1131 = vmatmul.bf16.gmra.mxu0 %v817
        %v1132 = vpop.f32.mrf.mxu0
        %v1133 = vadd.f32 %v555, %v1132
        %v1134 = vpop.f32.mrf.mxu0
        %v1135 = vadd.f32 %v555, %v1134
        %1136 = vmatmul.bf16.gmra.mxu0 %v820
        %v1137 = vpop.f32.mrf.mxu0
        %v1138 = vadd.f32 %v555, %v1137
        %v1139 = vpop.f32.mrf.mxu0
        %v1140 = vadd.f32 %v555, %v1139
        %1141 = vmatmul.bf16.gmra.mxu0 %v823
        %v1142 = vpop.f32.mrf.mxu0
        %v1143 = vadd.f32 %v555, %v1142
        %v1144 = vpop.f32.mrf.mxu0
        %v1145 = vadd.f32 %v555, %v1144
        %1146 = vmatmul.bf16.gmra.mxu0 %v826
        %v1147 = vpop.f32.mrf.mxu0
        %v1148 = vadd.f32 %v555, %v1147
        %v1149 = vpop.f32.mrf.mxu0
        %v1150 = vadd.f32 %v555, %v1149
        %1151 = vmatmul.bf16.gmra.mxu0 %v829
        %v1152 = vpop.f32.mrf.mxu0
        %v1153 = vadd.f32 %v555, %v1152
        %v1154 = vpop.f32.mrf.mxu0
        %v1155 = vadd.f32 %v555, %v1154
        %1156 = vmatmul.bf16.gmra.mxu0 %v832
        %v1157 = vpop.f32.mrf.mxu0
        %v1158 = vadd.f32 %v555, %v1157
        %v1159 = vpop.f32.mrf.mxu0
        %v1160 = vadd.f32 %v555, %v1159
        %1161 = vmatmul.bf16.gmra.mxu0 %v835
        %v1162 = vpop.f32.mrf.mxu0
        %v1163 = vadd.f32 %v555, %v1162
        %v1164 = vpop.f32.mrf.mxu0
        %v1165 = vadd.f32 %v555, %v1164
        %1166 = vmatmul.bf16.gmra.mxu0 %v838
        %v1167 = vpop.f32.mrf.mxu0
        %v1168 = vadd.f32 %v555, %v1167
        %v1169 = vpop.f32.mrf.mxu0
        %v1170 = vadd.f32 %v555, %v1169
        %1171 = vmatmul.bf16.gmra.mxu0 %v841
        %v1172 = vpop.f32.mrf.mxu0
        %v1173 = vadd.f32 %v555, %v1172
        %v1174 = vpop.f32.mrf.mxu0
        %v1175 = vadd.f32 %v555, %v1174
        %1176 = vmatmul.bf16.gmra.mxu0 %v844
        %v1177 = vpop.f32.mrf.mxu0
        %v1178 = vadd.f32 %v555, %v1177
        %v1179 = vpop.f32.mrf.mxu0
        %v1180 = vadd.f32 %v555, %v1179
        %1181 = vdwg.mxu0
        %v1182 = vmax.f32 %v863, 0.0
        %v1183 = vmax.f32 %v865, 0.0
        %v1184 = vmax.f32 %v868, 0.0
        %v1185 = vmax.f32 %v870, 0.0
        %v1186 = vmax.f32 %v873, 0.0
        %v1187 = vmax.f32 %v875, 0.0
        %v1188 = vmax.f32 %v878, 0.0
        %v1189 = vmax.f32 %v880, 0.0
        %v1190 = vmax.f32 %v883, 0.0
        %v1191 = vmax.f32 %v885, 0.0
        %v1192 = vmax.f32 %v888, 0.0
        %v1193 = vmax.f32 %v890, 0.0
        %v1194 = vmax.f32 %v893, 0.0
        %v1195 = vmax.f32 %v895, 0.0
        %v1196 = vmax.f32 %v898, 0.0
        %v1197 = vmax.f32 %v900, 0.0
        %v1198 = vmax.f32 %v903, 0.0
        %v1199 = vmax.f32 %v905, 0.0
        %v1200 = vmax.f32 %v908, 0.0
        %v1201 = vmax.f32 %v910, 0.0
        %v1202 = vmax.f32 %v913, 0.0
        %v1203 = vmax.f32 %v915, 0.0
        %v1204 = vmax.f32 %v918, 0.0
        %v1205 = vmax.f32 %v920, 0.0
        %v1206 = vmax.f32 %v923, 0.0
        %v1207 = vmax.f32 %v925, 0.0
        %v1208 = vmax.f32 %v928, 0.0
        %v1209 = vmax.f32 %v930, 0.0
        %v1210 = vmax.f32 %v933, 0.0
        %v1211 = vmax.f32 %v935, 0.0
        %v1212 = vmax.f32 %v938, 0.0
        %v1213 = vmax.f32 %v940, 0.0
        %v1214 = vmax.f32 %v943, 0.0
        %v1215 = vmax.f32 %v945, 0.0
        %v1216 = vmax.f32 %v948, 0.0
        %v1217 = vmax.f32 %v950, 0.0
        %v1218 = vmax.f32 %v953, 0.0
        %v1219 = vmax.f32 %v955, 0.0
        %v1220 = vmax.f32 %v958, 0.0
        %v1221 = vmax.f32 %v960, 0.0
        %v1222 = vmax.f32 %v963, 0.0
        %v1223 = vmax.f32 %v965, 0.0
        %v1224 = vmax.f32 %v968, 0.0
        %v1225 = vmax.f32 %v970, 0.0
        %v1226 = vmax.f32 %v973, 0.0
        %v1227 = vmax.f32 %v975, 0.0
        %v1228 = vmax.f32 %v978, 0.0
        %v1229 = vmax.f32 %v980, 0.0
        %v1230 = vmax.f32 %v983, 0.0
        %v1231 = vmax.f32 %v985, 0.0
        %v1232 = vmax.f32 %v988, 0.0
        %v1233 = vmax.f32 %v990, 0.0
        %v1234 = vmax.f32 %v993, 0.0
        %v1235 = vmax.f32 %v995, 0.0
        %v1236 = vmax.f32 %v998, 0.0
        %v1237 = vmax.f32 %v1000, 0.0
        %v1238 = vmax.f32 %v1003, 0.0
        %v1239 = vmax.f32 %v1005, 0.0
        %v1240 = vmax.f32 %v1008, 0.0
        %v1241 = vmax.f32 %v1010, 0.0
        %v1242 = vmax.f32 %v1013, 0.0
        %v1243 = vmax.f32 %v1015, 0.0
        %v1244 = vmax.f32 %v1018, 0.0
        %v1245 = vmax.f32 %v1020, 0.0
        %v1246 = vmax.f32 %v1023, 0.0
        %v1247 = vmax.f32 %v1025, 0.0
        %v1248 = vmax.f32 %v1028, 0.0
        %v1249 = vmax.f32 %v1030, 0.0
        %v1250 = vmax.f32 %v1033, 0.0
        %v1251 = vmax.f32 %v1035, 0.0
        %v1252 = vmax.f32 %v1038, 0.0
        %v1253 = vmax.f32 %v1040, 0.0
        %v1254 = vmax.f32 %v1043, 0.0
        %v1255 = vmax.f32 %v1045, 0.0
        %v1256 = vmax.f32 %v1048, 0.0
        %v1257 = vmax.f32 %v1050, 0.0
        %v1258 = vmax.f32 %v1053, 0.0
        %v1259 = vmax.f32 %v1055, 0.0
        %v1260 = vmax.f32 %v1058, 0.0
        %v1261 = vmax.f32 %v1060, 0.0
        %v1262 = vmax.f32 %v1063, 0.0
        %v1263 = vmax.f32 %v1065, 0.0
        %v1264 = vmax.f32 %v1068, 0.0
        %v1265 = vmax.f32 %v1070, 0.0
        %v1266 = vmax.f32 %v1073, 0.0
        %v1267 = vmax.f32 %v1075, 0.0
        %v1268 = vmax.f32 %v1078, 0.0
        %v1269 = vmax.f32 %v1080, 0.0
        %v1270 = vmax.f32 %v1083, 0.0
        %v1271 = vmax.f32 %v1085, 0.0
        %v1272 = vmax.f32 %v1088, 0.0
        %v1273 = vmax.f32 %v1090, 0.0
        %v1274 = vmax.f32 %v1093, 0.0
        %v1275 = vmax.f32 %v1095, 0.0
        %v1276 = vmax.f32 %v1098, 0.0
        %v1277 = vmax.f32 %v1100, 0.0
        %v1278 = vmax.f32 %v1103, 0.0
        %v1279 = vmax.f32 %v1105, 0.0
        %v1280 = vmax.f32 %v1108, 0.0
        %v1281 = vmax.f32 %v1110, 0.0
        %v1282 = vmax.f32 %v1113, 0.0
        %v1283 = vmax.f32 %v1115, 0.0
        %v1284 = vmax.f32 %v1118, 0.0
        %v1285 = vmax.f32 %v1120, 0.0
        %v1286 = vmax.f32 %v1123, 0.0
        %v1287 = vmax.f32 %v1125, 0.0
        %v1288 = vmax.f32 %v1128, 0.0
        %v1289 = vmax.f32 %v1130, 0.0
        %v1290 = vmax.f32 %v1133, 0.0
        %v1291 = vmax.f32 %v1135, 0.0
        %v1292 = vmax.f32 %v1138, 0.0
        %v1293 = vmax.f32 %v1140, 0.0
        %v1294 = vmax.f32 %v1143, 0.0
        %v1295 = vmax.f32 %v1145, 0.0
        %v1296 = vmax.f32 %v1148, 0.0
        %v1297 = vmax.f32 %v1150, 0.0
        %v1298 = vmax.f32 %v1153, 0.0
        %v1299 = vmax.f32 %v1155, 0.0
        %v1300 = vmax.f32 %v1158, 0.0
        %v1301 = vmax.f32 %v1160, 0.0
        %v1302 = vmax.f32 %v1163, 0.0
        %v1303 = vmax.f32 %v1165, 0.0
        %v1304 = vmax.f32 %v1168, 0.0
        %v1305 = vmax.f32 %v1170, 0.0
        %v1306 = vmax.f32 %v1173, 0.0
        %v1307 = vmax.f32 %v1175, 0.0
        %v1308 = vmax.f32 %v1178, 0.0
        %v1309 = vmax.f32 %v1180, 0.0
        %v1310 = vpack.c.bf16 %v1183, %v1182
        %v1311 = vpack.c.bf16 %v1185, %v1184
        %v1312 = vpack.c.bf16 %v1187, %v1186
        %v1313 = vpack.c.bf16 %v1189, %v1188
        %v1314 = vpack.c.bf16 %v1191, %v1190
        %v1315 = vpack.c.bf16 %v1193, %v1192
        %v1316 = vpack.c.bf16 %v1195, %v1194
        %v1317 = vpack.c.bf16 %v1197, %v1196
        %v1318 = vpack.c.bf16 %v1199, %v1198
        %v1319 = vpack.c.bf16 %v1201, %v1200
        %v1320 = vpack.c.bf16 %v1203, %v1202
        %v1321 = vpack.c.bf16 %v1205, %v1204
        %v1322 = vpack.c.bf16 %v1207, %v1206
        %v1323 = vpack.c.bf16 %v1209, %v1208
        %v1324 = vpack.c.bf16 %v1211, %v1210
        %v1325 = vpack.c.bf16 %v1213, %v1212
        %v1326 = vpack.c.bf16 %v1215, %v1214
        %v1327 = vpack.c.bf16 %v1217, %v1216
        %v1328 = vpack.c.bf16 %v1219, %v1218
        %v1329 = vpack.c.bf16 %v1221, %v1220
        %v1330 = vpack.c.bf16 %v1223, %v1222
        %v1331 = vpack.c.bf16 %v1225, %v1224
        %v1332 = vpack.c.bf16 %v1227, %v1226
        %v1333 = vpack.c.bf16 %v1229, %v1228
        %v1334 = vpack.c.bf16 %v1231, %v1230
        %v1335 = vpack.c.bf16 %v1233, %v1232
        %v1336 = vpack.c.bf16 %v1235, %v1234
        %v1337 = vpack.c.bf16 %v1237, %v1236
        %v1338 = vpack.c.bf16 %v1239, %v1238
        %v1339 = vpack.c.bf16 %v1241, %v1240
        %v1340 = vpack.c.bf16 %v1243, %v1242
        %v1341 = vpack.c.bf16 %v1245, %v1244
        %v1342 = vpack.c.bf16 %v1247, %v1246
        %v1343 = vpack.c.bf16 %v1249, %v1248
        %v1344 = vpack.c.bf16 %v1251, %v1250
        %v1345 = vpack.c.bf16 %v1253, %v1252
        %v1346 = vpack.c.bf16 %v1255, %v1254
        %v1347 = vpack.c.bf16 %v1257, %v1256
        %v1348 = vpack.c.bf16 %v1259, %v1258
        %v1349 = vpack.c.bf16 %v1261, %v1260
        %v1350 = vpack.c.bf16 %v1263, %v1262
        %v1351 = vpack.c.bf16 %v1265, %v1264
        %v1352 = vpack.c.bf16 %v1267, %v1266
        %v1353 = vpack.c.bf16 %v1269, %v1268
        %v1354 = vpack.c.bf16 %v1271, %v1270
        %v1355 = vpack.c.bf16 %v1273, %v1272
        %v1356 = vpack.c.bf16 %v1275, %v1274
        %v1357 = vpack.c.bf16 %v1277, %v1276
        %v1358 = vpack.c.bf16 %v1279, %v1278
        %v1359 = vpack.c.bf16 %v1281, %v1280
        %v1360 = vpack.c.bf16 %v1283, %v1282
        %v1361 = vpack.c.bf16 %v1285, %v1284
        %v1362 = vpack.c.bf16 %v1287, %v1286
        %v1363 = vpack.c.bf16 %v1289, %v1288
        %v1364 = vpack.c.bf16 %v1291, %v1290
        %v1365 = vpack.c.bf16 %v1293, %v1292
        %v1366 = vpack.c.bf16 %v1295, %v1294
        %v1367 = vpack.c.bf16 %v1297, %v1296
        %v1368 = vpack.c.bf16 %v1299, %v1298
        %v1369 = vpack.c.bf16 %v1301, %v1300
        %v1370 = vpack.c.bf16 %v1303, %v1302
        %v1371 = vpack.c.bf16 %v1305, %v1304
        %v1372 = vpack.c.bf16 %v1307, %v1306
        %v1373 = vpack.c.bf16 %v1309, %v1308
        %v1374 = vld [vmem:[%s3] sm:$0xf]
        %v1375 = vld [vmem:[%s3 + $0x4] sm:$0xf]
        %v1376 = vld [vmem:[%s3 + $0x8] sm:$0xf]
        %v1377 = vld [vmem:[%s3 + $0xc] sm:$0xf]
        %v1378 = vld [vmem:[%s3 + $0x10] sm:$0xf]
        %v1379 = vld [vmem:[%s3 + $0x14] sm:$0xf]
        %v1380 = vld [vmem:[%s3 + $0x18] sm:$0xf]
        %v1381 = vld [vmem:[%s3 + $0x1c] sm:$0xf]
        %v1382 = vld [vmem:[%s4] sm:$0x1]
        %v1384 = vperm.slane %v1382, 0
        %v1394 = vunpack.c.l.b16 %v1374
        %v1395 = vunpack.c.l.b16 %v1375
        %v1396 = vunpack.c.l.b16 %v1376
        %v1397 = vunpack.c.l.b16 %v1377
        %v1398 = vunpack.c.l.b16 %v1378
        %v1399 = vunpack.c.l.b16 %v1379
        %v1400 = vunpack.c.l.b16 %v1380
        %v1401 = vunpack.c.l.b16 %v1381
        %v1402 = vpack.c.b16 %v1395, %v1394
        %v1403 = vpack.c.b16 %v1397, %v1396
        %v1404 = vpack.c.b16 %v1399, %v1398
        %v1405 = vpack.c.b16 %v1401, %v1400
        %vm1410 = vcmask 523264
        %v1412 = vsel %vm1410, %v1310, 0
        %v1415 = vsel %vm1410, %v1311, 0
        %v1418 = vsel %vm1410, %v1312, 0
        %v1421 = vsel %vm1410, %v1313, 0
        %v1424 = vsel %vm1410, %v1314, 0
        %v1427 = vsel %vm1410, %v1315, 0
        %v1430 = vsel %vm1410, %v1316, 0
        %v1433 = vsel %vm1410, %v1317, 0
        %v1436 = vsel %vm1410, %v1318, 0
        %v1439 = vsel %vm1410, %v1319, 0
        %v1442 = vsel %vm1410, %v1320, 0
        %v1445 = vsel %vm1410, %v1321, 0
        %v1448 = vsel %vm1410, %v1322, 0
        %v1451 = vsel %vm1410, %v1323, 0
        %v1454 = vsel %vm1410, %v1324, 0
        %v1457 = vsel %vm1410, %v1325, 0
        %v1460 = vsel %vm1410, %v1326, 0
        %v1463 = vsel %vm1410, %v1327, 0
        %v1466 = vsel %vm1410, %v1328, 0
        %v1469 = vsel %vm1410, %v1329, 0
        %v1472 = vsel %vm1410, %v1330, 0
        %v1475 = vsel %vm1410, %v1331, 0
        %v1478 = vsel %vm1410, %v1332, 0
        %v1481 = vsel %vm1410, %v1333, 0
        %v1484 = vsel %vm1410, %v1334, 0
        %v1487 = vsel %vm1410, %v1335, 0
        %v1490 = vsel %vm1410, %v1336, 0
        %v1493 = vsel %vm1410, %v1337, 0
        %v1496 = vsel %vm1410, %v1338, 0
        %v1499 = vsel %vm1410, %v1339, 0
        %v1502 = vsel %vm1410, %v1340, 0
        %v1505 = vsel %vm1410, %v1341, 0
        %v1508 = vsel %vm1410, %v1342, 0
        %v1511 = vsel %vm1410, %v1343, 0
        %v1514 = vsel %vm1410, %v1344, 0
        %v1517 = vsel %vm1410, %v1345, 0
        %v1520 = vsel %vm1410, %v1346, 0
        %v1523 = vsel %vm1410, %v1347, 0
        %v1526 = vsel %vm1410, %v1348, 0
        %v1529 = vsel %vm1410, %v1349, 0
        %v1532 = vsel %vm1410, %v1350, 0
        %v1535 = vsel %vm1410, %v1351, 0
        %v1538 = vsel %vm1410, %v1352, 0
        %v1541 = vsel %vm1410, %v1353, 0
        %v1544 = vsel %vm1410, %v1354, 0
        %v1547 = vsel %vm1410, %v1355, 0
        %v1550 = vsel %vm1410, %v1356, 0
        %v1553 = vsel %vm1410, %v1357, 0
        %v1556 = vsel %vm1410, %v1358, 0
        %v1559 = vsel %vm1410, %v1359, 0
        %v1562 = vsel %vm1410, %v1360, 0
        %v1565 = vsel %vm1410, %v1361, 0
        %v1568 = vsel %vm1410, %v1362, 0
        %v1571 = vsel %vm1410, %v1363, 0
        %v1574 = vsel %vm1410, %v1364, 0
        %v1577 = vsel %vm1410, %v1365, 0
        %v1580 = vsel %vm1410, %v1366, 0
        %v1583 = vsel %vm1410, %v1367, 0
        %v1586 = vsel %vm1410, %v1368, 0
        %v1589 = vsel %vm1410, %v1369, 0
        %v1592 = vsel %vm1410, %v1370, 0
        %v1595 = vsel %vm1410, %v1371, 0
        %v1598 = vsel %vm1410, %v1372, 0
        %v1601 = vsel %vm1410, %v1373, 0
        %1603 = vmatpush.bf16.msra.mxu0 0
        %1604 = vmatpush.bf16.msra.mxu0 0
        %1605 = vmatpush.bf16.msra.mxu0 0
        %1606 = vmatpush.bf16.msra.mxu0 0
        %1607 = vmatpush.bf16.msra.mxu0 %v1405
        %1608 = vmatpush.bf16.msra.mxu0 %v1404
        %1609 = vmatpush.bf16.msra.mxu0 %v1403
        %1610 = vmatpush.bf16.msra.mxu0 %v1402
        %1611 = vmatmul.bf16.gmra.mxu0 %v1412
        %v1612 = vpop.f32.mrf.mxu0
        %v1613 = vadd.f32 %v1384, %v1612
        %v1614 = vpop.f32.mrf.mxu0
        %v1615 = vadd.f32 %v1384, %v1614
        %1616 = vmatmul.bf16.gmra.mxu0 %v1415
        %v1617 = vpop.f32.mrf.mxu0
        %v1618 = vadd.f32 %v1384, %v1617
        %v1619 = vpop.f32.mrf.mxu0
        %v1620 = vadd.f32 %v1384, %v1619
        %1621 = vmatmul.bf16.gmra.mxu0 %v1418
        %v1622 = vpop.f32.mrf.mxu0
        %v1623 = vadd.f32 %v1384, %v1622
        %v1624 = vpop.f32.mrf.mxu0
        %v1625 = vadd.f32 %v1384, %v1624
        %1626 = vmatmul.bf16.gmra.mxu0 %v1421
        %v1627 = vpop.f32.mrf.mxu0
        %v1628 = vadd.f32 %v1384, %v1627
        %v1629 = vpop.f32.mrf.mxu0
        %v1630 = vadd.f32 %v1384, %v1629
        %1631 = vmatmul.bf16.gmra.mxu0 %v1424
        %v1632 = vpop.f32.mrf.mxu0
        %v1633 = vadd.f32 %v1384, %v1632
        %v1634 = vpop.f32.mrf.mxu0
        %v1635 = vadd.f32 %v1384, %v1634
        %1636 = vmatmul.bf16.gmra.mxu0 %v1427
        %v1637 = vpop.f32.mrf.mxu0
        %v1638 = vadd.f32 %v1384, %v1637
        %v1639 = vpop.f32.mrf.mxu0
        %v1640 = vadd.f32 %v1384, %v1639
        %1641 = vmatmul.bf16.gmra.mxu0 %v1430
        %v1642 = vpop.f32.mrf.mxu0
        %v1643 = vadd.f32 %v1384, %v1642
        %v1644 = vpop.f32.mrf.mxu0
        %v1645 = vadd.f32 %v1384, %v1644
        %1646 = vmatmul.bf16.gmra.mxu0 %v1433
        %v1647 = vpop.f32.mrf.mxu0
        %v1648 = vadd.f32 %v1384, %v1647
        %v1649 = vpop.f32.mrf.mxu0
        %v1650 = vadd.f32 %v1384, %v1649
        %1651 = vmatmul.bf16.gmra.mxu0 %v1436
        %v1652 = vpop.f32.mrf.mxu0
        %v1653 = vadd.f32 %v1384, %v1652
        %v1654 = vpop.f32.mrf.mxu0
        %v1655 = vadd.f32 %v1384, %v1654
        %1656 = vmatmul.bf16.gmra.mxu0 %v1439
        %v1657 = vpop.f32.mrf.mxu0
        %v1658 = vadd.f32 %v1384, %v1657
        %v1659 = vpop.f32.mrf.mxu0
        %v1660 = vadd.f32 %v1384, %v1659
        %1661 = vmatmul.bf16.gmra.mxu0 %v1442
        %v1662 = vpop.f32.mrf.mxu0
        %v1663 = vadd.f32 %v1384, %v1662
        %v1664 = vpop.f32.mrf.mxu0
        %v1665 = vadd.f32 %v1384, %v1664
        %1666 = vmatmul.bf16.gmra.mxu0 %v1445
        %v1667 = vpop.f32.mrf.mxu0
        %v1668 = vadd.f32 %v1384, %v1667
        %v1669 = vpop.f32.mrf.mxu0
        %v1670 = vadd.f32 %v1384, %v1669
        %1671 = vmatmul.bf16.gmra.mxu0 %v1448
        %v1672 = vpop.f32.mrf.mxu0
        %v1673 = vadd.f32 %v1384, %v1672
        %v1674 = vpop.f32.mrf.mxu0
        %v1675 = vadd.f32 %v1384, %v1674
        %1676 = vmatmul.bf16.gmra.mxu0 %v1451
        %v1677 = vpop.f32.mrf.mxu0
        %v1678 = vadd.f32 %v1384, %v1677
        %v1679 = vpop.f32.mrf.mxu0
        %v1680 = vadd.f32 %v1384, %v1679
        %1681 = vmatmul.bf16.gmra.mxu0 %v1454
        %v1682 = vpop.f32.mrf.mxu0
        %v1683 = vadd.f32 %v1384, %v1682
        %v1684 = vpop.f32.mrf.mxu0
        %v1685 = vadd.f32 %v1384, %v1684
        %1686 = vmatmul.bf16.gmra.mxu0 %v1457
        %v1687 = vpop.f32.mrf.mxu0
        %v1688 = vadd.f32 %v1384, %v1687
        %v1689 = vpop.f32.mrf.mxu0
        %v1690 = vadd.f32 %v1384, %v1689
        %1691 = vmatmul.bf16.gmra.mxu0 %v1460
        %v1692 = vpop.f32.mrf.mxu0
        %v1693 = vadd.f32 %v1384, %v1692
        %v1694 = vpop.f32.mrf.mxu0
        %v1695 = vadd.f32 %v1384, %v1694
        %1696 = vmatmul.bf16.gmra.mxu0 %v1463
        %v1697 = vpop.f32.mrf.mxu0
        %v1698 = vadd.f32 %v1384, %v1697
        %v1699 = vpop.f32.mrf.mxu0
        %v1700 = vadd.f32 %v1384, %v1699
        %1701 = vmatmul.bf16.gmra.mxu0 %v1466
        %v1702 = vpop.f32.mrf.mxu0
        %v1703 = vadd.f32 %v1384, %v1702
        %v1704 = vpop.f32.mrf.mxu0
        %v1705 = vadd.f32 %v1384, %v1704
        %1706 = vmatmul.bf16.gmra.mxu0 %v1469
        %v1707 = vpop.f32.mrf.mxu0
        %v1708 = vadd.f32 %v1384, %v1707
        %v1709 = vpop.f32.mrf.mxu0
        %v1710 = vadd.f32 %v1384, %v1709
        %1711 = vmatmul.bf16.gmra.mxu0 %v1472
        %v1712 = vpop.f32.mrf.mxu0
        %v1713 = vadd.f32 %v1384, %v1712
        %v1714 = vpop.f32.mrf.mxu0
        %v1715 = vadd.f32 %v1384, %v1714
        %1716 = vmatmul.bf16.gmra.mxu0 %v1475
        %v1717 = vpop.f32.mrf.mxu0
        %v1718 = vadd.f32 %v1384, %v1717
        %v1719 = vpop.f32.mrf.mxu0
        %v1720 = vadd.f32 %v1384, %v1719
        %1721 = vmatmul.bf16.gmra.mxu0 %v1478
        %v1722 = vpop.f32.mrf.mxu0
        %v1723 = vadd.f32 %v1384, %v1722
        %v1724 = vpop.f32.mrf.mxu0
        %v1725 = vadd.f32 %v1384, %v1724
        %1726 = vmatmul.bf16.gmra.mxu0 %v1481
        %v1727 = vpop.f32.mrf.mxu0
        %v1728 = vadd.f32 %v1384, %v1727
        %v1729 = vpop.f32.mrf.mxu0
        %v1730 = vadd.f32 %v1384, %v1729
        %1731 = vmatmul.bf16.gmra.mxu0 %v1484
        %v1732 = vpop.f32.mrf.mxu0
        %v1733 = vadd.f32 %v1384, %v1732
        %v1734 = vpop.f32.mrf.mxu0
        %v1735 = vadd.f32 %v1384, %v1734
        %1736 = vmatmul.bf16.gmra.mxu0 %v1487
        %v1737 = vpop.f32.mrf.mxu0
        %v1738 = vadd.f32 %v1384, %v1737
        %v1739 = vpop.f32.mrf.mxu0
        %v1740 = vadd.f32 %v1384, %v1739
        %1741 = vmatmul.bf16.gmra.mxu0 %v1490
        %v1742 = vpop.f32.mrf.mxu0
        %v1743 = vadd.f32 %v1384, %v1742
        %v1744 = vpop.f32.mrf.mxu0
        %v1745 = vadd.f32 %v1384, %v1744
        %1746 = vmatmul.bf16.gmra.mxu0 %v1493
        %v1747 = vpop.f32.mrf.mxu0
        %v1748 = vadd.f32 %v1384, %v1747
        %v1749 = vpop.f32.mrf.mxu0
        %v1750 = vadd.f32 %v1384, %v1749
        %1751 = vmatmul.bf16.gmra.mxu0 %v1496
        %v1752 = vpop.f32.mrf.mxu0
        %v1753 = vadd.f32 %v1384, %v1752
        %v1754 = vpop.f32.mrf.mxu0
        %v1755 = vadd.f32 %v1384, %v1754
        %1756 = vmatmul.bf16.gmra.mxu0 %v1499
        %v1757 = vpop.f32.mrf.mxu0
        %v1758 = vadd.f32 %v1384, %v1757
        %v1759 = vpop.f32.mrf.mxu0
        %v1760 = vadd.f32 %v1384, %v1759
        %1761 = vmatmul.bf16.gmra.mxu0 %v1502
        %v1762 = vpop.f32.mrf.mxu0
        %v1763 = vadd.f32 %v1384, %v1762
        %v1764 = vpop.f32.mrf.mxu0
        %v1765 = vadd.f32 %v1384, %v1764
        %1766 = vmatmul.bf16.gmra.mxu0 %v1505
        %v1767 = vpop.f32.mrf.mxu0
        %v1768 = vadd.f32 %v1384, %v1767
        %v1769 = vpop.f32.mrf.mxu0
        %v1770 = vadd.f32 %v1384, %v1769
        %1771 = vmatmul.bf16.gmra.mxu0 %v1508
        %v1772 = vpop.f32.mrf.mxu0
        %v1773 = vadd.f32 %v1384, %v1772
        %v1774 = vpop.f32.mrf.mxu0
        %v1775 = vadd.f32 %v1384, %v1774
        %1776 = vmatmul.bf16.gmra.mxu0 %v1511
        %v1777 = vpop.f32.mrf.mxu0
        %v1778 = vadd.f32 %v1384, %v1777
        %v1779 = vpop.f32.mrf.mxu0
        %v1780 = vadd.f32 %v1384, %v1779
        %1781 = vmatmul.bf16.gmra.mxu0 %v1514
        %v1782 = vpop.f32.mrf.mxu0
        %v1783 = vadd.f32 %v1384, %v1782
        %v1784 = vpop.f32.mrf.mxu0
        %v1785 = vadd.f32 %v1384, %v1784
        %1786 = vmatmul.bf16.gmra.mxu0 %v1517
        %v1787 = vpop.f32.mrf.mxu0
        %v1788 = vadd.f32 %v1384, %v1787
        %v1789 = vpop.f32.mrf.mxu0
        %v1790 = vadd.f32 %v1384, %v1789
        %1791 = vmatmul.bf16.gmra.mxu0 %v1520
        %v1792 = vpop.f32.mrf.mxu0
        %v1793 = vadd.f32 %v1384, %v1792
        %v1794 = vpop.f32.mrf.mxu0
        %v1795 = vadd.f32 %v1384, %v1794
        %1796 = vmatmul.bf16.gmra.mxu0 %v1523
        %v1797 = vpop.f32.mrf.mxu0
        %v1798 = vadd.f32 %v1384, %v1797
        %v1799 = vpop.f32.mrf.mxu0
        %v1800 = vadd.f32 %v1384, %v1799
        %1801 = vmatmul.bf16.gmra.mxu0 %v1526
        %v1802 = vpop.f32.mrf.mxu0
        %v1803 = vadd.f32 %v1384, %v1802
        %v1804 = vpop.f32.mrf.mxu0
        %v1805 = vadd.f32 %v1384, %v1804
        %1806 = vmatmul.bf16.gmra.mxu0 %v1529
        %v1807 = vpop.f32.mrf.mxu0
        %v1808 = vadd.f32 %v1384, %v1807
        %v1809 = vpop.f32.mrf.mxu0
        %v1810 = vadd.f32 %v1384, %v1809
        %1811 = vmatmul.bf16.gmra.mxu0 %v1532
        %v1812 = vpop.f32.mrf.mxu0
        %v1813 = vadd.f32 %v1384, %v1812
        %v1814 = vpop.f32.mrf.mxu0
        %v1815 = vadd.f32 %v1384, %v1814
        %1816 = vmatmul.bf16.gmra.mxu0 %v1535
        %v1817 = vpop.f32.mrf.mxu0
        %v1818 = vadd.f32 %v1384, %v1817
        %v1819 = vpop.f32.mrf.mxu0
        %v1820 = vadd.f32 %v1384, %v1819
        %1821 = vmatmul.bf16.gmra.mxu0 %v1538
        %v1822 = vpop.f32.mrf.mxu0
        %v1823 = vadd.f32 %v1384, %v1822
        %v1824 = vpop.f32.mrf.mxu0
        %v1825 = vadd.f32 %v1384, %v1824
        %1826 = vmatmul.bf16.gmra.mxu0 %v1541
        %v1827 = vpop.f32.mrf.mxu0
        %v1828 = vadd.f32 %v1384, %v1827
        %v1829 = vpop.f32.mrf.mxu0
        %v1830 = vadd.f32 %v1384, %v1829
        %1831 = vmatmul.bf16.gmra.mxu0 %v1544
        %v1832 = vpop.f32.mrf.mxu0
        %v1833 = vadd.f32 %v1384, %v1832
        %v1834 = vpop.f32.mrf.mxu0
        %v1835 = vadd.f32 %v1384, %v1834
        %1836 = vmatmul.bf16.gmra.mxu0 %v1547
        %v1837 = vpop.f32.mrf.mxu0
        %v1838 = vadd.f32 %v1384, %v1837
        %v1839 = vpop.f32.mrf.mxu0
        %v1840 = vadd.f32 %v1384, %v1839
        %1841 = vmatmul.bf16.gmra.mxu0 %v1550
        %v1842 = vpop.f32.mrf.mxu0
        %v1843 = vadd.f32 %v1384, %v1842
        %v1844 = vpop.f32.mrf.mxu0
        %v1845 = vadd.f32 %v1384, %v1844
        %1846 = vmatmul.bf16.gmra.mxu0 %v1553
        %v1847 = vpop.f32.mrf.mxu0
        %v1848 = vadd.f32 %v1384, %v1847
        %v1849 = vpop.f32.mrf.mxu0
        %v1850 = vadd.f32 %v1384, %v1849
        %1851 = vmatmul.bf16.gmra.mxu0 %v1556
        %v1852 = vpop.f32.mrf.mxu0
        %v1853 = vadd.f32 %v1384, %v1852
        %v1854 = vpop.f32.mrf.mxu0
        %v1855 = vadd.f32 %v1384, %v1854
        %1856 = vmatmul.bf16.gmra.mxu0 %v1559
        %v1857 = vpop.f32.mrf.mxu0
        %v1858 = vadd.f32 %v1384, %v1857
        %v1859 = vpop.f32.mrf.mxu0
        %v1860 = vadd.f32 %v1384, %v1859
        %1861 = vmatmul.bf16.gmra.mxu0 %v1562
        %v1862 = vpop.f32.mrf.mxu0
        %v1863 = vadd.f32 %v1384, %v1862
        %v1864 = vpop.f32.mrf.mxu0
        %v1865 = vadd.f32 %v1384, %v1864
        %1866 = vmatmul.bf16.gmra.mxu0 %v1565
        %v1867 = vpop.f32.mrf.mxu0
        %v1868 = vadd.f32 %v1384, %v1867
        %v1869 = vpop.f32.mrf.mxu0
        %v1870 = vadd.f32 %v1384, %v1869
        %1871 = vmatmul.bf16.gmra.mxu0 %v1568
        %v1872 = vpop.f32.mrf.mxu0
        %v1873 = vadd.f32 %v1384, %v1872
        %v1874 = vpop.f32.mrf.mxu0
        %v1875 = vadd.f32 %v1384, %v1874
        %1876 = vmatmul.bf16.gmra.mxu0 %v1571
        %v1877 = vpop.f32.mrf.mxu0
        %v1878 = vadd.f32 %v1384, %v1877
        %v1879 = vpop.f32.mrf.mxu0
        %v1880 = vadd.f32 %v1384, %v1879
        %1881 = vmatmul.bf16.gmra.mxu0 %v1574
        %v1882 = vpop.f32.mrf.mxu0
        %v1883 = vadd.f32 %v1384, %v1882
        %v1884 = vpop.f32.mrf.mxu0
        %v1885 = vadd.f32 %v1384, %v1884
        %1886 = vmatmul.bf16.gmra.mxu0 %v1577
        %v1887 = vpop.f32.mrf.mxu0
        %v1888 = vadd.f32 %v1384, %v1887
        %v1889 = vpop.f32.mrf.mxu0
        %v1890 = vadd.f32 %v1384, %v1889
        %1891 = vmatmul.bf16.gmra.mxu0 %v1580
        %v1892 = vpop.f32.mrf.mxu0
        %v1893 = vadd.f32 %v1384, %v1892
        %v1894 = vpop.f32.mrf.mxu0
        %v1895 = vadd.f32 %v1384, %v1894
        %1896 = vmatmul.bf16.gmra.mxu0 %v1583
        %v1897 = vpop.f32.mrf.mxu0
        %v1898 = vadd.f32 %v1384, %v1897
        %v1899 = vpop.f32.mrf.mxu0
        %v1900 = vadd.f32 %v1384, %v1899
        %1901 = vmatmul.bf16.gmra.mxu0 %v1586
        %v1902 = vpop.f32.mrf.mxu0
        %v1903 = vadd.f32 %v1384, %v1902
        %v1904 = vpop.f32.mrf.mxu0
        %v1905 = vadd.f32 %v1384, %v1904
        %1906 = vmatmul.bf16.gmra.mxu0 %v1589
        %v1907 = vpop.f32.mrf.mxu0
        %v1908 = vadd.f32 %v1384, %v1907
        %v1909 = vpop.f32.mrf.mxu0
        %v1910 = vadd.f32 %v1384, %v1909
        %1911 = vmatmul.bf16.gmra.mxu0 %v1592
        %v1912 = vpop.f32.mrf.mxu0
        %v1913 = vadd.f32 %v1384, %v1912
        %v1914 = vpop.f32.mrf.mxu0
        %v1915 = vadd.f32 %v1384, %v1914
        %1916 = vmatmul.bf16.gmra.mxu0 %v1595
        %v1917 = vpop.f32.mrf.mxu0
        %v1918 = vadd.f32 %v1384, %v1917
        %v1919 = vpop.f32.mrf.mxu0
        %v1920 = vadd.f32 %v1384, %v1919
        %1921 = vmatmul.bf16.gmra.mxu0 %v1598
        %v1922 = vpop.f32.mrf.mxu0
        %v1923 = vadd.f32 %v1384, %v1922
        %v1924 = vpop.f32.mrf.mxu0
        %v1925 = vadd.f32 %v1384, %v1924
        %1926 = vmatmul.bf16.gmra.mxu0 %v1601
        %v1927 = vpop.f32.mrf.mxu0
        %v1928 = vadd.f32 %v1384, %v1927
        %v1929 = vpop.f32.mrf.mxu0
        %v1930 = vadd.f32 %v1384, %v1929
        %1931 = vdwg.mxu0
        %v1932 = vmax.f32 %v1613, 0.0
        %v1933 = vmax.f32 %v1615, 0.0
        %v1934 = vmax.f32 %v1618, 0.0
        %v1935 = vmax.f32 %v1620, 0.0
        %v1936 = vmax.f32 %v1623, 0.0
        %v1937 = vmax.f32 %v1625, 0.0
        %v1938 = vmax.f32 %v1628, 0.0
        %v1939 = vmax.f32 %v1630, 0.0
        %v1940 = vmax.f32 %v1633, 0.0
        %v1941 = vmax.f32 %v1635, 0.0
        %v1942 = vmax.f32 %v1638, 0.0
        %v1943 = vmax.f32 %v1640, 0.0
        %v1944 = vmax.f32 %v1643, 0.0
        %v1945 = vmax.f32 %v1645, 0.0
        %v1946 = vmax.f32 %v1648, 0.0
        %v1947 = vmax.f32 %v1650, 0.0
        %v1948 = vmax.f32 %v1653, 0.0
        %v1949 = vmax.f32 %v1655, 0.0
        %v1950 = vmax.f32 %v1658, 0.0
        %v1951 = vmax.f32 %v1660, 0.0
        %v1952 = vmax.f32 %v1663, 0.0
        %v1953 = vmax.f32 %v1665, 0.0
        %v1954 = vmax.f32 %v1668, 0.0
        %v1955 = vmax.f32 %v1670, 0.0
        %v1956 = vmax.f32 %v1673, 0.0
        %v1957 = vmax.f32 %v1675, 0.0
        %v1958 = vmax.f32 %v1678, 0.0
        %v1959 = vmax.f32 %v1680, 0.0
        %v1960 = vmax.f32 %v1683, 0.0
        %v1961 = vmax.f32 %v1685, 0.0
        %v1962 = vmax.f32 %v1688, 0.0
        %v1963 = vmax.f32 %v1690, 0.0
        %v1964 = vmax.f32 %v1693, 0.0
        %v1965 = vmax.f32 %v1695, 0.0
        %v1966 = vmax.f32 %v1698, 0.0
        %v1967 = vmax.f32 %v1700, 0.0
        %v1968 = vmax.f32 %v1703, 0.0
        %v1969 = vmax.f32 %v1705, 0.0
        %v1970 = vmax.f32 %v1708, 0.0
        %v1971 = vmax.f32 %v1710, 0.0
        %v1972 = vmax.f32 %v1713, 0.0
        %v1973 = vmax.f32 %v1715, 0.0
        %v1974 = vmax.f32 %v1718, 0.0
        %v1975 = vmax.f32 %v1720, 0.0
        %v1976 = vmax.f32 %v1723, 0.0
        %v1977 = vmax.f32 %v1725, 0.0
        %v1978 = vmax.f32 %v1728, 0.0
        %v1979 = vmax.f32 %v1730, 0.0
        %v1980 = vmax.f32 %v1733, 0.0
        %v1981 = vmax.f32 %v1735, 0.0
        %v1982 = vmax.f32 %v1738, 0.0
        %v1983 = vmax.f32 %v1740, 0.0
        %v1984 = vmax.f32 %v1743, 0.0
        %v1985 = vmax.f32 %v1745, 0.0
        %v1986 = vmax.f32 %v1748, 0.0
        %v1987 = vmax.f32 %v1750, 0.0
        %v1988 = vmax.f32 %v1753, 0.0
        %v1989 = vmax.f32 %v1755, 0.0
        %v1990 = vmax.f32 %v1758, 0.0
        %v1991 = vmax.f32 %v1760, 0.0
        %v1992 = vmax.f32 %v1763, 0.0
        %v1993 = vmax.f32 %v1765, 0.0
        %v1994 = vmax.f32 %v1768, 0.0
        %v1995 = vmax.f32 %v1770, 0.0
        %v1996 = vmax.f32 %v1773, 0.0
        %v1997 = vmax.f32 %v1775, 0.0
        %v1998 = vmax.f32 %v1778, 0.0
        %v1999 = vmax.f32 %v1780, 0.0
        %v2000 = vmax.f32 %v1783, 0.0
        %v2001 = vmax.f32 %v1785, 0.0
        %v2002 = vmax.f32 %v1788, 0.0
        %v2003 = vmax.f32 %v1790, 0.0
        %v2004 = vmax.f32 %v1793, 0.0
        %v2005 = vmax.f32 %v1795, 0.0
        %v2006 = vmax.f32 %v1798, 0.0
        %v2007 = vmax.f32 %v1800, 0.0
        %v2008 = vmax.f32 %v1803, 0.0
        %v2009 = vmax.f32 %v1805, 0.0
        %v2010 = vmax.f32 %v1808, 0.0
        %v2011 = vmax.f32 %v1810, 0.0
        %v2012 = vmax.f32 %v1813, 0.0
        %v2013 = vmax.f32 %v1815, 0.0
        %v2014 = vmax.f32 %v1818, 0.0
        %v2015 = vmax.f32 %v1820, 0.0
        %v2016 = vmax.f32 %v1823, 0.0
        %v2017 = vmax.f32 %v1825, 0.0
        %v2018 = vmax.f32 %v1828, 0.0
        %v2019 = vmax.f32 %v1830, 0.0
        %v2020 = vmax.f32 %v1833, 0.0
        %v2021 = vmax.f32 %v1835, 0.0
        %v2022 = vmax.f32 %v1838, 0.0
        %v2023 = vmax.f32 %v1840, 0.0
        %v2024 = vmax.f32 %v1843, 0.0
        %v2025 = vmax.f32 %v1845, 0.0
        %v2026 = vmax.f32 %v1848, 0.0
        %v2027 = vmax.f32 %v1850, 0.0
        %v2028 = vmax.f32 %v1853, 0.0
        %v2029 = vmax.f32 %v1855, 0.0
        %v2030 = vmax.f32 %v1858, 0.0
        %v2031 = vmax.f32 %v1860, 0.0
        %v2032 = vmax.f32 %v1863, 0.0
        %v2033 = vmax.f32 %v1865, 0.0
        %v2034 = vmax.f32 %v1868, 0.0
        %v2035 = vmax.f32 %v1870, 0.0
        %v2036 = vmax.f32 %v1873, 0.0
        %v2037 = vmax.f32 %v1875, 0.0
        %v2038 = vmax.f32 %v1878, 0.0
        %v2039 = vmax.f32 %v1880, 0.0
        %v2040 = vmax.f32 %v1883, 0.0
        %v2041 = vmax.f32 %v1885, 0.0
        %v2042 = vmax.f32 %v1888, 0.0
        %v2043 = vmax.f32 %v1890, 0.0
        %v2044 = vmax.f32 %v1893, 0.0
        %v2045 = vmax.f32 %v1895, 0.0
        %v2046 = vmax.f32 %v1898, 0.0
        %v2047 = vmax.f32 %v1900, 0.0
        %v2048 = vmax.f32 %v1903, 0.0
        %v2049 = vmax.f32 %v1905, 0.0
        %v2050 = vmax.f32 %v1908, 0.0
        %v2051 = vmax.f32 %v1910, 0.0
        %v2052 = vmax.f32 %v1913, 0.0
        %v2053 = vmax.f32 %v1915, 0.0
        %v2054 = vmax.f32 %v1918, 0.0
        %v2055 = vmax.f32 %v1920, 0.0
        %v2056 = vmax.f32 %v1923, 0.0
        %v2057 = vmax.f32 %v1925, 0.0
        %v2058 = vmax.f32 %v1928, 0.0
        %v2059 = vmax.f32 %v1930, 0.0
        %v2060 = vpack.c.bf16 %v1933, %v1932
        %v2061 = vpack.c.bf16 %v1935, %v1934
        %v2062 = vpack.c.bf16 %v1937, %v1936
        %v2063 = vpack.c.bf16 %v1939, %v1938
        %v2064 = vpack.c.bf16 %v1941, %v1940
        %v2065 = vpack.c.bf16 %v1943, %v1942
        %v2066 = vpack.c.bf16 %v1945, %v1944
        %v2067 = vpack.c.bf16 %v1947, %v1946
        %v2068 = vpack.c.bf16 %v1949, %v1948
        %v2069 = vpack.c.bf16 %v1951, %v1950
        %v2070 = vpack.c.bf16 %v1953, %v1952
        %v2071 = vpack.c.bf16 %v1955, %v1954
        %v2072 = vpack.c.bf16 %v1957, %v1956
        %v2073 = vpack.c.bf16 %v1959, %v1958
        %v2074 = vpack.c.bf16 %v1961, %v1960
        %v2075 = vpack.c.bf16 %v1963, %v1962
        %v2076 = vpack.c.bf16 %v1965, %v1964
        %v2077 = vpack.c.bf16 %v1967, %v1966
        %v2078 = vpack.c.bf16 %v1969, %v1968
        %v2079 = vpack.c.bf16 %v1971, %v1970
        %v2080 = vpack.c.bf16 %v1973, %v1972
        %v2081 = vpack.c.bf16 %v1975, %v1974
        %v2082 = vpack.c.bf16 %v1977, %v1976
        %v2083 = vpack.c.bf16 %v1979, %v1978
        %v2084 = vpack.c.bf16 %v1981, %v1980
        %v2085 = vpack.c.bf16 %v1983, %v1982
        %v2086 = vpack.c.bf16 %v1985, %v1984
        %v2087 = vpack.c.bf16 %v1987, %v1986
        %v2088 = vpack.c.bf16 %v1989, %v1988
        %v2089 = vpack.c.bf16 %v1991, %v1990
        %v2090 = vpack.c.bf16 %v1993, %v1992
        %v2091 = vpack.c.bf16 %v1995, %v1994
        %v2092 = vpack.c.bf16 %v1997, %v1996
        %v2093 = vpack.c.bf16 %v1999, %v1998
        %v2094 = vpack.c.bf16 %v2001, %v2000
        %v2095 = vpack.c.bf16 %v2003, %v2002
        %v2096 = vpack.c.bf16 %v2005, %v2004
        %v2097 = vpack.c.bf16 %v2007, %v2006
        %v2098 = vpack.c.bf16 %v2009, %v2008
        %v2099 = vpack.c.bf16 %v2011, %v2010
        %v2100 = vpack.c.bf16 %v2013, %v2012
        %v2101 = vpack.c.bf16 %v2015, %v2014
        %v2102 = vpack.c.bf16 %v2017, %v2016
        %v2103 = vpack.c.bf16 %v2019, %v2018
        %v2104 = vpack.c.bf16 %v2021, %v2020
        %v2105 = vpack.c.bf16 %v2023, %v2022
        %v2106 = vpack.c.bf16 %v2025, %v2024
        %v2107 = vpack.c.bf16 %v2027, %v2026
        %v2108 = vpack.c.bf16 %v2029, %v2028
        %v2109 = vpack.c.bf16 %v2031, %v2030
        %v2110 = vpack.c.bf16 %v2033, %v2032
        %v2111 = vpack.c.bf16 %v2035, %v2034
        %v2112 = vpack.c.bf16 %v2037, %v2036
        %v2113 = vpack.c.bf16 %v2039, %v2038
        %v2114 = vpack.c.bf16 %v2041, %v2040
        %v2115 = vpack.c.bf16 %v2043, %v2042
        %v2116 = vpack.c.bf16 %v2045, %v2044
        %v2117 = vpack.c.bf16 %v2047, %v2046
        %v2118 = vpack.c.bf16 %v2049, %v2048
        %v2119 = vpack.c.bf16 %v2051, %v2050
        %v2120 = vpack.c.bf16 %v2053, %v2052
        %v2121 = vpack.c.bf16 %v2055, %v2054
        %v2122 = vpack.c.bf16 %v2057, %v2056
        %v2123 = vpack.c.bf16 %v2059, %v2058
        %v2124 = vld [vmem:[%s5] sm:$0xff]
        %v2125 = vld [vmem:[%s5 + $0x8] sm:$0xff]
        %v2126 = vld [vmem:[%s5 + $0x10] sm:$0xff]
        %v2127 = vld [vmem:[%s5 + $0x18] sm:$0xff]
        %v2128 = vld [vmem:[%s5 + $0x20] sm:$0xff]
        %v2129 = vld [vmem:[%s5 + $0x28] sm:$0xff]
        %v2130 = vld [vmem:[%s5 + $0x30] sm:$0xff]
        %v2131 = vld [vmem:[%s5 + $0x38] sm:$0xff]
        %v2132 = vld [vmem:[%s5 + $0x40] sm:$0xff]
        %v2133 = vld [vmem:[%s5 + $0x48] sm:$0xff]
        %v2134 = vld [vmem:[%s5 + $0x50] sm:$0xff]
        %v2135 = vld [vmem:[%s5 + $0x58] sm:$0xff]
        %v2136 = vld [vmem:[%s5 + $0x60] sm:$0xff]
        %v2137 = vld [vmem:[%s5 + $0x68] sm:$0xff]
        %v2138 = vld [vmem:[%s5 + $0x70] sm:$0xff]
        %v2139 = vld [vmem:[%s5 + $0x78] sm:$0xff]
        %v2140 = vld [vmem:[%s5 + $0x80] sm:$0xff]
        %v2141 = vld [vmem:[%s5 + $0x88] sm:$0xff]
        %v2142 = vld [vmem:[%s5 + $0x90] sm:$0xff]
        %v2143 = vld [vmem:[%s5 + $0x98] sm:$0xff]
        %v2144 = vld [vmem:[%s5 + $0xa0] sm:$0xff]
        %v2145 = vld [vmem:[%s5 + $0xa8] sm:$0xff]
        %v2146 = vld [vmem:[%s5 + $0xb0] sm:$0xff]
        %v2147 = vld [vmem:[%s5 + $0xb8] sm:$0xff]
        %v2148 = vld [vmem:[%s5 + $0xc0] sm:$0xff]
        %v2149 = vld [vmem:[%s5 + $0xc8] sm:$0xff]
        %v2150 = vld [vmem:[%s5 + $0xd0] sm:$0xff]
        %v2151 = vld [vmem:[%s5 + $0xd8] sm:$0xff]
        %v2152 = vld [vmem:[%s5 + $0xe0] sm:$0xff]
        %v2153 = vld [vmem:[%s5 + $0xe8] sm:$0xff]
        %v2154 = vld [vmem:[%s5 + $0xf0] sm:$0xff]
        %v2155 = vld [vmem:[%s5 + $0xf8] sm:$0xff]
        %v2156 = vld [vmem:[%s5 + $0x100] sm:$0xff]
        %v2157 = vld [vmem:[%s5 + $0x108] sm:$0xff]
        %v2158 = vld [vmem:[%s5 + $0x110] sm:$0xff]
        %v2159 = vld [vmem:[%s5 + $0x118] sm:$0xff]
        %v2160 = vld [vmem:[%s5 + $0x120] sm:$0xff]
        %v2161 = vld [vmem:[%s5 + $0x128] sm:$0xff]
        %v2162 = vld [vmem:[%s5 + $0x130] sm:$0xff]
        %v2163 = vld [vmem:[%s5 + $0x138] sm:$0xff]
        %v2164 = vld [vmem:[%s5 + $0x140] sm:$0xff]
        %v2165 = vld [vmem:[%s5 + $0x148] sm:$0xff]
        %v2166 = vld [vmem:[%s5 + $0x150] sm:$0xff]
        %v2167 = vld [vmem:[%s5 + $0x158] sm:$0xff]
        %v2168 = vld [vmem:[%s5 + $0x160] sm:$0xff]
        %v2169 = vld [vmem:[%s5 + $0x168] sm:$0xff]
        %v2170 = vld [vmem:[%s5 + $0x170] sm:$0xff]
        %v2171 = vld [vmem:[%s5 + $0x178] sm:$0xff]
        %v2172 = vld [vmem:[%s5 + $0x180] sm:$0xff]
        %v2173 = vld [vmem:[%s5 + $0x188] sm:$0xff]
        %v2174 = vld [vmem:[%s5 + $0x190] sm:$0xff]
        %v2175 = vld [vmem:[%s5 + $0x198] sm:$0xff]
        %v2176 = vld [vmem:[%s5 + $0x1a0] sm:$0xff]
        %v2177 = vld [vmem:[%s5 + $0x1a8] sm:$0xff]
        %v2178 = vld [vmem:[%s5 + $0x1b0] sm:$0xff]
        %v2179 = vld [vmem:[%s5 + $0x1b8] sm:$0xff]
        %v2180 = vld [vmem:[%s5 + $0x1c0] sm:$0xff]
        %v2181 = vld [vmem:[%s5 + $0x1c8] sm:$0xff]
        %v2182 = vld [vmem:[%s5 + $0x1d0] sm:$0xff]
        %v2183 = vld [vmem:[%s5 + $0x1d8] sm:$0xff]
        %v2184 = vld [vmem:[%s5 + $0x1e0] sm:$0xff]
        %v2185 = vld [vmem:[%s5 + $0x1e8] sm:$0xff]
        %v2186 = vld [vmem:[%s5 + $0x1f0] sm:$0xff]
        %v2187 = vld [vmem:[%s5 + $0x1f8] sm:$0xff]
        %v2252 = vunpack.c.l.b16 %v2124
        %v2253 = vunpack.c.h.b16 %v2124
        %v2254 = vunpack.c.l.b16 %v2125
        %v2255 = vunpack.c.h.b16 %v2125
        %v2256 = vunpack.c.l.b16 %v2126
        %v2257 = vunpack.c.h.b16 %v2126
        %v2258 = vunpack.c.l.b16 %v2127
        %v2259 = vunpack.c.h.b16 %v2127
        %v2260 = vunpack.c.l.b16 %v2128
        %v2261 = vunpack.c.h.b16 %v2128
        %v2262 = vunpack.c.l.b16 %v2129
        %v2263 = vunpack.c.h.b16 %v2129
        %v2264 = vunpack.c.l.b16 %v2130
        %v2265 = vunpack.c.h.b16 %v2130
        %v2266 = vunpack.c.l.b16 %v2131
        %v2267 = vunpack.c.h.b16 %v2131
        %v2268 = vunpack.c.l.b16 %v2132
        %v2269 = vunpack.c.h.b16 %v2132
        %v2270 = vunpack.c.l.b16 %v2133
        %v2271 = vunpack.c.h.b16 %v2133
        %v2272 = vunpack.c.l.b16 %v2134
        %v2273 = vunpack.c.h.b16 %v2134
        %v2274 = vunpack.c.l.b16 %v2135
        %v2275 = vunpack.c.h.b16 %v2135
        %v2276 = vunpack.c.l.b16 %v2136
        %v2277 = vunpack.c.h.b16 %v2136
        %v2278 = vunpack.c.l.b16 %v2137
        %v2279 = vunpack.c.h.b16 %v2137
        %v2280 = vunpack.c.l.b16 %v2138
        %v2281 = vunpack.c.h.b16 %v2138
        %v2282 = vunpack.c.l.b16 %v2139
        %v2283 = vunpack.c.h.b16 %v2139
        %v2284 = vunpack.c.l.b16 %v2140
        %v2285 = vunpack.c.h.b16 %v2140
        %v2286 = vunpack.c.l.b16 %v2141
        %v2287 = vunpack.c.h.b16 %v2141
        %v2288 = vunpack.c.l.b16 %v2142
        %v2289 = vunpack.c.h.b16 %v2142
        %v2290 = vunpack.c.l.b16 %v2143
        %v2291 = vunpack.c.h.b16 %v2143
        %v2292 = vunpack.c.l.b16 %v2144
        %v2293 = vunpack.c.h.b16 %v2144
        %v2294 = vunpack.c.l.b16 %v2145
        %v2295 = vunpack.c.h.b16 %v2145
        %v2296 = vunpack.c.l.b16 %v2146
        %v2297 = vunpack.c.h.b16 %v2146
        %v2298 = vunpack.c.l.b16 %v2147
        %v2299 = vunpack.c.h.b16 %v2147
        %v2300 = vunpack.c.l.b16 %v2148
        %v2301 = vunpack.c.h.b16 %v2148
        %v2302 = vunpack.c.l.b16 %v2149
        %v2303 = vunpack.c.h.b16 %v2149
        %v2304 = vunpack.c.l.b16 %v2150
        %v2305 = vunpack.c.h.b16 %v2150
        %v2306 = vunpack.c.l.b16 %v2151
        %v2307 = vunpack.c.h.b16 %v2151
        %v2308 = vunpack.c.l.b16 %v2152
        %v2309 = vunpack.c.h.b16 %v2152
        %v2310 = vunpack.c.l.b16 %v2153
        %v2311 = vunpack.c.h.b16 %v2153
        %v2312 = vunpack.c.l.b16 %v2154
        %v2313 = vunpack.c.h.b16 %v2154
        %v2314 = vunpack.c.l.b16 %v2155
        %v2315 = vunpack.c.h.b16 %v2155
        %v2316 = vunpack.c.l.b16 %v2156
        %v2317 = vunpack.c.h.b16 %v2156
        %v2318 = vunpack.c.l.b16 %v2157
        %v2319 = vunpack.c.h.b16 %v2157
        %v2320 = vunpack.c.l.b16 %v2158
        %v2321 = vunpack.c.h.b16 %v2158
        %v2322 = vunpack.c.l.b16 %v2159
        %v2323 = vunpack.c.h.b16 %v2159
        %v2324 = vunpack.c.l.b16 %v2160
        %v2325 = vunpack.c.h.b16 %v2160
        %v2326 = vunpack.c.l.b16 %v2161
        %v2327 = vunpack.c.h.b16 %v2161
        %v2328 = vunpack.c.l.b16 %v2162
        %v2329 = vunpack.c.h.b16 %v2162
        %v2330 = vunpack.c.l.b16 %v2163
        %v2331 = vunpack.c.h.b16 %v2163
        %v2332 = vunpack.c.l.b16 %v2164
        %v2333 = vunpack.c.h.b16 %v2164
        %v2334 = vunpack.c.l.b16 %v2165
        %v2335 = vunpack.c.h.b16 %v2165
        %v2336 = vunpack.c.l.b16 %v2166
        %v2337 = vunpack.c.h.b16 %v2166
        %v2338 = vunpack.c.l.b16 %v2167
        %v2339 = vunpack.c.h.b16 %v2167
        %v2340 = vunpack.c.l.b16 %v2168
        %v2341 = vunpack.c.h.b16 %v2168
        %v2342 = vunpack.c.l.b16 %v2169
        %v2343 = vunpack.c.h.b16 %v2169
        %v2344 = vunpack.c.l.b16 %v2170
        %v2345 = vunpack.c.h.b16 %v2170
        %v2346 = vunpack.c.l.b16 %v2171
        %v2347 = vunpack.c.h.b16 %v2171
        %v2348 = vunpack.c.l.b16 %v2172
        %v2349 = vunpack.c.h.b16 %v2172
        %v2350 = vunpack.c.l.b16 %v2173
        %v2351 = vunpack.c.h.b16 %v2173
        %v2352 = vunpack.c.l.b16 %v2174
        %v2353 = vunpack.c.h.b16 %v2174
        %v2354 = vunpack.c.l.b16 %v2175
        %v2355 = vunpack.c.h.b16 %v2175
        %v2356 = vunpack.c.l.b16 %v2176
        %v2357 = vunpack.c.h.b16 %v2176
        %v2358 = vunpack.c.l.b16 %v2177
        %v2359 = vunpack.c.h.b16 %v2177
        %v2360 = vunpack.c.l.b16 %v2178
        %v2361 = vunpack.c.h.b16 %v2178
        %v2362 = vunpack.c.l.b16 %v2179
        %v2363 = vunpack.c.h.b16 %v2179
        %v2364 = vunpack.c.l.b16 %v2180
        %v2365 = vunpack.c.h.b16 %v2180
        %v2366 = vunpack.c.l.b16 %v2181
        %v2367 = vunpack.c.h.b16 %v2181
        %v2368 = vunpack.c.l.b16 %v2182
        %v2369 = vunpack.c.h.b16 %v2182
        %v2370 = vunpack.c.l.b16 %v2183
        %v2371 = vunpack.c.h.b16 %v2183
        %v2372 = vunpack.c.l.b16 %v2184
        %v2373 = vunpack.c.h.b16 %v2184
        %v2374 = vunpack.c.l.b16 %v2185
        %v2375 = vunpack.c.h.b16 %v2185
        %v2376 = vunpack.c.l.b16 %v2186
        %v2377 = vunpack.c.h.b16 %v2186
        %v2378 = vunpack.c.l.b16 %v2187
        %v2379 = vunpack.c.h.b16 %v2187
        %v2380 = vpack.c.b16 %v2260, %v2252
        %v2381 = vpack.c.b16 %v2261, %v2253
        %v2382 = vpack.c.b16 %v2262, %v2254
        %v2383 = vpack.c.b16 %v2263, %v2255
        %v2384 = vpack.c.b16 %v2264, %v2256
        %v2385 = vpack.c.b16 %v2265, %v2257
        %v2386 = vpack.c.b16 %v2266, %v2258
        %v2387 = vpack.c.b16 %v2267, %v2259
        %v2388 = vpack.c.b16 %v2276, %v2268
        %v2389 = vpack.c.b16 %v2277, %v2269
        %v2390 = vpack.c.b16 %v2278, %v2270
        %v2391 = vpack.c.b16 %v2279, %v2271
        %v2392 = vpack.c.b16 %v2280, %v2272
        %v2393 = vpack.c.b16 %v2281, %v2273
        %v2394 = vpack.c.b16 %v2282, %v2274
        %v2395 = vpack.c.b16 %v2283, %v2275
        %v2396 = vpack.c.b16 %v2292, %v2284
        %v2397 = vpack.c.b16 %v2293, %v2285
        %v2398 = vpack.c.b16 %v2294, %v2286
        %v2399 = vpack.c.b16 %v2295, %v2287
        %v2400 = vpack.c.b16 %v2296, %v2288
        %v2401 = vpack.c.b16 %v2297, %v2289
        %v2402 = vpack.c.b16 %v2298, %v2290
        %v2403 = vpack.c.b16 %v2299, %v2291
        %v2404 = vpack.c.b16 %v2308, %v2300
        %v2405 = vpack.c.b16 %v2309, %v2301
        %v2406 = vpack.c.b16 %v2310, %v2302
        %v2407 = vpack.c.b16 %v2311, %v2303
        %v2408 = vpack.c.b16 %v2312, %v2304
        %v2409 = vpack.c.b16 %v2313, %v2305
        %v2410 = vpack.c.b16 %v2314, %v2306
        %v2411 = vpack.c.b16 %v2315, %v2307
        %v2412 = vpack.c.b16 %v2324, %v2316
        %v2413 = vpack.c.b16 %v2325, %v2317
        %v2414 = vpack.c.b16 %v2326, %v2318
        %v2415 = vpack.c.b16 %v2327, %v2319
        %v2416 = vpack.c.b16 %v2328, %v2320
        %v2417 = vpack.c.b16 %v2329, %v2321
        %v2418 = vpack.c.b16 %v2330, %v2322
        %v2419 = vpack.c.b16 %v2331, %v2323
        %v2420 = vpack.c.b16 %v2340, %v2332
        %v2421 = vpack.c.b16 %v2341, %v2333
        %v2422 = vpack.c.b16 %v2342, %v2334
        %v2423 = vpack.c.b16 %v2343, %v2335
        %v2424 = vpack.c.b16 %v2344, %v2336
        %v2425 = vpack.c.b16 %v2345, %v2337
        %v2426 = vpack.c.b16 %v2346, %v2338
        %v2427 = vpack.c.b16 %v2347, %v2339
        %v2428 = vpack.c.b16 %v2356, %v2348
        %v2429 = vpack.c.b16 %v2357, %v2349
        %v2430 = vpack.c.b16 %v2358, %v2350
        %v2431 = vpack.c.b16 %v2359, %v2351
        %v2432 = vpack.c.b16 %v2360, %v2352
        %v2433 = vpack.c.b16 %v2361, %v2353
        %v2434 = vpack.c.b16 %v2362, %v2354
        %v2435 = vpack.c.b16 %v2363, %v2355
        %v2436 = vpack.c.b16 %v2372, %v2364
        %v2437 = vpack.c.b16 %v2373, %v2365
        %v2438 = vpack.c.b16 %v2374, %v2366
        %v2439 = vpack.c.b16 %v2375, %v2367
        %v2440 = vpack.c.b16 %v2376, %v2368
        %v2441 = vpack.c.b16 %v2377, %v2369
        %v2442 = vpack.c.b16 %v2378, %v2370
        %v2443 = vpack.c.b16 %v2379, %v2371
        %2508 = vmatpush.bf16.msra.mxu0 %v2436
        %2509 = vmatpush.bf16.msra.mxu0 %v2428
        %2510 = vmatpush.bf16.msra.mxu0 %v2420
        %2511 = vmatpush.bf16.msra.mxu0 %v2412
        %2512 = vmatpush.bf16.msra.mxu0 %v2404
        %2513 = vmatpush.bf16.msra.mxu0 %v2396
        %2514 = vmatpush.bf16.msra.mxu0 %v2388
        %2515 = vmatpush.bf16.msra.mxu0 %v2380
        %2516 = vmatmul.bf16.gmra.mxu0 %v2060
        %v2517 = vpop.f32.mrf.mxu0
        %v2518 = vadd.f32 0.0, %v2517
        %v2519 = vpop.f32.mrf.mxu0
        %v2520 = vadd.f32 0.0, %v2519
        %2521 = vmatmul.bf16.gmra.mxu0 %v2061
        %v2522 = vpop.f32.mrf.mxu0
        %v2523 = vadd.f32 0.0, %v2522
        %v2524 = vpop.f32.mrf.mxu0
        %v2525 = vadd.f32 0.0, %v2524
        %2526 = vmatmul.bf16.gmra.mxu0 %v2062
        %v2527 = vpop.f32.mrf.mxu0
        %v2528 = vadd.f32 0.0, %v2527
        %v2529 = vpop.f32.mrf.mxu0
        %v2530 = vadd.f32 0.0, %v2529
        %2531 = vmatmul.bf16.gmra.mxu0 %v2063
        %v2532 = vpop.f32.mrf.mxu0
        %v2533 = vadd.f32 0.0, %v2532
        %v2534 = vpop.f32.mrf.mxu0
        %v2535 = vadd.f32 0.0, %v2534
        %2536 = vmatmul.bf16.gmra.mxu0 %v2064
        %v2537 = vpop.f32.mrf.mxu0
        %v2538 = vadd.f32 0.0, %v2537
        %v2539 = vpop.f32.mrf.mxu0
        %v2540 = vadd.f32 0.0, %v2539
        %2541 = vmatmul.bf16.gmra.mxu0 %v2065
        %v2542 = vpop.f32.mrf.mxu0
        %v2543 = vadd.f32 0.0, %v2542
        %v2544 = vpop.f32.mrf.mxu0
        %v2545 = vadd.f32 0.0, %v2544
        %2546 = vmatmul.bf16.gmra.mxu0 %v2066
        %v2547 = vpop.f32.mrf.mxu0
        %v2548 = vadd.f32 0.0, %v2547
        %v2549 = vpop.f32.mrf.mxu0
        %v2550 = vadd.f32 0.0, %v2549
        %2551 = vmatmul.bf16.gmra.mxu0 %v2067
        %v2552 = vpop.f32.mrf.mxu0
        %v2553 = vadd.f32 0.0, %v2552
        %v2554 = vpop.f32.mrf.mxu0
        %v2555 = vadd.f32 0.0, %v2554
        %2556 = vmatmul.bf16.gmra.mxu0 %v2068
        %v2557 = vpop.f32.mrf.mxu0
        %v2558 = vadd.f32 0.0, %v2557
        %v2559 = vpop.f32.mrf.mxu0
        %v2560 = vadd.f32 0.0, %v2559
        %2561 = vmatmul.bf16.gmra.mxu0 %v2069
        %v2562 = vpop.f32.mrf.mxu0
        %v2563 = vadd.f32 0.0, %v2562
        %v2564 = vpop.f32.mrf.mxu0
        %v2565 = vadd.f32 0.0, %v2564
        %2566 = vmatmul.bf16.gmra.mxu0 %v2070
        %v2567 = vpop.f32.mrf.mxu0
        %v2568 = vadd.f32 0.0, %v2567
        %v2569 = vpop.f32.mrf.mxu0
        %v2570 = vadd.f32 0.0, %v2569
        %2571 = vmatmul.bf16.gmra.mxu0 %v2071
        %v2572 = vpop.f32.mrf.mxu0
        %v2573 = vadd.f32 0.0, %v2572
        %v2574 = vpop.f32.mrf.mxu0
        %v2575 = vadd.f32 0.0, %v2574
        %2576 = vmatmul.bf16.gmra.mxu0 %v2072
        %v2577 = vpop.f32.mrf.mxu0
        %v2578 = vadd.f32 0.0, %v2577
        %v2579 = vpop.f32.mrf.mxu0
        %v2580 = vadd.f32 0.0, %v2579
        %2581 = vmatmul.bf16.gmra.mxu0 %v2073
        %v2582 = vpop.f32.mrf.mxu0
        %v2583 = vadd.f32 0.0, %v2582
        %v2584 = vpop.f32.mrf.mxu0
        %v2585 = vadd.f32 0.0, %v2584
        %2586 = vmatmul.bf16.gmra.mxu0 %v2074
        %v2587 = vpop.f32.mrf.mxu0
        %v2588 = vadd.f32 0.0, %v2587
        %v2589 = vpop.f32.mrf.mxu0
        %v2590 = vadd.f32 0.0, %v2589
        %2591 = vmatmul.bf16.gmra.mxu0 %v2075
        %v2592 = vpop.f32.mrf.mxu0
        %v2593 = vadd.f32 0.0, %v2592
        %v2594 = vpop.f32.mrf.mxu0
        %v2595 = vadd.f32 0.0, %v2594
        %2596 = vmatmul.bf16.gmra.mxu0 %v2076
        %v2597 = vpop.f32.mrf.mxu0
        %v2598 = vadd.f32 0.0, %v2597
        %v2599 = vpop.f32.mrf.mxu0
        %v2600 = vadd.f32 0.0, %v2599
        %2601 = vmatmul.bf16.gmra.mxu0 %v2077
        %v2602 = vpop.f32.mrf.mxu0
        %v2603 = vadd.f32 0.0, %v2602
        %v2604 = vpop.f32.mrf.mxu0
        %v2605 = vadd.f32 0.0, %v2604
        %2606 = vmatmul.bf16.gmra.mxu0 %v2078
        %v2607 = vpop.f32.mrf.mxu0
        %v2608 = vadd.f32 0.0, %v2607
        %v2609 = vpop.f32.mrf.mxu0
        %v2610 = vadd.f32 0.0, %v2609
        %2611 = vmatmul.bf16.gmra.mxu0 %v2079
        %v2612 = vpop.f32.mrf.mxu0
        %v2613 = vadd.f32 0.0, %v2612
        %v2614 = vpop.f32.mrf.mxu0
        %v2615 = vadd.f32 0.0, %v2614
        %2616 = vmatmul.bf16.gmra.mxu0 %v2080
        %v2617 = vpop.f32.mrf.mxu0
        %v2618 = vadd.f32 0.0, %v2617
        %v2619 = vpop.f32.mrf.mxu0
        %v2620 = vadd.f32 0.0, %v2619
        %2621 = vmatmul.bf16.gmra.mxu0 %v2081
        %v2622 = vpop.f32.mrf.mxu0
        %v2623 = vadd.f32 0.0, %v2622
        %v2624 = vpop.f32.mrf.mxu0
        %v2625 = vadd.f32 0.0, %v2624
        %2626 = vmatmul.bf16.gmra.mxu0 %v2082
        %v2627 = vpop.f32.mrf.mxu0
        %v2628 = vadd.f32 0.0, %v2627
        %v2629 = vpop.f32.mrf.mxu0
        %v2630 = vadd.f32 0.0, %v2629
        %2631 = vmatmul.bf16.gmra.mxu0 %v2083
        %v2632 = vpop.f32.mrf.mxu0
        %v2633 = vadd.f32 0.0, %v2632
        %v2634 = vpop.f32.mrf.mxu0
        %v2635 = vadd.f32 0.0, %v2634
        %2636 = vmatmul.bf16.gmra.mxu0 %v2084
        %v2637 = vpop.f32.mrf.mxu0
        %v2638 = vadd.f32 0.0, %v2637
        %v2639 = vpop.f32.mrf.mxu0
        %v2640 = vadd.f32 0.0, %v2639
        %2641 = vmatmul.bf16.gmra.mxu0 %v2085
        %v2642 = vpop.f32.mrf.mxu0
        %v2643 = vadd.f32 0.0, %v2642
        %v2644 = vpop.f32.mrf.mxu0
        %v2645 = vadd.f32 0.0, %v2644
        %2646 = vmatmul.bf16.gmra.mxu0 %v2086
        %v2647 = vpop.f32.mrf.mxu0
        %v2648 = vadd.f32 0.0, %v2647
        %v2649 = vpop.f32.mrf.mxu0
        %v2650 = vadd.f32 0.0, %v2649
        %2651 = vmatmul.bf16.gmra.mxu0 %v2087
        %v2652 = vpop.f32.mrf.mxu0
        %v2653 = vadd.f32 0.0, %v2652
        %v2654 = vpop.f32.mrf.mxu0
        %v2655 = vadd.f32 0.0, %v2654
        %2656 = vmatmul.bf16.gmra.mxu0 %v2088
        %v2657 = vpop.f32.mrf.mxu0
        %v2658 = vadd.f32 0.0, %v2657
        %v2659 = vpop.f32.mrf.mxu0
        %v2660 = vadd.f32 0.0, %v2659
        %2661 = vmatmul.bf16.gmra.mxu0 %v2089
        %v2662 = vpop.f32.mrf.mxu0
        %v2663 = vadd.f32 0.0, %v2662
        %v2664 = vpop.f32.mrf.mxu0
        %v2665 = vadd.f32 0.0, %v2664
        %2666 = vmatmul.bf16.gmra.mxu0 %v2090
        %v2667 = vpop.f32.mrf.mxu0
        %v2668 = vadd.f32 0.0, %v2667
        %v2669 = vpop.f32.mrf.mxu0
        %v2670 = vadd.f32 0.0, %v2669
        %2671 = vmatmul.bf16.gmra.mxu0 %v2091
        %v2672 = vpop.f32.mrf.mxu0
        %v2673 = vadd.f32 0.0, %v2672
        %v2674 = vpop.f32.mrf.mxu0
        %v2675 = vadd.f32 0.0, %v2674
        %2676 = vmatmul.bf16.gmra.mxu0 %v2092
        %v2677 = vpop.f32.mrf.mxu0
        %v2678 = vadd.f32 0.0, %v2677
        %v2679 = vpop.f32.mrf.mxu0
        %v2680 = vadd.f32 0.0, %v2679
        %2681 = vmatmul.bf16.gmra.mxu0 %v2093
        %v2682 = vpop.f32.mrf.mxu0
        %v2683 = vadd.f32 0.0, %v2682
        %v2684 = vpop.f32.mrf.mxu0
        %v2685 = vadd.f32 0.0, %v2684
        %2686 = vmatmul.bf16.gmra.mxu0 %v2094
        %v2687 = vpop.f32.mrf.mxu0
        %v2688 = vadd.f32 0.0, %v2687
        %v2689 = vpop.f32.mrf.mxu0
        %v2690 = vadd.f32 0.0, %v2689
        %2691 = vmatmul.bf16.gmra.mxu0 %v2095
        %v2692 = vpop.f32.mrf.mxu0
        %v2693 = vadd.f32 0.0, %v2692
        %v2694 = vpop.f32.mrf.mxu0
        %v2695 = vadd.f32 0.0, %v2694
        %2696 = vmatmul.bf16.gmra.mxu0 %v2096
        %v2697 = vpop.f32.mrf.mxu0
        %v2698 = vadd.f32 0.0, %v2697
        %v2699 = vpop.f32.mrf.mxu0
        %v2700 = vadd.f32 0.0, %v2699
        %2701 = vmatmul.bf16.gmra.mxu0 %v2097
        %v2702 = vpop.f32.mrf.mxu0
        %v2703 = vadd.f32 0.0, %v2702
        %v2704 = vpop.f32.mrf.mxu0
        %v2705 = vadd.f32 0.0, %v2704
        %2706 = vmatmul.bf16.gmra.mxu0 %v2098
        %v2707 = vpop.f32.mrf.mxu0
        %v2708 = vadd.f32 0.0, %v2707
        %v2709 = vpop.f32.mrf.mxu0
        %v2710 = vadd.f32 0.0, %v2709
        %2711 = vmatmul.bf16.gmra.mxu0 %v2099
        %v2712 = vpop.f32.mrf.mxu0
        %v2713 = vadd.f32 0.0, %v2712
        %v2714 = vpop.f32.mrf.mxu0
        %v2715 = vadd.f32 0.0, %v2714
        %2716 = vmatmul.bf16.gmra.mxu0 %v2100
        %v2717 = vpop.f32.mrf.mxu0
        %v2718 = vadd.f32 0.0, %v2717
        %v2719 = vpop.f32.mrf.mxu0
        %v2720 = vadd.f32 0.0, %v2719
        %2721 = vmatmul.bf16.gmra.mxu0 %v2101
        %v2722 = vpop.f32.mrf.mxu0
        %v2723 = vadd.f32 0.0, %v2722
        %v2724 = vpop.f32.mrf.mxu0
        %v2725 = vadd.f32 0.0, %v2724
        %2726 = vmatmul.bf16.gmra.mxu0 %v2102
        %v2727 = vpop.f32.mrf.mxu0
        %v2728 = vadd.f32 0.0, %v2727
        %v2729 = vpop.f32.mrf.mxu0
        %v2730 = vadd.f32 0.0, %v2729
        %2731 = vmatmul.bf16.gmra.mxu0 %v2103
        %v2732 = vpop.f32.mrf.mxu0
        %v2733 = vadd.f32 0.0, %v2732
        %v2734 = vpop.f32.mrf.mxu0
        %v2735 = vadd.f32 0.0, %v2734
        %2736 = vmatmul.bf16.gmra.mxu0 %v2104
        %v2737 = vpop.f32.mrf.mxu0
        %v2738 = vadd.f32 0.0, %v2737
        %v2739 = vpop.f32.mrf.mxu0
        %v2740 = vadd.f32 0.0, %v2739
        %2741 = vmatmul.bf16.gmra.mxu0 %v2105
        %v2742 = vpop.f32.mrf.mxu0
        %v2743 = vadd.f32 0.0, %v2742
        %v2744 = vpop.f32.mrf.mxu0
        %v2745 = vadd.f32 0.0, %v2744
        %2746 = vmatmul.bf16.gmra.mxu0 %v2106
        %v2747 = vpop.f32.mrf.mxu0
        %v2748 = vadd.f32 0.0, %v2747
        %v2749 = vpop.f32.mrf.mxu0
        %v2750 = vadd.f32 0.0, %v2749
        %2751 = vmatmul.bf16.gmra.mxu0 %v2107
        %v2752 = vpop.f32.mrf.mxu0
        %v2753 = vadd.f32 0.0, %v2752
        %v2754 = vpop.f32.mrf.mxu0
        %v2755 = vadd.f32 0.0, %v2754
        %2756 = vmatmul.bf16.gmra.mxu0 %v2108
        %v2757 = vpop.f32.mrf.mxu0
        %v2758 = vadd.f32 0.0, %v2757
        %v2759 = vpop.f32.mrf.mxu0
        %v2760 = vadd.f32 0.0, %v2759
        %2761 = vmatmul.bf16.gmra.mxu0 %v2109
        %v2762 = vpop.f32.mrf.mxu0
        %v2763 = vadd.f32 0.0, %v2762
        %v2764 = vpop.f32.mrf.mxu0
        %v2765 = vadd.f32 0.0, %v2764
        %2766 = vmatmul.bf16.gmra.mxu0 %v2110
        %v2767 = vpop.f32.mrf.mxu0
        %v2768 = vadd.f32 0.0, %v2767
        %v2769 = vpop.f32.mrf.mxu0
        %v2770 = vadd.f32 0.0, %v2769
        %2771 = vmatmul.bf16.gmra.mxu0 %v2111
        %v2772 = vpop.f32.mrf.mxu0
        %v2773 = vadd.f32 0.0, %v2772
        %v2774 = vpop.f32.mrf.mxu0
        %v2775 = vadd.f32 0.0, %v2774
        %2776 = vmatmul.bf16.gmra.mxu0 %v2112
        %v2777 = vpop.f32.mrf.mxu0
        %v2778 = vadd.f32 0.0, %v2777
        %v2779 = vpop.f32.mrf.mxu0
        %v2780 = vadd.f32 0.0, %v2779
        %2781 = vmatmul.bf16.gmra.mxu0 %v2113
        %v2782 = vpop.f32.mrf.mxu0
        %v2783 = vadd.f32 0.0, %v2782
        %v2784 = vpop.f32.mrf.mxu0
        %v2785 = vadd.f32 0.0, %v2784
        %2786 = vmatmul.bf16.gmra.mxu0 %v2114
        %v2787 = vpop.f32.mrf.mxu0
        %v2788 = vadd.f32 0.0, %v2787
        %v2789 = vpop.f32.mrf.mxu0
        %v2790 = vadd.f32 0.0, %v2789
        %2791 = vmatmul.bf16.gmra.mxu0 %v2115
        %v2792 = vpop.f32.mrf.mxu0
        %v2793 = vadd.f32 0.0, %v2792
        %v2794 = vpop.f32.mrf.mxu0
        %v2795 = vadd.f32 0.0, %v2794
        %2796 = vmatmul.bf16.gmra.mxu0 %v2116
        %v2797 = vpop.f32.mrf.mxu0
        %v2798 = vadd.f32 0.0, %v2797
        %v2799 = vpop.f32.mrf.mxu0
        %v2800 = vadd.f32 0.0, %v2799
        %2801 = vmatmul.bf16.gmra.mxu0 %v2117
        %v2802 = vpop.f32.mrf.mxu0
        %v2803 = vadd.f32 0.0, %v2802
        %v2804 = vpop.f32.mrf.mxu0
        %v2805 = vadd.f32 0.0, %v2804
        %2806 = vmatmul.bf16.gmra.mxu0 %v2118
        %v2807 = vpop.f32.mrf.mxu0
        %v2808 = vadd.f32 0.0, %v2807
        %v2809 = vpop.f32.mrf.mxu0
        %v2810 = vadd.f32 0.0, %v2809
        %2811 = vmatmul.bf16.gmra.mxu0 %v2119
        %v2812 = vpop.f32.mrf.mxu0
        %v2813 = vadd.f32 0.0, %v2812
        %v2814 = vpop.f32.mrf.mxu0
        %v2815 = vadd.f32 0.0, %v2814
        %2816 = vmatmul.bf16.gmra.mxu0 %v2120
        %v2817 = vpop.f32.mrf.mxu0
        %v2818 = vadd.f32 0.0, %v2817
        %v2819 = vpop.f32.mrf.mxu0
        %v2820 = vadd.f32 0.0, %v2819
        %2821 = vmatmul.bf16.gmra.mxu0 %v2121
        %v2822 = vpop.f32.mrf.mxu0
        %v2823 = vadd.f32 0.0, %v2822
        %v2824 = vpop.f32.mrf.mxu0
        %v2825 = vadd.f32 0.0, %v2824
        %2826 = vmatmul.bf16.gmra.mxu0 %v2122
        %v2827 = vpop.f32.mrf.mxu0
        %v2828 = vadd.f32 0.0, %v2827
        %v2829 = vpop.f32.mrf.mxu0
        %v2830 = vadd.f32 0.0, %v2829
        %2831 = vmatmul.bf16.gmra.mxu0 %v2123
        %v2832 = vpop.f32.mrf.mxu0
        %v2833 = vadd.f32 0.0, %v2832
        %v2834 = vpop.f32.mrf.mxu0
        %v2835 = vadd.f32 0.0, %v2834
        %2836 = vdwg.mxu0
        %2837 = vmatpush.bf16.msra.mxu0 %v2437
        %2838 = vmatpush.bf16.msra.mxu0 %v2429
        %2839 = vmatpush.bf16.msra.mxu0 %v2421
        %2840 = vmatpush.bf16.msra.mxu0 %v2413
        %2841 = vmatpush.bf16.msra.mxu0 %v2405
        %2842 = vmatpush.bf16.msra.mxu0 %v2397
        %2843 = vmatpush.bf16.msra.mxu0 %v2389
        %2844 = vmatpush.bf16.msra.mxu0 %v2381
        %2845 = vmatmul.bf16.gmra.mxu0 %v2060
        %v2846 = vpop.f32.mrf.mxu0
        %v2847 = vadd.f32 0.0, %v2846
        %v2848 = vpop.f32.mrf.mxu0
        %v2849 = vadd.f32 0.0, %v2848
        %2850 = vmatmul.bf16.gmra.mxu0 %v2061
        %v2851 = vpop.f32.mrf.mxu0
        %v2852 = vadd.f32 0.0, %v2851
        %v2853 = vpop.f32.mrf.mxu0
        %v2854 = vadd.f32 0.0, %v2853
        %2855 = vmatmul.bf16.gmra.mxu0 %v2062
        %v2856 = vpop.f32.mrf.mxu0
        %v2857 = vadd.f32 0.0, %v2856
        %v2858 = vpop.f32.mrf.mxu0
        %v2859 = vadd.f32 0.0, %v2858
        %2860 = vmatmul.bf16.gmra.mxu0 %v2063
        %v2861 = vpop.f32.mrf.mxu0
        %v2862 = vadd.f32 0.0, %v2861
        %v2863 = vpop.f32.mrf.mxu0
        %v2864 = vadd.f32 0.0, %v2863
        %2865 = vmatmul.bf16.gmra.mxu0 %v2064
        %v2866 = vpop.f32.mrf.mxu0
        %v2867 = vadd.f32 0.0, %v2866
        %v2868 = vpop.f32.mrf.mxu0
        %v2869 = vadd.f32 0.0, %v2868
        %2870 = vmatmul.bf16.gmra.mxu0 %v2065
        %v2871 = vpop.f32.mrf.mxu0
        %v2872 = vadd.f32 0.0, %v2871
        %v2873 = vpop.f32.mrf.mxu0
        %v2874 = vadd.f32 0.0, %v2873
        %2875 = vmatmul.bf16.gmra.mxu0 %v2066
        %v2876 = vpop.f32.mrf.mxu0
        %v2877 = vadd.f32 0.0, %v2876
        %v2878 = vpop.f32.mrf.mxu0
        %v2879 = vadd.f32 0.0, %v2878
        %2880 = vmatmul.bf16.gmra.mxu0 %v2067
        %v2881 = vpop.f32.mrf.mxu0
        %v2882 = vadd.f32 0.0, %v2881
        %v2883 = vpop.f32.mrf.mxu0
        %v2884 = vadd.f32 0.0, %v2883
        %2885 = vmatmul.bf16.gmra.mxu0 %v2068
        %v2886 = vpop.f32.mrf.mxu0
        %v2887 = vadd.f32 0.0, %v2886
        %v2888 = vpop.f32.mrf.mxu0
        %v2889 = vadd.f32 0.0, %v2888
        %2890 = vmatmul.bf16.gmra.mxu0 %v2069
        %v2891 = vpop.f32.mrf.mxu0
        %v2892 = vadd.f32 0.0, %v2891
        %v2893 = vpop.f32.mrf.mxu0
        %v2894 = vadd.f32 0.0, %v2893
        %2895 = vmatmul.bf16.gmra.mxu0 %v2070
        %v2896 = vpop.f32.mrf.mxu0
        %v2897 = vadd.f32 0.0, %v2896
        %v2898 = vpop.f32.mrf.mxu0
        %v2899 = vadd.f32 0.0, %v2898
        %2900 = vmatmul.bf16.gmra.mxu0 %v2071
        %v2901 = vpop.f32.mrf.mxu0
        %v2902 = vadd.f32 0.0, %v2901
        %v2903 = vpop.f32.mrf.mxu0
        %v2904 = vadd.f32 0.0, %v2903
        %2905 = vmatmul.bf16.gmra.mxu0 %v2072
        %v2906 = vpop.f32.mrf.mxu0
        %v2907 = vadd.f32 0.0, %v2906
        %v2908 = vpop.f32.mrf.mxu0
        %v2909 = vadd.f32 0.0, %v2908
        %2910 = vmatmul.bf16.gmra.mxu0 %v2073
        %v2911 = vpop.f32.mrf.mxu0
        %v2912 = vadd.f32 0.0, %v2911
        %v2913 = vpop.f32.mrf.mxu0
        %v2914 = vadd.f32 0.0, %v2913
        %2915 = vmatmul.bf16.gmra.mxu0 %v2074
        %v2916 = vpop.f32.mrf.mxu0
        %v2917 = vadd.f32 0.0, %v2916
        %v2918 = vpop.f32.mrf.mxu0
        %v2919 = vadd.f32 0.0, %v2918
        %2920 = vmatmul.bf16.gmra.mxu0 %v2075
        %v2921 = vpop.f32.mrf.mxu0
        %v2922 = vadd.f32 0.0, %v2921
        %v2923 = vpop.f32.mrf.mxu0
        %v2924 = vadd.f32 0.0, %v2923
        %2925 = vmatmul.bf16.gmra.mxu0 %v2076
        %v2926 = vpop.f32.mrf.mxu0
        %v2927 = vadd.f32 0.0, %v2926
        %v2928 = vpop.f32.mrf.mxu0
        %v2929 = vadd.f32 0.0, %v2928
        %2930 = vmatmul.bf16.gmra.mxu0 %v2077
        %v2931 = vpop.f32.mrf.mxu0
        %v2932 = vadd.f32 0.0, %v2931
        %v2933 = vpop.f32.mrf.mxu0
        %v2934 = vadd.f32 0.0, %v2933
        %2935 = vmatmul.bf16.gmra.mxu0 %v2078
        %v2936 = vpop.f32.mrf.mxu0
        %v2937 = vadd.f32 0.0, %v2936
        %v2938 = vpop.f32.mrf.mxu0
        %v2939 = vadd.f32 0.0, %v2938
        %2940 = vmatmul.bf16.gmra.mxu0 %v2079
        %v2941 = vpop.f32.mrf.mxu0
        %v2942 = vadd.f32 0.0, %v2941
        %v2943 = vpop.f32.mrf.mxu0
        %v2944 = vadd.f32 0.0, %v2943
        %2945 = vmatmul.bf16.gmra.mxu0 %v2080
        %v2946 = vpop.f32.mrf.mxu0
        %v2947 = vadd.f32 0.0, %v2946
        %v2948 = vpop.f32.mrf.mxu0
        %v2949 = vadd.f32 0.0, %v2948
        %2950 = vmatmul.bf16.gmra.mxu0 %v2081
        %v2951 = vpop.f32.mrf.mxu0
        %v2952 = vadd.f32 0.0, %v2951
        %v2953 = vpop.f32.mrf.mxu0
        %v2954 = vadd.f32 0.0, %v2953
        %2955 = vmatmul.bf16.gmra.mxu0 %v2082
        %v2956 = vpop.f32.mrf.mxu0
        %v2957 = vadd.f32 0.0, %v2956
        %v2958 = vpop.f32.mrf.mxu0
        %v2959 = vadd.f32 0.0, %v2958
        %2960 = vmatmul.bf16.gmra.mxu0 %v2083
        %v2961 = vpop.f32.mrf.mxu0
        %v2962 = vadd.f32 0.0, %v2961
        %v2963 = vpop.f32.mrf.mxu0
        %v2964 = vadd.f32 0.0, %v2963
        %2965 = vmatmul.bf16.gmra.mxu0 %v2084
        %v2966 = vpop.f32.mrf.mxu0
        %v2967 = vadd.f32 0.0, %v2966
        %v2968 = vpop.f32.mrf.mxu0
        %v2969 = vadd.f32 0.0, %v2968
        %2970 = vmatmul.bf16.gmra.mxu0 %v2085
        %v2971 = vpop.f32.mrf.mxu0
        %v2972 = vadd.f32 0.0, %v2971
        %v2973 = vpop.f32.mrf.mxu0
        %v2974 = vadd.f32 0.0, %v2973
        %2975 = vmatmul.bf16.gmra.mxu0 %v2086
        %v2976 = vpop.f32.mrf.mxu0
        %v2977 = vadd.f32 0.0, %v2976
        %v2978 = vpop.f32.mrf.mxu0
        %v2979 = vadd.f32 0.0, %v2978
        %2980 = vmatmul.bf16.gmra.mxu0 %v2087
        %v2981 = vpop.f32.mrf.mxu0
        %v2982 = vadd.f32 0.0, %v2981
        %v2983 = vpop.f32.mrf.mxu0
        %v2984 = vadd.f32 0.0, %v2983
        %2985 = vmatmul.bf16.gmra.mxu0 %v2088
        %v2986 = vpop.f32.mrf.mxu0
        %v2987 = vadd.f32 0.0, %v2986
        %v2988 = vpop.f32.mrf.mxu0
        %v2989 = vadd.f32 0.0, %v2988
        %2990 = vmatmul.bf16.gmra.mxu0 %v2089
        %v2991 = vpop.f32.mrf.mxu0
        %v2992 = vadd.f32 0.0, %v2991
        %v2993 = vpop.f32.mrf.mxu0
        %v2994 = vadd.f32 0.0, %v2993
        %2995 = vmatmul.bf16.gmra.mxu0 %v2090
        %v2996 = vpop.f32.mrf.mxu0
        %v2997 = vadd.f32 0.0, %v2996
        %v2998 = vpop.f32.mrf.mxu0
        %v2999 = vadd.f32 0.0, %v2998
        %3000 = vmatmul.bf16.gmra.mxu0 %v2091
        %v3001 = vpop.f32.mrf.mxu0
        %v3002 = vadd.f32 0.0, %v3001
        %v3003 = vpop.f32.mrf.mxu0
        %v3004 = vadd.f32 0.0, %v3003
        %3005 = vmatmul.bf16.gmra.mxu0 %v2092
        %v3006 = vpop.f32.mrf.mxu0
        %v3007 = vadd.f32 0.0, %v3006
        %v3008 = vpop.f32.mrf.mxu0
        %v3009 = vadd.f32 0.0, %v3008
        %3010 = vmatmul.bf16.gmra.mxu0 %v2093
        %v3011 = vpop.f32.mrf.mxu0
        %v3012 = vadd.f32 0.0, %v3011
        %v3013 = vpop.f32.mrf.mxu0
        %v3014 = vadd.f32 0.0, %v3013
        %3015 = vmatmul.bf16.gmra.mxu0 %v2094
        %v3016 = vpop.f32.mrf.mxu0
        %v3017 = vadd.f32 0.0, %v3016
        %v3018 = vpop.f32.mrf.mxu0
        %v3019 = vadd.f32 0.0, %v3018
        %3020 = vmatmul.bf16.gmra.mxu0 %v2095
        %v3021 = vpop.f32.mrf.mxu0
        %v3022 = vadd.f32 0.0, %v3021
        %v3023 = vpop.f32.mrf.mxu0
        %v3024 = vadd.f32 0.0, %v3023
        %3025 = vmatmul.bf16.gmra.mxu0 %v2096
        %v3026 = vpop.f32.mrf.mxu0
        %v3027 = vadd.f32 0.0, %v3026
        %v3028 = vpop.f32.mrf.mxu0
        %v3029 = vadd.f32 0.0, %v3028
        %3030 = vmatmul.bf16.gmra.mxu0 %v2097
        %v3031 = vpop.f32.mrf.mxu0
        %v3032 = vadd.f32 0.0, %v3031
        %v3033 = vpop.f32.mrf.mxu0
        %v3034 = vadd.f32 0.0, %v3033
        %3035 = vmatmul.bf16.gmra.mxu0 %v2098
        %v3036 = vpop.f32.mrf.mxu0
        %v3037 = vadd.f32 0.0, %v3036
        %v3038 = vpop.f32.mrf.mxu0
        %v3039 = vadd.f32 0.0, %v3038
        %3040 = vmatmul.bf16.gmra.mxu0 %v2099
        %v3041 = vpop.f32.mrf.mxu0
        %v3042 = vadd.f32 0.0, %v3041
        %v3043 = vpop.f32.mrf.mxu0
        %v3044 = vadd.f32 0.0, %v3043
        %3045 = vmatmul.bf16.gmra.mxu0 %v2100
        %v3046 = vpop.f32.mrf.mxu0
        %v3047 = vadd.f32 0.0, %v3046
        %v3048 = vpop.f32.mrf.mxu0
        %v3049 = vadd.f32 0.0, %v3048
        %3050 = vmatmul.bf16.gmra.mxu0 %v2101
        %v3051 = vpop.f32.mrf.mxu0
        %v3052 = vadd.f32 0.0, %v3051
        %v3053 = vpop.f32.mrf.mxu0
        %v3054 = vadd.f32 0.0, %v3053
        %3055 = vmatmul.bf16.gmra.mxu0 %v2102
        %v3056 = vpop.f32.mrf.mxu0
        %v3057 = vadd.f32 0.0, %v3056
        %v3058 = vpop.f32.mrf.mxu0
        %v3059 = vadd.f32 0.0, %v3058
        %3060 = vmatmul.bf16.gmra.mxu0 %v2103
        %v3061 = vpop.f32.mrf.mxu0
        %v3062 = vadd.f32 0.0, %v3061
        %v3063 = vpop.f32.mrf.mxu0
        %v3064 = vadd.f32 0.0, %v3063
        %3065 = vmatmul.bf16.gmra.mxu0 %v2104
        %v3066 = vpop.f32.mrf.mxu0
        %v3067 = vadd.f32 0.0, %v3066
        %v3068 = vpop.f32.mrf.mxu0
        %v3069 = vadd.f32 0.0, %v3068
        %3070 = vmatmul.bf16.gmra.mxu0 %v2105
        %v3071 = vpop.f32.mrf.mxu0
        %v3072 = vadd.f32 0.0, %v3071
        %v3073 = vpop.f32.mrf.mxu0
        %v3074 = vadd.f32 0.0, %v3073
        %3075 = vmatmul.bf16.gmra.mxu0 %v2106
        %v3076 = vpop.f32.mrf.mxu0
        %v3077 = vadd.f32 0.0, %v3076
        %v3078 = vpop.f32.mrf.mxu0
        %v3079 = vadd.f32 0.0, %v3078
        %3080 = vmatmul.bf16.gmra.mxu0 %v2107
        %v3081 = vpop.f32.mrf.mxu0
        %v3082 = vadd.f32 0.0, %v3081
        %v3083 = vpop.f32.mrf.mxu0
        %v3084 = vadd.f32 0.0, %v3083
        %3085 = vmatmul.bf16.gmra.mxu0 %v2108
        %v3086 = vpop.f32.mrf.mxu0
        %v3087 = vadd.f32 0.0, %v3086
        %v3088 = vpop.f32.mrf.mxu0
        %v3089 = vadd.f32 0.0, %v3088
        %3090 = vmatmul.bf16.gmra.mxu0 %v2109
        %v3091 = vpop.f32.mrf.mxu0
        %v3092 = vadd.f32 0.0, %v3091
        %v3093 = vpop.f32.mrf.mxu0
        %v3094 = vadd.f32 0.0, %v3093
        %3095 = vmatmul.bf16.gmra.mxu0 %v2110
        %v3096 = vpop.f32.mrf.mxu0
        %v3097 = vadd.f32 0.0, %v3096
        %v3098 = vpop.f32.mrf.mxu0
        %v3099 = vadd.f32 0.0, %v3098
        %3100 = vmatmul.bf16.gmra.mxu0 %v2111
        %v3101 = vpop.f32.mrf.mxu0
        %v3102 = vadd.f32 0.0, %v3101
        %v3103 = vpop.f32.mrf.mxu0
        %v3104 = vadd.f32 0.0, %v3103
        %3105 = vmatmul.bf16.gmra.mxu0 %v2112
        %v3106 = vpop.f32.mrf.mxu0
        %v3107 = vadd.f32 0.0, %v3106
        %v3108 = vpop.f32.mrf.mxu0
        %v3109 = vadd.f32 0.0, %v3108
        %3110 = vmatmul.bf16.gmra.mxu0 %v2113
        %v3111 = vpop.f32.mrf.mxu0
        %v3112 = vadd.f32 0.0, %v3111
        %v3113 = vpop.f32.mrf.mxu0
        %v3114 = vadd.f32 0.0, %v3113
        %3115 = vmatmul.bf16.gmra.mxu0 %v2114
        %v3116 = vpop.f32.mrf.mxu0
        %v3117 = vadd.f32 0.0, %v3116
        %v3118 = vpop.f32.mrf.mxu0
        %v3119 = vadd.f32 0.0, %v3118
        %3120 = vmatmul.bf16.gmra.mxu0 %v2115
        %v3121 = vpop.f32.mrf.mxu0
        %v3122 = vadd.f32 0.0, %v3121
        %v3123 = vpop.f32.mrf.mxu0
        %v3124 = vadd.f32 0.0, %v3123
        %3125 = vmatmul.bf16.gmra.mxu0 %v2116
        %v3126 = vpop.f32.mrf.mxu0
        %v3127 = vadd.f32 0.0, %v3126
        %v3128 = vpop.f32.mrf.mxu0
        %v3129 = vadd.f32 0.0, %v3128
        %3130 = vmatmul.bf16.gmra.mxu0 %v2117
        %v3131 = vpop.f32.mrf.mxu0
        %v3132 = vadd.f32 0.0, %v3131
        %v3133 = vpop.f32.mrf.mxu0
        %v3134 = vadd.f32 0.0, %v3133
        %3135 = vmatmul.bf16.gmra.mxu0 %v2118
        %v3136 = vpop.f32.mrf.mxu0
        %v3137 = vadd.f32 0.0, %v3136
        %v3138 = vpop.f32.mrf.mxu0
        %v3139 = vadd.f32 0.0, %v3138
        %3140 = vmatmul.bf16.gmra.mxu0 %v2119
        %v3141 = vpop.f32.mrf.mxu0
        %v3142 = vadd.f32 0.0, %v3141
        %v3143 = vpop.f32.mrf.mxu0
        %v3144 = vadd.f32 0.0, %v3143
        %3145 = vmatmul.bf16.gmra.mxu0 %v2120
        %v3146 = vpop.f32.mrf.mxu0
        %v3147 = vadd.f32 0.0, %v3146
        %v3148 = vpop.f32.mrf.mxu0
        %v3149 = vadd.f32 0.0, %v3148
        %3150 = vmatmul.bf16.gmra.mxu0 %v2121
        %v3151 = vpop.f32.mrf.mxu0
        %v3152 = vadd.f32 0.0, %v3151
        %v3153 = vpop.f32.mrf.mxu0
        %v3154 = vadd.f32 0.0, %v3153
        %3155 = vmatmul.bf16.gmra.mxu0 %v2122
        %v3156 = vpop.f32.mrf.mxu0
        %v3157 = vadd.f32 0.0, %v3156
        %v3158 = vpop.f32.mrf.mxu0
        %v3159 = vadd.f32 0.0, %v3158
        %3160 = vmatmul.bf16.gmra.mxu0 %v2123
        %v3161 = vpop.f32.mrf.mxu0
        %v3162 = vadd.f32 0.0, %v3161
        %v3163 = vpop.f32.mrf.mxu0
        %v3164 = vadd.f32 0.0, %v3163
        %3165 = vdwg.mxu0
        %3166 = vmatpush.bf16.msra.mxu0 %v2438
        %3167 = vmatpush.bf16.msra.mxu0 %v2430
        %3168 = vmatpush.bf16.msra.mxu0 %v2422
        %3169 = vmatpush.bf16.msra.mxu0 %v2414
        %3170 = vmatpush.bf16.msra.mxu0 %v2406
        %3171 = vmatpush.bf16.msra.mxu0 %v2398
        %3172 = vmatpush.bf16.msra.mxu0 %v2390
        %3173 = vmatpush.bf16.msra.mxu0 %v2382
        %3174 = vmatmul.bf16.gmra.mxu0 %v2060
        %v3175 = vpop.f32.mrf.mxu0
        %v3176 = vadd.f32 0.0, %v3175
        %v3177 = vpop.f32.mrf.mxu0
        %v3178 = vadd.f32 0.0, %v3177
        %3179 = vmatmul.bf16.gmra.mxu0 %v2061
        %v3180 = vpop.f32.mrf.mxu0
        %v3181 = vadd.f32 0.0, %v3180
        %v3182 = vpop.f32.mrf.mxu0
        %v3183 = vadd.f32 0.0, %v3182
        %3184 = vmatmul.bf16.gmra.mxu0 %v2062
        %v3185 = vpop.f32.mrf.mxu0
        %v3186 = vadd.f32 0.0, %v3185
        %v3187 = vpop.f32.mrf.mxu0
        %v3188 = vadd.f32 0.0, %v3187
        %3189 = vmatmul.bf16.gmra.mxu0 %v2063
        %v3190 = vpop.f32.mrf.mxu0
        %v3191 = vadd.f32 0.0, %v3190
        %v3192 = vpop.f32.mrf.mxu0
        %v3193 = vadd.f32 0.0, %v3192
        %3194 = vmatmul.bf16.gmra.mxu0 %v2064
        %v3195 = vpop.f32.mrf.mxu0
        %v3196 = vadd.f32 0.0, %v3195
        %v3197 = vpop.f32.mrf.mxu0
        %v3198 = vadd.f32 0.0, %v3197
        %3199 = vmatmul.bf16.gmra.mxu0 %v2065
        %v3200 = vpop.f32.mrf.mxu0
        %v3201 = vadd.f32 0.0, %v3200
        %v3202 = vpop.f32.mrf.mxu0
        %v3203 = vadd.f32 0.0, %v3202
        %3204 = vmatmul.bf16.gmra.mxu0 %v2066
        %v3205 = vpop.f32.mrf.mxu0
        %v3206 = vadd.f32 0.0, %v3205
        %v3207 = vpop.f32.mrf.mxu0
        %v3208 = vadd.f32 0.0, %v3207
        %3209 = vmatmul.bf16.gmra.mxu0 %v2067
        %v3210 = vpop.f32.mrf.mxu0
        %v3211 = vadd.f32 0.0, %v3210
        %v3212 = vpop.f32.mrf.mxu0
        %v3213 = vadd.f32 0.0, %v3212
        %3214 = vmatmul.bf16.gmra.mxu0 %v2068
        %v3215 = vpop.f32.mrf.mxu0
        %v3216 = vadd.f32 0.0, %v3215
        %v3217 = vpop.f32.mrf.mxu0
        %v3218 = vadd.f32 0.0, %v3217
        %3219 = vmatmul.bf16.gmra.mxu0 %v2069
        %v3220 = vpop.f32.mrf.mxu0
        %v3221 = vadd.f32 0.0, %v3220
        %v3222 = vpop.f32.mrf.mxu0
        %v3223 = vadd.f32 0.0, %v3222
        %3224 = vmatmul.bf16.gmra.mxu0 %v2070
        %v3225 = vpop.f32.mrf.mxu0
        %v3226 = vadd.f32 0.0, %v3225
        %v3227 = vpop.f32.mrf.mxu0
        %v3228 = vadd.f32 0.0, %v3227
        %3229 = vmatmul.bf16.gmra.mxu0 %v2071
        %v3230 = vpop.f32.mrf.mxu0
        %v3231 = vadd.f32 0.0, %v3230
        %v3232 = vpop.f32.mrf.mxu0
        %v3233 = vadd.f32 0.0, %v3232
        %3234 = vmatmul.bf16.gmra.mxu0 %v2072
        %v3235 = vpop.f32.mrf.mxu0
        %v3236 = vadd.f32 0.0, %v3235
        %v3237 = vpop.f32.mrf.mxu0
        %v3238 = vadd.f32 0.0, %v3237
        %3239 = vmatmul.bf16.gmra.mxu0 %v2073
        %v3240 = vpop.f32.mrf.mxu0
        %v3241 = vadd.f32 0.0, %v3240
        %v3242 = vpop.f32.mrf.mxu0
        %v3243 = vadd.f32 0.0, %v3242
        %3244 = vmatmul.bf16.gmra.mxu0 %v2074
        %v3245 = vpop.f32.mrf.mxu0
        %v3246 = vadd.f32 0.0, %v3245
        %v3247 = vpop.f32.mrf.mxu0
        %v3248 = vadd.f32 0.0, %v3247
        %3249 = vmatmul.bf16.gmra.mxu0 %v2075
        %v3250 = vpop.f32.mrf.mxu0
        %v3251 = vadd.f32 0.0, %v3250
        %v3252 = vpop.f32.mrf.mxu0
        %v3253 = vadd.f32 0.0, %v3252
        %3254 = vmatmul.bf16.gmra.mxu0 %v2076
        %v3255 = vpop.f32.mrf.mxu0
        %v3256 = vadd.f32 0.0, %v3255
        %v3257 = vpop.f32.mrf.mxu0
        %v3258 = vadd.f32 0.0, %v3257
        %3259 = vmatmul.bf16.gmra.mxu0 %v2077
        %v3260 = vpop.f32.mrf.mxu0
        %v3261 = vadd.f32 0.0, %v3260
        %v3262 = vpop.f32.mrf.mxu0
        %v3263 = vadd.f32 0.0, %v3262
        %3264 = vmatmul.bf16.gmra.mxu0 %v2078
        %v3265 = vpop.f32.mrf.mxu0
        %v3266 = vadd.f32 0.0, %v3265
        %v3267 = vpop.f32.mrf.mxu0
        %v3268 = vadd.f32 0.0, %v3267
        %3269 = vmatmul.bf16.gmra.mxu0 %v2079
        %v3270 = vpop.f32.mrf.mxu0
        %v3271 = vadd.f32 0.0, %v3270
        %v3272 = vpop.f32.mrf.mxu0
        %v3273 = vadd.f32 0.0, %v3272
        %3274 = vmatmul.bf16.gmra.mxu0 %v2080
        %v3275 = vpop.f32.mrf.mxu0
        %v3276 = vadd.f32 0.0, %v3275
        %v3277 = vpop.f32.mrf.mxu0
        %v3278 = vadd.f32 0.0, %v3277
        %3279 = vmatmul.bf16.gmra.mxu0 %v2081
        %v3280 = vpop.f32.mrf.mxu0
        %v3281 = vadd.f32 0.0, %v3280
        %v3282 = vpop.f32.mrf.mxu0
        %v3283 = vadd.f32 0.0, %v3282
        %3284 = vmatmul.bf16.gmra.mxu0 %v2082
        %v3285 = vpop.f32.mrf.mxu0
        %v3286 = vadd.f32 0.0, %v3285
        %v3287 = vpop.f32.mrf.mxu0
        %v3288 = vadd.f32 0.0, %v3287
        %3289 = vmatmul.bf16.gmra.mxu0 %v2083
        %v3290 = vpop.f32.mrf.mxu0
        %v3291 = vadd.f32 0.0, %v3290
        %v3292 = vpop.f32.mrf.mxu0
        %v3293 = vadd.f32 0.0, %v3292
        %3294 = vmatmul.bf16.gmra.mxu0 %v2084
        %v3295 = vpop.f32.mrf.mxu0
        %v3296 = vadd.f32 0.0, %v3295
        %v3297 = vpop.f32.mrf.mxu0
        %v3298 = vadd.f32 0.0, %v3297
        %3299 = vmatmul.bf16.gmra.mxu0 %v2085
        %v3300 = vpop.f32.mrf.mxu0
        %v3301 = vadd.f32 0.0, %v3300
        %v3302 = vpop.f32.mrf.mxu0
        %v3303 = vadd.f32 0.0, %v3302
        %3304 = vmatmul.bf16.gmra.mxu0 %v2086
        %v3305 = vpop.f32.mrf.mxu0
        %v3306 = vadd.f32 0.0, %v3305
        %v3307 = vpop.f32.mrf.mxu0
        %v3308 = vadd.f32 0.0, %v3307
        %3309 = vmatmul.bf16.gmra.mxu0 %v2087
        %v3310 = vpop.f32.mrf.mxu0
        %v3311 = vadd.f32 0.0, %v3310
        %v3312 = vpop.f32.mrf.mxu0
        %v3313 = vadd.f32 0.0, %v3312
        %3314 = vmatmul.bf16.gmra.mxu0 %v2088
        %v3315 = vpop.f32.mrf.mxu0
        %v3316 = vadd.f32 0.0, %v3315
        %v3317 = vpop.f32.mrf.mxu0
        %v3318 = vadd.f32 0.0, %v3317
        %3319 = vmatmul.bf16.gmra.mxu0 %v2089
        %v3320 = vpop.f32.mrf.mxu0
        %v3321 = vadd.f32 0.0, %v3320
        %v3322 = vpop.f32.mrf.mxu0
        %v3323 = vadd.f32 0.0, %v3322
        %3324 = vmatmul.bf16.gmra.mxu0 %v2090
        %v3325 = vpop.f32.mrf.mxu0
        %v3326 = vadd.f32 0.0, %v3325
        %v3327 = vpop.f32.mrf.mxu0
        %v3328 = vadd.f32 0.0, %v3327
        %3329 = vmatmul.bf16.gmra.mxu0 %v2091
        %v3330 = vpop.f32.mrf.mxu0
        %v3331 = vadd.f32 0.0, %v3330
        %v3332 = vpop.f32.mrf.mxu0
        %v3333 = vadd.f32 0.0, %v3332
        %3334 = vmatmul.bf16.gmra.mxu0 %v2092
        %v3335 = vpop.f32.mrf.mxu0
        %v3336 = vadd.f32 0.0, %v3335
        %v3337 = vpop.f32.mrf.mxu0
        %v3338 = vadd.f32 0.0, %v3337
        %3339 = vmatmul.bf16.gmra.mxu0 %v2093
        %v3340 = vpop.f32.mrf.mxu0
        %v3341 = vadd.f32 0.0, %v3340
        %v3342 = vpop.f32.mrf.mxu0
        %v3343 = vadd.f32 0.0, %v3342
        %3344 = vmatmul.bf16.gmra.mxu0 %v2094
        %v3345 = vpop.f32.mrf.mxu0
        %v3346 = vadd.f32 0.0, %v3345
        %v3347 = vpop.f32.mrf.mxu0
        %v3348 = vadd.f32 0.0, %v3347
        %3349 = vmatmul.bf16.gmra.mxu0 %v2095
        %v3350 = vpop.f32.mrf.mxu0
        %v3351 = vadd.f32 0.0, %v3350
        %v3352 = vpop.f32.mrf.mxu0
        %v3353 = vadd.f32 0.0, %v3352
        %3354 = vmatmul.bf16.gmra.mxu0 %v2096
        %v3355 = vpop.f32.mrf.mxu0
        %v3356 = vadd.f32 0.0, %v3355
        %v3357 = vpop.f32.mrf.mxu0
        %v3358 = vadd.f32 0.0, %v3357
        %3359 = vmatmul.bf16.gmra.mxu0 %v2097
        %v3360 = vpop.f32.mrf.mxu0
        %v3361 = vadd.f32 0.0, %v3360
        %v3362 = vpop.f32.mrf.mxu0
        %v3363 = vadd.f32 0.0, %v3362
        %3364 = vmatmul.bf16.gmra.mxu0 %v2098
        %v3365 = vpop.f32.mrf.mxu0
        %v3366 = vadd.f32 0.0, %v3365
        %v3367 = vpop.f32.mrf.mxu0
        %v3368 = vadd.f32 0.0, %v3367
        %3369 = vmatmul.bf16.gmra.mxu0 %v2099
        %v3370 = vpop.f32.mrf.mxu0
        %v3371 = vadd.f32 0.0, %v3370
        %v3372 = vpop.f32.mrf.mxu0
        %v3373 = vadd.f32 0.0, %v3372
        %3374 = vmatmul.bf16.gmra.mxu0 %v2100
        %v3375 = vpop.f32.mrf.mxu0
        %v3376 = vadd.f32 0.0, %v3375
        %v3377 = vpop.f32.mrf.mxu0
        %v3378 = vadd.f32 0.0, %v3377
        %3379 = vmatmul.bf16.gmra.mxu0 %v2101
        %v3380 = vpop.f32.mrf.mxu0
        %v3381 = vadd.f32 0.0, %v3380
        %v3382 = vpop.f32.mrf.mxu0
        %v3383 = vadd.f32 0.0, %v3382
        %3384 = vmatmul.bf16.gmra.mxu0 %v2102
        %v3385 = vpop.f32.mrf.mxu0
        %v3386 = vadd.f32 0.0, %v3385
        %v3387 = vpop.f32.mrf.mxu0
        %v3388 = vadd.f32 0.0, %v3387
        %3389 = vmatmul.bf16.gmra.mxu0 %v2103
        %v3390 = vpop.f32.mrf.mxu0
        %v3391 = vadd.f32 0.0, %v3390
        %v3392 = vpop.f32.mrf.mxu0
        %v3393 = vadd.f32 0.0, %v3392
        %3394 = vmatmul.bf16.gmra.mxu0 %v2104
        %v3395 = vpop.f32.mrf.mxu0
        %v3396 = vadd.f32 0.0, %v3395
        %v3397 = vpop.f32.mrf.mxu0
        %v3398 = vadd.f32 0.0, %v3397
        %3399 = vmatmul.bf16.gmra.mxu0 %v2105
        %v3400 = vpop.f32.mrf.mxu0
        %v3401 = vadd.f32 0.0, %v3400
        %v3402 = vpop.f32.mrf.mxu0
        %v3403 = vadd.f32 0.0, %v3402
        %3404 = vmatmul.bf16.gmra.mxu0 %v2106
        %v3405 = vpop.f32.mrf.mxu0
        %v3406 = vadd.f32 0.0, %v3405
        %v3407 = vpop.f32.mrf.mxu0
        %v3408 = vadd.f32 0.0, %v3407
        %3409 = vmatmul.bf16.gmra.mxu0 %v2107
        %v3410 = vpop.f32.mrf.mxu0
        %v3411 = vadd.f32 0.0, %v3410
        %v3412 = vpop.f32.mrf.mxu0
        %v3413 = vadd.f32 0.0, %v3412
        %3414 = vmatmul.bf16.gmra.mxu0 %v2108
        %v3415 = vpop.f32.mrf.mxu0
        %v3416 = vadd.f32 0.0, %v3415
        %v3417 = vpop.f32.mrf.mxu0
        %v3418 = vadd.f32 0.0, %v3417
        %3419 = vmatmul.bf16.gmra.mxu0 %v2109
        %v3420 = vpop.f32.mrf.mxu0
        %v3421 = vadd.f32 0.0, %v3420
        %v3422 = vpop.f32.mrf.mxu0
        %v3423 = vadd.f32 0.0, %v3422
        %3424 = vmatmul.bf16.gmra.mxu0 %v2110
        %v3425 = vpop.f32.mrf.mxu0
        %v3426 = vadd.f32 0.0, %v3425
        %v3427 = vpop.f32.mrf.mxu0
        %v3428 = vadd.f32 0.0, %v3427
        %3429 = vmatmul.bf16.gmra.mxu0 %v2111
        %v3430 = vpop.f32.mrf.mxu0
        %v3431 = vadd.f32 0.0, %v3430
        %v3432 = vpop.f32.mrf.mxu0
        %v3433 = vadd.f32 0.0, %v3432
        %3434 = vmatmul.bf16.gmra.mxu0 %v2112
        %v3435 = vpop.f32.mrf.mxu0
        %v3436 = vadd.f32 0.0, %v3435
        %v3437 = vpop.f32.mrf.mxu0
        %v3438 = vadd.f32 0.0, %v3437
        %3439 = vmatmul.bf16.gmra.mxu0 %v2113
        %v3440 = vpop.f32.mrf.mxu0
        %v3441 = vadd.f32 0.0, %v3440
        %v3442 = vpop.f32.mrf.mxu0
        %v3443 = vadd.f32 0.0, %v3442
        %3444 = vmatmul.bf16.gmra.mxu0 %v2114
        %v3445 = vpop.f32.mrf.mxu0
        %v3446 = vadd.f32 0.0, %v3445
        %v3447 = vpop.f32.mrf.mxu0
        %v3448 = vadd.f32 0.0, %v3447
        %3449 = vmatmul.bf16.gmra.mxu0 %v2115
        %v3450 = vpop.f32.mrf.mxu0
        %v3451 = vadd.f32 0.0, %v3450
        %v3452 = vpop.f32.mrf.mxu0
        %v3453 = vadd.f32 0.0, %v3452
        %3454 = vmatmul.bf16.gmra.mxu0 %v2116
        %v3455 = vpop.f32.mrf.mxu0
        %v3456 = vadd.f32 0.0, %v3455
        %v3457 = vpop.f32.mrf.mxu0
        %v3458 = vadd.f32 0.0, %v3457
        %3459 = vmatmul.bf16.gmra.mxu0 %v2117
        %v3460 = vpop.f32.mrf.mxu0
        %v3461 = vadd.f32 0.0, %v3460
        %v3462 = vpop.f32.mrf.mxu0
        %v3463 = vadd.f32 0.0, %v3462
        %3464 = vmatmul.bf16.gmra.mxu0 %v2118
        %v3465 = vpop.f32.mrf.mxu0
        %v3466 = vadd.f32 0.0, %v3465
        %v3467 = vpop.f32.mrf.mxu0
        %v3468 = vadd.f32 0.0, %v3467
        %3469 = vmatmul.bf16.gmra.mxu0 %v2119
        %v3470 = vpop.f32.mrf.mxu0
        %v3471 = vadd.f32 0.0, %v3470
        %v3472 = vpop.f32.mrf.mxu0
        %v3473 = vadd.f32 0.0, %v3472
        %3474 = vmatmul.bf16.gmra.mxu0 %v2120
        %v3475 = vpop.f32.mrf.mxu0
        %v3476 = vadd.f32 0.0, %v3475
        %v3477 = vpop.f32.mrf.mxu0
        %v3478 = vadd.f32 0.0, %v3477
        %3479 = vmatmul.bf16.gmra.mxu0 %v2121
        %v3480 = vpop.f32.mrf.mxu0
        %v3481 = vadd.f32 0.0, %v3480
        %v3482 = vpop.f32.mrf.mxu0
        %v3483 = vadd.f32 0.0, %v3482
        %3484 = vmatmul.bf16.gmra.mxu0 %v2122
        %v3485 = vpop.f32.mrf.mxu0
        %v3486 = vadd.f32 0.0, %v3485
        %v3487 = vpop.f32.mrf.mxu0
        %v3488 = vadd.f32 0.0, %v3487
        %3489 = vmatmul.bf16.gmra.mxu0 %v2123
        %v3490 = vpop.f32.mrf.mxu0
        %v3491 = vadd.f32 0.0, %v3490
        %v3492 = vpop.f32.mrf.mxu0
        %v3493 = vadd.f32 0.0, %v3492
        %3494 = vdwg.mxu0
        %3495 = vmatpush.bf16.msra.mxu0 %v2439
        %3496 = vmatpush.bf16.msra.mxu0 %v2431
        %3497 = vmatpush.bf16.msra.mxu0 %v2423
        %3498 = vmatpush.bf16.msra.mxu0 %v2415
        %3499 = vmatpush.bf16.msra.mxu0 %v2407
        %3500 = vmatpush.bf16.msra.mxu0 %v2399
        %3501 = vmatpush.bf16.msra.mxu0 %v2391
        %3502 = vmatpush.bf16.msra.mxu0 %v2383
        %3503 = vmatmul.bf16.gmra.mxu0 %v2060
        %v3504 = vpop.f32.mrf.mxu0
        %v3505 = vadd.f32 0.0, %v3504
        %v3506 = vpop.f32.mrf.mxu0
        %v3507 = vadd.f32 0.0, %v3506
        %3508 = vmatmul.bf16.gmra.mxu0 %v2061
        %v3509 = vpop.f32.mrf.mxu0
        %v3510 = vadd.f32 0.0, %v3509
        %v3511 = vpop.f32.mrf.mxu0
        %v3512 = vadd.f32 0.0, %v3511
        %3513 = vmatmul.bf16.gmra.mxu0 %v2062
        %v3514 = vpop.f32.mrf.mxu0
        %v3515 = vadd.f32 0.0, %v3514
        %v3516 = vpop.f32.mrf.mxu0
        %v3517 = vadd.f32 0.0, %v3516
        %3518 = vmatmul.bf16.gmra.mxu0 %v2063
        %v3519 = vpop.f32.mrf.mxu0
        %v3520 = vadd.f32 0.0, %v3519
        %v3521 = vpop.f32.mrf.mxu0
        %v3522 = vadd.f32 0.0, %v3521
        %3523 = vmatmul.bf16.gmra.mxu0 %v2064
        %v3524 = vpop.f32.mrf.mxu0
        %v3525 = vadd.f32 0.0, %v3524
        %v3526 = vpop.f32.mrf.mxu0
        %v3527 = vadd.f32 0.0, %v3526
        %3528 = vmatmul.bf16.gmra.mxu0 %v2065
        %v3529 = vpop.f32.mrf.mxu0
        %v3530 = vadd.f32 0.0, %v3529
        %v3531 = vpop.f32.mrf.mxu0
        %v3532 = vadd.f32 0.0, %v3531
        %3533 = vmatmul.bf16.gmra.mxu0 %v2066
        %v3534 = vpop.f32.mrf.mxu0
        %v3535 = vadd.f32 0.0, %v3534
        %v3536 = vpop.f32.mrf.mxu0
        %v3537 = vadd.f32 0.0, %v3536
        %3538 = vmatmul.bf16.gmra.mxu0 %v2067
        %v3539 = vpop.f32.mrf.mxu0
        %v3540 = vadd.f32 0.0, %v3539
        %v3541 = vpop.f32.mrf.mxu0
        %v3542 = vadd.f32 0.0, %v3541
        %3543 = vmatmul.bf16.gmra.mxu0 %v2068
        %v3544 = vpop.f32.mrf.mxu0
        %v3545 = vadd.f32 0.0, %v3544
        %v3546 = vpop.f32.mrf.mxu0
        %v3547 = vadd.f32 0.0, %v3546
        %3548 = vmatmul.bf16.gmra.mxu0 %v2069
        %v3549 = vpop.f32.mrf.mxu0
        %v3550 = vadd.f32 0.0, %v3549
        %v3551 = vpop.f32.mrf.mxu0
        %v3552 = vadd.f32 0.0, %v3551
        %3553 = vmatmul.bf16.gmra.mxu0 %v2070
        %v3554 = vpop.f32.mrf.mxu0
        %v3555 = vadd.f32 0.0, %v3554
        %v3556 = vpop.f32.mrf.mxu0
        %v3557 = vadd.f32 0.0, %v3556
        %3558 = vmatmul.bf16.gmra.mxu0 %v2071
        %v3559 = vpop.f32.mrf.mxu0
        %v3560 = vadd.f32 0.0, %v3559
        %v3561 = vpop.f32.mrf.mxu0
        %v3562 = vadd.f32 0.0, %v3561
        %3563 = vmatmul.bf16.gmra.mxu0 %v2072
        %v3564 = vpop.f32.mrf.mxu0
        %v3565 = vadd.f32 0.0, %v3564
        %v3566 = vpop.f32.mrf.mxu0
        %v3567 = vadd.f32 0.0, %v3566
        %3568 = vmatmul.bf16.gmra.mxu0 %v2073
        %v3569 = vpop.f32.mrf.mxu0
        %v3570 = vadd.f32 0.0, %v3569
        %v3571 = vpop.f32.mrf.mxu0
        %v3572 = vadd.f32 0.0, %v3571
        %3573 = vmatmul.bf16.gmra.mxu0 %v2074
        %v3574 = vpop.f32.mrf.mxu0
        %v3575 = vadd.f32 0.0, %v3574
        %v3576 = vpop.f32.mrf.mxu0
        %v3577 = vadd.f32 0.0, %v3576
        %3578 = vmatmul.bf16.gmra.mxu0 %v2075
        %v3579 = vpop.f32.mrf.mxu0
        %v3580 = vadd.f32 0.0, %v3579
        %v3581 = vpop.f32.mrf.mxu0
        %v3582 = vadd.f32 0.0, %v3581
        %3583 = vmatmul.bf16.gmra.mxu0 %v2076
        %v3584 = vpop.f32.mrf.mxu0
        %v3585 = vadd.f32 0.0, %v3584
        %v3586 = vpop.f32.mrf.mxu0
        %v3587 = vadd.f32 0.0, %v3586
        %3588 = vmatmul.bf16.gmra.mxu0 %v2077
        %v3589 = vpop.f32.mrf.mxu0
        %v3590 = vadd.f32 0.0, %v3589
        %v3591 = vpop.f32.mrf.mxu0
        %v3592 = vadd.f32 0.0, %v3591
        %3593 = vmatmul.bf16.gmra.mxu0 %v2078
        %v3594 = vpop.f32.mrf.mxu0
        %v3595 = vadd.f32 0.0, %v3594
        %v3596 = vpop.f32.mrf.mxu0
        %v3597 = vadd.f32 0.0, %v3596
        %3598 = vmatmul.bf16.gmra.mxu0 %v2079
        %v3599 = vpop.f32.mrf.mxu0
        %v3600 = vadd.f32 0.0, %v3599
        %v3601 = vpop.f32.mrf.mxu0
        %v3602 = vadd.f32 0.0, %v3601
        %3603 = vmatmul.bf16.gmra.mxu0 %v2080
        %v3604 = vpop.f32.mrf.mxu0
        %v3605 = vadd.f32 0.0, %v3604
        %v3606 = vpop.f32.mrf.mxu0
        %v3607 = vadd.f32 0.0, %v3606
        %3608 = vmatmul.bf16.gmra.mxu0 %v2081
        %v3609 = vpop.f32.mrf.mxu0
        %v3610 = vadd.f32 0.0, %v3609
        %v3611 = vpop.f32.mrf.mxu0
        %v3612 = vadd.f32 0.0, %v3611
        %3613 = vmatmul.bf16.gmra.mxu0 %v2082
        %v3614 = vpop.f32.mrf.mxu0
        %v3615 = vadd.f32 0.0, %v3614
        %v3616 = vpop.f32.mrf.mxu0
        %v3617 = vadd.f32 0.0, %v3616
        %3618 = vmatmul.bf16.gmra.mxu0 %v2083
        %v3619 = vpop.f32.mrf.mxu0
        %v3620 = vadd.f32 0.0, %v3619
        %v3621 = vpop.f32.mrf.mxu0
        %v3622 = vadd.f32 0.0, %v3621
        %3623 = vmatmul.bf16.gmra.mxu0 %v2084
        %v3624 = vpop.f32.mrf.mxu0
        %v3625 = vadd.f32 0.0, %v3624
        %v3626 = vpop.f32.mrf.mxu0
        %v3627 = vadd.f32 0.0, %v3626
        %3628 = vmatmul.bf16.gmra.mxu0 %v2085
        %v3629 = vpop.f32.mrf.mxu0
        %v3630 = vadd.f32 0.0, %v3629
        %v3631 = vpop.f32.mrf.mxu0
        %v3632 = vadd.f32 0.0, %v3631
        %3633 = vmatmul.bf16.gmra.mxu0 %v2086
        %v3634 = vpop.f32.mrf.mxu0
        %v3635 = vadd.f32 0.0, %v3634
        %v3636 = vpop.f32.mrf.mxu0
        %v3637 = vadd.f32 0.0, %v3636
        %3638 = vmatmul.bf16.gmra.mxu0 %v2087
        %v3639 = vpop.f32.mrf.mxu0
        %v3640 = vadd.f32 0.0, %v3639
        %v3641 = vpop.f32.mrf.mxu0
        %v3642 = vadd.f32 0.0, %v3641
        %3643 = vmatmul.bf16.gmra.mxu0 %v2088
        %v3644 = vpop.f32.mrf.mxu0
        %v3645 = vadd.f32 0.0, %v3644
        %v3646 = vpop.f32.mrf.mxu0
        %v3647 = vadd.f32 0.0, %v3646
        %3648 = vmatmul.bf16.gmra.mxu0 %v2089
        %v3649 = vpop.f32.mrf.mxu0
        %v3650 = vadd.f32 0.0, %v3649
        %v3651 = vpop.f32.mrf.mxu0
        %v3652 = vadd.f32 0.0, %v3651
        %3653 = vmatmul.bf16.gmra.mxu0 %v2090
        %v3654 = vpop.f32.mrf.mxu0
        %v3655 = vadd.f32 0.0, %v3654
        %v3656 = vpop.f32.mrf.mxu0
        %v3657 = vadd.f32 0.0, %v3656
        %3658 = vmatmul.bf16.gmra.mxu0 %v2091
        %v3659 = vpop.f32.mrf.mxu0
        %v3660 = vadd.f32 0.0, %v3659
        %v3661 = vpop.f32.mrf.mxu0
        %v3662 = vadd.f32 0.0, %v3661
        %3663 = vmatmul.bf16.gmra.mxu0 %v2092
        %v3664 = vpop.f32.mrf.mxu0
        %v3665 = vadd.f32 0.0, %v3664
        %v3666 = vpop.f32.mrf.mxu0
        %v3667 = vadd.f32 0.0, %v3666
        %3668 = vmatmul.bf16.gmra.mxu0 %v2093
        %v3669 = vpop.f32.mrf.mxu0
        %v3670 = vadd.f32 0.0, %v3669
        %v3671 = vpop.f32.mrf.mxu0
        %v3672 = vadd.f32 0.0, %v3671
        %3673 = vmatmul.bf16.gmra.mxu0 %v2094
        %v3674 = vpop.f32.mrf.mxu0
        %v3675 = vadd.f32 0.0, %v3674
        %v3676 = vpop.f32.mrf.mxu0
        %v3677 = vadd.f32 0.0, %v3676
        %3678 = vmatmul.bf16.gmra.mxu0 %v2095
        %v3679 = vpop.f32.mrf.mxu0
        %v3680 = vadd.f32 0.0, %v3679
        %v3681 = vpop.f32.mrf.mxu0
        %v3682 = vadd.f32 0.0, %v3681
        %3683 = vmatmul.bf16.gmra.mxu0 %v2096
        %v3684 = vpop.f32.mrf.mxu0
        %v3685 = vadd.f32 0.0, %v3684
        %v3686 = vpop.f32.mrf.mxu0
        %v3687 = vadd.f32 0.0, %v3686
        %3688 = vmatmul.bf16.gmra.mxu0 %v2097
        %v3689 = vpop.f32.mrf.mxu0
        %v3690 = vadd.f32 0.0, %v3689
        %v3691 = vpop.f32.mrf.mxu0
        %v3692 = vadd.f32 0.0, %v3691
        %3693 = vmatmul.bf16.gmra.mxu0 %v2098
        %v3694 = vpop.f32.mrf.mxu0
        %v3695 = vadd.f32 0.0, %v3694
        %v3696 = vpop.f32.mrf.mxu0
        %v3697 = vadd.f32 0.0, %v3696
        %3698 = vmatmul.bf16.gmra.mxu0 %v2099
        %v3699 = vpop.f32.mrf.mxu0
        %v3700 = vadd.f32 0.0, %v3699
        %v3701 = vpop.f32.mrf.mxu0
        %v3702 = vadd.f32 0.0, %v3701
        %3703 = vmatmul.bf16.gmra.mxu0 %v2100
        %v3704 = vpop.f32.mrf.mxu0
        %v3705 = vadd.f32 0.0, %v3704
        %v3706 = vpop.f32.mrf.mxu0
        %v3707 = vadd.f32 0.0, %v3706
        %3708 = vmatmul.bf16.gmra.mxu0 %v2101
        %v3709 = vpop.f32.mrf.mxu0
        %v3710 = vadd.f32 0.0, %v3709
        %v3711 = vpop.f32.mrf.mxu0
        %v3712 = vadd.f32 0.0, %v3711
        %3713 = vmatmul.bf16.gmra.mxu0 %v2102
        %v3714 = vpop.f32.mrf.mxu0
        %v3715 = vadd.f32 0.0, %v3714
        %v3716 = vpop.f32.mrf.mxu0
        %v3717 = vadd.f32 0.0, %v3716
        %3718 = vmatmul.bf16.gmra.mxu0 %v2103
        %v3719 = vpop.f32.mrf.mxu0
        %v3720 = vadd.f32 0.0, %v3719
        %v3721 = vpop.f32.mrf.mxu0
        %v3722 = vadd.f32 0.0, %v3721
        %3723 = vmatmul.bf16.gmra.mxu0 %v2104
        %v3724 = vpop.f32.mrf.mxu0
        %v3725 = vadd.f32 0.0, %v3724
        %v3726 = vpop.f32.mrf.mxu0
        %v3727 = vadd.f32 0.0, %v3726
        %3728 = vmatmul.bf16.gmra.mxu0 %v2105
        %v3729 = vpop.f32.mrf.mxu0
        %v3730 = vadd.f32 0.0, %v3729
        %v3731 = vpop.f32.mrf.mxu0
        %v3732 = vadd.f32 0.0, %v3731
        %3733 = vmatmul.bf16.gmra.mxu0 %v2106
        %v3734 = vpop.f32.mrf.mxu0
        %v3735 = vadd.f32 0.0, %v3734
        %v3736 = vpop.f32.mrf.mxu0
        %v3737 = vadd.f32 0.0, %v3736
        %3738 = vmatmul.bf16.gmra.mxu0 %v2107
        %v3739 = vpop.f32.mrf.mxu0
        %v3740 = vadd.f32 0.0, %v3739
        %v3741 = vpop.f32.mrf.mxu0
        %v3742 = vadd.f32 0.0, %v3741
        %3743 = vmatmul.bf16.gmra.mxu0 %v2108
        %v3744 = vpop.f32.mrf.mxu0
        %v3745 = vadd.f32 0.0, %v3744
        %v3746 = vpop.f32.mrf.mxu0
        %v3747 = vadd.f32 0.0, %v3746
        %3748 = vmatmul.bf16.gmra.mxu0 %v2109
        %v3749 = vpop.f32.mrf.mxu0
        %v3750 = vadd.f32 0.0, %v3749
        %v3751 = vpop.f32.mrf.mxu0
        %v3752 = vadd.f32 0.0, %v3751
        %3753 = vmatmul.bf16.gmra.mxu0 %v2110
        %v3754 = vpop.f32.mrf.mxu0
        %v3755 = vadd.f32 0.0, %v3754
        %v3756 = vpop.f32.mrf.mxu0
        %v3757 = vadd.f32 0.0, %v3756
        %3758 = vmatmul.bf16.gmra.mxu0 %v2111
        %v3759 = vpop.f32.mrf.mxu0
        %v3760 = vadd.f32 0.0, %v3759
        %v3761 = vpop.f32.mrf.mxu0
        %v3762 = vadd.f32 0.0, %v3761
        %3763 = vmatmul.bf16.gmra.mxu0 %v2112
        %v3764 = vpop.f32.mrf.mxu0
        %v3765 = vadd.f32 0.0, %v3764
        %v3766 = vpop.f32.mrf.mxu0
        %v3767 = vadd.f32 0.0, %v3766
        %3768 = vmatmul.bf16.gmra.mxu0 %v2113
        %v3769 = vpop.f32.mrf.mxu0
        %v3770 = vadd.f32 0.0, %v3769
        %v3771 = vpop.f32.mrf.mxu0
        %v3772 = vadd.f32 0.0, %v3771
        %3773 = vmatmul.bf16.gmra.mxu0 %v2114
        %v3774 = vpop.f32.mrf.mxu0
        %v3775 = vadd.f32 0.0, %v3774
        %v3776 = vpop.f32.mrf.mxu0
        %v3777 = vadd.f32 0.0, %v3776
        %3778 = vmatmul.bf16.gmra.mxu0 %v2115
        %v3779 = vpop.f32.mrf.mxu0
        %v3780 = vadd.f32 0.0, %v3779
        %v3781 = vpop.f32.mrf.mxu0
        %v3782 = vadd.f32 0.0, %v3781
        %3783 = vmatmul.bf16.gmra.mxu0 %v2116
        %v3784 = vpop.f32.mrf.mxu0
        %v3785 = vadd.f32 0.0, %v3784
        %v3786 = vpop.f32.mrf.mxu0
        %v3787 = vadd.f32 0.0, %v3786
        %3788 = vmatmul.bf16.gmra.mxu0 %v2117
        %v3789 = vpop.f32.mrf.mxu0
        %v3790 = vadd.f32 0.0, %v3789
        %v3791 = vpop.f32.mrf.mxu0
        %v3792 = vadd.f32 0.0, %v3791
        %3793 = vmatmul.bf16.gmra.mxu0 %v2118
        %v3794 = vpop.f32.mrf.mxu0
        %v3795 = vadd.f32 0.0, %v3794
        %v3796 = vpop.f32.mrf.mxu0
        %v3797 = vadd.f32 0.0, %v3796
        %3798 = vmatmul.bf16.gmra.mxu0 %v2119
        %v3799 = vpop.f32.mrf.mxu0
        %v3800 = vadd.f32 0.0, %v3799
        %v3801 = vpop.f32.mrf.mxu0
        %v3802 = vadd.f32 0.0, %v3801
        %3803 = vmatmul.bf16.gmra.mxu0 %v2120
        %v3804 = vpop.f32.mrf.mxu0
        %v3805 = vadd.f32 0.0, %v3804
        %v3806 = vpop.f32.mrf.mxu0
        %v3807 = vadd.f32 0.0, %v3806
        %3808 = vmatmul.bf16.gmra.mxu0 %v2121
        %v3809 = vpop.f32.mrf.mxu0
        %v3810 = vadd.f32 0.0, %v3809
        %v3811 = vpop.f32.mrf.mxu0
        %v3812 = vadd.f32 0.0, %v3811
        %3813 = vmatmul.bf16.gmra.mxu0 %v2122
        %v3814 = vpop.f32.mrf.mxu0
        %v3815 = vadd.f32 0.0, %v3814
        %v3816 = vpop.f32.mrf.mxu0
        %v3817 = vadd.f32 0.0, %v3816
        %3818 = vmatmul.bf16.gmra.mxu0 %v2123
        %v3819 = vpop.f32.mrf.mxu0
        %v3820 = vadd.f32 0.0, %v3819
        %v3821 = vpop.f32.mrf.mxu0
        %v3822 = vadd.f32 0.0, %v3821
        %3823 = vdwg.mxu0
        %3824 = vmatpush.bf16.msra.mxu0 %v2440
        %3825 = vmatpush.bf16.msra.mxu0 %v2432
        %3826 = vmatpush.bf16.msra.mxu0 %v2424
        %3827 = vmatpush.bf16.msra.mxu0 %v2416
        %3828 = vmatpush.bf16.msra.mxu0 %v2408
        %3829 = vmatpush.bf16.msra.mxu0 %v2400
        %3830 = vmatpush.bf16.msra.mxu0 %v2392
        %3831 = vmatpush.bf16.msra.mxu0 %v2384
        %3832 = vmatmul.bf16.gmra.mxu0 %v2060
        %v3833 = vpop.f32.mrf.mxu0
        %v3834 = vadd.f32 0.0, %v3833
        %v3835 = vpop.f32.mrf.mxu0
        %v3836 = vadd.f32 0.0, %v3835
        %3837 = vmatmul.bf16.gmra.mxu0 %v2061
        %v3838 = vpop.f32.mrf.mxu0
        %v3839 = vadd.f32 0.0, %v3838
        %v3840 = vpop.f32.mrf.mxu0
        %v3841 = vadd.f32 0.0, %v3840
        %3842 = vmatmul.bf16.gmra.mxu0 %v2062
        %v3843 = vpop.f32.mrf.mxu0
        %v3844 = vadd.f32 0.0, %v3843
        %v3845 = vpop.f32.mrf.mxu0
        %v3846 = vadd.f32 0.0, %v3845
        %3847 = vmatmul.bf16.gmra.mxu0 %v2063
        %v3848 = vpop.f32.mrf.mxu0
        %v3849 = vadd.f32 0.0, %v3848
        %v3850 = vpop.f32.mrf.mxu0
        %v3851 = vadd.f32 0.0, %v3850
        %3852 = vmatmul.bf16.gmra.mxu0 %v2064
        %v3853 = vpop.f32.mrf.mxu0
        %v3854 = vadd.f32 0.0, %v3853
        %v3855 = vpop.f32.mrf.mxu0
        %v3856 = vadd.f32 0.0, %v3855
        %3857 = vmatmul.bf16.gmra.mxu0 %v2065
        %v3858 = vpop.f32.mrf.mxu0
        %v3859 = vadd.f32 0.0, %v3858
        %v3860 = vpop.f32.mrf.mxu0
        %v3861 = vadd.f32 0.0, %v3860
        %3862 = vmatmul.bf16.gmra.mxu0 %v2066
        %v3863 = vpop.f32.mrf.mxu0
        %v3864 = vadd.f32 0.0, %v3863
        %v3865 = vpop.f32.mrf.mxu0
        %v3866 = vadd.f32 0.0, %v3865
        %3867 = vmatmul.bf16.gmra.mxu0 %v2067
        %v3868 = vpop.f32.mrf.mxu0
        %v3869 = vadd.f32 0.0, %v3868
        %v3870 = vpop.f32.mrf.mxu0
        %v3871 = vadd.f32 0.0, %v3870
        %3872 = vmatmul.bf16.gmra.mxu0 %v2068
        %v3873 = vpop.f32.mrf.mxu0
        %v3874 = vadd.f32 0.0, %v3873
        %v3875 = vpop.f32.mrf.mxu0
        %v3876 = vadd.f32 0.0, %v3875
        %3877 = vmatmul.bf16.gmra.mxu0 %v2069
        %v3878 = vpop.f32.mrf.mxu0
        %v3879 = vadd.f32 0.0, %v3878
        %v3880 = vpop.f32.mrf.mxu0
        %v3881 = vadd.f32 0.0, %v3880
        %3882 = vmatmul.bf16.gmra.mxu0 %v2070
        %v3883 = vpop.f32.mrf.mxu0
        %v3884 = vadd.f32 0.0, %v3883
        %v3885 = vpop.f32.mrf.mxu0
        %v3886 = vadd.f32 0.0, %v3885
        %3887 = vmatmul.bf16.gmra.mxu0 %v2071
        %v3888 = vpop.f32.mrf.mxu0
        %v3889 = vadd.f32 0.0, %v3888
        %v3890 = vpop.f32.mrf.mxu0
        %v3891 = vadd.f32 0.0, %v3890
        %3892 = vmatmul.bf16.gmra.mxu0 %v2072
        %v3893 = vpop.f32.mrf.mxu0
        %v3894 = vadd.f32 0.0, %v3893
        %v3895 = vpop.f32.mrf.mxu0
        %v3896 = vadd.f32 0.0, %v3895
        %3897 = vmatmul.bf16.gmra.mxu0 %v2073
        %v3898 = vpop.f32.mrf.mxu0
        %v3899 = vadd.f32 0.0, %v3898
        %v3900 = vpop.f32.mrf.mxu0
        %v3901 = vadd.f32 0.0, %v3900
        %3902 = vmatmul.bf16.gmra.mxu0 %v2074
        %v3903 = vpop.f32.mrf.mxu0
        %v3904 = vadd.f32 0.0, %v3903
        %v3905 = vpop.f32.mrf.mxu0
        %v3906 = vadd.f32 0.0, %v3905
        %3907 = vmatmul.bf16.gmra.mxu0 %v2075
        %v3908 = vpop.f32.mrf.mxu0
        %v3909 = vadd.f32 0.0, %v3908
        %v3910 = vpop.f32.mrf.mxu0
        %v3911 = vadd.f32 0.0, %v3910
        %3912 = vmatmul.bf16.gmra.mxu0 %v2076
        %v3913 = vpop.f32.mrf.mxu0
        %v3914 = vadd.f32 0.0, %v3913
        %v3915 = vpop.f32.mrf.mxu0
        %v3916 = vadd.f32 0.0, %v3915
        %3917 = vmatmul.bf16.gmra.mxu0 %v2077
        %v3918 = vpop.f32.mrf.mxu0
        %v3919 = vadd.f32 0.0, %v3918
        %v3920 = vpop.f32.mrf.mxu0
        %v3921 = vadd.f32 0.0, %v3920
        %3922 = vmatmul.bf16.gmra.mxu0 %v2078
        %v3923 = vpop.f32.mrf.mxu0
        %v3924 = vadd.f32 0.0, %v3923
        %v3925 = vpop.f32.mrf.mxu0
        %v3926 = vadd.f32 0.0, %v3925
        %3927 = vmatmul.bf16.gmra.mxu0 %v2079
        %v3928 = vpop.f32.mrf.mxu0
        %v3929 = vadd.f32 0.0, %v3928
        %v3930 = vpop.f32.mrf.mxu0
        %v3931 = vadd.f32 0.0, %v3930
        %3932 = vmatmul.bf16.gmra.mxu0 %v2080
        %v3933 = vpop.f32.mrf.mxu0
        %v3934 = vadd.f32 0.0, %v3933
        %v3935 = vpop.f32.mrf.mxu0
        %v3936 = vadd.f32 0.0, %v3935
        %3937 = vmatmul.bf16.gmra.mxu0 %v2081
        %v3938 = vpop.f32.mrf.mxu0
        %v3939 = vadd.f32 0.0, %v3938
        %v3940 = vpop.f32.mrf.mxu0
        %v3941 = vadd.f32 0.0, %v3940
        %3942 = vmatmul.bf16.gmra.mxu0 %v2082
        %v3943 = vpop.f32.mrf.mxu0
        %v3944 = vadd.f32 0.0, %v3943
        %v3945 = vpop.f32.mrf.mxu0
        %v3946 = vadd.f32 0.0, %v3945
        %3947 = vmatmul.bf16.gmra.mxu0 %v2083
        %v3948 = vpop.f32.mrf.mxu0
        %v3949 = vadd.f32 0.0, %v3948
        %v3950 = vpop.f32.mrf.mxu0
        %v3951 = vadd.f32 0.0, %v3950
        %3952 = vmatmul.bf16.gmra.mxu0 %v2084
        %v3953 = vpop.f32.mrf.mxu0
        %v3954 = vadd.f32 0.0, %v3953
        %v3955 = vpop.f32.mrf.mxu0
        %v3956 = vadd.f32 0.0, %v3955
        %3957 = vmatmul.bf16.gmra.mxu0 %v2085
        %v3958 = vpop.f32.mrf.mxu0
        %v3959 = vadd.f32 0.0, %v3958
        %v3960 = vpop.f32.mrf.mxu0
        %v3961 = vadd.f32 0.0, %v3960
        %3962 = vmatmul.bf16.gmra.mxu0 %v2086
        %v3963 = vpop.f32.mrf.mxu0
        %v3964 = vadd.f32 0.0, %v3963
        %v3965 = vpop.f32.mrf.mxu0
        %v3966 = vadd.f32 0.0, %v3965
        %3967 = vmatmul.bf16.gmra.mxu0 %v2087
        %v3968 = vpop.f32.mrf.mxu0
        %v3969 = vadd.f32 0.0, %v3968
        %v3970 = vpop.f32.mrf.mxu0
        %v3971 = vadd.f32 0.0, %v3970
        %3972 = vmatmul.bf16.gmra.mxu0 %v2088
        %v3973 = vpop.f32.mrf.mxu0
        %v3974 = vadd.f32 0.0, %v3973
        %v3975 = vpop.f32.mrf.mxu0
        %v3976 = vadd.f32 0.0, %v3975
        %3977 = vmatmul.bf16.gmra.mxu0 %v2089
        %v3978 = vpop.f32.mrf.mxu0
        %v3979 = vadd.f32 0.0, %v3978
        %v3980 = vpop.f32.mrf.mxu0
        %v3981 = vadd.f32 0.0, %v3980
        %3982 = vmatmul.bf16.gmra.mxu0 %v2090
        %v3983 = vpop.f32.mrf.mxu0
        %v3984 = vadd.f32 0.0, %v3983
        %v3985 = vpop.f32.mrf.mxu0
        %v3986 = vadd.f32 0.0, %v3985
        %3987 = vmatmul.bf16.gmra.mxu0 %v2091
        %v3988 = vpop.f32.mrf.mxu0
        %v3989 = vadd.f32 0.0, %v3988
        %v3990 = vpop.f32.mrf.mxu0
        %v3991 = vadd.f32 0.0, %v3990
        %3992 = vmatmul.bf16.gmra.mxu0 %v2092
        %v3993 = vpop.f32.mrf.mxu0
        %v3994 = vadd.f32 0.0, %v3993
        %v3995 = vpop.f32.mrf.mxu0
        %v3996 = vadd.f32 0.0, %v3995
        %3997 = vmatmul.bf16.gmra.mxu0 %v2093
        %v3998 = vpop.f32.mrf.mxu0
        %v3999 = vadd.f32 0.0, %v3998
        %v4000 = vpop.f32.mrf.mxu0
        %v4001 = vadd.f32 0.0, %v4000
        %4002 = vmatmul.bf16.gmra.mxu0 %v2094
        %v4003 = vpop.f32.mrf.mxu0
        %v4004 = vadd.f32 0.0, %v4003
        %v4005 = vpop.f32.mrf.mxu0
        %v4006 = vadd.f32 0.0, %v4005
        %4007 = vmatmul.bf16.gmra.mxu0 %v2095
        %v4008 = vpop.f32.mrf.mxu0
        %v4009 = vadd.f32 0.0, %v4008
        %v4010 = vpop.f32.mrf.mxu0
        %v4011 = vadd.f32 0.0, %v4010
        %4012 = vmatmul.bf16.gmra.mxu0 %v2096
        %v4013 = vpop.f32.mrf.mxu0
        %v4014 = vadd.f32 0.0, %v4013
        %v4015 = vpop.f32.mrf.mxu0
        %v4016 = vadd.f32 0.0, %v4015
        %4017 = vmatmul.bf16.gmra.mxu0 %v2097
        %v4018 = vpop.f32.mrf.mxu0
        %v4019 = vadd.f32 0.0, %v4018
        %v4020 = vpop.f32.mrf.mxu0
        %v4021 = vadd.f32 0.0, %v4020
        %4022 = vmatmul.bf16.gmra.mxu0 %v2098
        %v4023 = vpop.f32.mrf.mxu0
        %v4024 = vadd.f32 0.0, %v4023
        %v4025 = vpop.f32.mrf.mxu0
        %v4026 = vadd.f32 0.0, %v4025
        %4027 = vmatmul.bf16.gmra.mxu0 %v2099
        %v4028 = vpop.f32.mrf.mxu0
        %v4029 = vadd.f32 0.0, %v4028
        %v4030 = vpop.f32.mrf.mxu0
        %v4031 = vadd.f32 0.0, %v4030
        %4032 = vmatmul.bf16.gmra.mxu0 %v2100
        %v4033 = vpop.f32.mrf.mxu0
        %v4034 = vadd.f32 0.0, %v4033
        %v4035 = vpop.f32.mrf.mxu0
        %v4036 = vadd.f32 0.0, %v4035
        %4037 = vmatmul.bf16.gmra.mxu0 %v2101
        %v4038 = vpop.f32.mrf.mxu0
        %v4039 = vadd.f32 0.0, %v4038
        %v4040 = vpop.f32.mrf.mxu0
        %v4041 = vadd.f32 0.0, %v4040
        %4042 = vmatmul.bf16.gmra.mxu0 %v2102
        %v4043 = vpop.f32.mrf.mxu0
        %v4044 = vadd.f32 0.0, %v4043
        %v4045 = vpop.f32.mrf.mxu0
        %v4046 = vadd.f32 0.0, %v4045
        %4047 = vmatmul.bf16.gmra.mxu0 %v2103
        %v4048 = vpop.f32.mrf.mxu0
        %v4049 = vadd.f32 0.0, %v4048
        %v4050 = vpop.f32.mrf.mxu0
        %v4051 = vadd.f32 0.0, %v4050
        %4052 = vmatmul.bf16.gmra.mxu0 %v2104
        %v4053 = vpop.f32.mrf.mxu0
        %v4054 = vadd.f32 0.0, %v4053
        %v4055 = vpop.f32.mrf.mxu0
        %v4056 = vadd.f32 0.0, %v4055
        %4057 = vmatmul.bf16.gmra.mxu0 %v2105
        %v4058 = vpop.f32.mrf.mxu0
        %v4059 = vadd.f32 0.0, %v4058
        %v4060 = vpop.f32.mrf.mxu0
        %v4061 = vadd.f32 0.0, %v4060
        %4062 = vmatmul.bf16.gmra.mxu0 %v2106
        %v4063 = vpop.f32.mrf.mxu0
        %v4064 = vadd.f32 0.0, %v4063
        %v4065 = vpop.f32.mrf.mxu0
        %v4066 = vadd.f32 0.0, %v4065
        %4067 = vmatmul.bf16.gmra.mxu0 %v2107
        %v4068 = vpop.f32.mrf.mxu0
        %v4069 = vadd.f32 0.0, %v4068
        %v4070 = vpop.f32.mrf.mxu0
        %v4071 = vadd.f32 0.0, %v4070
        %4072 = vmatmul.bf16.gmra.mxu0 %v2108
        %v4073 = vpop.f32.mrf.mxu0
        %v4074 = vadd.f32 0.0, %v4073
        %v4075 = vpop.f32.mrf.mxu0
        %v4076 = vadd.f32 0.0, %v4075
        %4077 = vmatmul.bf16.gmra.mxu0 %v2109
        %v4078 = vpop.f32.mrf.mxu0
        %v4079 = vadd.f32 0.0, %v4078
        %v4080 = vpop.f32.mrf.mxu0
        %v4081 = vadd.f32 0.0, %v4080
        %4082 = vmatmul.bf16.gmra.mxu0 %v2110
        %v4083 = vpop.f32.mrf.mxu0
        %v4084 = vadd.f32 0.0, %v4083
        %v4085 = vpop.f32.mrf.mxu0
        %v4086 = vadd.f32 0.0, %v4085
        %4087 = vmatmul.bf16.gmra.mxu0 %v2111
        %v4088 = vpop.f32.mrf.mxu0
        %v4089 = vadd.f32 0.0, %v4088
        %v4090 = vpop.f32.mrf.mxu0
        %v4091 = vadd.f32 0.0, %v4090
        %4092 = vmatmul.bf16.gmra.mxu0 %v2112
        %v4093 = vpop.f32.mrf.mxu0
        %v4094 = vadd.f32 0.0, %v4093
        %v4095 = vpop.f32.mrf.mxu0
        %v4096 = vadd.f32 0.0, %v4095
        %4097 = vmatmul.bf16.gmra.mxu0 %v2113
        %v4098 = vpop.f32.mrf.mxu0
        %v4099 = vadd.f32 0.0, %v4098
        %v4100 = vpop.f32.mrf.mxu0
        %v4101 = vadd.f32 0.0, %v4100
        %4102 = vmatmul.bf16.gmra.mxu0 %v2114
        %v4103 = vpop.f32.mrf.mxu0
        %v4104 = vadd.f32 0.0, %v4103
        %v4105 = vpop.f32.mrf.mxu0
        %v4106 = vadd.f32 0.0, %v4105
        %4107 = vmatmul.bf16.gmra.mxu0 %v2115
        %v4108 = vpop.f32.mrf.mxu0
        %v4109 = vadd.f32 0.0, %v4108
        %v4110 = vpop.f32.mrf.mxu0
        %v4111 = vadd.f32 0.0, %v4110
        %4112 = vmatmul.bf16.gmra.mxu0 %v2116
        %v4113 = vpop.f32.mrf.mxu0
        %v4114 = vadd.f32 0.0, %v4113
        %v4115 = vpop.f32.mrf.mxu0
        %v4116 = vadd.f32 0.0, %v4115
        %4117 = vmatmul.bf16.gmra.mxu0 %v2117
        %v4118 = vpop.f32.mrf.mxu0
        %v4119 = vadd.f32 0.0, %v4118
        %v4120 = vpop.f32.mrf.mxu0
        %v4121 = vadd.f32 0.0, %v4120
        %4122 = vmatmul.bf16.gmra.mxu0 %v2118
        %v4123 = vpop.f32.mrf.mxu0
        %v4124 = vadd.f32 0.0, %v4123
        %v4125 = vpop.f32.mrf.mxu0
        %v4126 = vadd.f32 0.0, %v4125
        %4127 = vmatmul.bf16.gmra.mxu0 %v2119
        %v4128 = vpop.f32.mrf.mxu0
        %v4129 = vadd.f32 0.0, %v4128
        %v4130 = vpop.f32.mrf.mxu0
        %v4131 = vadd.f32 0.0, %v4130
        %4132 = vmatmul.bf16.gmra.mxu0 %v2120
        %v4133 = vpop.f32.mrf.mxu0
        %v4134 = vadd.f32 0.0, %v4133
        %v4135 = vpop.f32.mrf.mxu0
        %v4136 = vadd.f32 0.0, %v4135
        %4137 = vmatmul.bf16.gmra.mxu0 %v2121
        %v4138 = vpop.f32.mrf.mxu0
        %v4139 = vadd.f32 0.0, %v4138
        %v4140 = vpop.f32.mrf.mxu0
        %v4141 = vadd.f32 0.0, %v4140
        %4142 = vmatmul.bf16.gmra.mxu0 %v2122
        %v4143 = vpop.f32.mrf.mxu0
        %v4144 = vadd.f32 0.0, %v4143
        %v4145 = vpop.f32.mrf.mxu0
        %v4146 = vadd.f32 0.0, %v4145
        %4147 = vmatmul.bf16.gmra.mxu0 %v2123
        %v4148 = vpop.f32.mrf.mxu0
        %v4149 = vadd.f32 0.0, %v4148
        %v4150 = vpop.f32.mrf.mxu0
        %v4151 = vadd.f32 0.0, %v4150
        %4152 = vdwg.mxu0
        %4153 = vmatpush.bf16.msra.mxu0 %v2441
        %4154 = vmatpush.bf16.msra.mxu0 %v2433
        %4155 = vmatpush.bf16.msra.mxu0 %v2425
        %4156 = vmatpush.bf16.msra.mxu0 %v2417
        %4157 = vmatpush.bf16.msra.mxu0 %v2409
        %4158 = vmatpush.bf16.msra.mxu0 %v2401
        %4159 = vmatpush.bf16.msra.mxu0 %v2393
        %4160 = vmatpush.bf16.msra.mxu0 %v2385
        %4161 = vmatmul.bf16.gmra.mxu0 %v2060
        %v4162 = vpop.f32.mrf.mxu0
        %v4163 = vadd.f32 0.0, %v4162
        %v4164 = vpop.f32.mrf.mxu0
        %v4165 = vadd.f32 0.0, %v4164
        %4166 = vmatmul.bf16.gmra.mxu0 %v2061
        %v4167 = vpop.f32.mrf.mxu0
        %v4168 = vadd.f32 0.0, %v4167
        %v4169 = vpop.f32.mrf.mxu0
        %v4170 = vadd.f32 0.0, %v4169
        %4171 = vmatmul.bf16.gmra.mxu0 %v2062
        %v4172 = vpop.f32.mrf.mxu0
        %v4173 = vadd.f32 0.0, %v4172
        %v4174 = vpop.f32.mrf.mxu0
        %v4175 = vadd.f32 0.0, %v4174
        %4176 = vmatmul.bf16.gmra.mxu0 %v2063
        %v4177 = vpop.f32.mrf.mxu0
        %v4178 = vadd.f32 0.0, %v4177
        %v4179 = vpop.f32.mrf.mxu0
        %v4180 = vadd.f32 0.0, %v4179
        %4181 = vmatmul.bf16.gmra.mxu0 %v2064
        %v4182 = vpop.f32.mrf.mxu0
        %v4183 = vadd.f32 0.0, %v4182
        %v4184 = vpop.f32.mrf.mxu0
        %v4185 = vadd.f32 0.0, %v4184
        %4186 = vmatmul.bf16.gmra.mxu0 %v2065
        %v4187 = vpop.f32.mrf.mxu0
        %v4188 = vadd.f32 0.0, %v4187
        %v4189 = vpop.f32.mrf.mxu0
        %v4190 = vadd.f32 0.0, %v4189
        %4191 = vmatmul.bf16.gmra.mxu0 %v2066
        %v4192 = vpop.f32.mrf.mxu0
        %v4193 = vadd.f32 0.0, %v4192
        %v4194 = vpop.f32.mrf.mxu0
        %v4195 = vadd.f32 0.0, %v4194
        %4196 = vmatmul.bf16.gmra.mxu0 %v2067
        %v4197 = vpop.f32.mrf.mxu0
        %v4198 = vadd.f32 0.0, %v4197
        %v4199 = vpop.f32.mrf.mxu0
        %v4200 = vadd.f32 0.0, %v4199
        %4201 = vmatmul.bf16.gmra.mxu0 %v2068
        %v4202 = vpop.f32.mrf.mxu0
        %v4203 = vadd.f32 0.0, %v4202
        %v4204 = vpop.f32.mrf.mxu0
        %v4205 = vadd.f32 0.0, %v4204
        %4206 = vmatmul.bf16.gmra.mxu0 %v2069
        %v4207 = vpop.f32.mrf.mxu0
        %v4208 = vadd.f32 0.0, %v4207
        %v4209 = vpop.f32.mrf.mxu0
        %v4210 = vadd.f32 0.0, %v4209
        %4211 = vmatmul.bf16.gmra.mxu0 %v2070
        %v4212 = vpop.f32.mrf.mxu0
        %v4213 = vadd.f32 0.0, %v4212
        %v4214 = vpop.f32.mrf.mxu0
        %v4215 = vadd.f32 0.0, %v4214
        %4216 = vmatmul.bf16.gmra.mxu0 %v2071
        %v4217 = vpop.f32.mrf.mxu0
        %v4218 = vadd.f32 0.0, %v4217
        %v4219 = vpop.f32.mrf.mxu0
        %v4220 = vadd.f32 0.0, %v4219
        %4221 = vmatmul.bf16.gmra.mxu0 %v2072
        %v4222 = vpop.f32.mrf.mxu0
        %v4223 = vadd.f32 0.0, %v4222
        %v4224 = vpop.f32.mrf.mxu0
        %v4225 = vadd.f32 0.0, %v4224
        %4226 = vmatmul.bf16.gmra.mxu0 %v2073
        %v4227 = vpop.f32.mrf.mxu0
        %v4228 = vadd.f32 0.0, %v4227
        %v4229 = vpop.f32.mrf.mxu0
        %v4230 = vadd.f32 0.0, %v4229
        %4231 = vmatmul.bf16.gmra.mxu0 %v2074
        %v4232 = vpop.f32.mrf.mxu0
        %v4233 = vadd.f32 0.0, %v4232
        %v4234 = vpop.f32.mrf.mxu0
        %v4235 = vadd.f32 0.0, %v4234
        %4236 = vmatmul.bf16.gmra.mxu0 %v2075
        %v4237 = vpop.f32.mrf.mxu0
        %v4238 = vadd.f32 0.0, %v4237
        %v4239 = vpop.f32.mrf.mxu0
        %v4240 = vadd.f32 0.0, %v4239
        %4241 = vmatmul.bf16.gmra.mxu0 %v2076
        %v4242 = vpop.f32.mrf.mxu0
        %v4243 = vadd.f32 0.0, %v4242
        %v4244 = vpop.f32.mrf.mxu0
        %v4245 = vadd.f32 0.0, %v4244
        %4246 = vmatmul.bf16.gmra.mxu0 %v2077
        %v4247 = vpop.f32.mrf.mxu0
        %v4248 = vadd.f32 0.0, %v4247
        %v4249 = vpop.f32.mrf.mxu0
        %v4250 = vadd.f32 0.0, %v4249
        %4251 = vmatmul.bf16.gmra.mxu0 %v2078
        %v4252 = vpop.f32.mrf.mxu0
        %v4253 = vadd.f32 0.0, %v4252
        %v4254 = vpop.f32.mrf.mxu0
        %v4255 = vadd.f32 0.0, %v4254
        %4256 = vmatmul.bf16.gmra.mxu0 %v2079
        %v4257 = vpop.f32.mrf.mxu0
        %v4258 = vadd.f32 0.0, %v4257
        %v4259 = vpop.f32.mrf.mxu0
        %v4260 = vadd.f32 0.0, %v4259
        %4261 = vmatmul.bf16.gmra.mxu0 %v2080
        %v4262 = vpop.f32.mrf.mxu0
        %v4263 = vadd.f32 0.0, %v4262
        %v4264 = vpop.f32.mrf.mxu0
        %v4265 = vadd.f32 0.0, %v4264
        %4266 = vmatmul.bf16.gmra.mxu0 %v2081
        %v4267 = vpop.f32.mrf.mxu0
        %v4268 = vadd.f32 0.0, %v4267
        %v4269 = vpop.f32.mrf.mxu0
        %v4270 = vadd.f32 0.0, %v4269
        %4271 = vmatmul.bf16.gmra.mxu0 %v2082
        %v4272 = vpop.f32.mrf.mxu0
        %v4273 = vadd.f32 0.0, %v4272
        %v4274 = vpop.f32.mrf.mxu0
        %v4275 = vadd.f32 0.0, %v4274
        %4276 = vmatmul.bf16.gmra.mxu0 %v2083
        %v4277 = vpop.f32.mrf.mxu0
        %v4278 = vadd.f32 0.0, %v4277
        %v4279 = vpop.f32.mrf.mxu0
        %v4280 = vadd.f32 0.0, %v4279
        %4281 = vmatmul.bf16.gmra.mxu0 %v2084
        %v4282 = vpop.f32.mrf.mxu0
        %v4283 = vadd.f32 0.0, %v4282
        %v4284 = vpop.f32.mrf.mxu0
        %v4285 = vadd.f32 0.0, %v4284
        %4286 = vmatmul.bf16.gmra.mxu0 %v2085
        %v4287 = vpop.f32.mrf.mxu0
        %v4288 = vadd.f32 0.0, %v4287
        %v4289 = vpop.f32.mrf.mxu0
        %v4290 = vadd.f32 0.0, %v4289
        %4291 = vmatmul.bf16.gmra.mxu0 %v2086
        %v4292 = vpop.f32.mrf.mxu0
        %v4293 = vadd.f32 0.0, %v4292
        %v4294 = vpop.f32.mrf.mxu0
        %v4295 = vadd.f32 0.0, %v4294
        %4296 = vmatmul.bf16.gmra.mxu0 %v2087
        %v4297 = vpop.f32.mrf.mxu0
        %v4298 = vadd.f32 0.0, %v4297
        %v4299 = vpop.f32.mrf.mxu0
        %v4300 = vadd.f32 0.0, %v4299
        %4301 = vmatmul.bf16.gmra.mxu0 %v2088
        %v4302 = vpop.f32.mrf.mxu0
        %v4303 = vadd.f32 0.0, %v4302
        %v4304 = vpop.f32.mrf.mxu0
        %v4305 = vadd.f32 0.0, %v4304
        %4306 = vmatmul.bf16.gmra.mxu0 %v2089
        %v4307 = vpop.f32.mrf.mxu0
        %v4308 = vadd.f32 0.0, %v4307
        %v4309 = vpop.f32.mrf.mxu0
        %v4310 = vadd.f32 0.0, %v4309
        %4311 = vmatmul.bf16.gmra.mxu0 %v2090
        %v4312 = vpop.f32.mrf.mxu0
        %v4313 = vadd.f32 0.0, %v4312
        %v4314 = vpop.f32.mrf.mxu0
        %v4315 = vadd.f32 0.0, %v4314
        %4316 = vmatmul.bf16.gmra.mxu0 %v2091
        %v4317 = vpop.f32.mrf.mxu0
        %v4318 = vadd.f32 0.0, %v4317
        %v4319 = vpop.f32.mrf.mxu0
        %v4320 = vadd.f32 0.0, %v4319
        %4321 = vmatmul.bf16.gmra.mxu0 %v2092
        %v4322 = vpop.f32.mrf.mxu0
        %v4323 = vadd.f32 0.0, %v4322
        %v4324 = vpop.f32.mrf.mxu0
        %v4325 = vadd.f32 0.0, %v4324
        %4326 = vmatmul.bf16.gmra.mxu0 %v2093
        %v4327 = vpop.f32.mrf.mxu0
        %v4328 = vadd.f32 0.0, %v4327
        %v4329 = vpop.f32.mrf.mxu0
        %v4330 = vadd.f32 0.0, %v4329
        %4331 = vmatmul.bf16.gmra.mxu0 %v2094
        %v4332 = vpop.f32.mrf.mxu0
        %v4333 = vadd.f32 0.0, %v4332
        %v4334 = vpop.f32.mrf.mxu0
        %v4335 = vadd.f32 0.0, %v4334
        %4336 = vmatmul.bf16.gmra.mxu0 %v2095
        %v4337 = vpop.f32.mrf.mxu0
        %v4338 = vadd.f32 0.0, %v4337
        %v4339 = vpop.f32.mrf.mxu0
        %v4340 = vadd.f32 0.0, %v4339
        %4341 = vmatmul.bf16.gmra.mxu0 %v2096
        %v4342 = vpop.f32.mrf.mxu0
        %v4343 = vadd.f32 0.0, %v4342
        %v4344 = vpop.f32.mrf.mxu0
        %v4345 = vadd.f32 0.0, %v4344
        %4346 = vmatmul.bf16.gmra.mxu0 %v2097
        %v4347 = vpop.f32.mrf.mxu0
        %v4348 = vadd.f32 0.0, %v4347
        %v4349 = vpop.f32.mrf.mxu0
        %v4350 = vadd.f32 0.0, %v4349
        %4351 = vmatmul.bf16.gmra.mxu0 %v2098
        %v4352 = vpop.f32.mrf.mxu0
        %v4353 = vadd.f32 0.0, %v4352
        %v4354 = vpop.f32.mrf.mxu0
        %v4355 = vadd.f32 0.0, %v4354
        %4356 = vmatmul.bf16.gmra.mxu0 %v2099
        %v4357 = vpop.f32.mrf.mxu0
        %v4358 = vadd.f32 0.0, %v4357
        %v4359 = vpop.f32.mrf.mxu0
        %v4360 = vadd.f32 0.0, %v4359
        %4361 = vmatmul.bf16.gmra.mxu0 %v2100
        %v4362 = vpop.f32.mrf.mxu0
        %v4363 = vadd.f32 0.0, %v4362
        %v4364 = vpop.f32.mrf.mxu0
        %v4365 = vadd.f32 0.0, %v4364
        %4366 = vmatmul.bf16.gmra.mxu0 %v2101
        %v4367 = vpop.f32.mrf.mxu0
        %v4368 = vadd.f32 0.0, %v4367
        %v4369 = vpop.f32.mrf.mxu0
        %v4370 = vadd.f32 0.0, %v4369
        %4371 = vmatmul.bf16.gmra.mxu0 %v2102
        %v4372 = vpop.f32.mrf.mxu0
        %v4373 = vadd.f32 0.0, %v4372
        %v4374 = vpop.f32.mrf.mxu0
        %v4375 = vadd.f32 0.0, %v4374
        %4376 = vmatmul.bf16.gmra.mxu0 %v2103
        %v4377 = vpop.f32.mrf.mxu0
        %v4378 = vadd.f32 0.0, %v4377
        %v4379 = vpop.f32.mrf.mxu0
        %v4380 = vadd.f32 0.0, %v4379
        %4381 = vmatmul.bf16.gmra.mxu0 %v2104
        %v4382 = vpop.f32.mrf.mxu0
        %v4383 = vadd.f32 0.0, %v4382
        %v4384 = vpop.f32.mrf.mxu0
        %v4385 = vadd.f32 0.0, %v4384
        %4386 = vmatmul.bf16.gmra.mxu0 %v2105
        %v4387 = vpop.f32.mrf.mxu0
        %v4388 = vadd.f32 0.0, %v4387
        %v4389 = vpop.f32.mrf.mxu0
        %v4390 = vadd.f32 0.0, %v4389
        %4391 = vmatmul.bf16.gmra.mxu0 %v2106
        %v4392 = vpop.f32.mrf.mxu0
        %v4393 = vadd.f32 0.0, %v4392
        %v4394 = vpop.f32.mrf.mxu0
        %v4395 = vadd.f32 0.0, %v4394
        %4396 = vmatmul.bf16.gmra.mxu0 %v2107
        %v4397 = vpop.f32.mrf.mxu0
        %v4398 = vadd.f32 0.0, %v4397
        %v4399 = vpop.f32.mrf.mxu0
        %v4400 = vadd.f32 0.0, %v4399
        %4401 = vmatmul.bf16.gmra.mxu0 %v2108
        %v4402 = vpop.f32.mrf.mxu0
        %v4403 = vadd.f32 0.0, %v4402
        %v4404 = vpop.f32.mrf.mxu0
        %v4405 = vadd.f32 0.0, %v4404
        %4406 = vmatmul.bf16.gmra.mxu0 %v2109
        %v4407 = vpop.f32.mrf.mxu0
        %v4408 = vadd.f32 0.0, %v4407
        %v4409 = vpop.f32.mrf.mxu0
        %v4410 = vadd.f32 0.0, %v4409
        %4411 = vmatmul.bf16.gmra.mxu0 %v2110
        %v4412 = vpop.f32.mrf.mxu0
        %v4413 = vadd.f32 0.0, %v4412
        %v4414 = vpop.f32.mrf.mxu0
        %v4415 = vadd.f32 0.0, %v4414
        %4416 = vmatmul.bf16.gmra.mxu0 %v2111
        %v4417 = vpop.f32.mrf.mxu0
        %v4418 = vadd.f32 0.0, %v4417
        %v4419 = vpop.f32.mrf.mxu0
        %v4420 = vadd.f32 0.0, %v4419
        %4421 = vmatmul.bf16.gmra.mxu0 %v2112
        %v4422 = vpop.f32.mrf.mxu0
        %v4423 = vadd.f32 0.0, %v4422
        %v4424 = vpop.f32.mrf.mxu0
        %v4425 = vadd.f32 0.0, %v4424
        %4426 = vmatmul.bf16.gmra.mxu0 %v2113
        %v4427 = vpop.f32.mrf.mxu0
        %v4428 = vadd.f32 0.0, %v4427
        %v4429 = vpop.f32.mrf.mxu0
        %v4430 = vadd.f32 0.0, %v4429
        %4431 = vmatmul.bf16.gmra.mxu0 %v2114
        %v4432 = vpop.f32.mrf.mxu0
        %v4433 = vadd.f32 0.0, %v4432
        %v4434 = vpop.f32.mrf.mxu0
        %v4435 = vadd.f32 0.0, %v4434
        %4436 = vmatmul.bf16.gmra.mxu0 %v2115
        %v4437 = vpop.f32.mrf.mxu0
        %v4438 = vadd.f32 0.0, %v4437
        %v4439 = vpop.f32.mrf.mxu0
        %v4440 = vadd.f32 0.0, %v4439
        %4441 = vmatmul.bf16.gmra.mxu0 %v2116
        %v4442 = vpop.f32.mrf.mxu0
        %v4443 = vadd.f32 0.0, %v4442
        %v4444 = vpop.f32.mrf.mxu0
        %v4445 = vadd.f32 0.0, %v4444
        %4446 = vmatmul.bf16.gmra.mxu0 %v2117
        %v4447 = vpop.f32.mrf.mxu0
        %v4448 = vadd.f32 0.0, %v4447
        %v4449 = vpop.f32.mrf.mxu0
        %v4450 = vadd.f32 0.0, %v4449
        %4451 = vmatmul.bf16.gmra.mxu0 %v2118
        %v4452 = vpop.f32.mrf.mxu0
        %v4453 = vadd.f32 0.0, %v4452
        %v4454 = vpop.f32.mrf.mxu0
        %v4455 = vadd.f32 0.0, %v4454
        %4456 = vmatmul.bf16.gmra.mxu0 %v2119
        %v4457 = vpop.f32.mrf.mxu0
        %v4458 = vadd.f32 0.0, %v4457
        %v4459 = vpop.f32.mrf.mxu0
        %v4460 = vadd.f32 0.0, %v4459
        %4461 = vmatmul.bf16.gmra.mxu0 %v2120
        %v4462 = vpop.f32.mrf.mxu0
        %v4463 = vadd.f32 0.0, %v4462
        %v4464 = vpop.f32.mrf.mxu0
        %v4465 = vadd.f32 0.0, %v4464
        %4466 = vmatmul.bf16.gmra.mxu0 %v2121
        %v4467 = vpop.f32.mrf.mxu0
        %v4468 = vadd.f32 0.0, %v4467
        %v4469 = vpop.f32.mrf.mxu0
        %v4470 = vadd.f32 0.0, %v4469
        %4471 = vmatmul.bf16.gmra.mxu0 %v2122
        %v4472 = vpop.f32.mrf.mxu0
        %v4473 = vadd.f32 0.0, %v4472
        %v4474 = vpop.f32.mrf.mxu0
        %v4475 = vadd.f32 0.0, %v4474
        %4476 = vmatmul.bf16.gmra.mxu0 %v2123
        %v4477 = vpop.f32.mrf.mxu0
        %v4478 = vadd.f32 0.0, %v4477
        %v4479 = vpop.f32.mrf.mxu0
        %v4480 = vadd.f32 0.0, %v4479
        %4481 = vdwg.mxu0
        %4482 = vmatpush.bf16.msra.mxu0 %v2442
        %4483 = vmatpush.bf16.msra.mxu0 %v2434
        %4484 = vmatpush.bf16.msra.mxu0 %v2426
        %4485 = vmatpush.bf16.msra.mxu0 %v2418
        %4486 = vmatpush.bf16.msra.mxu0 %v2410
        %4487 = vmatpush.bf16.msra.mxu0 %v2402
        %4488 = vmatpush.bf16.msra.mxu0 %v2394
        %4489 = vmatpush.bf16.msra.mxu0 %v2386
        %4490 = vmatmul.bf16.gmra.mxu0 %v2060
        %v4491 = vpop.f32.mrf.mxu0
        %v4492 = vadd.f32 0.0, %v4491
        %v4493 = vpop.f32.mrf.mxu0
        %v4494 = vadd.f32 0.0, %v4493
        %4495 = vmatmul.bf16.gmra.mxu0 %v2061
        %v4496 = vpop.f32.mrf.mxu0
        %v4497 = vadd.f32 0.0, %v4496
        %v4498 = vpop.f32.mrf.mxu0
        %v4499 = vadd.f32 0.0, %v4498
        %4500 = vmatmul.bf16.gmra.mxu0 %v2062
        %v4501 = vpop.f32.mrf.mxu0
        %v4502 = vadd.f32 0.0, %v4501
        %v4503 = vpop.f32.mrf.mxu0
        %v4504 = vadd.f32 0.0, %v4503
        %4505 = vmatmul.bf16.gmra.mxu0 %v2063
        %v4506 = vpop.f32.mrf.mxu0
        %v4507 = vadd.f32 0.0, %v4506
        %v4508 = vpop.f32.mrf.mxu0
        %v4509 = vadd.f32 0.0, %v4508
        %4510 = vmatmul.bf16.gmra.mxu0 %v2064
        %v4511 = vpop.f32.mrf.mxu0
        %v4512 = vadd.f32 0.0, %v4511
        %v4513 = vpop.f32.mrf.mxu0
        %v4514 = vadd.f32 0.0, %v4513
        %4515 = vmatmul.bf16.gmra.mxu0 %v2065
        %v4516 = vpop.f32.mrf.mxu0
        %v4517 = vadd.f32 0.0, %v4516
        %v4518 = vpop.f32.mrf.mxu0
        %v4519 = vadd.f32 0.0, %v4518
        %4520 = vmatmul.bf16.gmra.mxu0 %v2066
        %v4521 = vpop.f32.mrf.mxu0
        %v4522 = vadd.f32 0.0, %v4521
        %v4523 = vpop.f32.mrf.mxu0
        %v4524 = vadd.f32 0.0, %v4523
        %4525 = vmatmul.bf16.gmra.mxu0 %v2067
        %v4526 = vpop.f32.mrf.mxu0
        %v4527 = vadd.f32 0.0, %v4526
        %v4528 = vpop.f32.mrf.mxu0
        %v4529 = vadd.f32 0.0, %v4528
        %4530 = vmatmul.bf16.gmra.mxu0 %v2068
        %v4531 = vpop.f32.mrf.mxu0
        %v4532 = vadd.f32 0.0, %v4531
        %v4533 = vpop.f32.mrf.mxu0
        %v4534 = vadd.f32 0.0, %v4533
        %4535 = vmatmul.bf16.gmra.mxu0 %v2069
        %v4536 = vpop.f32.mrf.mxu0
        %v4537 = vadd.f32 0.0, %v4536
        %v4538 = vpop.f32.mrf.mxu0
        %v4539 = vadd.f32 0.0, %v4538
        %4540 = vmatmul.bf16.gmra.mxu0 %v2070
        %v4541 = vpop.f32.mrf.mxu0
        %v4542 = vadd.f32 0.0, %v4541
        %v4543 = vpop.f32.mrf.mxu0
        %v4544 = vadd.f32 0.0, %v4543
        %4545 = vmatmul.bf16.gmra.mxu0 %v2071
        %v4546 = vpop.f32.mrf.mxu0
        %v4547 = vadd.f32 0.0, %v4546
        %v4548 = vpop.f32.mrf.mxu0
        %v4549 = vadd.f32 0.0, %v4548
        %4550 = vmatmul.bf16.gmra.mxu0 %v2072
        %v4551 = vpop.f32.mrf.mxu0
        %v4552 = vadd.f32 0.0, %v4551
        %v4553 = vpop.f32.mrf.mxu0
        %v4554 = vadd.f32 0.0, %v4553
        %4555 = vmatmul.bf16.gmra.mxu0 %v2073
        %v4556 = vpop.f32.mrf.mxu0
        %v4557 = vadd.f32 0.0, %v4556
        %v4558 = vpop.f32.mrf.mxu0
        %v4559 = vadd.f32 0.0, %v4558
        %4560 = vmatmul.bf16.gmra.mxu0 %v2074
        %v4561 = vpop.f32.mrf.mxu0
        %v4562 = vadd.f32 0.0, %v4561
        %v4563 = vpop.f32.mrf.mxu0
        %v4564 = vadd.f32 0.0, %v4563
        %4565 = vmatmul.bf16.gmra.mxu0 %v2075
        %v4566 = vpop.f32.mrf.mxu0
        %v4567 = vadd.f32 0.0, %v4566
        %v4568 = vpop.f32.mrf.mxu0
        %v4569 = vadd.f32 0.0, %v4568
        %4570 = vmatmul.bf16.gmra.mxu0 %v2076
        %v4571 = vpop.f32.mrf.mxu0
        %v4572 = vadd.f32 0.0, %v4571
        %v4573 = vpop.f32.mrf.mxu0
        %v4574 = vadd.f32 0.0, %v4573
        %4575 = vmatmul.bf16.gmra.mxu0 %v2077
        %v4576 = vpop.f32.mrf.mxu0
        %v4577 = vadd.f32 0.0, %v4576
        %v4578 = vpop.f32.mrf.mxu0
        %v4579 = vadd.f32 0.0, %v4578
        %4580 = vmatmul.bf16.gmra.mxu0 %v2078
        %v4581 = vpop.f32.mrf.mxu0
        %v4582 = vadd.f32 0.0, %v4581
        %v4583 = vpop.f32.mrf.mxu0
        %v4584 = vadd.f32 0.0, %v4583
        %4585 = vmatmul.bf16.gmra.mxu0 %v2079
        %v4586 = vpop.f32.mrf.mxu0
        %v4587 = vadd.f32 0.0, %v4586
        %v4588 = vpop.f32.mrf.mxu0
        %v4589 = vadd.f32 0.0, %v4588
        %4590 = vmatmul.bf16.gmra.mxu0 %v2080
        %v4591 = vpop.f32.mrf.mxu0
        %v4592 = vadd.f32 0.0, %v4591
        %v4593 = vpop.f32.mrf.mxu0
        %v4594 = vadd.f32 0.0, %v4593
        %4595 = vmatmul.bf16.gmra.mxu0 %v2081
        %v4596 = vpop.f32.mrf.mxu0
        %v4597 = vadd.f32 0.0, %v4596
        %v4598 = vpop.f32.mrf.mxu0
        %v4599 = vadd.f32 0.0, %v4598
        %4600 = vmatmul.bf16.gmra.mxu0 %v2082
        %v4601 = vpop.f32.mrf.mxu0
        %v4602 = vadd.f32 0.0, %v4601
        %v4603 = vpop.f32.mrf.mxu0
        %v4604 = vadd.f32 0.0, %v4603
        %4605 = vmatmul.bf16.gmra.mxu0 %v2083
        %v4606 = vpop.f32.mrf.mxu0
        %v4607 = vadd.f32 0.0, %v4606
        %v4608 = vpop.f32.mrf.mxu0
        %v4609 = vadd.f32 0.0, %v4608
        %4610 = vmatmul.bf16.gmra.mxu0 %v2084
        %v4611 = vpop.f32.mrf.mxu0
        %v4612 = vadd.f32 0.0, %v4611
        %v4613 = vpop.f32.mrf.mxu0
        %v4614 = vadd.f32 0.0, %v4613
        %4615 = vmatmul.bf16.gmra.mxu0 %v2085
        %v4616 = vpop.f32.mrf.mxu0
        %v4617 = vadd.f32 0.0, %v4616
        %v4618 = vpop.f32.mrf.mxu0
        %v4619 = vadd.f32 0.0, %v4618
        %4620 = vmatmul.bf16.gmra.mxu0 %v2086
        %v4621 = vpop.f32.mrf.mxu0
        %v4622 = vadd.f32 0.0, %v4621
        %v4623 = vpop.f32.mrf.mxu0
        %v4624 = vadd.f32 0.0, %v4623
        %4625 = vmatmul.bf16.gmra.mxu0 %v2087
        %v4626 = vpop.f32.mrf.mxu0
        %v4627 = vadd.f32 0.0, %v4626
        %v4628 = vpop.f32.mrf.mxu0
        %v4629 = vadd.f32 0.0, %v4628
        %4630 = vmatmul.bf16.gmra.mxu0 %v2088
        %v4631 = vpop.f32.mrf.mxu0
        %v4632 = vadd.f32 0.0, %v4631
        %v4633 = vpop.f32.mrf.mxu0
        %v4634 = vadd.f32 0.0, %v4633
        %4635 = vmatmul.bf16.gmra.mxu0 %v2089
        %v4636 = vpop.f32.mrf.mxu0
        %v4637 = vadd.f32 0.0, %v4636
        %v4638 = vpop.f32.mrf.mxu0
        %v4639 = vadd.f32 0.0, %v4638
        %4640 = vmatmul.bf16.gmra.mxu0 %v2090
        %v4641 = vpop.f32.mrf.mxu0
        %v4642 = vadd.f32 0.0, %v4641
        %v4643 = vpop.f32.mrf.mxu0
        %v4644 = vadd.f32 0.0, %v4643
        %4645 = vmatmul.bf16.gmra.mxu0 %v2091
        %v4646 = vpop.f32.mrf.mxu0
        %v4647 = vadd.f32 0.0, %v4646
        %v4648 = vpop.f32.mrf.mxu0
        %v4649 = vadd.f32 0.0, %v4648
        %4650 = vmatmul.bf16.gmra.mxu0 %v2092
        %v4651 = vpop.f32.mrf.mxu0
        %v4652 = vadd.f32 0.0, %v4651
        %v4653 = vpop.f32.mrf.mxu0
        %v4654 = vadd.f32 0.0, %v4653
        %4655 = vmatmul.bf16.gmra.mxu0 %v2093
        %v4656 = vpop.f32.mrf.mxu0
        %v4657 = vadd.f32 0.0, %v4656
        %v4658 = vpop.f32.mrf.mxu0
        %v4659 = vadd.f32 0.0, %v4658
        %4660 = vmatmul.bf16.gmra.mxu0 %v2094
        %v4661 = vpop.f32.mrf.mxu0
        %v4662 = vadd.f32 0.0, %v4661
        %v4663 = vpop.f32.mrf.mxu0
        %v4664 = vadd.f32 0.0, %v4663
        %4665 = vmatmul.bf16.gmra.mxu0 %v2095
        %v4666 = vpop.f32.mrf.mxu0
        %v4667 = vadd.f32 0.0, %v4666
        %v4668 = vpop.f32.mrf.mxu0
        %v4669 = vadd.f32 0.0, %v4668
        %4670 = vmatmul.bf16.gmra.mxu0 %v2096
        %v4671 = vpop.f32.mrf.mxu0
        %v4672 = vadd.f32 0.0, %v4671
        %v4673 = vpop.f32.mrf.mxu0
        %v4674 = vadd.f32 0.0, %v4673
        %4675 = vmatmul.bf16.gmra.mxu0 %v2097
        %v4676 = vpop.f32.mrf.mxu0
        %v4677 = vadd.f32 0.0, %v4676
        %v4678 = vpop.f32.mrf.mxu0
        %v4679 = vadd.f32 0.0, %v4678
        %4680 = vmatmul.bf16.gmra.mxu0 %v2098
        %v4681 = vpop.f32.mrf.mxu0
        %v4682 = vadd.f32 0.0, %v4681
        %v4683 = vpop.f32.mrf.mxu0
        %v4684 = vadd.f32 0.0, %v4683
        %4685 = vmatmul.bf16.gmra.mxu0 %v2099
        %v4686 = vpop.f32.mrf.mxu0
        %v4687 = vadd.f32 0.0, %v4686
        %v4688 = vpop.f32.mrf.mxu0
        %v4689 = vadd.f32 0.0, %v4688
        %4690 = vmatmul.bf16.gmra.mxu0 %v2100
        %v4691 = vpop.f32.mrf.mxu0
        %v4692 = vadd.f32 0.0, %v4691
        %v4693 = vpop.f32.mrf.mxu0
        %v4694 = vadd.f32 0.0, %v4693
        %4695 = vmatmul.bf16.gmra.mxu0 %v2101
        %v4696 = vpop.f32.mrf.mxu0
        %v4697 = vadd.f32 0.0, %v4696
        %v4698 = vpop.f32.mrf.mxu0
        %v4699 = vadd.f32 0.0, %v4698
        %4700 = vmatmul.bf16.gmra.mxu0 %v2102
        %v4701 = vpop.f32.mrf.mxu0
        %v4702 = vadd.f32 0.0, %v4701
        %v4703 = vpop.f32.mrf.mxu0
        %v4704 = vadd.f32 0.0, %v4703
        %4705 = vmatmul.bf16.gmra.mxu0 %v2103
        %v4706 = vpop.f32.mrf.mxu0
        %v4707 = vadd.f32 0.0, %v4706
        %v4708 = vpop.f32.mrf.mxu0
        %v4709 = vadd.f32 0.0, %v4708
        %4710 = vmatmul.bf16.gmra.mxu0 %v2104
        %v4711 = vpop.f32.mrf.mxu0
        %v4712 = vadd.f32 0.0, %v4711
        %v4713 = vpop.f32.mrf.mxu0
        %v4714 = vadd.f32 0.0, %v4713
        %4715 = vmatmul.bf16.gmra.mxu0 %v2105
        %v4716 = vpop.f32.mrf.mxu0
        %v4717 = vadd.f32 0.0, %v4716
        %v4718 = vpop.f32.mrf.mxu0
        %v4719 = vadd.f32 0.0, %v4718
        %4720 = vmatmul.bf16.gmra.mxu0 %v2106
        %v4721 = vpop.f32.mrf.mxu0
        %v4722 = vadd.f32 0.0, %v4721
        %v4723 = vpop.f32.mrf.mxu0
        %v4724 = vadd.f32 0.0, %v4723
        %4725 = vmatmul.bf16.gmra.mxu0 %v2107
        %v4726 = vpop.f32.mrf.mxu0
        %v4727 = vadd.f32 0.0, %v4726
        %v4728 = vpop.f32.mrf.mxu0
        %v4729 = vadd.f32 0.0, %v4728
        %4730 = vmatmul.bf16.gmra.mxu0 %v2108
        %v4731 = vpop.f32.mrf.mxu0
        %v4732 = vadd.f32 0.0, %v4731
        %v4733 = vpop.f32.mrf.mxu0
        %v4734 = vadd.f32 0.0, %v4733
        %4735 = vmatmul.bf16.gmra.mxu0 %v2109
        %v4736 = vpop.f32.mrf.mxu0
        %v4737 = vadd.f32 0.0, %v4736
        %v4738 = vpop.f32.mrf.mxu0
        %v4739 = vadd.f32 0.0, %v4738
        %4740 = vmatmul.bf16.gmra.mxu0 %v2110
        %v4741 = vpop.f32.mrf.mxu0
        %v4742 = vadd.f32 0.0, %v4741
        %v4743 = vpop.f32.mrf.mxu0
        %v4744 = vadd.f32 0.0, %v4743
        %4745 = vmatmul.bf16.gmra.mxu0 %v2111
        %v4746 = vpop.f32.mrf.mxu0
        %v4747 = vadd.f32 0.0, %v4746
        %v4748 = vpop.f32.mrf.mxu0
        %v4749 = vadd.f32 0.0, %v4748
        %4750 = vmatmul.bf16.gmra.mxu0 %v2112
        %v4751 = vpop.f32.mrf.mxu0
        %v4752 = vadd.f32 0.0, %v4751
        %v4753 = vpop.f32.mrf.mxu0
        %v4754 = vadd.f32 0.0, %v4753
        %4755 = vmatmul.bf16.gmra.mxu0 %v2113
        %v4756 = vpop.f32.mrf.mxu0
        %v4757 = vadd.f32 0.0, %v4756
        %v4758 = vpop.f32.mrf.mxu0
        %v4759 = vadd.f32 0.0, %v4758
        %4760 = vmatmul.bf16.gmra.mxu0 %v2114
        %v4761 = vpop.f32.mrf.mxu0
        %v4762 = vadd.f32 0.0, %v4761
        %v4763 = vpop.f32.mrf.mxu0
        %v4764 = vadd.f32 0.0, %v4763
        %4765 = vmatmul.bf16.gmra.mxu0 %v2115
        %v4766 = vpop.f32.mrf.mxu0
        %v4767 = vadd.f32 0.0, %v4766
        %v4768 = vpop.f32.mrf.mxu0
        %v4769 = vadd.f32 0.0, %v4768
        %4770 = vmatmul.bf16.gmra.mxu0 %v2116
        %v4771 = vpop.f32.mrf.mxu0
        %v4772 = vadd.f32 0.0, %v4771
        %v4773 = vpop.f32.mrf.mxu0
        %v4774 = vadd.f32 0.0, %v4773
        %4775 = vmatmul.bf16.gmra.mxu0 %v2117
        %v4776 = vpop.f32.mrf.mxu0
        %v4777 = vadd.f32 0.0, %v4776
        %v4778 = vpop.f32.mrf.mxu0
        %v4779 = vadd.f32 0.0, %v4778
        %4780 = vmatmul.bf16.gmra.mxu0 %v2118
        %v4781 = vpop.f32.mrf.mxu0
        %v4782 = vadd.f32 0.0, %v4781
        %v4783 = vpop.f32.mrf.mxu0
        %v4784 = vadd.f32 0.0, %v4783
        %4785 = vmatmul.bf16.gmra.mxu0 %v2119
        %v4786 = vpop.f32.mrf.mxu0
        %v4787 = vadd.f32 0.0, %v4786
        %v4788 = vpop.f32.mrf.mxu0
        %v4789 = vadd.f32 0.0, %v4788
        %4790 = vmatmul.bf16.gmra.mxu0 %v2120
        %v4791 = vpop.f32.mrf.mxu0
        %v4792 = vadd.f32 0.0, %v4791
        %v4793 = vpop.f32.mrf.mxu0
        %v4794 = vadd.f32 0.0, %v4793
        %4795 = vmatmul.bf16.gmra.mxu0 %v2121
        %v4796 = vpop.f32.mrf.mxu0
        %v4797 = vadd.f32 0.0, %v4796
        %v4798 = vpop.f32.mrf.mxu0
        %v4799 = vadd.f32 0.0, %v4798
        %4800 = vmatmul.bf16.gmra.mxu0 %v2122
        %v4801 = vpop.f32.mrf.mxu0
        %v4802 = vadd.f32 0.0, %v4801
        %v4803 = vpop.f32.mrf.mxu0
        %v4804 = vadd.f32 0.0, %v4803
        %4805 = vmatmul.bf16.gmra.mxu0 %v2123
        %v4806 = vpop.f32.mrf.mxu0
        %v4807 = vadd.f32 0.0, %v4806
        %v4808 = vpop.f32.mrf.mxu0
        %v4809 = vadd.f32 0.0, %v4808
        %4810 = vdwg.mxu0
        %4811 = vmatpush.bf16.msra.mxu0 %v2443
        %4812 = vmatpush.bf16.msra.mxu0 %v2435
        %4813 = vmatpush.bf16.msra.mxu0 %v2427
        %4814 = vmatpush.bf16.msra.mxu0 %v2419
        %4815 = vmatpush.bf16.msra.mxu0 %v2411
        %4816 = vmatpush.bf16.msra.mxu0 %v2403
        %4817 = vmatpush.bf16.msra.mxu0 %v2395
        %4818 = vmatpush.bf16.msra.mxu0 %v2387
        %4819 = vmatmul.bf16.gmra.mxu0 %v2060
        %v4820 = vpop.f32.mrf.mxu0
        %v4821 = vadd.f32 0.0, %v4820
        %v4822 = vpop.f32.mrf.mxu0
        %v4823 = vadd.f32 0.0, %v4822
        %4824 = vmatmul.bf16.gmra.mxu0 %v2061
        %v4825 = vpop.f32.mrf.mxu0
        %v4826 = vadd.f32 0.0, %v4825
        %v4827 = vpop.f32.mrf.mxu0
        %v4828 = vadd.f32 0.0, %v4827
        %4829 = vmatmul.bf16.gmra.mxu0 %v2062
        %v4830 = vpop.f32.mrf.mxu0
        %v4831 = vadd.f32 0.0, %v4830
        %v4832 = vpop.f32.mrf.mxu0
        %v4833 = vadd.f32 0.0, %v4832
        %4834 = vmatmul.bf16.gmra.mxu0 %v2063
        %v4835 = vpop.f32.mrf.mxu0
        %v4836 = vadd.f32 0.0, %v4835
        %v4837 = vpop.f32.mrf.mxu0
        %v4838 = vadd.f32 0.0, %v4837
        %4839 = vmatmul.bf16.gmra.mxu0 %v2064
        %v4840 = vpop.f32.mrf.mxu0
        %v4841 = vadd.f32 0.0, %v4840
        %v4842 = vpop.f32.mrf.mxu0
        %v4843 = vadd.f32 0.0, %v4842
        %4844 = vmatmul.bf16.gmra.mxu0 %v2065
        %v4845 = vpop.f32.mrf.mxu0
        %v4846 = vadd.f32 0.0, %v4845
        %v4847 = vpop.f32.mrf.mxu0
        %v4848 = vadd.f32 0.0, %v4847
        %4849 = vmatmul.bf16.gmra.mxu0 %v2066
        %v4850 = vpop.f32.mrf.mxu0
        %v4851 = vadd.f32 0.0, %v4850
        %v4852 = vpop.f32.mrf.mxu0
        %v4853 = vadd.f32 0.0, %v4852
        %4854 = vmatmul.bf16.gmra.mxu0 %v2067
        %v4855 = vpop.f32.mrf.mxu0
        %v4856 = vadd.f32 0.0, %v4855
        %v4857 = vpop.f32.mrf.mxu0
        %v4858 = vadd.f32 0.0, %v4857
        %4859 = vmatmul.bf16.gmra.mxu0 %v2068
        %v4860 = vpop.f32.mrf.mxu0
        %v4861 = vadd.f32 0.0, %v4860
        %v4862 = vpop.f32.mrf.mxu0
        %v4863 = vadd.f32 0.0, %v4862
        %4864 = vmatmul.bf16.gmra.mxu0 %v2069
        %v4865 = vpop.f32.mrf.mxu0
        %v4866 = vadd.f32 0.0, %v4865
        %v4867 = vpop.f32.mrf.mxu0
        %v4868 = vadd.f32 0.0, %v4867
        %4869 = vmatmul.bf16.gmra.mxu0 %v2070
        %v4870 = vpop.f32.mrf.mxu0
        %v4871 = vadd.f32 0.0, %v4870
        %v4872 = vpop.f32.mrf.mxu0
        %v4873 = vadd.f32 0.0, %v4872
        %4874 = vmatmul.bf16.gmra.mxu0 %v2071
        %v4875 = vpop.f32.mrf.mxu0
        %v4876 = vadd.f32 0.0, %v4875
        %v4877 = vpop.f32.mrf.mxu0
        %v4878 = vadd.f32 0.0, %v4877
        %4879 = vmatmul.bf16.gmra.mxu0 %v2072
        %v4880 = vpop.f32.mrf.mxu0
        %v4881 = vadd.f32 0.0, %v4880
        %v4882 = vpop.f32.mrf.mxu0
        %v4883 = vadd.f32 0.0, %v4882
        %4884 = vmatmul.bf16.gmra.mxu0 %v2073
        %v4885 = vpop.f32.mrf.mxu0
        %v4886 = vadd.f32 0.0, %v4885
        %v4887 = vpop.f32.mrf.mxu0
        %v4888 = vadd.f32 0.0, %v4887
        %4889 = vmatmul.bf16.gmra.mxu0 %v2074
        %v4890 = vpop.f32.mrf.mxu0
        %v4891 = vadd.f32 0.0, %v4890
        %v4892 = vpop.f32.mrf.mxu0
        %v4893 = vadd.f32 0.0, %v4892
        %4894 = vmatmul.bf16.gmra.mxu0 %v2075
        %v4895 = vpop.f32.mrf.mxu0
        %v4896 = vadd.f32 0.0, %v4895
        %v4897 = vpop.f32.mrf.mxu0
        %v4898 = vadd.f32 0.0, %v4897
        %4899 = vmatmul.bf16.gmra.mxu0 %v2076
        %v4900 = vpop.f32.mrf.mxu0
        %v4901 = vadd.f32 0.0, %v4900
        %v4902 = vpop.f32.mrf.mxu0
        %v4903 = vadd.f32 0.0, %v4902
        %4904 = vmatmul.bf16.gmra.mxu0 %v2077
        %v4905 = vpop.f32.mrf.mxu0
        %v4906 = vadd.f32 0.0, %v4905
        %v4907 = vpop.f32.mrf.mxu0
        %v4908 = vadd.f32 0.0, %v4907
        %4909 = vmatmul.bf16.gmra.mxu0 %v2078
        %v4910 = vpop.f32.mrf.mxu0
        %v4911 = vadd.f32 0.0, %v4910
        %v4912 = vpop.f32.mrf.mxu0
        %v4913 = vadd.f32 0.0, %v4912
        %4914 = vmatmul.bf16.gmra.mxu0 %v2079
        %v4915 = vpop.f32.mrf.mxu0
        %v4916 = vadd.f32 0.0, %v4915
        %v4917 = vpop.f32.mrf.mxu0
        %v4918 = vadd.f32 0.0, %v4917
        %4919 = vmatmul.bf16.gmra.mxu0 %v2080
        %v4920 = vpop.f32.mrf.mxu0
        %v4921 = vadd.f32 0.0, %v4920
        %v4922 = vpop.f32.mrf.mxu0
        %v4923 = vadd.f32 0.0, %v4922
        %4924 = vmatmul.bf16.gmra.mxu0 %v2081
        %v4925 = vpop.f32.mrf.mxu0
        %v4926 = vadd.f32 0.0, %v4925
        %v4927 = vpop.f32.mrf.mxu0
        %v4928 = vadd.f32 0.0, %v4927
        %4929 = vmatmul.bf16.gmra.mxu0 %v2082
        %v4930 = vpop.f32.mrf.mxu0
        %v4931 = vadd.f32 0.0, %v4930
        %v4932 = vpop.f32.mrf.mxu0
        %v4933 = vadd.f32 0.0, %v4932
        %4934 = vmatmul.bf16.gmra.mxu0 %v2083
        %v4935 = vpop.f32.mrf.mxu0
        %v4936 = vadd.f32 0.0, %v4935
        %v4937 = vpop.f32.mrf.mxu0
        %v4938 = vadd.f32 0.0, %v4937
        %4939 = vmatmul.bf16.gmra.mxu0 %v2084
        %v4940 = vpop.f32.mrf.mxu0
        %v4941 = vadd.f32 0.0, %v4940
        %v4942 = vpop.f32.mrf.mxu0
        %v4943 = vadd.f32 0.0, %v4942
        %4944 = vmatmul.bf16.gmra.mxu0 %v2085
        %v4945 = vpop.f32.mrf.mxu0
        %v4946 = vadd.f32 0.0, %v4945
        %v4947 = vpop.f32.mrf.mxu0
        %v4948 = vadd.f32 0.0, %v4947
        %4949 = vmatmul.bf16.gmra.mxu0 %v2086
        %v4950 = vpop.f32.mrf.mxu0
        %v4951 = vadd.f32 0.0, %v4950
        %v4952 = vpop.f32.mrf.mxu0
        %v4953 = vadd.f32 0.0, %v4952
        %4954 = vmatmul.bf16.gmra.mxu0 %v2087
        %v4955 = vpop.f32.mrf.mxu0
        %v4956 = vadd.f32 0.0, %v4955
        %v4957 = vpop.f32.mrf.mxu0
        %v4958 = vadd.f32 0.0, %v4957
        %4959 = vmatmul.bf16.gmra.mxu0 %v2088
        %v4960 = vpop.f32.mrf.mxu0
        %v4961 = vadd.f32 0.0, %v4960
        %v4962 = vpop.f32.mrf.mxu0
        %v4963 = vadd.f32 0.0, %v4962
        %4964 = vmatmul.bf16.gmra.mxu0 %v2089
        %v4965 = vpop.f32.mrf.mxu0
        %v4966 = vadd.f32 0.0, %v4965
        %v4967 = vpop.f32.mrf.mxu0
        %v4968 = vadd.f32 0.0, %v4967
        %4969 = vmatmul.bf16.gmra.mxu0 %v2090
        %v4970 = vpop.f32.mrf.mxu0
        %v4971 = vadd.f32 0.0, %v4970
        %v4972 = vpop.f32.mrf.mxu0
        %v4973 = vadd.f32 0.0, %v4972
        %4974 = vmatmul.bf16.gmra.mxu0 %v2091
        %v4975 = vpop.f32.mrf.mxu0
        %v4976 = vadd.f32 0.0, %v4975
        %v4977 = vpop.f32.mrf.mxu0
        %v4978 = vadd.f32 0.0, %v4977
        %4979 = vmatmul.bf16.gmra.mxu0 %v2092
        %v4980 = vpop.f32.mrf.mxu0
        %v4981 = vadd.f32 0.0, %v4980
        %v4982 = vpop.f32.mrf.mxu0
        %v4983 = vadd.f32 0.0, %v4982
        %4984 = vmatmul.bf16.gmra.mxu0 %v2093
        %v4985 = vpop.f32.mrf.mxu0
        %v4986 = vadd.f32 0.0, %v4985
        %v4987 = vpop.f32.mrf.mxu0
        %v4988 = vadd.f32 0.0, %v4987
        %4989 = vmatmul.bf16.gmra.mxu0 %v2094
        %v4990 = vpop.f32.mrf.mxu0
        %v4991 = vadd.f32 0.0, %v4990
        %v4992 = vpop.f32.mrf.mxu0
        %v4993 = vadd.f32 0.0, %v4992
        %4994 = vmatmul.bf16.gmra.mxu0 %v2095
        %v4995 = vpop.f32.mrf.mxu0
        %v4996 = vadd.f32 0.0, %v4995
        %v4997 = vpop.f32.mrf.mxu0
        %v4998 = vadd.f32 0.0, %v4997
        %4999 = vmatmul.bf16.gmra.mxu0 %v2096
        %v5000 = vpop.f32.mrf.mxu0
        %v5001 = vadd.f32 0.0, %v5000
        %v5002 = vpop.f32.mrf.mxu0
        %v5003 = vadd.f32 0.0, %v5002
        %5004 = vmatmul.bf16.gmra.mxu0 %v2097
        %v5005 = vpop.f32.mrf.mxu0
        %v5006 = vadd.f32 0.0, %v5005
        %v5007 = vpop.f32.mrf.mxu0
        %v5008 = vadd.f32 0.0, %v5007
        %5009 = vmatmul.bf16.gmra.mxu0 %v2098
        %v5010 = vpop.f32.mrf.mxu0
        %v5011 = vadd.f32 0.0, %v5010
        %v5012 = vpop.f32.mrf.mxu0
        %v5013 = vadd.f32 0.0, %v5012
        %5014 = vmatmul.bf16.gmra.mxu0 %v2099
        %v5015 = vpop.f32.mrf.mxu0
        %v5016 = vadd.f32 0.0, %v5015
        %v5017 = vpop.f32.mrf.mxu0
        %v5018 = vadd.f32 0.0, %v5017
        %5019 = vmatmul.bf16.gmra.mxu0 %v2100
        %v5020 = vpop.f32.mrf.mxu0
        %v5021 = vadd.f32 0.0, %v5020
        %v5022 = vpop.f32.mrf.mxu0
        %v5023 = vadd.f32 0.0, %v5022
        %5024 = vmatmul.bf16.gmra.mxu0 %v2101
        %v5025 = vpop.f32.mrf.mxu0
        %v5026 = vadd.f32 0.0, %v5025
        %v5027 = vpop.f32.mrf.mxu0
        %v5028 = vadd.f32 0.0, %v5027
        %5029 = vmatmul.bf16.gmra.mxu0 %v2102
        %v5030 = vpop.f32.mrf.mxu0
        %v5031 = vadd.f32 0.0, %v5030
        %v5032 = vpop.f32.mrf.mxu0
        %v5033 = vadd.f32 0.0, %v5032
        %5034 = vmatmul.bf16.gmra.mxu0 %v2103
        %v5035 = vpop.f32.mrf.mxu0
        %v5036 = vadd.f32 0.0, %v5035
        %v5037 = vpop.f32.mrf.mxu0
        %v5038 = vadd.f32 0.0, %v5037
        %5039 = vmatmul.bf16.gmra.mxu0 %v2104
        %v5040 = vpop.f32.mrf.mxu0
        %v5041 = vadd.f32 0.0, %v5040
        %v5042 = vpop.f32.mrf.mxu0
        %v5043 = vadd.f32 0.0, %v5042
        %5044 = vmatmul.bf16.gmra.mxu0 %v2105
        %v5045 = vpop.f32.mrf.mxu0
        %v5046 = vadd.f32 0.0, %v5045
        %v5047 = vpop.f32.mrf.mxu0
        %v5048 = vadd.f32 0.0, %v5047
        %5049 = vmatmul.bf16.gmra.mxu0 %v2106
        %v5050 = vpop.f32.mrf.mxu0
        %v5051 = vadd.f32 0.0, %v5050
        %v5052 = vpop.f32.mrf.mxu0
        %v5053 = vadd.f32 0.0, %v5052
        %5054 = vmatmul.bf16.gmra.mxu0 %v2107
        %v5055 = vpop.f32.mrf.mxu0
        %v5056 = vadd.f32 0.0, %v5055
        %v5057 = vpop.f32.mrf.mxu0
        %v5058 = vadd.f32 0.0, %v5057
        %5059 = vmatmul.bf16.gmra.mxu0 %v2108
        %v5060 = vpop.f32.mrf.mxu0
        %v5061 = vadd.f32 0.0, %v5060
        %v5062 = vpop.f32.mrf.mxu0
        %v5063 = vadd.f32 0.0, %v5062
        %5064 = vmatmul.bf16.gmra.mxu0 %v2109
        %v5065 = vpop.f32.mrf.mxu0
        %v5066 = vadd.f32 0.0, %v5065
        %v5067 = vpop.f32.mrf.mxu0
        %v5068 = vadd.f32 0.0, %v5067
        %5069 = vmatmul.bf16.gmra.mxu0 %v2110
        %v5070 = vpop.f32.mrf.mxu0
        %v5071 = vadd.f32 0.0, %v5070
        %v5072 = vpop.f32.mrf.mxu0
        %v5073 = vadd.f32 0.0, %v5072
        %5074 = vmatmul.bf16.gmra.mxu0 %v2111
        %v5075 = vpop.f32.mrf.mxu0
        %v5076 = vadd.f32 0.0, %v5075
        %v5077 = vpop.f32.mrf.mxu0
        %v5078 = vadd.f32 0.0, %v5077
        %5079 = vmatmul.bf16.gmra.mxu0 %v2112
        %v5080 = vpop.f32.mrf.mxu0
        %v5081 = vadd.f32 0.0, %v5080
        %v5082 = vpop.f32.mrf.mxu0
        %v5083 = vadd.f32 0.0, %v5082
        %5084 = vmatmul.bf16.gmra.mxu0 %v2113
        %v5085 = vpop.f32.mrf.mxu0
        %v5086 = vadd.f32 0.0, %v5085
        %v5087 = vpop.f32.mrf.mxu0
        %v5088 = vadd.f32 0.0, %v5087
        %5089 = vmatmul.bf16.gmra.mxu0 %v2114
        %v5090 = vpop.f32.mrf.mxu0
        %v5091 = vadd.f32 0.0, %v5090
        %v5092 = vpop.f32.mrf.mxu0
        %v5093 = vadd.f32 0.0, %v5092
        %5094 = vmatmul.bf16.gmra.mxu0 %v2115
        %v5095 = vpop.f32.mrf.mxu0
        %v5096 = vadd.f32 0.0, %v5095
        %v5097 = vpop.f32.mrf.mxu0
        %v5098 = vadd.f32 0.0, %v5097
        %5099 = vmatmul.bf16.gmra.mxu0 %v2116
        %v5100 = vpop.f32.mrf.mxu0
        %v5101 = vadd.f32 0.0, %v5100
        %v5102 = vpop.f32.mrf.mxu0
        %v5103 = vadd.f32 0.0, %v5102
        %5104 = vmatmul.bf16.gmra.mxu0 %v2117
        %v5105 = vpop.f32.mrf.mxu0
        %v5106 = vadd.f32 0.0, %v5105
        %v5107 = vpop.f32.mrf.mxu0
        %v5108 = vadd.f32 0.0, %v5107
        %5109 = vmatmul.bf16.gmra.mxu0 %v2118
        %v5110 = vpop.f32.mrf.mxu0
        %v5111 = vadd.f32 0.0, %v5110
        %v5112 = vpop.f32.mrf.mxu0
        %v5113 = vadd.f32 0.0, %v5112
        %5114 = vmatmul.bf16.gmra.mxu0 %v2119
        %v5115 = vpop.f32.mrf.mxu0
        %v5116 = vadd.f32 0.0, %v5115
        %v5117 = vpop.f32.mrf.mxu0
        %v5118 = vadd.f32 0.0, %v5117
        %5119 = vmatmul.bf16.gmra.mxu0 %v2120
        %v5120 = vpop.f32.mrf.mxu0
        %v5121 = vadd.f32 0.0, %v5120
        %v5122 = vpop.f32.mrf.mxu0
        %v5123 = vadd.f32 0.0, %v5122
        %5124 = vmatmul.bf16.gmra.mxu0 %v2121
        %v5125 = vpop.f32.mrf.mxu0
        %v5126 = vadd.f32 0.0, %v5125
        %v5127 = vpop.f32.mrf.mxu0
        %v5128 = vadd.f32 0.0, %v5127
        %5129 = vmatmul.bf16.gmra.mxu0 %v2122
        %v5130 = vpop.f32.mrf.mxu0
        %v5131 = vadd.f32 0.0, %v5130
        %v5132 = vpop.f32.mrf.mxu0
        %v5133 = vadd.f32 0.0, %v5132
        %5134 = vmatmul.bf16.gmra.mxu0 %v2123
        %v5135 = vpop.f32.mrf.mxu0
        %v5136 = vadd.f32 0.0, %v5135
        %v5137 = vpop.f32.mrf.mxu0
        %v5138 = vadd.f32 0.0, %v5137
        %5139 = vdwg.mxu0
        %v5140 = vmax.f32 %v2518, %v2520
        %v5141 = vmax.f32 %v5140, %v2523
        %v5142 = vmax.f32 %v5141, %v2525
        %v5143 = vmax.f32 %v5142, %v2528
        %v5144 = vmax.f32 %v5143, %v2530
        %v5145 = vmax.f32 %v5144, %v2533
        %v5146 = vmax.f32 %v5145, %v2535
        %v5147 = vmax.f32 %v5146, %v2538
        %v5148 = vmax.f32 %v5147, %v2540
        %v5149 = vmax.f32 %v5148, %v2543
        %v5150 = vmax.f32 %v5149, %v2545
        %v5151 = vmax.f32 %v5150, %v2548
        %v5152 = vmax.f32 %v5151, %v2550
        %v5153 = vmax.f32 %v5152, %v2553
        %v5154 = vmax.f32 %v5153, %v2555
        %v5155 = vmax.f32 %v5154, %v2558
        %v5156 = vmax.f32 %v5155, %v2560
        %v5157 = vmax.f32 %v5156, %v2563
        %v5158 = vmax.f32 %v5157, %v2565
        %v5159 = vmax.f32 %v5158, %v2568
        %v5160 = vmax.f32 %v5159, %v2570
        %v5161 = vmax.f32 %v5160, %v2573
        %v5162 = vmax.f32 %v5161, %v2575
        %v5163 = vmax.f32 %v5162, %v2578
        %v5164 = vmax.f32 %v5163, %v2580
        %v5165 = vmax.f32 %v5164, %v2583
        %v5166 = vmax.f32 %v5165, %v2585
        %v5167 = vmax.f32 %v5166, %v2588
        %v5168 = vmax.f32 %v5167, %v2590
        %v5169 = vmax.f32 %v5168, %v2593
        %v5170 = vmax.f32 %v5169, %v2595
        %v5171 = vmax.f32 %v5170, %v2598
        %v5172 = vmax.f32 %v5171, %v2600
        %v5173 = vmax.f32 %v5172, %v2603
        %v5174 = vmax.f32 %v5173, %v2605
        %v5175 = vmax.f32 %v5174, %v2608
        %v5176 = vmax.f32 %v5175, %v2610
        %v5177 = vmax.f32 %v5176, %v2613
        %v5178 = vmax.f32 %v5177, %v2615
        %v5179 = vmax.f32 %v5178, %v2618
        %v5180 = vmax.f32 %v5179, %v2620
        %v5181 = vmax.f32 %v5180, %v2623
        %v5182 = vmax.f32 %v5181, %v2625
        %v5183 = vmax.f32 %v5182, %v2628
        %v5184 = vmax.f32 %v5183, %v2630
        %v5185 = vmax.f32 %v5184, %v2633
        %v5186 = vmax.f32 %v5185, %v2635
        %v5187 = vmax.f32 %v5186, %v2638
        %v5188 = vmax.f32 %v5187, %v2640
        %v5189 = vmax.f32 %v5188, %v2643
        %v5190 = vmax.f32 %v5189, %v2645
        %v5191 = vmax.f32 %v5190, %v2648
        %v5192 = vmax.f32 %v5191, %v2650
        %v5193 = vmax.f32 %v5192, %v2653
        %v5194 = vmax.f32 %v5193, %v2655
        %v5195 = vmax.f32 %v5194, %v2658
        %v5196 = vmax.f32 %v5195, %v2660
        %v5197 = vmax.f32 %v5196, %v2663
        %v5198 = vmax.f32 %v5197, %v2665
        %v5199 = vmax.f32 %v5198, %v2668
        %v5200 = vmax.f32 %v5199, %v2670
        %v5201 = vmax.f32 %v5200, %v2673
        %v5202 = vmax.f32 %v5201, %v2675
        %v5203 = vmax.f32 %v5202, %v2678
        %v5204 = vmax.f32 %v5203, %v2680
        %v5205 = vmax.f32 %v5204, %v2683
        %v5206 = vmax.f32 %v5205, %v2685
        %v5207 = vmax.f32 %v5206, %v2688
        %v5208 = vmax.f32 %v5207, %v2690
        %v5209 = vmax.f32 %v5208, %v2693
        %v5210 = vmax.f32 %v5209, %v2695
        %v5211 = vmax.f32 %v5210, %v2698
        %v5212 = vmax.f32 %v5211, %v2700
        %v5213 = vmax.f32 %v5212, %v2703
        %v5214 = vmax.f32 %v5213, %v2705
        %v5215 = vmax.f32 %v5214, %v2708
        %v5216 = vmax.f32 %v5215, %v2710
        %v5217 = vmax.f32 %v5216, %v2713
        %v5218 = vmax.f32 %v5217, %v2715
        %v5219 = vmax.f32 %v5218, %v2718
        %v5220 = vmax.f32 %v5219, %v2720
        %v5221 = vmax.f32 %v5220, %v2723
        %v5222 = vmax.f32 %v5221, %v2725
        %v5223 = vmax.f32 %v5222, %v2728
        %v5224 = vmax.f32 %v5223, %v2730
        %v5225 = vmax.f32 %v5224, %v2733
        %v5226 = vmax.f32 %v5225, %v2735
        %v5227 = vmax.f32 %v5226, %v2738
        %v5228 = vmax.f32 %v5227, %v2740
        %v5229 = vmax.f32 %v5228, %v2743
        %v5230 = vmax.f32 %v5229, %v2745
        %v5231 = vmax.f32 %v5230, %v2748
        %v5232 = vmax.f32 %v5231, %v2750
        %v5233 = vmax.f32 %v5232, %v2753
        %v5234 = vmax.f32 %v5233, %v2755
        %v5235 = vmax.f32 %v5234, %v2758
        %v5236 = vmax.f32 %v5235, %v2760
        %v5237 = vmax.f32 %v5236, %v2763
        %v5238 = vmax.f32 %v5237, %v2765
        %v5239 = vmax.f32 %v5238, %v2768
        %v5240 = vmax.f32 %v5239, %v2770
        %v5241 = vmax.f32 %v5240, %v2773
        %v5242 = vmax.f32 %v5241, %v2775
        %v5243 = vmax.f32 %v5242, %v2778
        %v5244 = vmax.f32 %v5243, %v2780
        %v5245 = vmax.f32 %v5244, %v2783
        %v5246 = vmax.f32 %v5245, %v2785
        %v5247 = vmax.f32 %v5246, %v2788
        %v5248 = vmax.f32 %v5247, %v2790
        %v5249 = vmax.f32 %v5248, %v2793
        %v5250 = vmax.f32 %v5249, %v2795
        %v5251 = vmax.f32 %v5250, %v2798
        %v5252 = vmax.f32 %v5251, %v2800
        %v5253 = vmax.f32 %v5252, %v2803
        %v5254 = vmax.f32 %v5253, %v2805
        %v5255 = vmax.f32 %v5254, %v2808
        %v5256 = vmax.f32 %v5255, %v2810
        %v5257 = vmax.f32 %v5256, %v2813
        %v5258 = vmax.f32 %v5257, %v2815
        %v5259 = vmax.f32 %v5258, %v2818
        %v5260 = vmax.f32 %v5259, %v2820
        %v5261 = vmax.f32 %v5260, %v2823
        %v5262 = vmax.f32 %v5261, %v2825
        %v5263 = vmax.f32 %v5262, %v2828
        %v5264 = vmax.f32 %v5263, %v2830
        %v5265 = vmax.f32 %v5264, %v2833
        %v5266 = vmax.f32 %v5265, %v2835
        %v5267 = vmax.f32 %v2847, %v2849
        %v5268 = vmax.f32 %v5267, %v2852
        %v5269 = vmax.f32 %v5268, %v2854
        %v5270 = vmax.f32 %v5269, %v2857
        %v5271 = vmax.f32 %v5270, %v2859
        %v5272 = vmax.f32 %v5271, %v2862
        %v5273 = vmax.f32 %v5272, %v2864
        %v5274 = vmax.f32 %v5273, %v2867
        %v5275 = vmax.f32 %v5274, %v2869
        %v5276 = vmax.f32 %v5275, %v2872
        %v5277 = vmax.f32 %v5276, %v2874
        %v5278 = vmax.f32 %v5277, %v2877
        %v5279 = vmax.f32 %v5278, %v2879
        %v5280 = vmax.f32 %v5279, %v2882
        %v5281 = vmax.f32 %v5280, %v2884
        %v5282 = vmax.f32 %v5281, %v2887
        %v5283 = vmax.f32 %v5282, %v2889
        %v5284 = vmax.f32 %v5283, %v2892
        %v5285 = vmax.f32 %v5284, %v2894
        %v5286 = vmax.f32 %v5285, %v2897
        %v5287 = vmax.f32 %v5286, %v2899
        %v5288 = vmax.f32 %v5287, %v2902
        %v5289 = vmax.f32 %v5288, %v2904
        %v5290 = vmax.f32 %v5289, %v2907
        %v5291 = vmax.f32 %v5290, %v2909
        %v5292 = vmax.f32 %v5291, %v2912
        %v5293 = vmax.f32 %v5292, %v2914
        %v5294 = vmax.f32 %v5293, %v2917
        %v5295 = vmax.f32 %v5294, %v2919
        %v5296 = vmax.f32 %v5295, %v2922
        %v5297 = vmax.f32 %v5296, %v2924
        %v5298 = vmax.f32 %v5297, %v2927
        %v5299 = vmax.f32 %v5298, %v2929
        %v5300 = vmax.f32 %v5299, %v2932
        %v5301 = vmax.f32 %v5300, %v2934
        %v5302 = vmax.f32 %v5301, %v2937
        %v5303 = vmax.f32 %v5302, %v2939
        %v5304 = vmax.f32 %v5303, %v2942
        %v5305 = vmax.f32 %v5304, %v2944
        %v5306 = vmax.f32 %v5305, %v2947
        %v5307 = vmax.f32 %v5306, %v2949
        %v5308 = vmax.f32 %v5307, %v2952
        %v5309 = vmax.f32 %v5308, %v2954
        %v5310 = vmax.f32 %v5309, %v2957
        %v5311 = vmax.f32 %v5310, %v2959
        %v5312 = vmax.f32 %v5311, %v2962
        %v5313 = vmax.f32 %v5312, %v2964
        %v5314 = vmax.f32 %v5313, %v2967
        %v5315 = vmax.f32 %v5314, %v2969
        %v5316 = vmax.f32 %v5315, %v2972
        %v5317 = vmax.f32 %v5316, %v2974
        %v5318 = vmax.f32 %v5317, %v2977
        %v5319 = vmax.f32 %v5318, %v2979
        %v5320 = vmax.f32 %v5319, %v2982
        %v5321 = vmax.f32 %v5320, %v2984
        %v5322 = vmax.f32 %v5321, %v2987
        %v5323 = vmax.f32 %v5322, %v2989
        %v5324 = vmax.f32 %v5323, %v2992
        %v5325 = vmax.f32 %v5324, %v2994
        %v5326 = vmax.f32 %v5325, %v2997
        %v5327 = vmax.f32 %v5326, %v2999
        %v5328 = vmax.f32 %v5327, %v3002
        %v5329 = vmax.f32 %v5328, %v3004
        %v5330 = vmax.f32 %v5329, %v3007
        %v5331 = vmax.f32 %v5330, %v3009
        %v5332 = vmax.f32 %v5331, %v3012
        %v5333 = vmax.f32 %v5332, %v3014
        %v5334 = vmax.f32 %v5333, %v3017
        %v5335 = vmax.f32 %v5334, %v3019
        %v5336 = vmax.f32 %v5335, %v3022
        %v5337 = vmax.f32 %v5336, %v3024
        %v5338 = vmax.f32 %v5337, %v3027
        %v5339 = vmax.f32 %v5338, %v3029
        %v5340 = vmax.f32 %v5339, %v3032
        %v5341 = vmax.f32 %v5340, %v3034
        %v5342 = vmax.f32 %v5341, %v3037
        %v5343 = vmax.f32 %v5342, %v3039
        %v5344 = vmax.f32 %v5343, %v3042
        %v5345 = vmax.f32 %v5344, %v3044
        %v5346 = vmax.f32 %v5345, %v3047
        %v5347 = vmax.f32 %v5346, %v3049
        %v5348 = vmax.f32 %v5347, %v3052
        %v5349 = vmax.f32 %v5348, %v3054
        %v5350 = vmax.f32 %v5349, %v3057
        %v5351 = vmax.f32 %v5350, %v3059
        %v5352 = vmax.f32 %v5351, %v3062
        %v5353 = vmax.f32 %v5352, %v3064
        %v5354 = vmax.f32 %v5353, %v3067
        %v5355 = vmax.f32 %v5354, %v3069
        %v5356 = vmax.f32 %v5355, %v3072
        %v5357 = vmax.f32 %v5356, %v3074
        %v5358 = vmax.f32 %v5357, %v3077
        %v5359 = vmax.f32 %v5358, %v3079
        %v5360 = vmax.f32 %v5359, %v3082
        %v5361 = vmax.f32 %v5360, %v3084
        %v5362 = vmax.f32 %v5361, %v3087
        %v5363 = vmax.f32 %v5362, %v3089
        %v5364 = vmax.f32 %v5363, %v3092
        %v5365 = vmax.f32 %v5364, %v3094
        %v5366 = vmax.f32 %v5365, %v3097
        %v5367 = vmax.f32 %v5366, %v3099
        %v5368 = vmax.f32 %v5367, %v3102
        %v5369 = vmax.f32 %v5368, %v3104
        %v5370 = vmax.f32 %v5369, %v3107
        %v5371 = vmax.f32 %v5370, %v3109
        %v5372 = vmax.f32 %v5371, %v3112
        %v5373 = vmax.f32 %v5372, %v3114
        %v5374 = vmax.f32 %v5373, %v3117
        %v5375 = vmax.f32 %v5374, %v3119
        %v5376 = vmax.f32 %v5375, %v3122
        %v5377 = vmax.f32 %v5376, %v3124
        %v5378 = vmax.f32 %v5377, %v3127
        %v5379 = vmax.f32 %v5378, %v3129
        %v5380 = vmax.f32 %v5379, %v3132
        %v5381 = vmax.f32 %v5380, %v3134
        %v5382 = vmax.f32 %v5381, %v3137
        %v5383 = vmax.f32 %v5382, %v3139
        %v5384 = vmax.f32 %v5383, %v3142
        %v5385 = vmax.f32 %v5384, %v3144
        %v5386 = vmax.f32 %v5385, %v3147
        %v5387 = vmax.f32 %v5386, %v3149
        %v5388 = vmax.f32 %v5387, %v3152
        %v5389 = vmax.f32 %v5388, %v3154
        %v5390 = vmax.f32 %v5389, %v3157
        %v5391 = vmax.f32 %v5390, %v3159
        %v5392 = vmax.f32 %v5391, %v3162
        %v5393 = vmax.f32 %v5392, %v3164
        %v5394 = vmax.f32 %v3176, %v3178
        %v5395 = vmax.f32 %v5394, %v3181
        %v5396 = vmax.f32 %v5395, %v3183
        %v5397 = vmax.f32 %v5396, %v3186
        %v5398 = vmax.f32 %v5397, %v3188
        %v5399 = vmax.f32 %v5398, %v3191
        %v5400 = vmax.f32 %v5399, %v3193
        %v5401 = vmax.f32 %v5400, %v3196
        %v5402 = vmax.f32 %v5401, %v3198
        %v5403 = vmax.f32 %v5402, %v3201
        %v5404 = vmax.f32 %v5403, %v3203
        %v5405 = vmax.f32 %v5404, %v3206
        %v5406 = vmax.f32 %v5405, %v3208
        %v5407 = vmax.f32 %v5406, %v3211
        %v5408 = vmax.f32 %v5407, %v3213
        %v5409 = vmax.f32 %v5408, %v3216
        %v5410 = vmax.f32 %v5409, %v3218
        %v5411 = vmax.f32 %v5410, %v3221
        %v5412 = vmax.f32 %v5411, %v3223
        %v5413 = vmax.f32 %v5412, %v3226
        %v5414 = vmax.f32 %v5413, %v3228
        %v5415 = vmax.f32 %v5414, %v3231
        %v5416 = vmax.f32 %v5415, %v3233
        %v5417 = vmax.f32 %v5416, %v3236
        %v5418 = vmax.f32 %v5417, %v3238
        %v5419 = vmax.f32 %v5418, %v3241
        %v5420 = vmax.f32 %v5419, %v3243
        %v5421 = vmax.f32 %v5420, %v3246
        %v5422 = vmax.f32 %v5421, %v3248
        %v5423 = vmax.f32 %v5422, %v3251
        %v5424 = vmax.f32 %v5423, %v3253
        %v5425 = vmax.f32 %v5424, %v3256
        %v5426 = vmax.f32 %v5425, %v3258
        %v5427 = vmax.f32 %v5426, %v3261
        %v5428 = vmax.f32 %v5427, %v3263
        %v5429 = vmax.f32 %v5428, %v3266
        %v5430 = vmax.f32 %v5429, %v3268
        %v5431 = vmax.f32 %v5430, %v3271
        %v5432 = vmax.f32 %v5431, %v3273
        %v5433 = vmax.f32 %v5432, %v3276
        %v5434 = vmax.f32 %v5433, %v3278
        %v5435 = vmax.f32 %v5434, %v3281
        %v5436 = vmax.f32 %v5435, %v3283
        %v5437 = vmax.f32 %v5436, %v3286
        %v5438 = vmax.f32 %v5437, %v3288
        %v5439 = vmax.f32 %v5438, %v3291
        %v5440 = vmax.f32 %v5439, %v3293
        %v5441 = vmax.f32 %v5440, %v3296
        %v5442 = vmax.f32 %v5441, %v3298
        %v5443 = vmax.f32 %v5442, %v3301
        %v5444 = vmax.f32 %v5443, %v3303
        %v5445 = vmax.f32 %v5444, %v3306
        %v5446 = vmax.f32 %v5445, %v3308
        %v5447 = vmax.f32 %v5446, %v3311
        %v5448 = vmax.f32 %v5447, %v3313
        %v5449 = vmax.f32 %v5448, %v3316
        %v5450 = vmax.f32 %v5449, %v3318
        %v5451 = vmax.f32 %v5450, %v3321
        %v5452 = vmax.f32 %v5451, %v3323
        %v5453 = vmax.f32 %v5452, %v3326
        %v5454 = vmax.f32 %v5453, %v3328
        %v5455 = vmax.f32 %v5454, %v3331
        %v5456 = vmax.f32 %v5455, %v3333
        %v5457 = vmax.f32 %v5456, %v3336
        %v5458 = vmax.f32 %v5457, %v3338
        %v5459 = vmax.f32 %v5458, %v3341
        %v5460 = vmax.f32 %v5459, %v3343
        %v5461 = vmax.f32 %v5460, %v3346
        %v5462 = vmax.f32 %v5461, %v3348
        %v5463 = vmax.f32 %v5462, %v3351
        %v5464 = vmax.f32 %v5463, %v3353
        %v5465 = vmax.f32 %v5464, %v3356
        %v5466 = vmax.f32 %v5465, %v3358
        %v5467 = vmax.f32 %v5466, %v3361
        %v5468 = vmax.f32 %v5467, %v3363
        %v5469 = vmax.f32 %v5468, %v3366
        %v5470 = vmax.f32 %v5469, %v3368
        %v5471 = vmax.f32 %v5470, %v3371
        %v5472 = vmax.f32 %v5471, %v3373
        %v5473 = vmax.f32 %v5472, %v3376
        %v5474 = vmax.f32 %v5473, %v3378
        %v5475 = vmax.f32 %v5474, %v3381
        %v5476 = vmax.f32 %v5475, %v3383
        %v5477 = vmax.f32 %v5476, %v3386
        %v5478 = vmax.f32 %v5477, %v3388
        %v5479 = vmax.f32 %v5478, %v3391
        %v5480 = vmax.f32 %v5479, %v3393
        %v5481 = vmax.f32 %v5480, %v3396
        %v5482 = vmax.f32 %v5481, %v3398
        %v5483 = vmax.f32 %v5482, %v3401
        %v5484 = vmax.f32 %v5483, %v3403
        %v5485 = vmax.f32 %v5484, %v3406
        %v5486 = vmax.f32 %v5485, %v3408
        %v5487 = vmax.f32 %v5486, %v3411
        %v5488 = vmax.f32 %v5487, %v3413
        %v5489 = vmax.f32 %v5488, %v3416
        %v5490 = vmax.f32 %v5489, %v3418
        %v5491 = vmax.f32 %v5490, %v3421
        %v5492 = vmax.f32 %v5491, %v3423
        %v5493 = vmax.f32 %v5492, %v3426
        %v5494 = vmax.f32 %v5493, %v3428
        %v5495 = vmax.f32 %v5494, %v3431
        %v5496 = vmax.f32 %v5495, %v3433
        %v5497 = vmax.f32 %v5496, %v3436
        %v5498 = vmax.f32 %v5497, %v3438
        %v5499 = vmax.f32 %v5498, %v3441
        %v5500 = vmax.f32 %v5499, %v3443
        %v5501 = vmax.f32 %v5500, %v3446
        %v5502 = vmax.f32 %v5501, %v3448
        %v5503 = vmax.f32 %v5502, %v3451
        %v5504 = vmax.f32 %v5503, %v3453
        %v5505 = vmax.f32 %v5504, %v3456
        %v5506 = vmax.f32 %v5505, %v3458
        %v5507 = vmax.f32 %v5506, %v3461
        %v5508 = vmax.f32 %v5507, %v3463
        %v5509 = vmax.f32 %v5508, %v3466
        %v5510 = vmax.f32 %v5509, %v3468
        %v5511 = vmax.f32 %v5510, %v3471
        %v5512 = vmax.f32 %v5511, %v3473
        %v5513 = vmax.f32 %v5512, %v3476
        %v5514 = vmax.f32 %v5513, %v3478
        %v5515 = vmax.f32 %v5514, %v3481
        %v5516 = vmax.f32 %v5515, %v3483
        %v5517 = vmax.f32 %v5516, %v3486
        %v5518 = vmax.f32 %v5517, %v3488
        %v5519 = vmax.f32 %v5518, %v3491
        %v5520 = vmax.f32 %v5519, %v3493
        %v5521 = vmax.f32 %v3505, %v3507
        %v5522 = vmax.f32 %v5521, %v3510
        %v5523 = vmax.f32 %v5522, %v3512
        %v5524 = vmax.f32 %v5523, %v3515
        %v5525 = vmax.f32 %v5524, %v3517
        %v5526 = vmax.f32 %v5525, %v3520
        %v5527 = vmax.f32 %v5526, %v3522
        %v5528 = vmax.f32 %v5527, %v3525
        %v5529 = vmax.f32 %v5528, %v3527
        %v5530 = vmax.f32 %v5529, %v3530
        %v5531 = vmax.f32 %v5530, %v3532
        %v5532 = vmax.f32 %v5531, %v3535
        %v5533 = vmax.f32 %v5532, %v3537
        %v5534 = vmax.f32 %v5533, %v3540
        %v5535 = vmax.f32 %v5534, %v3542
        %v5536 = vmax.f32 %v5535, %v3545
        %v5537 = vmax.f32 %v5536, %v3547
        %v5538 = vmax.f32 %v5537, %v3550
        %v5539 = vmax.f32 %v5538, %v3552
        %v5540 = vmax.f32 %v5539, %v3555
        %v5541 = vmax.f32 %v5540, %v3557
        %v5542 = vmax.f32 %v5541, %v3560
        %v5543 = vmax.f32 %v5542, %v3562
        %v5544 = vmax.f32 %v5543, %v3565
        %v5545 = vmax.f32 %v5544, %v3567
        %v5546 = vmax.f32 %v5545, %v3570
        %v5547 = vmax.f32 %v5546, %v3572
        %v5548 = vmax.f32 %v5547, %v3575
        %v5549 = vmax.f32 %v5548, %v3577
        %v5550 = vmax.f32 %v5549, %v3580
        %v5551 = vmax.f32 %v5550, %v3582
        %v5552 = vmax.f32 %v5551, %v3585
        %v5553 = vmax.f32 %v5552, %v3587
        %v5554 = vmax.f32 %v5553, %v3590
        %v5555 = vmax.f32 %v5554, %v3592
        %v5556 = vmax.f32 %v5555, %v3595
        %v5557 = vmax.f32 %v5556, %v3597
        %v5558 = vmax.f32 %v5557, %v3600
        %v5559 = vmax.f32 %v5558, %v3602
        %v5560 = vmax.f32 %v5559, %v3605
        %v5561 = vmax.f32 %v5560, %v3607
        %v5562 = vmax.f32 %v5561, %v3610
        %v5563 = vmax.f32 %v5562, %v3612
        %v5564 = vmax.f32 %v5563, %v3615
        %v5565 = vmax.f32 %v5564, %v3617
        %v5566 = vmax.f32 %v5565, %v3620
        %v5567 = vmax.f32 %v5566, %v3622
        %v5568 = vmax.f32 %v5567, %v3625
        %v5569 = vmax.f32 %v5568, %v3627
        %v5570 = vmax.f32 %v5569, %v3630
        %v5571 = vmax.f32 %v5570, %v3632
        %v5572 = vmax.f32 %v5571, %v3635
        %v5573 = vmax.f32 %v5572, %v3637
        %v5574 = vmax.f32 %v5573, %v3640
        %v5575 = vmax.f32 %v5574, %v3642
        %v5576 = vmax.f32 %v5575, %v3645
        %v5577 = vmax.f32 %v5576, %v3647
        %v5578 = vmax.f32 %v5577, %v3650
        %v5579 = vmax.f32 %v5578, %v3652
        %v5580 = vmax.f32 %v5579, %v3655
        %v5581 = vmax.f32 %v5580, %v3657
        %v5582 = vmax.f32 %v5581, %v3660
        %v5583 = vmax.f32 %v5582, %v3662
        %v5584 = vmax.f32 %v5583, %v3665
        %v5585 = vmax.f32 %v5584, %v3667
        %v5586 = vmax.f32 %v5585, %v3670
        %v5587 = vmax.f32 %v5586, %v3672
        %v5588 = vmax.f32 %v5587, %v3675
        %v5589 = vmax.f32 %v5588, %v3677
        %v5590 = vmax.f32 %v5589, %v3680
        %v5591 = vmax.f32 %v5590, %v3682
        %v5592 = vmax.f32 %v5591, %v3685
        %v5593 = vmax.f32 %v5592, %v3687
        %v5594 = vmax.f32 %v5593, %v3690
        %v5595 = vmax.f32 %v5594, %v3692
        %v5596 = vmax.f32 %v5595, %v3695
        %v5597 = vmax.f32 %v5596, %v3697
        %v5598 = vmax.f32 %v5597, %v3700
        %v5599 = vmax.f32 %v5598, %v3702
        %v5600 = vmax.f32 %v5599, %v3705
        %v5601 = vmax.f32 %v5600, %v3707
        %v5602 = vmax.f32 %v5601, %v3710
        %v5603 = vmax.f32 %v5602, %v3712
        %v5604 = vmax.f32 %v5603, %v3715
        %v5605 = vmax.f32 %v5604, %v3717
        %v5606 = vmax.f32 %v5605, %v3720
        %v5607 = vmax.f32 %v5606, %v3722
        %v5608 = vmax.f32 %v5607, %v3725
        %v5609 = vmax.f32 %v5608, %v3727
        %v5610 = vmax.f32 %v5609, %v3730
        %v5611 = vmax.f32 %v5610, %v3732
        %v5612 = vmax.f32 %v5611, %v3735
        %v5613 = vmax.f32 %v5612, %v3737
        %v5614 = vmax.f32 %v5613, %v3740
        %v5615 = vmax.f32 %v5614, %v3742
        %v5616 = vmax.f32 %v5615, %v3745
        %v5617 = vmax.f32 %v5616, %v3747
        %v5618 = vmax.f32 %v5617, %v3750
        %v5619 = vmax.f32 %v5618, %v3752
        %v5620 = vmax.f32 %v5619, %v3755
        %v5621 = vmax.f32 %v5620, %v3757
        %v5622 = vmax.f32 %v5621, %v3760
        %v5623 = vmax.f32 %v5622, %v3762
        %v5624 = vmax.f32 %v5623, %v3765
        %v5625 = vmax.f32 %v5624, %v3767
        %v5626 = vmax.f32 %v5625, %v3770
        %v5627 = vmax.f32 %v5626, %v3772
        %v5628 = vmax.f32 %v5627, %v3775
        %v5629 = vmax.f32 %v5628, %v3777
        %v5630 = vmax.f32 %v5629, %v3780
        %v5631 = vmax.f32 %v5630, %v3782
        %v5632 = vmax.f32 %v5631, %v3785
        %v5633 = vmax.f32 %v5632, %v3787
        %v5634 = vmax.f32 %v5633, %v3790
        %v5635 = vmax.f32 %v5634, %v3792
        %v5636 = vmax.f32 %v5635, %v3795
        %v5637 = vmax.f32 %v5636, %v3797
        %v5638 = vmax.f32 %v5637, %v3800
        %v5639 = vmax.f32 %v5638, %v3802
        %v5640 = vmax.f32 %v5639, %v3805
        %v5641 = vmax.f32 %v5640, %v3807
        %v5642 = vmax.f32 %v5641, %v3810
        %v5643 = vmax.f32 %v5642, %v3812
        %v5644 = vmax.f32 %v5643, %v3815
        %v5645 = vmax.f32 %v5644, %v3817
        %v5646 = vmax.f32 %v5645, %v3820
        %v5647 = vmax.f32 %v5646, %v3822
        %v5648 = vmax.f32 %v3834, %v3836
        %v5649 = vmax.f32 %v5648, %v3839
        %v5650 = vmax.f32 %v5649, %v3841
        %v5651 = vmax.f32 %v5650, %v3844
        %v5652 = vmax.f32 %v5651, %v3846
        %v5653 = vmax.f32 %v5652, %v3849
        %v5654 = vmax.f32 %v5653, %v3851
        %v5655 = vmax.f32 %v5654, %v3854
        %v5656 = vmax.f32 %v5655, %v3856
        %v5657 = vmax.f32 %v5656, %v3859
        %v5658 = vmax.f32 %v5657, %v3861
        %v5659 = vmax.f32 %v5658, %v3864
        %v5660 = vmax.f32 %v5659, %v3866
        %v5661 = vmax.f32 %v5660, %v3869
        %v5662 = vmax.f32 %v5661, %v3871
        %v5663 = vmax.f32 %v5662, %v3874
        %v5664 = vmax.f32 %v5663, %v3876
        %v5665 = vmax.f32 %v5664, %v3879
        %v5666 = vmax.f32 %v5665, %v3881
        %v5667 = vmax.f32 %v5666, %v3884
        %v5668 = vmax.f32 %v5667, %v3886
        %v5669 = vmax.f32 %v5668, %v3889
        %v5670 = vmax.f32 %v5669, %v3891
        %v5671 = vmax.f32 %v5670, %v3894
        %v5672 = vmax.f32 %v5671, %v3896
        %v5673 = vmax.f32 %v5672, %v3899
        %v5674 = vmax.f32 %v5673, %v3901
        %v5675 = vmax.f32 %v5674, %v3904
        %v5676 = vmax.f32 %v5675, %v3906
        %v5677 = vmax.f32 %v5676, %v3909
        %v5678 = vmax.f32 %v5677, %v3911
        %v5679 = vmax.f32 %v5678, %v3914
        %v5680 = vmax.f32 %v5679, %v3916
        %v5681 = vmax.f32 %v5680, %v3919
        %v5682 = vmax.f32 %v5681, %v3921
        %v5683 = vmax.f32 %v5682, %v3924
        %v5684 = vmax.f32 %v5683, %v3926
        %v5685 = vmax.f32 %v5684, %v3929
        %v5686 = vmax.f32 %v5685, %v3931
        %v5687 = vmax.f32 %v5686, %v3934
        %v5688 = vmax.f32 %v5687, %v3936
        %v5689 = vmax.f32 %v5688, %v3939
        %v5690 = vmax.f32 %v5689, %v3941
        %v5691 = vmax.f32 %v5690, %v3944
        %v5692 = vmax.f32 %v5691, %v3946
        %v5693 = vmax.f32 %v5692, %v3949
        %v5694 = vmax.f32 %v5693, %v3951
        %v5695 = vmax.f32 %v5694, %v3954
        %v5696 = vmax.f32 %v5695, %v3956
        %v5697 = vmax.f32 %v5696, %v3959
        %v5698 = vmax.f32 %v5697, %v3961
        %v5699 = vmax.f32 %v5698, %v3964
        %v5700 = vmax.f32 %v5699, %v3966
        %v5701 = vmax.f32 %v5700, %v3969
        %v5702 = vmax.f32 %v5701, %v3971
        %v5703 = vmax.f32 %v5702, %v3974
        %v5704 = vmax.f32 %v5703, %v3976
        %v5705 = vmax.f32 %v5704, %v3979
        %v5706 = vmax.f32 %v5705, %v3981
        %v5707 = vmax.f32 %v5706, %v3984
        %v5708 = vmax.f32 %v5707, %v3986
        %v5709 = vmax.f32 %v5708, %v3989
        %v5710 = vmax.f32 %v5709, %v3991
        %v5711 = vmax.f32 %v5710, %v3994
        %v5712 = vmax.f32 %v5711, %v3996
        %v5713 = vmax.f32 %v5712, %v3999
        %v5714 = vmax.f32 %v5713, %v4001
        %v5715 = vmax.f32 %v5714, %v4004
        %v5716 = vmax.f32 %v5715, %v4006
        %v5717 = vmax.f32 %v5716, %v4009
        %v5718 = vmax.f32 %v5717, %v4011
        %v5719 = vmax.f32 %v5718, %v4014
        %v5720 = vmax.f32 %v5719, %v4016
        %v5721 = vmax.f32 %v5720, %v4019
        %v5722 = vmax.f32 %v5721, %v4021
        %v5723 = vmax.f32 %v5722, %v4024
        %v5724 = vmax.f32 %v5723, %v4026
        %v5725 = vmax.f32 %v5724, %v4029
        %v5726 = vmax.f32 %v5725, %v4031
        %v5727 = vmax.f32 %v5726, %v4034
        %v5728 = vmax.f32 %v5727, %v4036
        %v5729 = vmax.f32 %v5728, %v4039
        %v5730 = vmax.f32 %v5729, %v4041
        %v5731 = vmax.f32 %v5730, %v4044
        %v5732 = vmax.f32 %v5731, %v4046
        %v5733 = vmax.f32 %v5732, %v4049
        %v5734 = vmax.f32 %v5733, %v4051
        %v5735 = vmax.f32 %v5734, %v4054
        %v5736 = vmax.f32 %v5735, %v4056
        %v5737 = vmax.f32 %v5736, %v4059
        %v5738 = vmax.f32 %v5737, %v4061
        %v5739 = vmax.f32 %v5738, %v4064
        %v5740 = vmax.f32 %v5739, %v4066
        %v5741 = vmax.f32 %v5740, %v4069
        %v5742 = vmax.f32 %v5741, %v4071
        %v5743 = vmax.f32 %v5742, %v4074
        %v5744 = vmax.f32 %v5743, %v4076
        %v5745 = vmax.f32 %v5744, %v4079
        %v5746 = vmax.f32 %v5745, %v4081
        %v5747 = vmax.f32 %v5746, %v4084
        %v5748 = vmax.f32 %v5747, %v4086
        %v5749 = vmax.f32 %v5748, %v4089
        %v5750 = vmax.f32 %v5749, %v4091
        %v5751 = vmax.f32 %v5750, %v4094
        %v5752 = vmax.f32 %v5751, %v4096
        %v5753 = vmax.f32 %v5752, %v4099
        %v5754 = vmax.f32 %v5753, %v4101
        %v5755 = vmax.f32 %v5754, %v4104
        %v5756 = vmax.f32 %v5755, %v4106
        %v5757 = vmax.f32 %v5756, %v4109
        %v5758 = vmax.f32 %v5757, %v4111
        %v5759 = vmax.f32 %v5758, %v4114
        %v5760 = vmax.f32 %v5759, %v4116
        %v5761 = vmax.f32 %v5760, %v4119
        %v5762 = vmax.f32 %v5761, %v4121
        %v5763 = vmax.f32 %v5762, %v4124
        %v5764 = vmax.f32 %v5763, %v4126
        %v5765 = vmax.f32 %v5764, %v4129
        %v5766 = vmax.f32 %v5765, %v4131
        %v5767 = vmax.f32 %v5766, %v4134
        %v5768 = vmax.f32 %v5767, %v4136
        %v5769 = vmax.f32 %v5768, %v4139
        %v5770 = vmax.f32 %v5769, %v4141
        %v5771 = vmax.f32 %v5770, %v4144
        %v5772 = vmax.f32 %v5771, %v4146
        %v5773 = vmax.f32 %v5772, %v4149
        %v5774 = vmax.f32 %v5773, %v4151
        %v5775 = vmax.f32 %v4163, %v4165
        %v5776 = vmax.f32 %v5775, %v4168
        %v5777 = vmax.f32 %v5776, %v4170
        %v5778 = vmax.f32 %v5777, %v4173
        %v5779 = vmax.f32 %v5778, %v4175
        %v5780 = vmax.f32 %v5779, %v4178
        %v5781 = vmax.f32 %v5780, %v4180
        %v5782 = vmax.f32 %v5781, %v4183
        %v5783 = vmax.f32 %v5782, %v4185
        %v5784 = vmax.f32 %v5783, %v4188
        %v5785 = vmax.f32 %v5784, %v4190
        %v5786 = vmax.f32 %v5785, %v4193
        %v5787 = vmax.f32 %v5786, %v4195
        %v5788 = vmax.f32 %v5787, %v4198
        %v5789 = vmax.f32 %v5788, %v4200
        %v5790 = vmax.f32 %v5789, %v4203
        %v5791 = vmax.f32 %v5790, %v4205
        %v5792 = vmax.f32 %v5791, %v4208
        %v5793 = vmax.f32 %v5792, %v4210
        %v5794 = vmax.f32 %v5793, %v4213
        %v5795 = vmax.f32 %v5794, %v4215
        %v5796 = vmax.f32 %v5795, %v4218
        %v5797 = vmax.f32 %v5796, %v4220
        %v5798 = vmax.f32 %v5797, %v4223
        %v5799 = vmax.f32 %v5798, %v4225
        %v5800 = vmax.f32 %v5799, %v4228
        %v5801 = vmax.f32 %v5800, %v4230
        %v5802 = vmax.f32 %v5801, %v4233
        %v5803 = vmax.f32 %v5802, %v4235
        %v5804 = vmax.f32 %v5803, %v4238
        %v5805 = vmax.f32 %v5804, %v4240
        %v5806 = vmax.f32 %v5805, %v4243
        %v5807 = vmax.f32 %v5806, %v4245
        %v5808 = vmax.f32 %v5807, %v4248
        %v5809 = vmax.f32 %v5808, %v4250
        %v5810 = vmax.f32 %v5809, %v4253
        %v5811 = vmax.f32 %v5810, %v4255
        %v5812 = vmax.f32 %v5811, %v4258
        %v5813 = vmax.f32 %v5812, %v4260
        %v5814 = vmax.f32 %v5813, %v4263
        %v5815 = vmax.f32 %v5814, %v4265
        %v5816 = vmax.f32 %v5815, %v4268
        %v5817 = vmax.f32 %v5816, %v4270
        %v5818 = vmax.f32 %v5817, %v4273
        %v5819 = vmax.f32 %v5818, %v4275
        %v5820 = vmax.f32 %v5819, %v4278
        %v5821 = vmax.f32 %v5820, %v4280
        %v5822 = vmax.f32 %v5821, %v4283
        %v5823 = vmax.f32 %v5822, %v4285
        %v5824 = vmax.f32 %v5823, %v4288
        %v5825 = vmax.f32 %v5824, %v4290
        %v5826 = vmax.f32 %v5825, %v4293
        %v5827 = vmax.f32 %v5826, %v4295
        %v5828 = vmax.f32 %v5827, %v4298
        %v5829 = vmax.f32 %v5828, %v4300
        %v5830 = vmax.f32 %v5829, %v4303
        %v5831 = vmax.f32 %v5830, %v4305
        %v5832 = vmax.f32 %v5831, %v4308
        %v5833 = vmax.f32 %v5832, %v4310
        %v5834 = vmax.f32 %v5833, %v4313
        %v5835 = vmax.f32 %v5834, %v4315
        %v5836 = vmax.f32 %v5835, %v4318
        %v5837 = vmax.f32 %v5836, %v4320
        %v5838 = vmax.f32 %v5837, %v4323
        %v5839 = vmax.f32 %v5838, %v4325
        %v5840 = vmax.f32 %v5839, %v4328
        %v5841 = vmax.f32 %v5840, %v4330
        %v5842 = vmax.f32 %v5841, %v4333
        %v5843 = vmax.f32 %v5842, %v4335
        %v5844 = vmax.f32 %v5843, %v4338
        %v5845 = vmax.f32 %v5844, %v4340
        %v5846 = vmax.f32 %v5845, %v4343
        %v5847 = vmax.f32 %v5846, %v4345
        %v5848 = vmax.f32 %v5847, %v4348
        %v5849 = vmax.f32 %v5848, %v4350
        %v5850 = vmax.f32 %v5849, %v4353
        %v5851 = vmax.f32 %v5850, %v4355
        %v5852 = vmax.f32 %v5851, %v4358
        %v5853 = vmax.f32 %v5852, %v4360
        %v5854 = vmax.f32 %v5853, %v4363
        %v5855 = vmax.f32 %v5854, %v4365
        %v5856 = vmax.f32 %v5855, %v4368
        %v5857 = vmax.f32 %v5856, %v4370
        %v5858 = vmax.f32 %v5857, %v4373
        %v5859 = vmax.f32 %v5858, %v4375
        %v5860 = vmax.f32 %v5859, %v4378
        %v5861 = vmax.f32 %v5860, %v4380
        %v5862 = vmax.f32 %v5861, %v4383
        %v5863 = vmax.f32 %v5862, %v4385
        %v5864 = vmax.f32 %v5863, %v4388
        %v5865 = vmax.f32 %v5864, %v4390
        %v5866 = vmax.f32 %v5865, %v4393
        %v5867 = vmax.f32 %v5866, %v4395
        %v5868 = vmax.f32 %v5867, %v4398
        %v5869 = vmax.f32 %v5868, %v4400
        %v5870 = vmax.f32 %v5869, %v4403
        %v5871 = vmax.f32 %v5870, %v4405
        %v5872 = vmax.f32 %v5871, %v4408
        %v5873 = vmax.f32 %v5872, %v4410
        %v5874 = vmax.f32 %v5873, %v4413
        %v5875 = vmax.f32 %v5874, %v4415
        %v5876 = vmax.f32 %v5875, %v4418
        %v5877 = vmax.f32 %v5876, %v4420
        %v5878 = vmax.f32 %v5877, %v4423
        %v5879 = vmax.f32 %v5878, %v4425
        %v5880 = vmax.f32 %v5879, %v4428
        %v5881 = vmax.f32 %v5880, %v4430
        %v5882 = vmax.f32 %v5881, %v4433
        %v5883 = vmax.f32 %v5882, %v4435
        %v5884 = vmax.f32 %v5883, %v4438
        %v5885 = vmax.f32 %v5884, %v4440
        %v5886 = vmax.f32 %v5885, %v4443
        %v5887 = vmax.f32 %v5886, %v4445
        %v5888 = vmax.f32 %v5887, %v4448
        %v5889 = vmax.f32 %v5888, %v4450
        %v5890 = vmax.f32 %v5889, %v4453
        %v5891 = vmax.f32 %v5890, %v4455
        %v5892 = vmax.f32 %v5891, %v4458
        %v5893 = vmax.f32 %v5892, %v4460
        %v5894 = vmax.f32 %v5893, %v4463
        %v5895 = vmax.f32 %v5894, %v4465
        %v5896 = vmax.f32 %v5895, %v4468
        %v5897 = vmax.f32 %v5896, %v4470
        %v5898 = vmax.f32 %v5897, %v4473
        %v5899 = vmax.f32 %v5898, %v4475
        %v5900 = vmax.f32 %v5899, %v4478
        %v5901 = vmax.f32 %v5900, %v4480
        %v5902 = vmax.f32 %v4492, %v4494
        %v5903 = vmax.f32 %v5902, %v4497
        %v5904 = vmax.f32 %v5903, %v4499
        %v5905 = vmax.f32 %v5904, %v4502
        %v5906 = vmax.f32 %v5905, %v4504
        %v5907 = vmax.f32 %v5906, %v4507
        %v5908 = vmax.f32 %v5907, %v4509
        %v5909 = vmax.f32 %v5908, %v4512
        %v5910 = vmax.f32 %v5909, %v4514
        %v5911 = vmax.f32 %v5910, %v4517
        %v5912 = vmax.f32 %v5911, %v4519
        %v5913 = vmax.f32 %v5912, %v4522
        %v5914 = vmax.f32 %v5913, %v4524
        %v5915 = vmax.f32 %v5914, %v4527
        %v5916 = vmax.f32 %v5915, %v4529
        %v5917 = vmax.f32 %v5916, %v4532
        %v5918 = vmax.f32 %v5917, %v4534
        %v5919 = vmax.f32 %v5918, %v4537
        %v5920 = vmax.f32 %v5919, %v4539
        %v5921 = vmax.f32 %v5920, %v4542
        %v5922 = vmax.f32 %v5921, %v4544
        %v5923 = vmax.f32 %v5922, %v4547
        %v5924 = vmax.f32 %v5923, %v4549
        %v5925 = vmax.f32 %v5924, %v4552
        %v5926 = vmax.f32 %v5925, %v4554
        %v5927 = vmax.f32 %v5926, %v4557
        %v5928 = vmax.f32 %v5927, %v4559
        %v5929 = vmax.f32 %v5928, %v4562
        %v5930 = vmax.f32 %v5929, %v4564
        %v5931 = vmax.f32 %v5930, %v4567
        %v5932 = vmax.f32 %v5931, %v4569
        %v5933 = vmax.f32 %v5932, %v4572
        %v5934 = vmax.f32 %v5933, %v4574
        %v5935 = vmax.f32 %v5934, %v4577
        %v5936 = vmax.f32 %v5935, %v4579
        %v5937 = vmax.f32 %v5936, %v4582
        %v5938 = vmax.f32 %v5937, %v4584
        %v5939 = vmax.f32 %v5938, %v4587
        %v5940 = vmax.f32 %v5939, %v4589
        %v5941 = vmax.f32 %v5940, %v4592
        %v5942 = vmax.f32 %v5941, %v4594
        %v5943 = vmax.f32 %v5942, %v4597
        %v5944 = vmax.f32 %v5943, %v4599
        %v5945 = vmax.f32 %v5944, %v4602
        %v5946 = vmax.f32 %v5945, %v4604
        %v5947 = vmax.f32 %v5946, %v4607
        %v5948 = vmax.f32 %v5947, %v4609
        %v5949 = vmax.f32 %v5948, %v4612
        %v5950 = vmax.f32 %v5949, %v4614
        %v5951 = vmax.f32 %v5950, %v4617
        %v5952 = vmax.f32 %v5951, %v4619
        %v5953 = vmax.f32 %v5952, %v4622
        %v5954 = vmax.f32 %v5953, %v4624
        %v5955 = vmax.f32 %v5954, %v4627
        %v5956 = vmax.f32 %v5955, %v4629
        %v5957 = vmax.f32 %v5956, %v4632
        %v5958 = vmax.f32 %v5957, %v4634
        %v5959 = vmax.f32 %v5958, %v4637
        %v5960 = vmax.f32 %v5959, %v4639
        %v5961 = vmax.f32 %v5960, %v4642
        %v5962 = vmax.f32 %v5961, %v4644
        %v5963 = vmax.f32 %v5962, %v4647
        %v5964 = vmax.f32 %v5963, %v4649
        %v5965 = vmax.f32 %v5964, %v4652
        %v5966 = vmax.f32 %v5965, %v4654
        %v5967 = vmax.f32 %v5966, %v4657
        %v5968 = vmax.f32 %v5967, %v4659
        %v5969 = vmax.f32 %v5968, %v4662
        %v5970 = vmax.f32 %v5969, %v4664
        %v5971 = vmax.f32 %v5970, %v4667
        %v5972 = vmax.f32 %v5971, %v4669
        %v5973 = vmax.f32 %v5972, %v4672
        %v5974 = vmax.f32 %v5973, %v4674
        %v5975 = vmax.f32 %v5974, %v4677
        %v5976 = vmax.f32 %v5975, %v4679
        %v5977 = vmax.f32 %v5976, %v4682
        %v5978 = vmax.f32 %v5977, %v4684
        %v5979 = vmax.f32 %v5978, %v4687
        %v5980 = vmax.f32 %v5979, %v4689
        %v5981 = vmax.f32 %v5980, %v4692
        %v5982 = vmax.f32 %v5981, %v4694
        %v5983 = vmax.f32 %v5982, %v4697
        %v5984 = vmax.f32 %v5983, %v4699
        %v5985 = vmax.f32 %v5984, %v4702
        %v5986 = vmax.f32 %v5985, %v4704
        %v5987 = vmax.f32 %v5986, %v4707
        %v5988 = vmax.f32 %v5987, %v4709
        %v5989 = vmax.f32 %v5988, %v4712
        %v5990 = vmax.f32 %v5989, %v4714
        %v5991 = vmax.f32 %v5990, %v4717
        %v5992 = vmax.f32 %v5991, %v4719
        %v5993 = vmax.f32 %v5992, %v4722
        %v5994 = vmax.f32 %v5993, %v4724
        %v5995 = vmax.f32 %v5994, %v4727
        %v5996 = vmax.f32 %v5995, %v4729
        %v5997 = vmax.f32 %v5996, %v4732
        %v5998 = vmax.f32 %v5997, %v4734
        %v5999 = vmax.f32 %v5998, %v4737
        %v6000 = vmax.f32 %v5999, %v4739
        %v6001 = vmax.f32 %v6000, %v4742
        %v6002 = vmax.f32 %v6001, %v4744
        %v6003 = vmax.f32 %v6002, %v4747
        %v6004 = vmax.f32 %v6003, %v4749
        %v6005 = vmax.f32 %v6004, %v4752
        %v6006 = vmax.f32 %v6005, %v4754
        %v6007 = vmax.f32 %v6006, %v4757
        %v6008 = vmax.f32 %v6007, %v4759
        %v6009 = vmax.f32 %v6008, %v4762
        %v6010 = vmax.f32 %v6009, %v4764
        %v6011 = vmax.f32 %v6010, %v4767
        %v6012 = vmax.f32 %v6011, %v4769
        %v6013 = vmax.f32 %v6012, %v4772
        %v6014 = vmax.f32 %v6013, %v4774
        %v6015 = vmax.f32 %v6014, %v4777
        %v6016 = vmax.f32 %v6015, %v4779
        %v6017 = vmax.f32 %v6016, %v4782
        %v6018 = vmax.f32 %v6017, %v4784
        %v6019 = vmax.f32 %v6018, %v4787
        %v6020 = vmax.f32 %v6019, %v4789
        %v6021 = vmax.f32 %v6020, %v4792
        %v6022 = vmax.f32 %v6021, %v4794
        %v6023 = vmax.f32 %v6022, %v4797
        %v6024 = vmax.f32 %v6023, %v4799
        %v6025 = vmax.f32 %v6024, %v4802
        %v6026 = vmax.f32 %v6025, %v4804
        %v6027 = vmax.f32 %v6026, %v4807
        %v6028 = vmax.f32 %v6027, %v4809
        %v6029 = vmax.f32 %v4821, %v4823
        %v6030 = vmax.f32 %v6029, %v4826
        %v6031 = vmax.f32 %v6030, %v4828
        %v6032 = vmax.f32 %v6031, %v4831
        %v6033 = vmax.f32 %v6032, %v4833
        %v6034 = vmax.f32 %v6033, %v4836
        %v6035 = vmax.f32 %v6034, %v4838
        %v6036 = vmax.f32 %v6035, %v4841
        %v6037 = vmax.f32 %v6036, %v4843
        %v6038 = vmax.f32 %v6037, %v4846
        %v6039 = vmax.f32 %v6038, %v4848
        %v6040 = vmax.f32 %v6039, %v4851
        %v6041 = vmax.f32 %v6040, %v4853
        %v6042 = vmax.f32 %v6041, %v4856
        %v6043 = vmax.f32 %v6042, %v4858
        %v6044 = vmax.f32 %v6043, %v4861
        %v6045 = vmax.f32 %v6044, %v4863
        %v6046 = vmax.f32 %v6045, %v4866
        %v6047 = vmax.f32 %v6046, %v4868
        %v6048 = vmax.f32 %v6047, %v4871
        %v6049 = vmax.f32 %v6048, %v4873
        %v6050 = vmax.f32 %v6049, %v4876
        %v6051 = vmax.f32 %v6050, %v4878
        %v6052 = vmax.f32 %v6051, %v4881
        %v6053 = vmax.f32 %v6052, %v4883
        %v6054 = vmax.f32 %v6053, %v4886
        %v6055 = vmax.f32 %v6054, %v4888
        %v6056 = vmax.f32 %v6055, %v4891
        %v6057 = vmax.f32 %v6056, %v4893
        %v6058 = vmax.f32 %v6057, %v4896
        %v6059 = vmax.f32 %v6058, %v4898
        %v6060 = vmax.f32 %v6059, %v4901
        %v6061 = vmax.f32 %v6060, %v4903
        %v6062 = vmax.f32 %v6061, %v4906
        %v6063 = vmax.f32 %v6062, %v4908
        %v6064 = vmax.f32 %v6063, %v4911
        %v6065 = vmax.f32 %v6064, %v4913
        %v6066 = vmax.f32 %v6065, %v4916
        %v6067 = vmax.f32 %v6066, %v4918
        %v6068 = vmax.f32 %v6067, %v4921
        %v6069 = vmax.f32 %v6068, %v4923
        %v6070 = vmax.f32 %v6069, %v4926
        %v6071 = vmax.f32 %v6070, %v4928
        %v6072 = vmax.f32 %v6071, %v4931
        %v6073 = vmax.f32 %v6072, %v4933
        %v6074 = vmax.f32 %v6073, %v4936
        %v6075 = vmax.f32 %v6074, %v4938
        %v6076 = vmax.f32 %v6075, %v4941
        %v6077 = vmax.f32 %v6076, %v4943
        %v6078 = vmax.f32 %v6077, %v4946
        %v6079 = vmax.f32 %v6078, %v4948
        %v6080 = vmax.f32 %v6079, %v4951
        %v6081 = vmax.f32 %v6080, %v4953
        %v6082 = vmax.f32 %v6081, %v4956
        %v6083 = vmax.f32 %v6082, %v4958
        %v6084 = vmax.f32 %v6083, %v4961
        %v6085 = vmax.f32 %v6084, %v4963
        %v6086 = vmax.f32 %v6085, %v4966
        %v6087 = vmax.f32 %v6086, %v4968
        %v6088 = vmax.f32 %v6087, %v4971
        %v6089 = vmax.f32 %v6088, %v4973
        %v6090 = vmax.f32 %v6089, %v4976
        %v6091 = vmax.f32 %v6090, %v4978
        %v6092 = vmax.f32 %v6091, %v4981
        %v6093 = vmax.f32 %v6092, %v4983
        %v6094 = vmax.f32 %v6093, %v4986
        %v6095 = vmax.f32 %v6094, %v4988
        %v6096 = vmax.f32 %v6095, %v4991
        %v6097 = vmax.f32 %v6096, %v4993
        %v6098 = vmax.f32 %v6097, %v4996
        %v6099 = vmax.f32 %v6098, %v4998
        %v6100 = vmax.f32 %v6099, %v5001
        %v6101 = vmax.f32 %v6100, %v5003
        %v6102 = vmax.f32 %v6101, %v5006
        %v6103 = vmax.f32 %v6102, %v5008
        %v6104 = vmax.f32 %v6103, %v5011
        %v6105 = vmax.f32 %v6104, %v5013
        %v6106 = vmax.f32 %v6105, %v5016
        %v6107 = vmax.f32 %v6106, %v5018
        %v6108 = vmax.f32 %v6107, %v5021
        %v6109 = vmax.f32 %v6108, %v5023
        %v6110 = vmax.f32 %v6109, %v5026
        %v6111 = vmax.f32 %v6110, %v5028
        %v6112 = vmax.f32 %v6111, %v5031
        %v6113 = vmax.f32 %v6112, %v5033
        %v6114 = vmax.f32 %v6113, %v5036
        %v6115 = vmax.f32 %v6114, %v5038
        %v6116 = vmax.f32 %v6115, %v5041
        %v6117 = vmax.f32 %v6116, %v5043
        %v6118 = vmax.f32 %v6117, %v5046
        %v6119 = vmax.f32 %v6118, %v5048
        %v6120 = vmax.f32 %v6119, %v5051
        %v6121 = vmax.f32 %v6120, %v5053
        %v6122 = vmax.f32 %v6121, %v5056
        %v6123 = vmax.f32 %v6122, %v5058
        %v6124 = vmax.f32 %v6123, %v5061
        %v6125 = vmax.f32 %v6124, %v5063
        %v6126 = vmax.f32 %v6125, %v5066
        %v6127 = vmax.f32 %v6126, %v5068
        %v6128 = vmax.f32 %v6127, %v5071
        %v6129 = vmax.f32 %v6128, %v5073
        %v6130 = vmax.f32 %v6129, %v5076
        %v6131 = vmax.f32 %v6130, %v5078
        %v6132 = vmax.f32 %v6131, %v5081
        %v6133 = vmax.f32 %v6132, %v5083
        %v6134 = vmax.f32 %v6133, %v5086
        %v6135 = vmax.f32 %v6134, %v5088
        %v6136 = vmax.f32 %v6135, %v5091
        %v6137 = vmax.f32 %v6136, %v5093
        %v6138 = vmax.f32 %v6137, %v5096
        %v6139 = vmax.f32 %v6138, %v5098
        %v6140 = vmax.f32 %v6139, %v5101
        %v6141 = vmax.f32 %v6140, %v5103
        %v6142 = vmax.f32 %v6141, %v5106
        %v6143 = vmax.f32 %v6142, %v5108
        %v6144 = vmax.f32 %v6143, %v5111
        %v6145 = vmax.f32 %v6144, %v5113
        %v6146 = vmax.f32 %v6145, %v5116
        %v6147 = vmax.f32 %v6146, %v5118
        %v6148 = vmax.f32 %v6147, %v5121
        %v6149 = vmax.f32 %v6148, %v5123
        %v6150 = vmax.f32 %v6149, %v5126
        %v6151 = vmax.f32 %v6150, %v5128
        %v6152 = vmax.f32 %v6151, %v5131
        %v6153 = vmax.f32 %v6152, %v5133
        %v6154 = vmax.f32 %v6153, %v5136
        %v6155 = vmax.f32 %v6154, %v5138
        %v6156 = vld [vmem:[#allocation2] sm:$0xff]
        %v6157 = vld [vmem:[#allocation2 + $0x8] sm:$0xff]
        %v6158 = vld [vmem:[#allocation2 + $0x10] sm:$0xff]
        %v6159 = vld [vmem:[#allocation2 + $0x18] sm:$0xff]
        %v6160 = vld [vmem:[#allocation2 + $0x20] sm:$0xff]
        %v6161 = vld [vmem:[#allocation2 + $0x28] sm:$0xff]
        %v6162 = vld [vmem:[#allocation2 + $0x30] sm:$0xff]
        %v6163 = vld [vmem:[#allocation2 + $0x38] sm:$0xff]
        %v6164 = vmax.f32 %v6156, %v5266
        %v6165 = vmax.f32 %v6157, %v5393
        %v6166 = vmax.f32 %v6158, %v5520
        %v6167 = vmax.f32 %v6159, %v5647
        %v6168 = vmax.f32 %v6160, %v5774
        %v6169 = vmax.f32 %v6161, %v5901
        %v6170 = vmax.f32 %v6162, %v6028
        %v6171 = vmax.f32 %v6163, %v6155
        %6172 = vst [vmem:[#allocation2] sm:$0xff] %v6164
        %6173 = vst [vmem:[#allocation2 + $0x8] sm:$0xff] %v6165
        %6174 = vst [vmem:[#allocation2 + $0x10] sm:$0xff] %v6166
        %6175 = vst [vmem:[#allocation2 + $0x18] sm:$0xff] %v6167
        %6176 = vst [vmem:[#allocation2 + $0x20] sm:$0xff] %v6168
        %6177 = vst [vmem:[#allocation2 + $0x28] sm:$0xff] %v6169
        %6178 = vst [vmem:[#allocation2 + $0x30] sm:$0xff] %v6170
        %6179 = vst [vmem:[#allocation2 + $0x38] sm:$0xff] %v6171
        %p6180 = scmp.eq.s32.totalorder %s34, 2
        // Predicated region
        $region85: #{tpu_custom_call.1} parent=71 // pred_check
          %p6181 = pneg %p6180
        $region86: #{tpu_custom_call.1} parent=71 // pred_check_branch
          %6183 = sbr.rel (%p6181) target = $region88
        $region87: #{tpu_custom_call.1} parent=71 // pred_region
          %v6184 = vld [vmem:[#allocation2] sm:$0xff]
          %v6185 = vld [vmem:[#allocation2 + $0x8] sm:$0xff]
          %v6186 = vld [vmem:[#allocation2 + $0x10] sm:$0xff]
          %v6187 = vld [vmem:[#allocation2 + $0x18] sm:$0xff]
          %v6188 = vld [vmem:[#allocation2 + $0x20] sm:$0xff]
          %v6189 = vld [vmem:[#allocation2 + $0x28] sm:$0xff]
          %v6190 = vld [vmem:[#allocation2 + $0x30] sm:$0xff]
          %v6191 = vld [vmem:[#allocation2 + $0x38] sm:$0xff]
          %v6192 = vrot.slane %v6184, 4
          %v6193 = vmax.f32 %v6184, %v6192
          %v6194 = vrot.slane %v6193, 2
          %v6195 = vmax.f32 %v6193, %v6194
          %v6196 = vrot.slane %v6195, 1
          %v6197 = vmax.f32 %v6195, %v6196
          %v6198 = vrot.slane %v6185, 4
          %v6199 = vmax.f32 %v6185, %v6198
          %v6200 = vrot.slane %v6199, 2
          %v6201 = vmax.f32 %v6199, %v6200
          %v6202 = vrot.slane %v6201, 1
          %v6203 = vmax.f32 %v6201, %v6202
          %v6204 = vrot.slane %v6186, 4
          %v6205 = vmax.f32 %v6186, %v6204
          %v6206 = vrot.slane %v6205, 2
          %v6207 = vmax.f32 %v6205, %v6206
          %v6208 = vrot.slane %v6207, 1
          %v6209 = vmax.f32 %v6207, %v6208
          %v6210 = vrot.slane %v6187, 4
          %v6211 = vmax.f32 %v6187, %v6210
          %v6212 = vrot.slane %v6211, 2
          %v6213 = vmax.f32 %v6211, %v6212
          %v6214 = vrot.slane %v6213, 1
          %v6215 = vmax.f32 %v6213, %v6214
          %v6216 = vrot.slane %v6188, 4
          %v6217 = vmax.f32 %v6188, %v6216
          %v6218 = vrot.slane %v6217, 2
          %v6219 = vmax.f32 %v6217, %v6218
          %v6220 = vrot.slane %v6219, 1
          %v6221 = vmax.f32 %v6219, %v6220
          %v6222 = vrot.slane %v6189, 4
          %v6223 = vmax.f32 %v6189, %v6222
          %v6224 = vrot.slane %v6223, 2
          %v6225 = vmax.f32 %v6223, %v6224
          %v6226 = vrot.slane %v6225, 1
          %v6227 = vmax.f32 %v6225, %v6226
          %v6228 = vrot.slane %v6190, 4
          %v6229 = vmax.f32 %v6190, %v6228
          %v6230 = vrot.slane %v6229, 2
          %v6231 = vmax.f32 %v6229, %v6230
          %v6232 = vrot.slane %v6231, 1
          %v6233 = vmax.f32 %v6231, %v6232
          %v6234 = vrot.slane %v6191, 4
          %v6235 = vmax.f32 %v6191, %v6234
          %v6236 = vrot.slane %v6235, 2
          %v6237 = vmax.f32 %v6235, %v6236
          %v6238 = vrot.slane %v6237, 1
          %v6239 = vmax.f32 %v6237, %v6238
          %v6240 = vld [vmem:[%s6] sm:$0xff]
          %v6242 = vperm.slane %v6240, 0
          %v6243 = vperm.slane %v6240, 1
          %v6244 = vperm.slane %v6240, 2
          %v6245 = vperm.slane %v6240, 3
          %v6246 = vperm.slane %v6240, 4
          %v6247 = vperm.slane %v6240, 5
          %v6248 = vperm.slane %v6240, 6
          %v6249 = vperm.slane %v6240, 7
          %v6258 = vadd.f32 %v6197, %v6242
          %v6259 = vadd.f32 %v6203, %v6243
          %v6260 = vadd.f32 %v6209, %v6244
          %v6261 = vadd.f32 %v6215, %v6245
          %v6262 = vadd.f32 %v6221, %v6246
          %v6263 = vadd.f32 %v6227, %v6247
          %v6264 = vadd.f32 %v6233, %v6248
          %v6265 = vadd.f32 %v6239, %v6249
          %v6266 = vmax.f32 %v6258, 0.0
          %v6267 = vmax.f32 %v6259, 0.0
          %v6268 = vmax.f32 %v6260, 0.0
          %v6269 = vmax.f32 %v6261, 0.0
          %v6270 = vmax.f32 %v6262, 0.0
          %v6271 = vmax.f32 %v6263, 0.0
          %v6272 = vmax.f32 %v6264, 0.0
          %v6273 = vmax.f32 %v6265, 0.0
          %v6274 = vpack.c.bf16 %v6266, %v6266
          %v6275 = vpack.c.bf16 %v6267, %v6267
          %v6276 = vpack.c.bf16 %v6268, %v6268
          %v6277 = vpack.c.bf16 %v6269, %v6269
          %v6278 = vpack.c.bf16 %v6270, %v6270
          %v6279 = vpack.c.bf16 %v6271, %v6271
          %v6280 = vpack.c.bf16 %v6272, %v6272
          %v6281 = vpack.c.bf16 %v6273, %v6273
          %v6282 = vld [vmem:[#allocation3] sm:$0xff]
          %v6283 = vld [vmem:[#allocation3 + $0x8] sm:$0xff]
          %v6284 = vld [vmem:[#allocation3 + $0x10] sm:$0xff]
          %v6285 = vld [vmem:[#allocation3 + $0x18] sm:$0xff]
          %v6286 = vld [vmem:[#allocation3 + $0x20] sm:$0xff]
          %v6287 = vld [vmem:[#allocation3 + $0x28] sm:$0xff]
          %v6288 = vld [vmem:[#allocation3 + $0x30] sm:$0xff]
          %v6289 = vld [vmem:[#allocation3 + $0x38] sm:$0xff]
          %v6290 = vld [vmem:[#allocation3 + $0x40] sm:$0xff]
          %v6291 = vld [vmem:[#allocation3 + $0x48] sm:$0xff]
          %v6292 = vld [vmem:[#allocation3 + $0x50] sm:$0xff]
          %v6293 = vld [vmem:[#allocation3 + $0x58] sm:$0xff]
          %v6294 = vld [vmem:[#allocation3 + $0x60] sm:$0xff]
          %v6295 = vld [vmem:[#allocation3 + $0x68] sm:$0xff]
          %v6296 = vld [vmem:[#allocation3 + $0x70] sm:$0xff]
          %v6297 = vld [vmem:[#allocation3 + $0x78] sm:$0xff]
          %v6298 = vld [vmem:[#allocation3 + $0x80] sm:$0xff]
          %v6299 = vld [vmem:[#allocation3 + $0x88] sm:$0xff]
          %v6300 = vld [vmem:[#allocation3 + $0x90] sm:$0xff]
          %v6301 = vld [vmem:[#allocation3 + $0x98] sm:$0xff]
          %v6302 = vld [vmem:[#allocation3 + $0xa0] sm:$0xff]
          %v6303 = vld [vmem:[#allocation3 + $0xa8] sm:$0xff]
          %v6304 = vld [vmem:[#allocation3 + $0xb0] sm:$0xff]
          %v6305 = vld [vmem:[#allocation3 + $0xb8] sm:$0xff]
          %v6306 = vld [vmem:[#allocation3 + $0xc0] sm:$0xff]
          %v6307 = vld [vmem:[#allocation3 + $0xc8] sm:$0xff]
          %v6308 = vld [vmem:[#allocation3 + $0xd0] sm:$0xff]
          %v6309 = vld [vmem:[#allocation3 + $0xd8] sm:$0xff]
          %v6310 = vld [vmem:[#allocation3 + $0xe0] sm:$0xff]
          %v6311 = vld [vmem:[#allocation3 + $0xe8] sm:$0xff]
          %v6312 = vld [vmem:[#allocation3 + $0xf0] sm:$0xff]
          %v6313 = vld [vmem:[#allocation3 + $0xf8] sm:$0xff]
          %v6314 = vld [vmem:[#allocation3 + $0x100] sm:$0xff]
          %v6315 = vld [vmem:[#allocation3 + $0x108] sm:$0xff]
          %v6316 = vld [vmem:[#allocation3 + $0x110] sm:$0xff]
          %v6317 = vld [vmem:[#allocation3 + $0x118] sm:$0xff]
          %v6318 = vld [vmem:[#allocation3 + $0x120] sm:$0xff]
          %v6319 = vld [vmem:[#allocation3 + $0x128] sm:$0xff]
          %v6320 = vld [vmem:[#allocation3 + $0x130] sm:$0xff]
          %v6321 = vld [vmem:[#allocation3 + $0x138] sm:$0xff]
          %v6322 = vld [vmem:[#allocation3 + $0x140] sm:$0xff]
          %v6323 = vld [vmem:[#allocation3 + $0x148] sm:$0xff]
          %v6324 = vld [vmem:[#allocation3 + $0x150] sm:$0xff]
          %v6325 = vld [vmem:[#allocation3 + $0x158] sm:$0xff]
          %v6326 = vld [vmem:[#allocation3 + $0x160] sm:$0xff]
          %v6327 = vld [vmem:[#allocation3 + $0x168] sm:$0xff]
          %v6328 = vld [vmem:[#allocation3 + $0x170] sm:$0xff]
          %v6329 = vld [vmem:[#allocation3 + $0x178] sm:$0xff]
          %v6330 = vld [vmem:[#allocation3 + $0x180] sm:$0xff]
          %v6331 = vld [vmem:[#allocation3 + $0x188] sm:$0xff]
          %v6332 = vld [vmem:[#allocation3 + $0x190] sm:$0xff]
          %v6333 = vld [vmem:[#allocation3 + $0x198] sm:$0xff]
          %v6334 = vld [vmem:[#allocation3 + $0x1a0] sm:$0xff]
          %v6335 = vld [vmem:[#allocation3 + $0x1a8] sm:$0xff]
          %v6336 = vld [vmem:[#allocation3 + $0x1b0] sm:$0xff]
          %v6337 = vld [vmem:[#allocation3 + $0x1b8] sm:$0xff]
          %v6338 = vld [vmem:[#allocation3 + $0x1c0] sm:$0xff]
          %v6339 = vld [vmem:[#allocation3 + $0x1c8] sm:$0xff]
          %v6340 = vld [vmem:[#allocation3 + $0x1d0] sm:$0xff]
          %v6341 = vld [vmem:[#allocation3 + $0x1d8] sm:$0xff]
          %v6342 = vld [vmem:[#allocation3 + $0x1e0] sm:$0xff]
          %v6343 = vld [vmem:[#allocation3 + $0x1e8] sm:$0xff]
          %v6344 = vld [vmem:[#allocation3 + $0x1f0] sm:$0xff]
          %v6345 = vld [vmem:[#allocation3 + $0x1f8] sm:$0xff]
          %v6346 = vld [vmem:[#allocation3 + $0x200] sm:$0xff]
          %v6347 = vld [vmem:[#allocation3 + $0x208] sm:$0xff]
          %v6348 = vld [vmem:[#allocation3 + $0x210] sm:$0xff]
          %v6349 = vld [vmem:[#allocation3 + $0x218] sm:$0xff]
          %v6350 = vld [vmem:[#allocation3 + $0x220] sm:$0xff]
          %v6351 = vld [vmem:[#allocation3 + $0x228] sm:$0xff]
          %v6352 = vld [vmem:[#allocation3 + $0x230] sm:$0xff]
          %v6353 = vld [vmem:[#allocation3 + $0x238] sm:$0xff]
          %v6354 = vld [vmem:[#allocation3 + $0x240] sm:$0xff]
          %v6355 = vld [vmem:[#allocation3 + $0x248] sm:$0xff]
          %v6356 = vld [vmem:[#allocation3 + $0x250] sm:$0xff]
          %v6357 = vld [vmem:[#allocation3 + $0x258] sm:$0xff]
          %v6358 = vld [vmem:[#allocation3 + $0x260] sm:$0xff]
          %v6359 = vld [vmem:[#allocation3 + $0x268] sm:$0xff]
          %v6360 = vld [vmem:[#allocation3 + $0x270] sm:$0xff]
          %v6361 = vld [vmem:[#allocation3 + $0x278] sm:$0xff]
          %v6362 = vld [vmem:[#allocation3 + $0x280] sm:$0xff]
          %v6363 = vld [vmem:[#allocation3 + $0x288] sm:$0xff]
          %v6364 = vld [vmem:[#allocation3 + $0x290] sm:$0xff]
          %v6365 = vld [vmem:[#allocation3 + $0x298] sm:$0xff]
          %v6366 = vld [vmem:[#allocation3 + $0x2a0] sm:$0xff]
          %v6367 = vld [vmem:[#allocation3 + $0x2a8] sm:$0xff]
          %v6368 = vld [vmem:[#allocation3 + $0x2b0] sm:$0xff]
          %v6369 = vld [vmem:[#allocation3 + $0x2b8] sm:$0xff]
          %v6370 = vld [vmem:[#allocation3 + $0x2c0] sm:$0xff]
          %v6371 = vld [vmem:[#allocation3 + $0x2c8] sm:$0xff]
          %v6372 = vld [vmem:[#allocation3 + $0x2d0] sm:$0xff]
          %v6373 = vld [vmem:[#allocation3 + $0x2d8] sm:$0xff]
          %v6374 = vld [vmem:[#allocation3 + $0x2e0] sm:$0xff]
          %v6375 = vld [vmem:[#allocation3 + $0x2e8] sm:$0xff]
          %v6376 = vld [vmem:[#allocation3 + $0x2f0] sm:$0xff]
          %v6377 = vld [vmem:[#allocation3 + $0x2f8] sm:$0xff]
          %v6378 = vld [vmem:[#allocation3 + $0x300] sm:$0xff]
          %v6379 = vld [vmem:[#allocation3 + $0x308] sm:$0xff]
          %v6380 = vld [vmem:[#allocation3 + $0x310] sm:$0xff]
          %v6381 = vld [vmem:[#allocation3 + $0x318] sm:$0xff]
          %v6382 = vld [vmem:[#allocation3 + $0x320] sm:$0xff]
          %v6383 = vld [vmem:[#allocation3 + $0x328] sm:$0xff]
          %v6384 = vld [vmem:[#allocation3 + $0x330] sm:$0xff]
          %v6385 = vld [vmem:[#allocation3 + $0x338] sm:$0xff]
          %v6386 = vld [vmem:[#allocation3 + $0x340] sm:$0xff]
          %v6387 = vld [vmem:[#allocation3 + $0x348] sm:$0xff]
          %v6388 = vld [vmem:[#allocation3 + $0x350] sm:$0xff]
          %v6389 = vld [vmem:[#allocation3 + $0x358] sm:$0xff]
          %v6390 = vld [vmem:[#allocation3 + $0x360] sm:$0xff]
          %v6391 = vld [vmem:[#allocation3 + $0x368] sm:$0xff]
          %v6392 = vld [vmem:[#allocation3 + $0x370] sm:$0xff]
          %v6393 = vld [vmem:[#allocation3 + $0x378] sm:$0xff]
          %v6394 = vld [vmem:[#allocation3 + $0x380] sm:$0xff]
          %v6395 = vld [vmem:[#allocation3 + $0x388] sm:$0xff]
          %v6396 = vld [vmem:[#allocation3 + $0x390] sm:$0xff]
          %v6397 = vld [vmem:[#allocation3 + $0x398] sm:$0xff]
          %v6398 = vld [vmem:[#allocation3 + $0x3a0] sm:$0xff]
          %v6399 = vld [vmem:[#allocation3 + $0x3a8] sm:$0xff]
          %v6400 = vld [vmem:[#allocation3 + $0x3b0] sm:$0xff]
          %v6401 = vld [vmem:[#allocation3 + $0x3b8] sm:$0xff]
          %v6402 = vld [vmem:[#allocation3 + $0x3c0] sm:$0xff]
          %v6403 = vld [vmem:[#allocation3 + $0x3c8] sm:$0xff]
          %v6404 = vld [vmem:[#allocation3 + $0x3d0] sm:$0xff]
          %v6405 = vld [vmem:[#allocation3 + $0x3d8] sm:$0xff]
          %v6406 = vld [vmem:[#allocation3 + $0x3e0] sm:$0xff]
          %v6407 = vld [vmem:[#allocation3 + $0x3e8] sm:$0xff]
          %v6408 = vld [vmem:[#allocation3 + $0x3f0] sm:$0xff]
          %v6409 = vld [vmem:[#allocation3 + $0x3f8] sm:$0xff]
          %v6410 = vld [vmem:[#allocation3 + $0x400] sm:$0xff]
          %v6411 = vld [vmem:[#allocation3 + $0x408] sm:$0xff]
          %v6412 = vld [vmem:[#allocation3 + $0x410] sm:$0xff]
          %v6413 = vld [vmem:[#allocation3 + $0x418] sm:$0xff]
          %v6414 = vld [vmem:[#allocation3 + $0x420] sm:$0xff]
          %v6415 = vld [vmem:[#allocation3 + $0x428] sm:$0xff]
          %v6416 = vld [vmem:[#allocation3 + $0x430] sm:$0xff]
          %v6417 = vld [vmem:[#allocation3 + $0x438] sm:$0xff]
          %v6418 = vld [vmem:[#allocation3 + $0x440] sm:$0xff]
          %v6419 = vld [vmem:[#allocation3 + $0x448] sm:$0xff]
          %v6420 = vld [vmem:[#allocation3 + $0x450] sm:$0xff]
          %v6421 = vld [vmem:[#allocation3 + $0x458] sm:$0xff]
          %v6422 = vld [vmem:[#allocation3 + $0x460] sm:$0xff]
          %v6423 = vld [vmem:[#allocation3 + $0x468] sm:$0xff]
          %v6424 = vld [vmem:[#allocation3 + $0x470] sm:$0xff]
          %v6425 = vld [vmem:[#allocation3 + $0x478] sm:$0xff]
          %v6426 = vld [vmem:[#allocation3 + $0x480] sm:$0xff]
          %v6427 = vld [vmem:[#allocation3 + $0x488] sm:$0xff]
          %v6428 = vld [vmem:[#allocation3 + $0x490] sm:$0xff]
          %v6429 = vld [vmem:[#allocation3 + $0x498] sm:$0xff]
          %v6430 = vld [vmem:[#allocation3 + $0x4a0] sm:$0xff]
          %v6431 = vld [vmem:[#allocation3 + $0x4a8] sm:$0xff]
          %v6432 = vld [vmem:[#allocation3 + $0x4b0] sm:$0xff]
          %v6433 = vld [vmem:[#allocation3 + $0x4b8] sm:$0xff]
          %v6434 = vld [vmem:[#allocation3 + $0x4c0] sm:$0xff]
          %v6435 = vld [vmem:[#allocation3 + $0x4c8] sm:$0xff]
          %v6436 = vld [vmem:[#allocation3 + $0x4d0] sm:$0xff]
          %v6437 = vld [vmem:[#allocation3 + $0x4d8] sm:$0xff]
          %v6438 = vld [vmem:[#allocation3 + $0x4e0] sm:$0xff]
          %v6439 = vld [vmem:[#allocation3 + $0x4e8] sm:$0xff]
          %v6440 = vld [vmem:[#allocation3 + $0x4f0] sm:$0xff]
          %v6441 = vld [vmem:[#allocation3 + $0x4f8] sm:$0xff]
          %v6442 = vld [vmem:[#allocation3 + $0x500] sm:$0xff]
          %v6443 = vld [vmem:[#allocation3 + $0x508] sm:$0xff]
          %v6444 = vld [vmem:[#allocation3 + $0x510] sm:$0xff]
          %v6445 = vld [vmem:[#allocation3 + $0x518] sm:$0xff]
          %v6446 = vld [vmem:[#allocation3 + $0x520] sm:$0xff]
          %v6447 = vld [vmem:[#allocation3 + $0x528] sm:$0xff]
          %v6448 = vld [vmem:[#allocation3 + $0x530] sm:$0xff]
          %v6449 = vld [vmem:[#allocation3 + $0x538] sm:$0xff]
          %v6450 = vld [vmem:[#allocation3 + $0x540] sm:$0xff]
          %v6451 = vld [vmem:[#allocation3 + $0x548] sm:$0xff]
          %v6452 = vld [vmem:[#allocation3 + $0x550] sm:$0xff]
          %v6453 = vld [vmem:[#allocation3 + $0x558] sm:$0xff]
          %v6454 = vld [vmem:[#allocation3 + $0x560] sm:$0xff]
          %v6455 = vld [vmem:[#allocation3 + $0x568] sm:$0xff]
          %v6456 = vld [vmem:[#allocation3 + $0x570] sm:$0xff]
          %v6457 = vld [vmem:[#allocation3 + $0x578] sm:$0xff]
          %v6458 = vld [vmem:[#allocation3 + $0x580] sm:$0xff]
          %v6459 = vld [vmem:[#allocation3 + $0x588] sm:$0xff]
          %v6460 = vld [vmem:[#allocation3 + $0x590] sm:$0xff]
          %v6461 = vld [vmem:[#allocation3 + $0x598] sm:$0xff]
          %v6462 = vld [vmem:[#allocation3 + $0x5a0] sm:$0xff]
          %v6463 = vld [vmem:[#allocation3 + $0x5a8] sm:$0xff]
          %v6464 = vld [vmem:[#allocation3 + $0x5b0] sm:$0xff]
          %v6465 = vld [vmem:[#allocation3 + $0x5b8] sm:$0xff]
          %v6466 = vld [vmem:[#allocation3 + $0x5c0] sm:$0xff]
          %v6467 = vld [vmem:[#allocation3 + $0x5c8] sm:$0xff]
          %v6468 = vld [vmem:[#allocation3 + $0x5d0] sm:$0xff]
          %v6469 = vld [vmem:[#allocation3 + $0x5d8] sm:$0xff]
          %v6470 = vld [vmem:[#allocation3 + $0x5e0] sm:$0xff]
          %v6471 = vld [vmem:[#allocation3 + $0x5e8] sm:$0xff]
          %v6472 = vld [vmem:[#allocation3 + $0x5f0] sm:$0xff]
          %v6473 = vld [vmem:[#allocation3 + $0x5f8] sm:$0xff]
          %v6474 = vld [vmem:[#allocation3 + $0x600] sm:$0xff]
          %v6475 = vld [vmem:[#allocation3 + $0x608] sm:$0xff]
          %v6476 = vld [vmem:[#allocation3 + $0x610] sm:$0xff]
          %v6477 = vld [vmem:[#allocation3 + $0x618] sm:$0xff]
          %v6478 = vld [vmem:[#allocation3 + $0x620] sm:$0xff]
          %v6479 = vld [vmem:[#allocation3 + $0x628] sm:$0xff]
          %v6480 = vld [vmem:[#allocation3 + $0x630] sm:$0xff]
          %v6481 = vld [vmem:[#allocation3 + $0x638] sm:$0xff]
          %v6482 = vld [vmem:[#allocation3 + $0x640] sm:$0xff]
          %v6483 = vld [vmem:[#allocation3 + $0x648] sm:$0xff]
          %v6484 = vld [vmem:[#allocation3 + $0x650] sm:$0xff]
          %v6485 = vld [vmem:[#allocation3 + $0x658] sm:$0xff]
          %v6486 = vld [vmem:[#allocation3 + $0x660] sm:$0xff]
          %v6487 = vld [vmem:[#allocation3 + $0x668] sm:$0xff]
          %v6488 = vld [vmem:[#allocation3 + $0x670] sm:$0xff]
          %v6489 = vld [vmem:[#allocation3 + $0x678] sm:$0xff]
          %v6490 = vld [vmem:[#allocation3 + $0x680] sm:$0xff]
          %v6491 = vld [vmem:[#allocation3 + $0x688] sm:$0xff]
          %v6492 = vld [vmem:[#allocation3 + $0x690] sm:$0xff]
          %v6493 = vld [vmem:[#allocation3 + $0x698] sm:$0xff]
          %v6494 = vld [vmem:[#allocation3 + $0x6a0] sm:$0xff]
          %v6495 = vld [vmem:[#allocation3 + $0x6a8] sm:$0xff]
          %v6496 = vld [vmem:[#allocation3 + $0x6b0] sm:$0xff]
          %v6497 = vld [vmem:[#allocation3 + $0x6b8] sm:$0xff]
          %v6498 = vld [vmem:[#allocation3 + $0x6c0] sm:$0xff]
          %v6499 = vld [vmem:[#allocation3 + $0x6c8] sm:$0xff]
          %v6500 = vld [vmem:[#allocation3 + $0x6d0] sm:$0xff]
          %v6501 = vld [vmem:[#allocation3 + $0x6d8] sm:$0xff]
          %v6502 = vld [vmem:[#allocation3 + $0x6e0] sm:$0xff]
          %v6503 = vld [vmem:[#allocation3 + $0x6e8] sm:$0xff]
          %v6504 = vld [vmem:[#allocation3 + $0x6f0] sm:$0xff]
          %v6505 = vld [vmem:[#allocation3 + $0x6f8] sm:$0xff]
          %v6506 = vld [vmem:[#allocation3 + $0x700] sm:$0xff]
          %v6507 = vld [vmem:[#allocation3 + $0x708] sm:$0xff]
          %v6508 = vld [vmem:[#allocation3 + $0x710] sm:$0xff]
          %v6509 = vld [vmem:[#allocation3 + $0x718] sm:$0xff]
          %v6510 = vld [vmem:[#allocation3 + $0x720] sm:$0xff]
          %v6511 = vld [vmem:[#allocation3 + $0x728] sm:$0xff]
          %v6512 = vld [vmem:[#allocation3 + $0x730] sm:$0xff]
          %v6513 = vld [vmem:[#allocation3 + $0x738] sm:$0xff]
          %v6514 = vld [vmem:[#allocation3 + $0x740] sm:$0xff]
          %v6515 = vld [vmem:[#allocation3 + $0x748] sm:$0xff]
          %v6516 = vld [vmem:[#allocation3 + $0x750] sm:$0xff]
          %v6517 = vld [vmem:[#allocation3 + $0x758] sm:$0xff]
          %v6518 = vld [vmem:[#allocation3 + $0x760] sm:$0xff]
          %v6519 = vld [vmem:[#allocation3 + $0x768] sm:$0xff]
          %v6520 = vld [vmem:[#allocation3 + $0x770] sm:$0xff]
          %v6521 = vld [vmem:[#allocation3 + $0x778] sm:$0xff]
          %v6522 = vld [vmem:[#allocation3 + $0x780] sm:$0xff]
          %v6523 = vld [vmem:[#allocation3 + $0x788] sm:$0xff]
          %v6524 = vld [vmem:[#allocation3 + $0x790] sm:$0xff]
          %v6525 = vld [vmem:[#allocation3 + $0x798] sm:$0xff]
          %v6526 = vld [vmem:[#allocation3 + $0x7a0] sm:$0xff]
          %v6527 = vld [vmem:[#allocation3 + $0x7a8] sm:$0xff]
          %v6528 = vld [vmem:[#allocation3 + $0x7b0] sm:$0xff]
          %v6529 = vld [vmem:[#allocation3 + $0x7b8] sm:$0xff]
          %v6530 = vld [vmem:[#allocation3 + $0x7c0] sm:$0xff]
          %v6531 = vld [vmem:[#allocation3 + $0x7c8] sm:$0xff]
          %v6532 = vld [vmem:[#allocation3 + $0x7d0] sm:$0xff]
          %v6533 = vld [vmem:[#allocation3 + $0x7d8] sm:$0xff]
          %v6534 = vld [vmem:[#allocation3 + $0x7e0] sm:$0xff]
          %v6535 = vld [vmem:[#allocation3 + $0x7e8] sm:$0xff]
          %v6536 = vld [vmem:[#allocation3 + $0x7f0] sm:$0xff]
          %v6537 = vld [vmem:[#allocation3 + $0x7f8] sm:$0xff]
          %v6538 = vld [vmem:[%s8] sm:$0xf]
          %v6795 = vunpack.c.l.b16 %v6282
          %v6796 = vunpack.c.h.b16 %v6282
          %v6797 = vunpack.c.l.b16 %v6283
          %v6798 = vunpack.c.h.b16 %v6283
          %v6799 = vunpack.c.l.b16 %v6284
          %v6800 = vunpack.c.h.b16 %v6284
          %v6801 = vunpack.c.l.b16 %v6285
          %v6802 = vunpack.c.h.b16 %v6285
          %v6803 = vunpack.c.l.b16 %v6286
          %v6804 = vunpack.c.h.b16 %v6286
          %v6805 = vunpack.c.l.b16 %v6287
          %v6806 = vunpack.c.h.b16 %v6287
          %v6807 = vunpack.c.l.b16 %v6288
          %v6808 = vunpack.c.h.b16 %v6288
          %v6809 = vunpack.c.l.b16 %v6289
          %v6810 = vunpack.c.h.b16 %v6289
          %v6811 = vunpack.c.l.b16 %v6290
          %v6812 = vunpack.c.h.b16 %v6290
          %v6813 = vunpack.c.l.b16 %v6291
          %v6814 = vunpack.c.h.b16 %v6291
          %v6815 = vunpack.c.l.b16 %v6292
          %v6816 = vunpack.c.h.b16 %v6292
          %v6817 = vunpack.c.l.b16 %v6293
          %v6818 = vunpack.c.h.b16 %v6293
          %v6819 = vunpack.c.l.b16 %v6294
          %v6820 = vunpack.c.h.b16 %v6294
          %v6821 = vunpack.c.l.b16 %v6295
          %v6822 = vunpack.c.h.b16 %v6295
          %v6823 = vunpack.c.l.b16 %v6296
          %v6824 = vunpack.c.h.b16 %v6296
          %v6825 = vunpack.c.l.b16 %v6297
          %v6826 = vunpack.c.h.b16 %v6297
          %v6827 = vunpack.c.l.b16 %v6298
          %v6828 = vunpack.c.h.b16 %v6298
          %v6829 = vunpack.c.l.b16 %v6299
          %v6830 = vunpack.c.h.b16 %v6299
          %v6831 = vunpack.c.l.b16 %v6300
          %v6832 = vunpack.c.h.b16 %v6300
          %v6833 = vunpack.c.l.b16 %v6301
          %v6834 = vunpack.c.h.b16 %v6301
          %v6835 = vunpack.c.l.b16 %v6302
          %v6836 = vunpack.c.h.b16 %v6302
          %v6837 = vunpack.c.l.b16 %v6303
          %v6838 = vunpack.c.h.b16 %v6303
          %v6839 = vunpack.c.l.b16 %v6304
          %v6840 = vunpack.c.h.b16 %v6304
          %v6841 = vunpack.c.l.b16 %v6305
          %v6842 = vunpack.c.h.b16 %v6305
          %v6843 = vunpack.c.l.b16 %v6306
          %v6844 = vunpack.c.h.b16 %v6306
          %v6845 = vunpack.c.l.b16 %v6307
          %v6846 = vunpack.c.h.b16 %v6307
          %v6847 = vunpack.c.l.b16 %v6308
          %v6848 = vunpack.c.h.b16 %v6308
          %v6849 = vunpack.c.l.b16 %v6309
          %v6850 = vunpack.c.h.b16 %v6309
          %v6851 = vunpack.c.l.b16 %v6310
          %v6852 = vunpack.c.h.b16 %v6310
          %v6853 = vunpack.c.l.b16 %v6311
          %v6854 = vunpack.c.h.b16 %v6311
          %v6855 = vunpack.c.l.b16 %v6312
          %v6856 = vunpack.c.h.b16 %v6312
          %v6857 = vunpack.c.l.b16 %v6313
          %v6858 = vunpack.c.h.b16 %v6313
          %v6859 = vunpack.c.l.b16 %v6314
          %v6860 = vunpack.c.h.b16 %v6314
          %v6861 = vunpack.c.l.b16 %v6315
          %v6862 = vunpack.c.h.b16 %v6315
          %v6863 = vunpack.c.l.b16 %v6316
          %v6864 = vunpack.c.h.b16 %v6316
          %v6865 = vunpack.c.l.b16 %v6317
          %v6866 = vunpack.c.h.b16 %v6317
          %v6867 = vunpack.c.l.b16 %v6318
          %v6868 = vunpack.c.h.b16 %v6318
          %v6869 = vunpack.c.l.b16 %v6319
          %v6870 = vunpack.c.h.b16 %v6319
          %v6871 = vunpack.c.l.b16 %v6320
          %v6872 = vunpack.c.h.b16 %v6320
          %v6873 = vunpack.c.l.b16 %v6321
          %v6874 = vunpack.c.h.b16 %v6321
          %v6875 = vunpack.c.l.b16 %v6322
          %v6876 = vunpack.c.h.b16 %v6322
          %v6877 = vunpack.c.l.b16 %v6323
          %v6878 = vunpack.c.h.b16 %v6323
          %v6879 = vunpack.c.l.b16 %v6324
          %v6880 = vunpack.c.h.b16 %v6324
          %v6881 = vunpack.c.l.b16 %v6325
          %v6882 = vunpack.c.h.b16 %v6325
          %v6883 = vunpack.c.l.b16 %v6326
          %v6884 = vunpack.c.h.b16 %v6326
          %v6885 = vunpack.c.l.b16 %v6327
          %v6886 = vunpack.c.h.b16 %v6327
          %v6887 = vunpack.c.l.b16 %v6328
          %v6888 = vunpack.c.h.b16 %v6328
          %v6889 = vunpack.c.l.b16 %v6329
          %v6890 = vunpack.c.h.b16 %v6329
          %v6891 = vunpack.c.l.b16 %v6330
          %v6892 = vunpack.c.h.b16 %v6330
          %v6893 = vunpack.c.l.b16 %v6331
          %v6894 = vunpack.c.h.b16 %v6331
          %v6895 = vunpack.c.l.b16 %v6332
          %v6896 = vunpack.c.h.b16 %v6332
          %v6897 = vunpack.c.l.b16 %v6333
          %v6898 = vunpack.c.h.b16 %v6333
          %v6899 = vunpack.c.l.b16 %v6334
          %v6900 = vunpack.c.h.b16 %v6334
          %v6901 = vunpack.c.l.b16 %v6335
          %v6902 = vunpack.c.h.b16 %v6335
          %v6903 = vunpack.c.l.b16 %v6336
          %v6904 = vunpack.c.h.b16 %v6336
          %v6905 = vunpack.c.l.b16 %v6337
          %v6906 = vunpack.c.h.b16 %v6337
          %v6907 = vunpack.c.l.b16 %v6338
          %v6908 = vunpack.c.h.b16 %v6338
          %v6909 = vunpack.c.l.b16 %v6339
          %v6910 = vunpack.c.h.b16 %v6339
          %v6911 = vunpack.c.l.b16 %v6340
          %v6912 = vunpack.c.h.b16 %v6340
          %v6913 = vunpack.c.l.b16 %v6341
          %v6914 = vunpack.c.h.b16 %v6341
          %v6915 = vunpack.c.l.b16 %v6342
          %v6916 = vunpack.c.h.b16 %v6342
          %v6917 = vunpack.c.l.b16 %v6343
          %v6918 = vunpack.c.h.b16 %v6343
          %v6919 = vunpack.c.l.b16 %v6344
          %v6920 = vunpack.c.h.b16 %v6344
          %v6921 = vunpack.c.l.b16 %v6345
          %v6922 = vunpack.c.h.b16 %v6345
          %v6923 = vunpack.c.l.b16 %v6346
          %v6924 = vunpack.c.h.b16 %v6346
          %v6925 = vunpack.c.l.b16 %v6347
          %v6926 = vunpack.c.h.b16 %v6347
          %v6927 = vunpack.c.l.b16 %v6348
          %v6928 = vunpack.c.h.b16 %v6348
          %v6929 = vunpack.c.l.b16 %v6349
          %v6930 = vunpack.c.h.b16 %v6349
          %v6931 = vunpack.c.l.b16 %v6350
          %v6932 = vunpack.c.h.b16 %v6350
          %v6933 = vunpack.c.l.b16 %v6351
          %v6934 = vunpack.c.h.b16 %v6351
          %v6935 = vunpack.c.l.b16 %v6352
          %v6936 = vunpack.c.h.b16 %v6352
          %v6937 = vunpack.c.l.b16 %v6353
          %v6938 = vunpack.c.h.b16 %v6353
          %v6939 = vunpack.c.l.b16 %v6354
          %v6940 = vunpack.c.h.b16 %v6354
          %v6941 = vunpack.c.l.b16 %v6355
          %v6942 = vunpack.c.h.b16 %v6355
          %v6943 = vunpack.c.l.b16 %v6356
          %v6944 = vunpack.c.h.b16 %v6356
          %v6945 = vunpack.c.l.b16 %v6357
          %v6946 = vunpack.c.h.b16 %v6357
          %v6947 = vunpack.c.l.b16 %v6358
          %v6948 = vunpack.c.h.b16 %v6358
          %v6949 = vunpack.c.l.b16 %v6359
          %v6950 = vunpack.c.h.b16 %v6359
          %v6951 = vunpack.c.l.b16 %v6360
          %v6952 = vunpack.c.h.b16 %v6360
          %v6953 = vunpack.c.l.b16 %v6361
          %v6954 = vunpack.c.h.b16 %v6361
          %v6955 = vunpack.c.l.b16 %v6362
          %v6956 = vunpack.c.h.b16 %v6362
          %v6957 = vunpack.c.l.b16 %v6363
          %v6958 = vunpack.c.h.b16 %v6363
          %v6959 = vunpack.c.l.b16 %v6364
          %v6960 = vunpack.c.h.b16 %v6364
          %v6961 = vunpack.c.l.b16 %v6365
          %v6962 = vunpack.c.h.b16 %v6365
          %v6963 = vunpack.c.l.b16 %v6366
          %v6964 = vunpack.c.h.b16 %v6366
          %v6965 = vunpack.c.l.b16 %v6367
          %v6966 = vunpack.c.h.b16 %v6367
          %v6967 = vunpack.c.l.b16 %v6368
          %v6968 = vunpack.c.h.b16 %v6368
          %v6969 = vunpack.c.l.b16 %v6369
          %v6970 = vunpack.c.h.b16 %v6369
          %v6971 = vunpack.c.l.b16 %v6370
          %v6972 = vunpack.c.h.b16 %v6370
          %v6973 = vunpack.c.l.b16 %v6371
          %v6974 = vunpack.c.h.b16 %v6371
          %v6975 = vunpack.c.l.b16 %v6372
          %v6976 = vunpack.c.h.b16 %v6372
          %v6977 = vunpack.c.l.b16 %v6373
          %v6978 = vunpack.c.h.b16 %v6373
          %v6979 = vunpack.c.l.b16 %v6374
          %v6980 = vunpack.c.h.b16 %v6374
          %v6981 = vunpack.c.l.b16 %v6375
          %v6982 = vunpack.c.h.b16 %v6375
          %v6983 = vunpack.c.l.b16 %v6376
          %v6984 = vunpack.c.h.b16 %v6376
          %v6985 = vunpack.c.l.b16 %v6377
          %v6986 = vunpack.c.h.b16 %v6377
          %v6987 = vunpack.c.l.b16 %v6378
          %v6988 = vunpack.c.h.b16 %v6378
          %v6989 = vunpack.c.l.b16 %v6379
          %v6990 = vunpack.c.h.b16 %v6379
          %v6991 = vunpack.c.l.b16 %v6380
          %v6992 = vunpack.c.h.b16 %v6380
          %v6993 = vunpack.c.l.b16 %v6381
          %v6994 = vunpack.c.h.b16 %v6381
          %v6995 = vunpack.c.l.b16 %v6382
          %v6996 = vunpack.c.h.b16 %v6382
          %v6997 = vunpack.c.l.b16 %v6383
          %v6998 = vunpack.c.h.b16 %v6383
          %v6999 = vunpack.c.l.b16 %v6384
          %v7000 = vunpack.c.h.b16 %v6384
          %v7001 = vunpack.c.l.b16 %v6385
          %v7002 = vunpack.c.h.b16 %v6385
          %v7003 = vunpack.c.l.b16 %v6386
          %v7004 = vunpack.c.h.b16 %v6386
          %v7005 = vunpack.c.l.b16 %v6387
          %v7006 = vunpack.c.h.b16 %v6387
          %v7007 = vunpack.c.l.b16 %v6388
          %v7008 = vunpack.c.h.b16 %v6388
          %v7009 = vunpack.c.l.b16 %v6389
          %v7010 = vunpack.c.h.b16 %v6389
          %v7011 = vunpack.c.l.b16 %v6390
          %v7012 = vunpack.c.h.b16 %v6390
          %v7013 = vunpack.c.l.b16 %v6391
          %v7014 = vunpack.c.h.b16 %v6391
          %v7015 = vunpack.c.l.b16 %v6392
          %v7016 = vunpack.c.h.b16 %v6392
          %v7017 = vunpack.c.l.b16 %v6393
          %v7018 = vunpack.c.h.b16 %v6393
          %v7019 = vunpack.c.l.b16 %v6394
          %v7020 = vunpack.c.h.b16 %v6394
          %v7021 = vunpack.c.l.b16 %v6395
          %v7022 = vunpack.c.h.b16 %v6395
          %v7023 = vunpack.c.l.b16 %v6396
          %v7024 = vunpack.c.h.b16 %v6396
          %v7025 = vunpack.c.l.b16 %v6397
          %v7026 = vunpack.c.h.b16 %v6397
          %v7027 = vunpack.c.l.b16 %v6398
          %v7028 = vunpack.c.h.b16 %v6398
          %v7029 = vunpack.c.l.b16 %v6399
          %v7030 = vunpack.c.h.b16 %v6399
          %v7031 = vunpack.c.l.b16 %v6400
          %v7032 = vunpack.c.h.b16 %v6400
          %v7033 = vunpack.c.l.b16 %v6401
          %v7034 = vunpack.c.h.b16 %v6401
          %v7035 = vunpack.c.l.b16 %v6402
          %v7036 = vunpack.c.h.b16 %v6402
          %v7037 = vunpack.c.l.b16 %v6403
          %v7038 = vunpack.c.h.b16 %v6403
          %v7039 = vunpack.c.l.b16 %v6404
          %v7040 = vunpack.c.h.b16 %v6404
          %v7041 = vunpack.c.l.b16 %v6405
          %v7042 = vunpack.c.h.b16 %v6405
          %v7043 = vunpack.c.l.b16 %v6406
          %v7044 = vunpack.c.h.b16 %v6406
          %v7045 = vunpack.c.l.b16 %v6407
          %v7046 = vunpack.c.h.b16 %v6407
          %v7047 = vunpack.c.l.b16 %v6408
          %v7048 = vunpack.c.h.b16 %v6408
          %v7049 = vunpack.c.l.b16 %v6409
          %v7050 = vunpack.c.h.b16 %v6409
          %v7051 = vunpack.c.l.b16 %v6410
          %v7052 = vunpack.c.h.b16 %v6410
          %v7053 = vunpack.c.l.b16 %v6411
          %v7054 = vunpack.c.h.b16 %v6411
          %v7055 = vunpack.c.l.b16 %v6412
          %v7056 = vunpack.c.h.b16 %v6412
          %v7057 = vunpack.c.l.b16 %v6413
          %v7058 = vunpack.c.h.b16 %v6413
          %v7059 = vunpack.c.l.b16 %v6414
          %v7060 = vunpack.c.h.b16 %v6414
          %v7061 = vunpack.c.l.b16 %v6415
          %v7062 = vunpack.c.h.b16 %v6415
          %v7063 = vunpack.c.l.b16 %v6416
          %v7064 = vunpack.c.h.b16 %v6416
          %v7065 = vunpack.c.l.b16 %v6417
          %v7066 = vunpack.c.h.b16 %v6417
          %v7067 = vunpack.c.l.b16 %v6418
          %v7068 = vunpack.c.h.b16 %v6418
          %v7069 = vunpack.c.l.b16 %v6419
          %v7070 = vunpack.c.h.b16 %v6419
          %v7071 = vunpack.c.l.b16 %v6420
          %v7072 = vunpack.c.h.b16 %v6420
          %v7073 = vunpack.c.l.b16 %v6421
          %v7074 = vunpack.c.h.b16 %v6421
          %v7075 = vunpack.c.l.b16 %v6422
          %v7076 = vunpack.c.h.b16 %v6422
          %v7077 = vunpack.c.l.b16 %v6423
          %v7078 = vunpack.c.h.b16 %v6423
          %v7079 = vunpack.c.l.b16 %v6424
          %v7080 = vunpack.c.h.b16 %v6424
          %v7081 = vunpack.c.l.b16 %v6425
          %v7082 = vunpack.c.h.b16 %v6425
          %v7083 = vunpack.c.l.b16 %v6426
          %v7084 = vunpack.c.h.b16 %v6426
          %v7085 = vunpack.c.l.b16 %v6427
          %v7086 = vunpack.c.h.b16 %v6427
          %v7087 = vunpack.c.l.b16 %v6428
          %v7088 = vunpack.c.h.b16 %v6428
          %v7089 = vunpack.c.l.b16 %v6429
          %v7090 = vunpack.c.h.b16 %v6429
          %v7091 = vunpack.c.l.b16 %v6430
          %v7092 = vunpack.c.h.b16 %v6430
          %v7093 = vunpack.c.l.b16 %v6431
          %v7094 = vunpack.c.h.b16 %v6431
          %v7095 = vunpack.c.l.b16 %v6432
          %v7096 = vunpack.c.h.b16 %v6432
          %v7097 = vunpack.c.l.b16 %v6433
          %v7098 = vunpack.c.h.b16 %v6433
          %v7099 = vunpack.c.l.b16 %v6434
          %v7100 = vunpack.c.h.b16 %v6434
          %v7101 = vunpack.c.l.b16 %v6435
          %v7102 = vunpack.c.h.b16 %v6435
          %v7103 = vunpack.c.l.b16 %v6436
          %v7104 = vunpack.c.h.b16 %v6436
          %v7105 = vunpack.c.l.b16 %v6437
          %v7106 = vunpack.c.h.b16 %v6437
          %v7107 = vunpack.c.l.b16 %v6438
          %v7108 = vunpack.c.h.b16 %v6438
          %v7109 = vunpack.c.l.b16 %v6439
          %v7110 = vunpack.c.h.b16 %v6439
          %v7111 = vunpack.c.l.b16 %v6440
          %v7112 = vunpack.c.h.b16 %v6440
          %v7113 = vunpack.c.l.b16 %v6441
          %v7114 = vunpack.c.h.b16 %v6441
          %v7115 = vunpack.c.l.b16 %v6442
          %v7116 = vunpack.c.h.b16 %v6442
          %v7117 = vunpack.c.l.b16 %v6443
          %v7118 = vunpack.c.h.b16 %v6443
          %v7119 = vunpack.c.l.b16 %v6444
          %v7120 = vunpack.c.h.b16 %v6444
          %v7121 = vunpack.c.l.b16 %v6445
          %v7122 = vunpack.c.h.b16 %v6445
          %v7123 = vunpack.c.l.b16 %v6446
          %v7124 = vunpack.c.h.b16 %v6446
          %v7125 = vunpack.c.l.b16 %v6447
          %v7126 = vunpack.c.h.b16 %v6447
          %v7127 = vunpack.c.l.b16 %v6448
          %v7128 = vunpack.c.h.b16 %v6448
          %v7129 = vunpack.c.l.b16 %v6449
          %v7130 = vunpack.c.h.b16 %v6449
          %v7131 = vunpack.c.l.b16 %v6450
          %v7132 = vunpack.c.h.b16 %v6450
          %v7133 = vunpack.c.l.b16 %v6451
          %v7134 = vunpack.c.h.b16 %v6451
          %v7135 = vunpack.c.l.b16 %v6452
          %v7136 = vunpack.c.h.b16 %v6452
          %v7137 = vunpack.c.l.b16 %v6453
          %v7138 = vunpack.c.h.b16 %v6453
          %v7139 = vunpack.c.l.b16 %v6454
          %v7140 = vunpack.c.h.b16 %v6454
          %v7141 = vunpack.c.l.b16 %v6455
          %v7142 = vunpack.c.h.b16 %v6455
          %v7143 = vunpack.c.l.b16 %v6456
          %v7144 = vunpack.c.h.b16 %v6456
          %v7145 = vunpack.c.l.b16 %v6457
          %v7146 = vunpack.c.h.b16 %v6457
          %v7147 = vunpack.c.l.b16 %v6458
          %v7148 = vunpack.c.h.b16 %v6458
          %v7149 = vunpack.c.l.b16 %v6459
          %v7150 = vunpack.c.h.b16 %v6459
          %v7151 = vunpack.c.l.b16 %v6460
          %v7152 = vunpack.c.h.b16 %v6460
          %v7153 = vunpack.c.l.b16 %v6461
          %v7154 = vunpack.c.h.b16 %v6461
          %v7155 = vunpack.c.l.b16 %v6462
          %v7156 = vunpack.c.h.b16 %v6462
          %v7157 = vunpack.c.l.b16 %v6463
          %v7158 = vunpack.c.h.b16 %v6463
          %v7159 = vunpack.c.l.b16 %v6464
          %v7160 = vunpack.c.h.b16 %v6464
          %v7161 = vunpack.c.l.b16 %v6465
          %v7162 = vunpack.c.h.b16 %v6465
          %v7163 = vunpack.c.l.b16 %v6466
          %v7164 = vunpack.c.h.b16 %v6466
          %v7165 = vunpack.c.l.b16 %v6467
          %v7166 = vunpack.c.h.b16 %v6467
          %v7167 = vunpack.c.l.b16 %v6468
          %v7168 = vunpack.c.h.b16 %v6468
          %v7169 = vunpack.c.l.b16 %v6469
          %v7170 = vunpack.c.h.b16 %v6469
          %v7171 = vunpack.c.l.b16 %v6470
          %v7172 = vunpack.c.h.b16 %v6470
          %v7173 = vunpack.c.l.b16 %v6471
          %v7174 = vunpack.c.h.b16 %v6471
          %v7175 = vunpack.c.l.b16 %v6472
          %v7176 = vunpack.c.h.b16 %v6472
          %v7177 = vunpack.c.l.b16 %v6473
          %v7178 = vunpack.c.h.b16 %v6473
          %v7179 = vunpack.c.l.b16 %v6474
          %v7180 = vunpack.c.h.b16 %v6474
          %v7181 = vunpack.c.l.b16 %v6475
          %v7182 = vunpack.c.h.b16 %v6475
          %v7183 = vunpack.c.l.b16 %v6476
          %v7184 = vunpack.c.h.b16 %v6476
          %v7185 = vunpack.c.l.b16 %v6477
          %v7186 = vunpack.c.h.b16 %v6477
          %v7187 = vunpack.c.l.b16 %v6478
          %v7188 = vunpack.c.h.b16 %v6478
          %v7189 = vunpack.c.l.b16 %v6479
          %v7190 = vunpack.c.h.b16 %v6479
          %v7191 = vunpack.c.l.b16 %v6480
          %v7192 = vunpack.c.h.b16 %v6480
          %v7193 = vunpack.c.l.b16 %v6481
          %v7194 = vunpack.c.h.b16 %v6481
          %v7195 = vunpack.c.l.b16 %v6482
          %v7196 = vunpack.c.h.b16 %v6482
          %v7197 = vunpack.c.l.b16 %v6483
          %v7198 = vunpack.c.h.b16 %v6483
          %v7199 = vunpack.c.l.b16 %v6484
          %v7200 = vunpack.c.h.b16 %v6484
          %v7201 = vunpack.c.l.b16 %v6485
          %v7202 = vunpack.c.h.b16 %v6485
          %v7203 = vunpack.c.l.b16 %v6486
          %v7204 = vunpack.c.h.b16 %v6486
          %v7205 = vunpack.c.l.b16 %v6487
          %v7206 = vunpack.c.h.b16 %v6487
          %v7207 = vunpack.c.l.b16 %v6488
          %v7208 = vunpack.c.h.b16 %v6488
          %v7209 = vunpack.c.l.b16 %v6489
          %v7210 = vunpack.c.h.b16 %v6489
          %v7211 = vunpack.c.l.b16 %v6490
          %v7212 = vunpack.c.h.b16 %v6490
          %v7213 = vunpack.c.l.b16 %v6491
          %v7214 = vunpack.c.h.b16 %v6491
          %v7215 = vunpack.c.l.b16 %v6492
          %v7216 = vunpack.c.h.b16 %v6492
          %v7217 = vunpack.c.l.b16 %v6493
          %v7218 = vunpack.c.h.b16 %v6493
          %v7219 = vunpack.c.l.b16 %v6494
          %v7220 = vunpack.c.h.b16 %v6494
          %v7221 = vunpack.c.l.b16 %v6495
          %v7222 = vunpack.c.h.b16 %v6495
          %v7223 = vunpack.c.l.b16 %v6496
          %v7224 = vunpack.c.h.b16 %v6496
          %v7225 = vunpack.c.l.b16 %v6497
          %v7226 = vunpack.c.h.b16 %v6497
          %v7227 = vunpack.c.l.b16 %v6498
          %v7228 = vunpack.c.h.b16 %v6498
          %v7229 = vunpack.c.l.b16 %v6499
          %v7230 = vunpack.c.h.b16 %v6499
          %v7231 = vunpack.c.l.b16 %v6500
          %v7232 = vunpack.c.h.b16 %v6500
          %v7233 = vunpack.c.l.b16 %v6501
          %v7234 = vunpack.c.h.b16 %v6501
          %v7235 = vunpack.c.l.b16 %v6502
          %v7236 = vunpack.c.h.b16 %v6502
          %v7237 = vunpack.c.l.b16 %v6503
          %v7238 = vunpack.c.h.b16 %v6503
          %v7239 = vunpack.c.l.b16 %v6504
          %v7240 = vunpack.c.h.b16 %v6504
          %v7241 = vunpack.c.l.b16 %v6505
          %v7242 = vunpack.c.h.b16 %v6505
          %v7243 = vunpack.c.l.b16 %v6506
          %v7244 = vunpack.c.h.b16 %v6506
          %v7245 = vunpack.c.l.b16 %v6507
          %v7246 = vunpack.c.h.b16 %v6507
          %v7247 = vunpack.c.l.b16 %v6508
          %v7248 = vunpack.c.h.b16 %v6508
          %v7249 = vunpack.c.l.b16 %v6509
          %v7250 = vunpack.c.h.b16 %v6509
          %v7251 = vunpack.c.l.b16 %v6510
          %v7252 = vunpack.c.h.b16 %v6510
          %v7253 = vunpack.c.l.b16 %v6511
          %v7254 = vunpack.c.h.b16 %v6511
          %v7255 = vunpack.c.l.b16 %v6512
          %v7256 = vunpack.c.h.b16 %v6512
          %v7257 = vunpack.c.l.b16 %v6513
          %v7258 = vunpack.c.h.b16 %v6513
          %v7259 = vunpack.c.l.b16 %v6514
          %v7260 = vunpack.c.h.b16 %v6514
          %v7261 = vunpack.c.l.b16 %v6515
          %v7262 = vunpack.c.h.b16 %v6515
          %v7263 = vunpack.c.l.b16 %v6516
          %v7264 = vunpack.c.h.b16 %v6516
          %v7265 = vunpack.c.l.b16 %v6517
          %v7266 = vunpack.c.h.b16 %v6517
          %v7267 = vunpack.c.l.b16 %v6518
          %v7268 = vunpack.c.h.b16 %v6518
          %v7269 = vunpack.c.l.b16 %v6519
          %v7270 = vunpack.c.h.b16 %v6519
          %v7271 = vunpack.c.l.b16 %v6520
          %v7272 = vunpack.c.h.b16 %v6520
          %v7273 = vunpack.c.l.b16 %v6521
          %v7274 = vunpack.c.h.b16 %v6521
          %v7275 = vunpack.c.l.b16 %v6522
          %v7276 = vunpack.c.h.b16 %v6522
          %v7277 = vunpack.c.l.b16 %v6523
          %v7278 = vunpack.c.h.b16 %v6523
          %v7279 = vunpack.c.l.b16 %v6524
          %v7280 = vunpack.c.h.b16 %v6524
          %v7281 = vunpack.c.l.b16 %v6525
          %v7282 = vunpack.c.h.b16 %v6525
          %v7283 = vunpack.c.l.b16 %v6526
          %v7284 = vunpack.c.h.b16 %v6526
          %v7285 = vunpack.c.l.b16 %v6527
          %v7286 = vunpack.c.h.b16 %v6527
          %v7287 = vunpack.c.l.b16 %v6528
          %v7288 = vunpack.c.h.b16 %v6528
          %v7289 = vunpack.c.l.b16 %v6529
          %v7290 = vunpack.c.h.b16 %v6529
          %v7291 = vunpack.c.l.b16 %v6530
          %v7292 = vunpack.c.h.b16 %v6530
          %v7293 = vunpack.c.l.b16 %v6531
          %v7294 = vunpack.c.h.b16 %v6531
          %v7295 = vunpack.c.l.b16 %v6532
          %v7296 = vunpack.c.h.b16 %v6532
          %v7297 = vunpack.c.l.b16 %v6533
          %v7298 = vunpack.c.h.b16 %v6533
          %v7299 = vunpack.c.l.b16 %v6534
          %v7300 = vunpack.c.h.b16 %v6534
          %v7301 = vunpack.c.l.b16 %v6535
          %v7302 = vunpack.c.h.b16 %v6535
          %v7303 = vunpack.c.l.b16 %v6536
          %v7304 = vunpack.c.h.b16 %v6536
          %v7305 = vunpack.c.l.b16 %v6537
          %v7306 = vunpack.c.h.b16 %v6537
          %v7307 = vpack.c.b16 %v6799, %v6795
          %v7308 = vpack.c.b16 %v6800, %v6796
          %v7309 = vpack.c.b16 %v6801, %v6797
          %v7310 = vpack.c.b16 %v6802, %v6798
          %v7311 = vpack.c.b16 %v6807, %v6803
          %v7312 = vpack.c.b16 %v6808, %v6804
          %v7313 = vpack.c.b16 %v6809, %v6805
          %v7314 = vpack.c.b16 %v6810, %v6806
          %v7315 = vpack.c.b16 %v6815, %v6811
          %v7316 = vpack.c.b16 %v6816, %v6812
          %v7317 = vpack.c.b16 %v6817, %v6813
          %v7318 = vpack.c.b16 %v6818, %v6814
          %v7319 = vpack.c.b16 %v6823, %v6819
          %v7320 = vpack.c.b16 %v6824, %v6820
          %v7321 = vpack.c.b16 %v6825, %v6821
          %v7322 = vpack.c.b16 %v6826, %v6822
          %v7323 = vpack.c.b16 %v6831, %v6827
          %v7324 = vpack.c.b16 %v6832, %v6828
          %v7325 = vpack.c.b16 %v6833, %v6829
          %v7326 = vpack.c.b16 %v6834, %v6830
          %v7327 = vpack.c.b16 %v6839, %v6835
          %v7328 = vpack.c.b16 %v6840, %v6836
          %v7329 = vpack.c.b16 %v6841, %v6837
          %v7330 = vpack.c.b16 %v6842, %v6838
          %v7331 = vpack.c.b16 %v6847, %v6843
          %v7332 = vpack.c.b16 %v6848, %v6844
          %v7333 = vpack.c.b16 %v6849, %v6845
          %v7334 = vpack.c.b16 %v6850, %v6846
          %v7335 = vpack.c.b16 %v6855, %v6851
          %v7336 = vpack.c.b16 %v6856, %v6852
          %v7337 = vpack.c.b16 %v6857, %v6853
          %v7338 = vpack.c.b16 %v6858, %v6854
          %v7339 = vpack.c.b16 %v6863, %v6859
          %v7340 = vpack.c.b16 %v6864, %v6860
          %v7341 = vpack.c.b16 %v6865, %v6861
          %v7342 = vpack.c.b16 %v6866, %v6862
          %v7343 = vpack.c.b16 %v6871, %v6867
          %v7344 = vpack.c.b16 %v6872, %v6868
          %v7345 = vpack.c.b16 %v6873, %v6869
          %v7346 = vpack.c.b16 %v6874, %v6870
          %v7347 = vpack.c.b16 %v6879, %v6875
          %v7348 = vpack.c.b16 %v6880, %v6876
          %v7349 = vpack.c.b16 %v6881, %v6877
          %v7350 = vpack.c.b16 %v6882, %v6878
          %v7351 = vpack.c.b16 %v6887, %v6883
          %v7352 = vpack.c.b16 %v6888, %v6884
          %v7353 = vpack.c.b16 %v6889, %v6885
          %v7354 = vpack.c.b16 %v6890, %v6886
          %v7355 = vpack.c.b16 %v6895, %v6891
          %v7356 = vpack.c.b16 %v6896, %v6892
          %v7357 = vpack.c.b16 %v6897, %v6893
          %v7358 = vpack.c.b16 %v6898, %v6894
          %v7359 = vpack.c.b16 %v6903, %v6899
          %v7360 = vpack.c.b16 %v6904, %v6900
          %v7361 = vpack.c.b16 %v6905, %v6901
          %v7362 = vpack.c.b16 %v6906, %v6902
          %v7363 = vpack.c.b16 %v6911, %v6907
          %v7364 = vpack.c.b16 %v6912, %v6908
          %v7365 = vpack.c.b16 %v6913, %v6909
          %v7366 = vpack.c.b16 %v6914, %v6910
          %v7367 = vpack.c.b16 %v6919, %v6915
          %v7368 = vpack.c.b16 %v6920, %v6916
          %v7369 = vpack.c.b16 %v6921, %v6917
          %v7370 = vpack.c.b16 %v6922, %v6918
          %v7371 = vpack.c.b16 %v6927, %v6923
          %v7372 = vpack.c.b16 %v6928, %v6924
          %v7373 = vpack.c.b16 %v6929, %v6925
          %v7374 = vpack.c.b16 %v6930, %v6926
          %v7375 = vpack.c.b16 %v6935, %v6931
          %v7376 = vpack.c.b16 %v6936, %v6932
          %v7377 = vpack.c.b16 %v6937, %v6933
          %v7378 = vpack.c.b16 %v6938, %v6934
          %v7379 = vpack.c.b16 %v6943, %v6939
          %v7380 = vpack.c.b16 %v6944, %v6940
          %v7381 = vpack.c.b16 %v6945, %v6941
          %v7382 = vpack.c.b16 %v6946, %v6942
          %v7383 = vpack.c.b16 %v6951, %v6947
          %v7384 = vpack.c.b16 %v6952, %v6948
          %v7385 = vpack.c.b16 %v6953, %v6949
          %v7386 = vpack.c.b16 %v6954, %v6950
          %v7387 = vpack.c.b16 %v6959, %v6955
          %v7388 = vpack.c.b16 %v6960, %v6956
          %v7389 = vpack.c.b16 %v6961, %v6957
          %v7390 = vpack.c.b16 %v6962, %v6958
          %v7391 = vpack.c.b16 %v6967, %v6963
          %v7392 = vpack.c.b16 %v6968, %v6964
          %v7393 = vpack.c.b16 %v6969, %v6965
          %v7394 = vpack.c.b16 %v6970, %v6966
          %v7395 = vpack.c.b16 %v6975, %v6971
          %v7396 = vpack.c.b16 %v6976, %v6972
          %v7397 = vpack.c.b16 %v6977, %v6973
          %v7398 = vpack.c.b16 %v6978, %v6974
          %v7399 = vpack.c.b16 %v6983, %v6979
          %v7400 = vpack.c.b16 %v6984, %v6980
          %v7401 = vpack.c.b16 %v6985, %v6981
          %v7402 = vpack.c.b16 %v6986, %v6982
          %v7403 = vpack.c.b16 %v6991, %v6987
          %v7404 = vpack.c.b16 %v6992, %v6988
          %v7405 = vpack.c.b16 %v6993, %v6989
          %v7406 = vpack.c.b16 %v6994, %v6990
          %v7407 = vpack.c.b16 %v6999, %v6995
          %v7408 = vpack.c.b16 %v7000, %v6996
          %v7409 = vpack.c.b16 %v7001, %v6997
          %v7410 = vpack.c.b16 %v7002, %v6998
          %v7411 = vpack.c.b16 %v7007, %v7003
          %v7412 = vpack.c.b16 %v7008, %v7004
          %v7413 = vpack.c.b16 %v7009, %v7005
          %v7414 = vpack.c.b16 %v7010, %v7006
          %v7415 = vpack.c.b16 %v7015, %v7011
          %v7416 = vpack.c.b16 %v7016, %v7012
          %v7417 = vpack.c.b16 %v7017, %v7013
          %v7418 = vpack.c.b16 %v7018, %v7014
          %v7419 = vpack.c.b16 %v7023, %v7019
          %v7420 = vpack.c.b16 %v7024, %v7020
          %v7421 = vpack.c.b16 %v7025, %v7021
          %v7422 = vpack.c.b16 %v7026, %v7022
          %v7423 = vpack.c.b16 %v7031, %v7027
          %v7424 = vpack.c.b16 %v7032, %v7028
          %v7425 = vpack.c.b16 %v7033, %v7029
          %v7426 = vpack.c.b16 %v7034, %v7030
          %v7427 = vpack.c.b16 %v7039, %v7035
          %v7428 = vpack.c.b16 %v7040, %v7036
          %v7429 = vpack.c.b16 %v7041, %v7037
          %v7430 = vpack.c.b16 %v7042, %v7038
          %v7431 = vpack.c.b16 %v7047, %v7043
          %v7432 = vpack.c.b16 %v7048, %v7044
          %v7433 = vpack.c.b16 %v7049, %v7045
          %v7434 = vpack.c.b16 %v7050, %v7046
          %v7435 = vpack.c.b16 %v7055, %v7051
          %v7436 = vpack.c.b16 %v7056, %v7052
          %v7437 = vpack.c.b16 %v7057, %v7053
          %v7438 = vpack.c.b16 %v7058, %v7054
          %v7439 = vpack.c.b16 %v7063, %v7059
          %v7440 = vpack.c.b16 %v7064, %v7060
          %v7441 = vpack.c.b16 %v7065, %v7061
          %v7442 = vpack.c.b16 %v7066, %v7062
          %v7443 = vpack.c.b16 %v7071, %v7067
          %v7444 = vpack.c.b16 %v7072, %v7068
          %v7445 = vpack.c.b16 %v7073, %v7069
          %v7446 = vpack.c.b16 %v7074, %v7070
          %v7447 = vpack.c.b16 %v7079, %v7075
          %v7448 = vpack.c.b16 %v7080, %v7076
          %v7449 = vpack.c.b16 %v7081, %v7077
          %v7450 = vpack.c.b16 %v7082, %v7078
          %v7451 = vpack.c.b16 %v7087, %v7083
          %v7452 = vpack.c.b16 %v7088, %v7084
          %v7453 = vpack.c.b16 %v7089, %v7085
          %v7454 = vpack.c.b16 %v7090, %v7086
          %v7455 = vpack.c.b16 %v7095, %v7091
          %v7456 = vpack.c.b16 %v7096, %v7092
          %v7457 = vpack.c.b16 %v7097, %v7093
          %v7458 = vpack.c.b16 %v7098, %v7094
          %v7459 = vpack.c.b16 %v7103, %v7099
          %v7460 = vpack.c.b16 %v7104, %v7100
          %v7461 = vpack.c.b16 %v7105, %v7101
          %v7462 = vpack.c.b16 %v7106, %v7102
          %v7463 = vpack.c.b16 %v7111, %v7107
          %v7464 = vpack.c.b16 %v7112, %v7108
          %v7465 = vpack.c.b16 %v7113, %v7109
          %v7466 = vpack.c.b16 %v7114, %v7110
          %v7467 = vpack.c.b16 %v7119, %v7115
          %v7468 = vpack.c.b16 %v7120, %v7116
          %v7469 = vpack.c.b16 %v7121, %v7117
          %v7470 = vpack.c.b16 %v7122, %v7118
          %v7471 = vpack.c.b16 %v7127, %v7123
          %v7472 = vpack.c.b16 %v7128, %v7124
          %v7473 = vpack.c.b16 %v7129, %v7125
          %v7474 = vpack.c.b16 %v7130, %v7126
          %v7475 = vpack.c.b16 %v7135, %v7131
          %v7476 = vpack.c.b16 %v7136, %v7132
          %v7477 = vpack.c.b16 %v7137, %v7133
          %v7478 = vpack.c.b16 %v7138, %v7134
          %v7479 = vpack.c.b16 %v7143, %v7139
          %v7480 = vpack.c.b16 %v7144, %v7140
          %v7481 = vpack.c.b16 %v7145, %v7141
          %v7482 = vpack.c.b16 %v7146, %v7142
          %v7483 = vpack.c.b16 %v7151, %v7147
          %v7484 = vpack.c.b16 %v7152, %v7148
          %v7485 = vpack.c.b16 %v7153, %v7149
          %v7486 = vpack.c.b16 %v7154, %v7150
          %v7487 = vpack.c.b16 %v7159, %v7155
          %v7488 = vpack.c.b16 %v7160, %v7156
          %v7489 = vpack.c.b16 %v7161, %v7157
          %v7490 = vpack.c.b16 %v7162, %v7158
          %v7491 = vpack.c.b16 %v7167, %v7163
          %v7492 = vpack.c.b16 %v7168, %v7164
          %v7493 = vpack.c.b16 %v7169, %v7165
          %v7494 = vpack.c.b16 %v7170, %v7166
          %v7495 = vpack.c.b16 %v7175, %v7171
          %v7496 = vpack.c.b16 %v7176, %v7172
          %v7497 = vpack.c.b16 %v7177, %v7173
          %v7498 = vpack.c.b16 %v7178, %v7174
          %v7499 = vpack.c.b16 %v7183, %v7179
          %v7500 = vpack.c.b16 %v7184, %v7180
          %v7501 = vpack.c.b16 %v7185, %v7181
          %v7502 = vpack.c.b16 %v7186, %v7182
          %v7503 = vpack.c.b16 %v7191, %v7187
          %v7504 = vpack.c.b16 %v7192, %v7188
          %v7505 = vpack.c.b16 %v7193, %v7189
          %v7506 = vpack.c.b16 %v7194, %v7190
          %v7507 = vpack.c.b16 %v7199, %v7195
          %v7508 = vpack.c.b16 %v7200, %v7196
          %v7509 = vpack.c.b16 %v7201, %v7197
          %v7510 = vpack.c.b16 %v7202, %v7198
          %v7511 = vpack.c.b16 %v7207, %v7203
          %v7512 = vpack.c.b16 %v7208, %v7204
          %v7513 = vpack.c.b16 %v7209, %v7205
          %v7514 = vpack.c.b16 %v7210, %v7206
          %v7515 = vpack.c.b16 %v7215, %v7211
          %v7516 = vpack.c.b16 %v7216, %v7212
          %v7517 = vpack.c.b16 %v7217, %v7213
          %v7518 = vpack.c.b16 %v7218, %v7214
          %v7519 = vpack.c.b16 %v7223, %v7219
          %v7520 = vpack.c.b16 %v7224, %v7220
          %v7521 = vpack.c.b16 %v7225, %v7221
          %v7522 = vpack.c.b16 %v7226, %v7222
          %v7523 = vpack.c.b16 %v7231, %v7227
          %v7524 = vpack.c.b16 %v7232, %v7228
          %v7525 = vpack.c.b16 %v7233, %v7229
          %v7526 = vpack.c.b16 %v7234, %v7230
          %v7527 = vpack.c.b16 %v7239, %v7235
          %v7528 = vpack.c.b16 %v7240, %v7236
          %v7529 = vpack.c.b16 %v7241, %v7237
          %v7530 = vpack.c.b16 %v7242, %v7238
          %v7531 = vpack.c.b16 %v7247, %v7243
          %v7532 = vpack.c.b16 %v7248, %v7244
          %v7533 = vpack.c.b16 %v7249, %v7245
          %v7534 = vpack.c.b16 %v7250, %v7246
          %v7535 = vpack.c.b16 %v7255, %v7251
          %v7536 = vpack.c.b16 %v7256, %v7252
          %v7537 = vpack.c.b16 %v7257, %v7253
          %v7538 = vpack.c.b16 %v7258, %v7254
          %v7539 = vpack.c.b16 %v7263, %v7259
          %v7540 = vpack.c.b16 %v7264, %v7260
          %v7541 = vpack.c.b16 %v7265, %v7261
          %v7542 = vpack.c.b16 %v7266, %v7262
          %v7543 = vpack.c.b16 %v7271, %v7267
          %v7544 = vpack.c.b16 %v7272, %v7268
          %v7545 = vpack.c.b16 %v7273, %v7269
          %v7546 = vpack.c.b16 %v7274, %v7270
          %v7547 = vpack.c.b16 %v7279, %v7275
          %v7548 = vpack.c.b16 %v7280, %v7276
          %v7549 = vpack.c.b16 %v7281, %v7277
          %v7550 = vpack.c.b16 %v7282, %v7278
          %v7551 = vpack.c.b16 %v7287, %v7283
          %v7552 = vpack.c.b16 %v7288, %v7284
          %v7553 = vpack.c.b16 %v7289, %v7285
          %v7554 = vpack.c.b16 %v7290, %v7286
          %v7555 = vpack.c.b16 %v7295, %v7291
          %v7556 = vpack.c.b16 %v7296, %v7292
          %v7557 = vpack.c.b16 %v7297, %v7293
          %v7558 = vpack.c.b16 %v7298, %v7294
          %v7559 = vpack.c.b16 %v7303, %v7299
          %v7560 = vpack.c.b16 %v7304, %v7300
          %v7561 = vpack.c.b16 %v7305, %v7301
          %v7562 = vpack.c.b16 %v7306, %v7302
          %v7820 = vperm.slane %v6538, 0
          %v7821 = vperm.slane %v6538, 1
          %v7822 = vperm.slane %v6538, 2
          %v7823 = vperm.slane %v6538, 3
          %7828 = vmatpush.bf16.msra.mxu0 %v7335
          %7829 = vmatpush.bf16.msra.mxu0 %v7331
          %7830 = vmatpush.bf16.msra.mxu0 %v7327
          %7831 = vmatpush.bf16.msra.mxu0 %v7323
          %7832 = vmatpush.bf16.msra.mxu0 %v7319
          %7833 = vmatpush.bf16.msra.mxu0 %v7315
          %7834 = vmatpush.bf16.msra.mxu0 %v7311
          %7835 = vmatpush.bf16.msra.mxu0 %v7307
          %7836 = vmatmul.bf16.gmra.mxu0 %v6274
          %v7837 = vpop.f32.mrf.mxu0
          %v7838 = vadd.f32 %v7820, %v7837
          %v7839 = vpop.f32.mrf.mxu0
          %7840 = vdwg.mxu0
          %7841 = vmatpush.bf16.msra.mxu0 %v7367
          %7842 = vmatpush.bf16.msra.mxu0 %v7363
          %7843 = vmatpush.bf16.msra.mxu0 %v7359
          %7844 = vmatpush.bf16.msra.mxu0 %v7355
          %7845 = vmatpush.bf16.msra.mxu0 %v7351
          %7846 = vmatpush.bf16.msra.mxu0 %v7347
          %7847 = vmatpush.bf16.msra.mxu0 %v7343
          %7848 = vmatpush.bf16.msra.mxu0 %v7339
          %7849 = vmatmul.bf16.gmra.mxu0 %v6275
          %v7850 = vpop.f32.mrf.mxu0
          %v7851 = vadd.f32 %v7838, %v7850
          %v7852 = vpop.f32.mrf.mxu0
          %7853 = vdwg.mxu0
          %7854 = vmatpush.bf16.msra.mxu0 %v7399
          %7855 = vmatpush.bf16.msra.mxu0 %v7395
          %7856 = vmatpush.bf16.msra.mxu0 %v7391
          %7857 = vmatpush.bf16.msra.mxu0 %v7387
          %7858 = vmatpush.bf16.msra.mxu0 %v7383
          %7859 = vmatpush.bf16.msra.mxu0 %v7379
          %7860 = vmatpush.bf16.msra.mxu0 %v7375
          %7861 = vmatpush.bf16.msra.mxu0 %v7371
          %7862 = vmatmul.bf16.gmra.mxu0 %v6276
          %v7863 = vpop.f32.mrf.mxu0
          %v7864 = vadd.f32 %v7851, %v7863
          %v7865 = vpop.f32.mrf.mxu0
          %7866 = vdwg.mxu0
          %7867 = vmatpush.bf16.msra.mxu0 %v7431
          %7868 = vmatpush.bf16.msra.mxu0 %v7427
          %7869 = vmatpush.bf16.msra.mxu0 %v7423
          %7870 = vmatpush.bf16.msra.mxu0 %v7419
          %7871 = vmatpush.bf16.msra.mxu0 %v7415
          %7872 = vmatpush.bf16.msra.mxu0 %v7411
          %7873 = vmatpush.bf16.msra.mxu0 %v7407
          %7874 = vmatpush.bf16.msra.mxu0 %v7403
          %7875 = vmatmul.bf16.gmra.mxu0 %v6277
          %v7876 = vpop.f32.mrf.mxu0
          %v7877 = vadd.f32 %v7864, %v7876
          %v7878 = vpop.f32.mrf.mxu0
          %7879 = vdwg.mxu0
          %7880 = vmatpush.bf16.msra.mxu0 %v7463
          %7881 = vmatpush.bf16.msra.mxu0 %v7459
          %7882 = vmatpush.bf16.msra.mxu0 %v7455
          %7883 = vmatpush.bf16.msra.mxu0 %v7451
          %7884 = vmatpush.bf16.msra.mxu0 %v7447
          %7885 = vmatpush.bf16.msra.mxu0 %v7443
          %7886 = vmatpush.bf16.msra.mxu0 %v7439
          %7887 = vmatpush.bf16.msra.mxu0 %v7435
          %7888 = vmatmul.bf16.gmra.mxu0 %v6278
          %v7889 = vpop.f32.mrf.mxu0
          %v7890 = vadd.f32 %v7877, %v7889
          %v7891 = vpop.f32.mrf.mxu0
          %7892 = vdwg.mxu0
          %7893 = vmatpush.bf16.msra.mxu0 %v7495
          %7894 = vmatpush.bf16.msra.mxu0 %v7491
          %7895 = vmatpush.bf16.msra.mxu0 %v7487
          %7896 = vmatpush.bf16.msra.mxu0 %v7483
          %7897 = vmatpush.bf16.msra.mxu0 %v7479
          %7898 = vmatpush.bf16.msra.mxu0 %v7475
          %7899 = vmatpush.bf16.msra.mxu0 %v7471
          %7900 = vmatpush.bf16.msra.mxu0 %v7467
          %7901 = vmatmul.bf16.gmra.mxu0 %v6279
          %v7902 = vpop.f32.mrf.mxu0
          %v7903 = vadd.f32 %v7890, %v7902
          %v7904 = vpop.f32.mrf.mxu0
          %7905 = vdwg.mxu0
          %7906 = vmatpush.bf16.msra.mxu0 %v7527
          %7907 = vmatpush.bf16.msra.mxu0 %v7523
          %7908 = vmatpush.bf16.msra.mxu0 %v7519
          %7909 = vmatpush.bf16.msra.mxu0 %v7515
          %7910 = vmatpush.bf16.msra.mxu0 %v7511
          %7911 = vmatpush.bf16.msra.mxu0 %v7507
          %7912 = vmatpush.bf16.msra.mxu0 %v7503
          %7913 = vmatpush.bf16.msra.mxu0 %v7499
          %7914 = vmatmul.bf16.gmra.mxu0 %v6280
          %v7915 = vpop.f32.mrf.mxu0
          %v7916 = vadd.f32 %v7903, %v7915
          %v7917 = vpop.f32.mrf.mxu0
          %7918 = vdwg.mxu0
          %7919 = vmatpush.bf16.msra.mxu0 %v7559
          %7920 = vmatpush.bf16.msra.mxu0 %v7555
          %7921 = vmatpush.bf16.msra.mxu0 %v7551
          %7922 = vmatpush.bf16.msra.mxu0 %v7547
          %7923 = vmatpush.bf16.msra.mxu0 %v7543
          %7924 = vmatpush.bf16.msra.mxu0 %v7539
          %7925 = vmatpush.bf16.msra.mxu0 %v7535
          %7926 = vmatpush.bf16.msra.mxu0 %v7531
          %7927 = vmatmul.bf16.gmra.mxu0 %v6281
          %v7928 = vpop.f32.mrf.mxu0
          %v7929 = vadd.f32 %v7916, %v7928
          %v7930 = vpop.f32.mrf.mxu0
          %7931 = vdwg.mxu0
          %7932 = vmatpush.bf16.msra.mxu0 %v7336
          %7933 = vmatpush.bf16.msra.mxu0 %v7332
          %7934 = vmatpush.bf16.msra.mxu0 %v7328
          %7935 = vmatpush.bf16.msra.mxu0 %v7324
          %7936 = vmatpush.bf16.msra.mxu0 %v7320
          %7937 = vmatpush.bf16.msra.mxu0 %v7316
          %7938 = vmatpush.bf16.msra.mxu0 %v7312
          %7939 = vmatpush.bf16.msra.mxu0 %v7308
          %7940 = vmatmul.bf16.gmra.mxu0 %v6274
          %v7941 = vpop.f32.mrf.mxu0
          %v7942 = vadd.f32 %v7821, %v7941
          %v7943 = vpop.f32.mrf.mxu0
          %7944 = vdwg.mxu0
          %7945 = vmatpush.bf16.msra.mxu0 %v7368
          %7946 = vmatpush.bf16.msra.mxu0 %v7364
          %7947 = vmatpush.bf16.msra.mxu0 %v7360
          %7948 = vmatpush.bf16.msra.mxu0 %v7356
          %7949 = vmatpush.bf16.msra.mxu0 %v7352
          %7950 = vmatpush.bf16.msra.mxu0 %v7348
          %7951 = vmatpush.bf16.msra.mxu0 %v7344
          %7952 = vmatpush.bf16.msra.mxu0 %v7340
          %7953 = vmatmul.bf16.gmra.mxu0 %v6275
          %v7954 = vpop.f32.mrf.mxu0
          %v7955 = vadd.f32 %v7942, %v7954
          %v7956 = vpop.f32.mrf.mxu0
          %7957 = vdwg.mxu0
          %7958 = vmatpush.bf16.msra.mxu0 %v7400
          %7959 = vmatpush.bf16.msra.mxu0 %v7396
          %7960 = vmatpush.bf16.msra.mxu0 %v7392
          %7961 = vmatpush.bf16.msra.mxu0 %v7388
          %7962 = vmatpush.bf16.msra.mxu0 %v7384
          %7963 = vmatpush.bf16.msra.mxu0 %v7380
          %7964 = vmatpush.bf16.msra.mxu0 %v7376
          %7965 = vmatpush.bf16.msra.mxu0 %v7372
          %7966 = vmatmul.bf16.gmra.mxu0 %v6276
          %v7967 = vpop.f32.mrf.mxu0
          %v7968 = vadd.f32 %v7955, %v7967
          %v7969 = vpop.f32.mrf.mxu0
          %7970 = vdwg.mxu0
          %7971 = vmatpush.bf16.msra.mxu0 %v7432
          %7972 = vmatpush.bf16.msra.mxu0 %v7428
          %7973 = vmatpush.bf16.msra.mxu0 %v7424
          %7974 = vmatpush.bf16.msra.mxu0 %v7420
          %7975 = vmatpush.bf16.msra.mxu0 %v7416
          %7976 = vmatpush.bf16.msra.mxu0 %v7412
          %7977 = vmatpush.bf16.msra.mxu0 %v7408
          %7978 = vmatpush.bf16.msra.mxu0 %v7404
          %7979 = vmatmul.bf16.gmra.mxu0 %v6277
          %v7980 = vpop.f32.mrf.mxu0
          %v7981 = vadd.f32 %v7968, %v7980
          %v7982 = vpop.f32.mrf.mxu0
          %7983 = vdwg.mxu0
          %7984 = vmatpush.bf16.msra.mxu0 %v7464
          %7985 = vmatpush.bf16.msra.mxu0 %v7460
          %7986 = vmatpush.bf16.msra.mxu0 %v7456
          %7987 = vmatpush.bf16.msra.mxu0 %v7452
          %7988 = vmatpush.bf16.msra.mxu0 %v7448
          %7989 = vmatpush.bf16.msra.mxu0 %v7444
          %7990 = vmatpush.bf16.msra.mxu0 %v7440
          %7991 = vmatpush.bf16.msra.mxu0 %v7436
          %7992 = vmatmul.bf16.gmra.mxu0 %v6278
          %v7993 = vpop.f32.mrf.mxu0
          %v7994 = vadd.f32 %v7981, %v7993
          %v7995 = vpop.f32.mrf.mxu0
          %7996 = vdwg.mxu0
          %7997 = vmatpush.bf16.msra.mxu0 %v7496
          %7998 = vmatpush.bf16.msra.mxu0 %v7492
          %7999 = vmatpush.bf16.msra.mxu0 %v7488
          %8000 = vmatpush.bf16.msra.mxu0 %v7484
          %8001 = vmatpush.bf16.msra.mxu0 %v7480
          %8002 = vmatpush.bf16.msra.mxu0 %v7476
          %8003 = vmatpush.bf16.msra.mxu0 %v7472
          %8004 = vmatpush.bf16.msra.mxu0 %v7468
          %8005 = vmatmul.bf16.gmra.mxu0 %v6279
          %v8006 = vpop.f32.mrf.mxu0
          %v8007 = vadd.f32 %v7994, %v8006
          %v8008 = vpop.f32.mrf.mxu0
          %8009 = vdwg.mxu0
          %8010 = vmatpush.bf16.msra.mxu0 %v7528
          %8011 = vmatpush.bf16.msra.mxu0 %v7524
          %8012 = vmatpush.bf16.msra.mxu0 %v7520
          %8013 = vmatpush.bf16.msra.mxu0 %v7516
          %8014 = vmatpush.bf16.msra.mxu0 %v7512
          %8015 = vmatpush.bf16.msra.mxu0 %v7508
          %8016 = vmatpush.bf16.msra.mxu0 %v7504
          %8017 = vmatpush.bf16.msra.mxu0 %v7500
          %8018 = vmatmul.bf16.gmra.mxu0 %v6280
          %v8019 = vpop.f32.mrf.mxu0
          %v8020 = vadd.f32 %v8007, %v8019
          %v8021 = vpop.f32.mrf.mxu0
          %8022 = vdwg.mxu0
          %8023 = vmatpush.bf16.msra.mxu0 %v7560
          %8024 = vmatpush.bf16.msra.mxu0 %v7556
          %8025 = vmatpush.bf16.msra.mxu0 %v7552
          %8026 = vmatpush.bf16.msra.mxu0 %v7548
          %8027 = vmatpush.bf16.msra.mxu0 %v7544
          %8028 = vmatpush.bf16.msra.mxu0 %v7540
          %8029 = vmatpush.bf16.msra.mxu0 %v7536
          %8030 = vmatpush.bf16.msra.mxu0 %v7532
          %8031 = vmatmul.bf16.gmra.mxu0 %v6281
          %v8032 = vpop.f32.mrf.mxu0
          %v8033 = vadd.f32 %v8020, %v8032
          %v8034 = vpop.f32.mrf.mxu0
          %8035 = vdwg.mxu0
          %8036 = vmatpush.bf16.msra.mxu0 %v7337
          %8037 = vmatpush.bf16.msra.mxu0 %v7333
          %8038 = vmatpush.bf16.msra.mxu0 %v7329
          %8039 = vmatpush.bf16.msra.mxu0 %v7325
          %8040 = vmatpush.bf16.msra.mxu0 %v7321
          %8041 = vmatpush.bf16.msra.mxu0 %v7317
          %8042 = vmatpush.bf16.msra.mxu0 %v7313
          %8043 = vmatpush.bf16.msra.mxu0 %v7309
          %8044 = vmatmul.bf16.gmra.mxu0 %v6274
          %v8045 = vpop.f32.mrf.mxu0
          %v8046 = vadd.f32 %v7822, %v8045
          %v8047 = vpop.f32.mrf.mxu0
          %8048 = vdwg.mxu0
          %8049 = vmatpush.bf16.msra.mxu0 %v7369
          %8050 = vmatpush.bf16.msra.mxu0 %v7365
          %8051 = vmatpush.bf16.msra.mxu0 %v7361
          %8052 = vmatpush.bf16.msra.mxu0 %v7357
          %8053 = vmatpush.bf16.msra.mxu0 %v7353
          %8054 = vmatpush.bf16.msra.mxu0 %v7349
          %8055 = vmatpush.bf16.msra.mxu0 %v7345
          %8056 = vmatpush.bf16.msra.mxu0 %v7341
          %8057 = vmatmul.bf16.gmra.mxu0 %v6275
          %v8058 = vpop.f32.mrf.mxu0
          %v8059 = vadd.f32 %v8046, %v8058
          %v8060 = vpop.f32.mrf.mxu0
          %8061 = vdwg.mxu0
          %8062 = vmatpush.bf16.msra.mxu0 %v7401
          %8063 = vmatpush.bf16.msra.mxu0 %v7397
          %8064 = vmatpush.bf16.msra.mxu0 %v7393
          %8065 = vmatpush.bf16.msra.mxu0 %v7389
          %8066 = vmatpush.bf16.msra.mxu0 %v7385
          %8067 = vmatpush.bf16.msra.mxu0 %v7381
          %8068 = vmatpush.bf16.msra.mxu0 %v7377
          %8069 = vmatpush.bf16.msra.mxu0 %v7373
          %8070 = vmatmul.bf16.gmra.mxu0 %v6276
          %v8071 = vpop.f32.mrf.mxu0
          %v8072 = vadd.f32 %v8059, %v8071
          %v8073 = vpop.f32.mrf.mxu0
          %8074 = vdwg.mxu0
          %8075 = vmatpush.bf16.msra.mxu0 %v7433
          %8076 = vmatpush.bf16.msra.mxu0 %v7429
          %8077 = vmatpush.bf16.msra.mxu0 %v7425
          %8078 = vmatpush.bf16.msra.mxu0 %v7421
          %8079 = vmatpush.bf16.msra.mxu0 %v7417
          %8080 = vmatpush.bf16.msra.mxu0 %v7413
          %8081 = vmatpush.bf16.msra.mxu0 %v7409
          %8082 = vmatpush.bf16.msra.mxu0 %v7405
          %8083 = vmatmul.bf16.gmra.mxu0 %v6277
          %v8084 = vpop.f32.mrf.mxu0
          %v8085 = vadd.f32 %v8072, %v8084
          %v8086 = vpop.f32.mrf.mxu0
          %8087 = vdwg.mxu0
          %8088 = vmatpush.bf16.msra.mxu0 %v7465
          %8089 = vmatpush.bf16.msra.mxu0 %v7461
          %8090 = vmatpush.bf16.msra.mxu0 %v7457
          %8091 = vmatpush.bf16.msra.mxu0 %v7453
          %8092 = vmatpush.bf16.msra.mxu0 %v7449
          %8093 = vmatpush.bf16.msra.mxu0 %v7445
          %8094 = vmatpush.bf16.msra.mxu0 %v7441
          %8095 = vmatpush.bf16.msra.mxu0 %v7437
          %8096 = vmatmul.bf16.gmra.mxu0 %v6278
          %v8097 = vpop.f32.mrf.mxu0
          %v8098 = vadd.f32 %v8085, %v8097
          %v8099 = vpop.f32.mrf.mxu0
          %8100 = vdwg.mxu0
          %8101 = vmatpush.bf16.msra.mxu0 %v7497
          %8102 = vmatpush.bf16.msra.mxu0 %v7493
          %8103 = vmatpush.bf16.msra.mxu0 %v7489
          %8104 = vmatpush.bf16.msra.mxu0 %v7485
          %8105 = vmatpush.bf16.msra.mxu0 %v7481
          %8106 = vmatpush.bf16.msra.mxu0 %v7477
          %8107 = vmatpush.bf16.msra.mxu0 %v7473
          %8108 = vmatpush.bf16.msra.mxu0 %v7469
          %8109 = vmatmul.bf16.gmra.mxu0 %v6279
          %v8110 = vpop.f32.mrf.mxu0
          %v8111 = vadd.f32 %v8098, %v8110
          %v8112 = vpop.f32.mrf.mxu0
          %8113 = vdwg.mxu0
          %8114 = vmatpush.bf16.msra.mxu0 %v7529
          %8115 = vmatpush.bf16.msra.mxu0 %v7525
          %8116 = vmatpush.bf16.msra.mxu0 %v7521
          %8117 = vmatpush.bf16.msra.mxu0 %v7517
          %8118 = vmatpush.bf16.msra.mxu0 %v7513
          %8119 = vmatpush.bf16.msra.mxu0 %v7509
          %8120 = vmatpush.bf16.msra.mxu0 %v7505
          %8121 = vmatpush.bf16.msra.mxu0 %v7501
          %8122 = vmatmul.bf16.gmra.mxu0 %v6280
          %v8123 = vpop.f32.mrf.mxu0
          %v8124 = vadd.f32 %v8111, %v8123
          %v8125 = vpop.f32.mrf.mxu0
          %8126 = vdwg.mxu0
          %8127 = vmatpush.bf16.msra.mxu0 %v7561
          %8128 = vmatpush.bf16.msra.mxu0 %v7557
          %8129 = vmatpush.bf16.msra.mxu0 %v7553
          %8130 = vmatpush.bf16.msra.mxu0 %v7549
          %8131 = vmatpush.bf16.msra.mxu0 %v7545
          %8132 = vmatpush.bf16.msra.mxu0 %v7541
          %8133 = vmatpush.bf16.msra.mxu0 %v7537
          %8134 = vmatpush.bf16.msra.mxu0 %v7533
          %8135 = vmatmul.bf16.gmra.mxu0 %v6281
          %v8136 = vpop.f32.mrf.mxu0
          %v8137 = vadd.f32 %v8124, %v8136
          %v8138 = vpop.f32.mrf.mxu0
          %8139 = vdwg.mxu0
          %8140 = vmatpush.bf16.msra.mxu0 %v7338
          %8141 = vmatpush.bf16.msra.mxu0 %v7334
          %8142 = vmatpush.bf16.msra.mxu0 %v7330
          %8143 = vmatpush.bf16.msra.mxu0 %v7326
          %8144 = vmatpush.bf16.msra.mxu0 %v7322
          %8145 = vmatpush.bf16.msra.mxu0 %v7318
          %8146 = vmatpush.bf16.msra.mxu0 %v7314
          %8147 = vmatpush.bf16.msra.mxu0 %v7310
          %8148 = vmatmul.bf16.gmra.mxu0 %v6274
          %v8149 = vpop.f32.mrf.mxu0
          %v8150 = vadd.f32 %v7823, %v8149
          %v8151 = vpop.f32.mrf.mxu0
          %8152 = vdwg.mxu0
          %8153 = vmatpush.bf16.msra.mxu0 %v7370
          %8154 = vmatpush.bf16.msra.mxu0 %v7366
          %8155 = vmatpush.bf16.msra.mxu0 %v7362
          %8156 = vmatpush.bf16.msra.mxu0 %v7358
          %8157 = vmatpush.bf16.msra.mxu0 %v7354
          %8158 = vmatpush.bf16.msra.mxu0 %v7350
          %8159 = vmatpush.bf16.msra.mxu0 %v7346
          %8160 = vmatpush.bf16.msra.mxu0 %v7342
          %8161 = vmatmul.bf16.gmra.mxu0 %v6275
          %v8162 = vpop.f32.mrf.mxu0
          %v8163 = vadd.f32 %v8150, %v8162
          %v8164 = vpop.f32.mrf.mxu0
          %8165 = vdwg.mxu0
          %8166 = vmatpush.bf16.msra.mxu0 %v7402
          %8167 = vmatpush.bf16.msra.mxu0 %v7398
          %8168 = vmatpush.bf16.msra.mxu0 %v7394
          %8169 = vmatpush.bf16.msra.mxu0 %v7390
          %8170 = vmatpush.bf16.msra.mxu0 %v7386
          %8171 = vmatpush.bf16.msra.mxu0 %v7382
          %8172 = vmatpush.bf16.msra.mxu0 %v7378
          %8173 = vmatpush.bf16.msra.mxu0 %v7374
          %8174 = vmatmul.bf16.gmra.mxu0 %v6276
          %v8175 = vpop.f32.mrf.mxu0
          %v8176 = vadd.f32 %v8163, %v8175
          %v8177 = vpop.f32.mrf.mxu0
          %8178 = vdwg.mxu0
          %8179 = vmatpush.bf16.msra.mxu0 %v7434
          %8180 = vmatpush.bf16.msra.mxu0 %v7430
          %8181 = vmatpush.bf16.msra.mxu0 %v7426
          %8182 = vmatpush.bf16.msra.mxu0 %v7422
          %8183 = vmatpush.bf16.msra.mxu0 %v7418
          %8184 = vmatpush.bf16.msra.mxu0 %v7414
          %8185 = vmatpush.bf16.msra.mxu0 %v7410
          %8186 = vmatpush.bf16.msra.mxu0 %v7406
          %8187 = vmatmul.bf16.gmra.mxu0 %v6277
          %v8188 = vpop.f32.mrf.mxu0
          %v8189 = vadd.f32 %v8176, %v8188
          %v8190 = vpop.f32.mrf.mxu0
          %8191 = vdwg.mxu0
          %8192 = vmatpush.bf16.msra.mxu0 %v7466
          %8193 = vmatpush.bf16.msra.mxu0 %v7462
          %8194 = vmatpush.bf16.msra.mxu0 %v7458
          %8195 = vmatpush.bf16.msra.mxu0 %v7454
          %8196 = vmatpush.bf16.msra.mxu0 %v7450
          %8197 = vmatpush.bf16.msra.mxu0 %v7446
          %8198 = vmatpush.bf16.msra.mxu0 %v7442
          %8199 = vmatpush.bf16.msra.mxu0 %v7438
          %8200 = vmatmul.bf16.gmra.mxu0 %v6278
          %v8201 = vpop.f32.mrf.mxu0
          %v8202 = vadd.f32 %v8189, %v8201
          %v8203 = vpop.f32.mrf.mxu0
          %8204 = vdwg.mxu0
          %8205 = vmatpush.bf16.msra.mxu0 %v7498
          %8206 = vmatpush.bf16.msra.mxu0 %v7494
          %8207 = vmatpush.bf16.msra.mxu0 %v7490
          %8208 = vmatpush.bf16.msra.mxu0 %v7486
          %8209 = vmatpush.bf16.msra.mxu0 %v7482
          %8210 = vmatpush.bf16.msra.mxu0 %v7478
          %8211 = vmatpush.bf16.msra.mxu0 %v7474
          %8212 = vmatpush.bf16.msra.mxu0 %v7470
          %8213 = vmatmul.bf16.gmra.mxu0 %v6279
          %v8214 = vpop.f32.mrf.mxu0
          %v8215 = vadd.f32 %v8202, %v8214
          %v8216 = vpop.f32.mrf.mxu0
          %8217 = vdwg.mxu0
          %8218 = vmatpush.bf16.msra.mxu0 %v7530
          %8219 = vmatpush.bf16.msra.mxu0 %v7526
          %8220 = vmatpush.bf16.msra.mxu0 %v7522
          %8221 = vmatpush.bf16.msra.mxu0 %v7518
          %8222 = vmatpush.bf16.msra.mxu0 %v7514
          %8223 = vmatpush.bf16.msra.mxu0 %v7510
          %8224 = vmatpush.bf16.msra.mxu0 %v7506
          %8225 = vmatpush.bf16.msra.mxu0 %v7502
          %8226 = vmatmul.bf16.gmra.mxu0 %v6280
          %v8227 = vpop.f32.mrf.mxu0
          %v8228 = vadd.f32 %v8215, %v8227
          %v8229 = vpop.f32.mrf.mxu0
          %8230 = vdwg.mxu0
          %8231 = vmatpush.bf16.msra.mxu0 %v7562
          %8232 = vmatpush.bf16.msra.mxu0 %v7558
          %8233 = vmatpush.bf16.msra.mxu0 %v7554
          %8234 = vmatpush.bf16.msra.mxu0 %v7550
          %8235 = vmatpush.bf16.msra.mxu0 %v7546
          %8236 = vmatpush.bf16.msra.mxu0 %v7542
          %8237 = vmatpush.bf16.msra.mxu0 %v7538
          %8238 = vmatpush.bf16.msra.mxu0 %v7534
          %8239 = vmatmul.bf16.gmra.mxu0 %v6281
          %v8240 = vpop.f32.mrf.mxu0
          %v8241 = vadd.f32 %v8228, %v8240
          %v8242 = vpop.f32.mrf.mxu0
          %8243 = vdwg.mxu0
          %v8244 = vmax.f32 %v7929, 0.0
          %v8245 = vmax.f32 %v8033, 0.0
          %v8246 = vmax.f32 %v8137, 0.0
          %v8247 = vmax.f32 %v8241, 0.0
          %v8248 = vpack.c.bf16 %v8244, %v8244
          %v8249 = vpack.c.bf16 %v8245, %v8245
          %v8250 = vpack.c.bf16 %v8246, %v8246
          %v8251 = vpack.c.bf16 %v8247, %v8247
          %v8252 = vld [vmem:[#allocation6] sm:$0xff]
          %v8253 = vld [vmem:[#allocation6 + $0x8] sm:$0xff]
          %v8254 = vld [vmem:[#allocation6 + $0x10] sm:$0xff]
          %v8255 = vld [vmem:[#allocation6 + $0x18] sm:$0xff]
          %v8256 = vld [vmem:[#allocation6 + $0x20] sm:$0xff]
          %v8257 = vld [vmem:[#allocation6 + $0x28] sm:$0xff]
          %v8258 = vld [vmem:[#allocation6 + $0x30] sm:$0xff]
          %v8259 = vld [vmem:[#allocation6 + $0x38] sm:$0xff]
          %v8260 = vld [vmem:[#allocation6 + $0x40] sm:$0xff]
          %v8261 = vld [vmem:[#allocation6 + $0x48] sm:$0xff]
          %v8262 = vld [vmem:[#allocation6 + $0x50] sm:$0xff]
          %v8263 = vld [vmem:[#allocation6 + $0x58] sm:$0xff]
          %v8264 = vld [vmem:[#allocation6 + $0x60] sm:$0xff]
          %v8265 = vld [vmem:[#allocation6 + $0x68] sm:$0xff]
          %v8266 = vld [vmem:[#allocation6 + $0x70] sm:$0xff]
          %v8267 = vld [vmem:[#allocation6 + $0x78] sm:$0xff]
          %v8268 = vld [vmem:[#allocation6 + $0x80] sm:$0xff]
          %v8269 = vld [vmem:[#allocation6 + $0x88] sm:$0xff]
          %v8270 = vld [vmem:[#allocation6 + $0x90] sm:$0xff]
          %v8271 = vld [vmem:[#allocation6 + $0x98] sm:$0xff]
          %v8272 = vld [vmem:[#allocation6 + $0xa0] sm:$0xff]
          %v8273 = vld [vmem:[#allocation6 + $0xa8] sm:$0xff]
          %v8274 = vld [vmem:[#allocation6 + $0xb0] sm:$0xff]
          %v8275 = vld [vmem:[#allocation6 + $0xb8] sm:$0xff]
          %v8276 = vld [vmem:[#allocation6 + $0xc0] sm:$0xff]
          %v8277 = vld [vmem:[#allocation6 + $0xc8] sm:$0xff]
          %v8278 = vld [vmem:[#allocation6 + $0xd0] sm:$0xff]
          %v8279 = vld [vmem:[#allocation6 + $0xd8] sm:$0xff]
          %v8280 = vld [vmem:[#allocation6 + $0xe0] sm:$0xff]
          %v8281 = vld [vmem:[#allocation6 + $0xe8] sm:$0xff]
          %v8282 = vld [vmem:[#allocation6 + $0xf0] sm:$0xff]
          %v8283 = vld [vmem:[#allocation6 + $0xf8] sm:$0xff]
          %v8284 = vld [vmem:[#allocation6 + $0x100] sm:$0xff]
          %v8285 = vld [vmem:[#allocation6 + $0x108] sm:$0xff]
          %v8286 = vld [vmem:[#allocation6 + $0x110] sm:$0xff]
          %v8287 = vld [vmem:[#allocation6 + $0x118] sm:$0xff]
          %v8288 = vld [vmem:[#allocation6 + $0x120] sm:$0xff]
          %v8289 = vld [vmem:[#allocation6 + $0x128] sm:$0xff]
          %v8290 = vld [vmem:[#allocation6 + $0x130] sm:$0xff]
          %v8291 = vld [vmem:[#allocation6 + $0x138] sm:$0xff]
          %v8292 = vld [vmem:[#allocation6 + $0x140] sm:$0xff]
          %v8293 = vld [vmem:[#allocation6 + $0x148] sm:$0xff]
          %v8294 = vld [vmem:[#allocation6 + $0x150] sm:$0xff]
          %v8295 = vld [vmem:[#allocation6 + $0x158] sm:$0xff]
          %v8296 = vld [vmem:[#allocation6 + $0x160] sm:$0xff]
          %v8297 = vld [vmem:[#allocation6 + $0x168] sm:$0xff]
          %v8298 = vld [vmem:[#allocation6 + $0x170] sm:$0xff]
          %v8299 = vld [vmem:[#allocation6 + $0x178] sm:$0xff]
          %v8300 = vld [vmem:[#allocation6 + $0x180] sm:$0xff]
          %v8301 = vld [vmem:[#allocation6 + $0x188] sm:$0xff]
          %v8302 = vld [vmem:[#allocation6 + $0x190] sm:$0xff]
          %v8303 = vld [vmem:[#allocation6 + $0x198] sm:$0xff]
          %v8304 = vld [vmem:[#allocation6 + $0x1a0] sm:$0xff]
          %v8305 = vld [vmem:[#allocation6 + $0x1a8] sm:$0xff]
          %v8306 = vld [vmem:[#allocation6 + $0x1b0] sm:$0xff]
          %v8307 = vld [vmem:[#allocation6 + $0x1b8] sm:$0xff]
          %v8308 = vld [vmem:[#allocation6 + $0x1c0] sm:$0xff]
          %v8309 = vld [vmem:[#allocation6 + $0x1c8] sm:$0xff]
          %v8310 = vld [vmem:[#allocation6 + $0x1d0] sm:$0xff]
          %v8311 = vld [vmem:[#allocation6 + $0x1d8] sm:$0xff]
          %v8312 = vld [vmem:[#allocation6 + $0x1e0] sm:$0xff]
          %v8313 = vld [vmem:[#allocation6 + $0x1e8] sm:$0xff]
          %v8314 = vld [vmem:[#allocation6 + $0x1f0] sm:$0xff]
          %v8315 = vld [vmem:[#allocation6 + $0x1f8] sm:$0xff]
          %v8316 = vld [vmem:[%s10] sm:$0x3]
          %v8381 = vunpack.c.l.b16 %v8252
          %v8382 = vunpack.c.h.b16 %v8252
          %v8383 = vunpack.c.l.b16 %v8253
          %v8384 = vunpack.c.h.b16 %v8253
          %v8385 = vunpack.c.l.b16 %v8254
          %v8386 = vunpack.c.h.b16 %v8254
          %v8387 = vunpack.c.l.b16 %v8255
          %v8388 = vunpack.c.h.b16 %v8255
          %v8389 = vunpack.c.l.b16 %v8256
          %v8390 = vunpack.c.h.b16 %v8256
          %v8391 = vunpack.c.l.b16 %v8257
          %v8392 = vunpack.c.h.b16 %v8257
          %v8393 = vunpack.c.l.b16 %v8258
          %v8394 = vunpack.c.h.b16 %v8258
          %v8395 = vunpack.c.l.b16 %v8259
          %v8396 = vunpack.c.h.b16 %v8259
          %v8397 = vunpack.c.l.b16 %v8260
          %v8398 = vunpack.c.h.b16 %v8260
          %v8399 = vunpack.c.l.b16 %v8261
          %v8400 = vunpack.c.h.b16 %v8261
          %v8401 = vunpack.c.l.b16 %v8262
          %v8402 = vunpack.c.h.b16 %v8262
          %v8403 = vunpack.c.l.b16 %v8263
          %v8404 = vunpack.c.h.b16 %v8263
          %v8405 = vunpack.c.l.b16 %v8264
          %v8406 = vunpack.c.h.b16 %v8264
          %v8407 = vunpack.c.l.b16 %v8265
          %v8408 = vunpack.c.h.b16 %v8265
          %v8409 = vunpack.c.l.b16 %v8266
          %v8410 = vunpack.c.h.b16 %v8266
          %v8411 = vunpack.c.l.b16 %v8267
          %v8412 = vunpack.c.h.b16 %v8267
          %v8413 = vunpack.c.l.b16 %v8268
          %v8414 = vunpack.c.h.b16 %v8268
          %v8415 = vunpack.c.l.b16 %v8269
          %v8416 = vunpack.c.h.b16 %v8269
          %v8417 = vunpack.c.l.b16 %v8270
          %v8418 = vunpack.c.h.b16 %v8270
          %v8419 = vunpack.c.l.b16 %v8271
          %v8420 = vunpack.c.h.b16 %v8271
          %v8421 = vunpack.c.l.b16 %v8272
          %v8422 = vunpack.c.h.b16 %v8272
          %v8423 = vunpack.c.l.b16 %v8273
          %v8424 = vunpack.c.h.b16 %v8273
          %v8425 = vunpack.c.l.b16 %v8274
          %v8426 = vunpack.c.h.b16 %v8274
          %v8427 = vunpack.c.l.b16 %v8275
          %v8428 = vunpack.c.h.b16 %v8275
          %v8429 = vunpack.c.l.b16 %v8276
          %v8430 = vunpack.c.h.b16 %v8276
          %v8431 = vunpack.c.l.b16 %v8277
          %v8432 = vunpack.c.h.b16 %v8277
          %v8433 = vunpack.c.l.b16 %v8278
          %v8434 = vunpack.c.h.b16 %v8278
          %v8435 = vunpack.c.l.b16 %v8279
          %v8436 = vunpack.c.h.b16 %v8279
          %v8437 = vunpack.c.l.b16 %v8280
          %v8438 = vunpack.c.h.b16 %v8280
          %v8439 = vunpack.c.l.b16 %v8281
          %v8440 = vunpack.c.h.b16 %v8281
          %v8441 = vunpack.c.l.b16 %v8282
          %v8442 = vunpack.c.h.b16 %v8282
          %v8443 = vunpack.c.l.b16 %v8283
          %v8444 = vunpack.c.h.b16 %v8283
          %v8445 = vunpack.c.l.b16 %v8284
          %v8446 = vunpack.c.h.b16 %v8284
          %v8447 = vunpack.c.l.b16 %v8285
          %v8448 = vunpack.c.h.b16 %v8285
          %v8449 = vunpack.c.l.b16 %v8286
          %v8450 = vunpack.c.h.b16 %v8286
          %v8451 = vunpack.c.l.b16 %v8287
          %v8452 = vunpack.c.h.b16 %v8287
          %v8453 = vunpack.c.l.b16 %v8288
          %v8454 = vunpack.c.h.b16 %v8288
          %v8455 = vunpack.c.l.b16 %v8289
          %v8456 = vunpack.c.h.b16 %v8289
          %v8457 = vunpack.c.l.b16 %v8290
          %v8458 = vunpack.c.h.b16 %v8290
          %v8459 = vunpack.c.l.b16 %v8291
          %v8460 = vunpack.c.h.b16 %v8291
          %v8461 = vunpack.c.l.b16 %v8292
          %v8462 = vunpack.c.h.b16 %v8292
          %v8463 = vunpack.c.l.b16 %v8293
          %v8464 = vunpack.c.h.b16 %v8293
          %v8465 = vunpack.c.l.b16 %v8294
          %v8466 = vunpack.c.h.b16 %v8294
          %v8467 = vunpack.c.l.b16 %v8295
          %v8468 = vunpack.c.h.b16 %v8295
          %v8469 = vunpack.c.l.b16 %v8296
          %v8470 = vunpack.c.h.b16 %v8296
          %v8471 = vunpack.c.l.b16 %v8297
          %v8472 = vunpack.c.h.b16 %v8297
          %v8473 = vunpack.c.l.b16 %v8298
          %v8474 = vunpack.c.h.b16 %v8298
          %v8475 = vunpack.c.l.b16 %v8299
          %v8476 = vunpack.c.h.b16 %v8299
          %v8477 = vunpack.c.l.b16 %v8300
          %v8478 = vunpack.c.h.b16 %v8300
          %v8479 = vunpack.c.l.b16 %v8301
          %v8480 = vunpack.c.h.b16 %v8301
          %v8481 = vunpack.c.l.b16 %v8302
          %v8482 = vunpack.c.h.b16 %v8302
          %v8483 = vunpack.c.l.b16 %v8303
          %v8484 = vunpack.c.h.b16 %v8303
          %v8485 = vunpack.c.l.b16 %v8304
          %v8486 = vunpack.c.h.b16 %v8304
          %v8487 = vunpack.c.l.b16 %v8305
          %v8488 = vunpack.c.h.b16 %v8305
          %v8489 = vunpack.c.l.b16 %v8306
          %v8490 = vunpack.c.h.b16 %v8306
          %v8491 = vunpack.c.l.b16 %v8307
          %v8492 = vunpack.c.h.b16 %v8307
          %v8493 = vunpack.c.l.b16 %v8308
          %v8494 = vunpack.c.h.b16 %v8308
          %v8495 = vunpack.c.l.b16 %v8309
          %v8496 = vunpack.c.h.b16 %v8309
          %v8497 = vunpack.c.l.b16 %v8310
          %v8498 = vunpack.c.h.b16 %v8310
          %v8499 = vunpack.c.l.b16 %v8311
          %v8500 = vunpack.c.h.b16 %v8311
          %v8501 = vunpack.c.l.b16 %v8312
          %v8502 = vunpack.c.h.b16 %v8312
          %v8503 = vunpack.c.l.b16 %v8313
          %v8504 = vunpack.c.h.b16 %v8313
          %v8505 = vunpack.c.l.b16 %v8314
          %v8506 = vunpack.c.h.b16 %v8314
          %v8507 = vunpack.c.l.b16 %v8315
          %v8508 = vunpack.c.h.b16 %v8315
          %v8509 = vpack.c.b16 %v8383, %v8381
          %v8510 = vpack.c.b16 %v8384, %v8382
          %v8511 = vpack.c.b16 %v8387, %v8385
          %v8512 = vpack.c.b16 %v8388, %v8386
          %v8513 = vpack.c.b16 %v8391, %v8389
          %v8514 = vpack.c.b16 %v8392, %v8390
          %v8515 = vpack.c.b16 %v8395, %v8393
          %v8516 = vpack.c.b16 %v8396, %v8394
          %v8517 = vpack.c.b16 %v8399, %v8397
          %v8518 = vpack.c.b16 %v8400, %v8398
          %v8519 = vpack.c.b16 %v8403, %v8401
          %v8520 = vpack.c.b16 %v8404, %v8402
          %v8521 = vpack.c.b16 %v8407, %v8405
          %v8522 = vpack.c.b16 %v8408, %v8406
          %v8523 = vpack.c.b16 %v8411, %v8409
          %v8524 = vpack.c.b16 %v8412, %v8410
          %v8525 = vpack.c.b16 %v8415, %v8413
          %v8526 = vpack.c.b16 %v8416, %v8414
          %v8527 = vpack.c.b16 %v8419, %v8417
          %v8528 = vpack.c.b16 %v8420, %v8418
          %v8529 = vpack.c.b16 %v8423, %v8421
          %v8530 = vpack.c.b16 %v8424, %v8422
          %v8531 = vpack.c.b16 %v8427, %v8425
          %v8532 = vpack.c.b16 %v8428, %v8426
          %v8533 = vpack.c.b16 %v8431, %v8429
          %v8534 = vpack.c.b16 %v8432, %v8430
          %v8535 = vpack.c.b16 %v8435, %v8433
          %v8536 = vpack.c.b16 %v8436, %v8434
          %v8537 = vpack.c.b16 %v8439, %v8437
          %v8538 = vpack.c.b16 %v8440, %v8438
          %v8539 = vpack.c.b16 %v8443, %v8441
          %v8540 = vpack.c.b16 %v8444, %v8442
          %v8541 = vpack.c.b16 %v8447, %v8445
          %v8542 = vpack.c.b16 %v8448, %v8446
          %v8543 = vpack.c.b16 %v8451, %v8449
          %v8544 = vpack.c.b16 %v8452, %v8450
          %v8545 = vpack.c.b16 %v8455, %v8453
          %v8546 = vpack.c.b16 %v8456, %v8454
          %v8547 = vpack.c.b16 %v8459, %v8457
          %v8548 = vpack.c.b16 %v8460, %v8458
          %v8549 = vpack.c.b16 %v8463, %v8461
          %v8550 = vpack.c.b16 %v8464, %v8462
          %v8551 = vpack.c.b16 %v8467, %v8465
          %v8552 = vpack.c.b16 %v8468, %v8466
          %v8553 = vpack.c.b16 %v8471, %v8469
          %v8554 = vpack.c.b16 %v8472, %v8470
          %v8555 = vpack.c.b16 %v8475, %v8473
          %v8556 = vpack.c.b16 %v8476, %v8474
          %v8557 = vpack.c.b16 %v8479, %v8477
          %v8558 = vpack.c.b16 %v8480, %v8478
          %v8559 = vpack.c.b16 %v8483, %v8481
          %v8560 = vpack.c.b16 %v8484, %v8482
          %v8561 = vpack.c.b16 %v8487, %v8485
          %v8562 = vpack.c.b16 %v8488, %v8486
          %v8563 = vpack.c.b16 %v8491, %v8489
          %v8564 = vpack.c.b16 %v8492, %v8490
          %v8565 = vpack.c.b16 %v8495, %v8493
          %v8566 = vpack.c.b16 %v8496, %v8494
          %v8567 = vpack.c.b16 %v8499, %v8497
          %v8568 = vpack.c.b16 %v8500, %v8498
          %v8569 = vpack.c.b16 %v8503, %v8501
          %v8570 = vpack.c.b16 %v8504, %v8502
          %v8571 = vpack.c.b16 %v8507, %v8505
          %v8572 = vpack.c.b16 %v8508, %v8506
          %v8638 = vperm.slane %v8316, 0
          %v8639 = vperm.slane %v8316, 1
          %8642 = vmatpush.bf16.msra.mxu0 %v8523
          %8643 = vmatpush.bf16.msra.mxu0 %v8521
          %8644 = vmatpush.bf16.msra.mxu0 %v8519
          %8645 = vmatpush.bf16.msra.mxu0 %v8517
          %8646 = vmatpush.bf16.msra.mxu0 %v8515
          %8647 = vmatpush.bf16.msra.mxu0 %v8513
          %8648 = vmatpush.bf16.msra.mxu0 %v8511
          %8649 = vmatpush.bf16.msra.mxu0 %v8509
          %8650 = vmatmul.bf16.gmra.mxu0 %v8248
          %v8651 = vpop.f32.mrf.mxu0
          %v8652 = vadd.f32 %v8638, %v8651
          %v8653 = vpop.f32.mrf.mxu0
          %8654 = vdwg.mxu0
          %8655 = vmatpush.bf16.msra.mxu0 %v8539
          %8656 = vmatpush.bf16.msra.mxu0 %v8537
          %8657 = vmatpush.bf16.msra.mxu0 %v8535
          %8658 = vmatpush.bf16.msra.mxu0 %v8533
          %8659 = vmatpush.bf16.msra.mxu0 %v8531
          %8660 = vmatpush.bf16.msra.mxu0 %v8529
          %8661 = vmatpush.bf16.msra.mxu0 %v8527
          %8662 = vmatpush.bf16.msra.mxu0 %v8525
          %8663 = vmatmul.bf16.gmra.mxu0 %v8249
          %v8664 = vpop.f32.mrf.mxu0
          %v8665 = vadd.f32 %v8652, %v8664
          %v8666 = vpop.f32.mrf.mxu0
          %8667 = vdwg.mxu0
          %8668 = vmatpush.bf16.msra.mxu0 %v8555
          %8669 = vmatpush.bf16.msra.mxu0 %v8553
          %8670 = vmatpush.bf16.msra.mxu0 %v8551
          %8671 = vmatpush.bf16.msra.mxu0 %v8549
          %8672 = vmatpush.bf16.msra.mxu0 %v8547
          %8673 = vmatpush.bf16.msra.mxu0 %v8545
          %8674 = vmatpush.bf16.msra.mxu0 %v8543
          %8675 = vmatpush.bf16.msra.mxu0 %v8541
          %8676 = vmatmul.bf16.gmra.mxu0 %v8250
          %v8677 = vpop.f32.mrf.mxu0
          %v8678 = vadd.f32 %v8665, %v8677
          %v8679 = vpop.f32.mrf.mxu0
          %8680 = vdwg.mxu0
          %8681 = vmatpush.bf16.msra.mxu0 %v8571
          %8682 = vmatpush.bf16.msra.mxu0 %v8569
          %8683 = vmatpush.bf16.msra.mxu0 %v8567
          %8684 = vmatpush.bf16.msra.mxu0 %v8565
          %8685 = vmatpush.bf16.msra.mxu0 %v8563
          %8686 = vmatpush.bf16.msra.mxu0 %v8561
          %8687 = vmatpush.bf16.msra.mxu0 %v8559
          %8688 = vmatpush.bf16.msra.mxu0 %v8557
          %8689 = vmatmul.bf16.gmra.mxu0 %v8251
          %v8690 = vpop.f32.mrf.mxu0
          %v8691 = vadd.f32 %v8678, %v8690
          %v8692 = vpop.f32.mrf.mxu0
          %8693 = vdwg.mxu0
          %8694 = vmatpush.bf16.msra.mxu0 %v8524
          %8695 = vmatpush.bf16.msra.mxu0 %v8522
          %8696 = vmatpush.bf16.msra.mxu0 %v8520
          %8697 = vmatpush.bf16.msra.mxu0 %v8518
          %8698 = vmatpush.bf16.msra.mxu0 %v8516
          %8699 = vmatpush.bf16.msra.mxu0 %v8514
          %8700 = vmatpush.bf16.msra.mxu0 %v8512
          %8701 = vmatpush.bf16.msra.mxu0 %v8510
          %8702 = vmatmul.bf16.gmra.mxu0 %v8248
          %v8703 = vpop.f32.mrf.mxu0
          %v8704 = vadd.f32 %v8639, %v8703
          %v8705 = vpop.f32.mrf.mxu0
          %8706 = vdwg.mxu0
          %8707 = vmatpush.bf16.msra.mxu0 %v8540
          %8708 = vmatpush.bf16.msra.mxu0 %v8538
          %8709 = vmatpush.bf16.msra.mxu0 %v8536
          %8710 = vmatpush.bf16.msra.mxu0 %v8534
          %8711 = vmatpush.bf16.msra.mxu0 %v8532
          %8712 = vmatpush.bf16.msra.mxu0 %v8530
          %8713 = vmatpush.bf16.msra.mxu0 %v8528
          %8714 = vmatpush.bf16.msra.mxu0 %v8526
          %8715 = vmatmul.bf16.gmra.mxu0 %v8249
          %v8716 = vpop.f32.mrf.mxu0
          %v8717 = vadd.f32 %v8704, %v8716
          %v8718 = vpop.f32.mrf.mxu0
          %8719 = vdwg.mxu0
          %8720 = vmatpush.bf16.msra.mxu0 %v8556
          %8721 = vmatpush.bf16.msra.mxu0 %v8554
          %8722 = vmatpush.bf16.msra.mxu0 %v8552
          %8723 = vmatpush.bf16.msra.mxu0 %v8550
          %8724 = vmatpush.bf16.msra.mxu0 %v8548
          %8725 = vmatpush.bf16.msra.mxu0 %v8546
          %8726 = vmatpush.bf16.msra.mxu0 %v8544
          %8727 = vmatpush.bf16.msra.mxu0 %v8542
          %8728 = vmatmul.bf16.gmra.mxu0 %v8250
          %v8729 = vpop.f32.mrf.mxu0
          %v8730 = vadd.f32 %v8717, %v8729
          %v8731 = vpop.f32.mrf.mxu0
          %8732 = vdwg.mxu0
          %8733 = vmatpush.bf16.msra.mxu0 %v8572
          %8734 = vmatpush.bf16.msra.mxu0 %v8570
          %8735 = vmatpush.bf16.msra.mxu0 %v8568
          %8736 = vmatpush.bf16.msra.mxu0 %v8566
          %8737 = vmatpush.bf16.msra.mxu0 %v8564
          %8738 = vmatpush.bf16.msra.mxu0 %v8562
          %8739 = vmatpush.bf16.msra.mxu0 %v8560
          %8740 = vmatpush.bf16.msra.mxu0 %v8558
          %8741 = vmatmul.bf16.gmra.mxu0 %v8251
          %v8742 = vpop.f32.mrf.mxu0
          %v8743 = vadd.f32 %v8730, %v8742
          %v8744 = vpop.f32.mrf.mxu0
          %8745 = vdwg.mxu0
          %v8746 = vmax.f32 %v8691, 0.0
          %v8747 = vmax.f32 %v8743, 0.0
          %v8748 = vpack.c.bf16 %v8746, %v8746
          %v8749 = vpack.c.bf16 %v8747, %v8747
          %v8750 = vld [vmem:[%s11] sm:$0xf]
          %v8751 = vld [vmem:[%s11 + $0x4] sm:$0xf]
          %v8752 = vld [vmem:[%s11 + $0x8] sm:$0xf]
          %v8753 = vld [vmem:[%s11 + $0xc] sm:$0xf]
          %v8754 = vld [vmem:[%s11 + $0x10] sm:$0xf]
          %v8755 = vld [vmem:[%s11 + $0x14] sm:$0xf]
          %v8756 = vld [vmem:[%s11 + $0x18] sm:$0xf]
          %v8757 = vld [vmem:[%s11 + $0x1c] sm:$0xf]
          %v8758 = vld [vmem:[%s11 + $0x20] sm:$0xf]
          %v8759 = vld [vmem:[%s11 + $0x24] sm:$0xf]
          %v8760 = vld [vmem:[%s11 + $0x28] sm:$0xf]
          %v8761 = vld [vmem:[%s11 + $0x2c] sm:$0xf]
          %v8762 = vld [vmem:[%s11 + $0x30] sm:$0xf]
          %v8763 = vld [vmem:[%s11 + $0x34] sm:$0xf]
          %v8764 = vld [vmem:[%s11 + $0x38] sm:$0xf]
          %v8765 = vld [vmem:[%s11 + $0x3c] sm:$0xf]
          %v8766 = vld [vmem:[%s11 + $0x40] sm:$0xf]
          %v8767 = vld [vmem:[%s11 + $0x44] sm:$0xf]
          %v8768 = vld [vmem:[%s11 + $0x48] sm:$0xf]
          %v8769 = vld [vmem:[%s11 + $0x4c] sm:$0xf]
          %v8770 = vld [vmem:[%s11 + $0x50] sm:$0xf]
          %v8771 = vld [vmem:[%s11 + $0x54] sm:$0xf]
          %v8772 = vld [vmem:[%s11 + $0x58] sm:$0xf]
          %v8773 = vld [vmem:[%s11 + $0x5c] sm:$0xf]
          %v8774 = vld [vmem:[%s11 + $0x60] sm:$0xf]
          %v8775 = vld [vmem:[%s11 + $0x64] sm:$0xf]
          %v8776 = vld [vmem:[%s11 + $0x68] sm:$0xf]
          %v8777 = vld [vmem:[%s11 + $0x6c] sm:$0xf]
          %v8778 = vld [vmem:[%s11 + $0x70] sm:$0xf]
          %v8779 = vld [vmem:[%s11 + $0x74] sm:$0xf]
          %v8780 = vld [vmem:[%s11 + $0x78] sm:$0xf]
          %v8781 = vld [vmem:[%s11 + $0x7c] sm:$0xf]
          %v8782 = vld [vmem:[%s12] sm:$0x1]
          %v8815 = vunpack.c.l.b16 %v8750
          %v8816 = vunpack.c.l.b16 %v8751
          %v8817 = vunpack.c.l.b16 %v8752
          %v8818 = vunpack.c.l.b16 %v8753
          %v8819 = vunpack.c.l.b16 %v8754
          %v8820 = vunpack.c.l.b16 %v8755
          %v8821 = vunpack.c.l.b16 %v8756
          %v8822 = vunpack.c.l.b16 %v8757
          %v8823 = vunpack.c.l.b16 %v8758
          %v8824 = vunpack.c.l.b16 %v8759
          %v8825 = vunpack.c.l.b16 %v8760
          %v8826 = vunpack.c.l.b16 %v8761
          %v8827 = vunpack.c.l.b16 %v8762
          %v8828 = vunpack.c.l.b16 %v8763
          %v8829 = vunpack.c.l.b16 %v8764
          %v8830 = vunpack.c.l.b16 %v8765
          %v8831 = vunpack.c.l.b16 %v8766
          %v8832 = vunpack.c.l.b16 %v8767
          %v8833 = vunpack.c.l.b16 %v8768
          %v8834 = vunpack.c.l.b16 %v8769
          %v8835 = vunpack.c.l.b16 %v8770
          %v8836 = vunpack.c.l.b16 %v8771
          %v8837 = vunpack.c.l.b16 %v8772
          %v8838 = vunpack.c.l.b16 %v8773
          %v8839 = vunpack.c.l.b16 %v8774
          %v8840 = vunpack.c.l.b16 %v8775
          %v8841 = vunpack.c.l.b16 %v8776
          %v8842 = vunpack.c.l.b16 %v8777
          %v8843 = vunpack.c.l.b16 %v8778
          %v8844 = vunpack.c.l.b16 %v8779
          %v8845 = vunpack.c.l.b16 %v8780
          %v8846 = vunpack.c.l.b16 %v8781
          %v8847 = vpack.c.b16 %v8816, %v8815
          %v8848 = vpack.c.b16 %v8818, %v8817
          %v8849 = vpack.c.b16 %v8820, %v8819
          %v8850 = vpack.c.b16 %v8822, %v8821
          %v8851 = vpack.c.b16 %v8824, %v8823
          %v8852 = vpack.c.b16 %v8826, %v8825
          %v8853 = vpack.c.b16 %v8828, %v8827
          %v8854 = vpack.c.b16 %v8830, %v8829
          %v8855 = vpack.c.b16 %v8832, %v8831
          %v8856 = vpack.c.b16 %v8834, %v8833
          %v8857 = vpack.c.b16 %v8836, %v8835
          %v8858 = vpack.c.b16 %v8838, %v8837
          %v8859 = vpack.c.b16 %v8840, %v8839
          %v8860 = vpack.c.b16 %v8842, %v8841
          %v8861 = vpack.c.b16 %v8844, %v8843
          %v8862 = vpack.c.b16 %v8846, %v8845
          %8879 = vmatpush.bf16.msra.mxu0 %v8854
          %8880 = vmatpush.bf16.msra.mxu0 %v8853
          %8881 = vmatpush.bf16.msra.mxu0 %v8852
          %8882 = vmatpush.bf16.msra.mxu0 %v8851
          %8883 = vmatpush.bf16.msra.mxu0 %v8850
          %8884 = vmatpush.bf16.msra.mxu0 %v8849
          %8885 = vmatpush.bf16.msra.mxu0 %v8848
          %8886 = vmatpush.bf16.msra.mxu0 %v8847
          %8887 = vmatmul.bf16.gmra.mxu0 %v8748
          %v8888 = vpop.f32.mrf.mxu0
          %v8889 = vadd.f32 %v8782, %v8888
          %v8890 = vpop.f32.mrf.mxu0
          %8891 = vdwg.mxu0
          %8892 = vmatpush.bf16.msra.mxu0 %v8862
          %8893 = vmatpush.bf16.msra.mxu0 %v8861
          %8894 = vmatpush.bf16.msra.mxu0 %v8860
          %8895 = vmatpush.bf16.msra.mxu0 %v8859
          %8896 = vmatpush.bf16.msra.mxu0 %v8858
          %8897 = vmatpush.bf16.msra.mxu0 %v8857
          %8898 = vmatpush.bf16.msra.mxu0 %v8856
          %8899 = vmatpush.bf16.msra.mxu0 %v8855
          %8900 = vmatmul.bf16.gmra.mxu0 %v8749
          %v8901 = vpop.f32.mrf.mxu0
          %v8902 = vadd.f32 %v8889, %v8901
          %v8903 = vpop.f32.mrf.mxu0
          %8904 = vdwg.mxu0
          %vm8905 = vcmask 65536
          %8906 = vst.msk [vmem:[%s489] sm:$0x1] %vm8905, %v8902
        $region88: #{tpu_custom_call.1} parent=71 // pred_fallthru
          _
        %s8907 = sand.u32 %s329, 1
        %s8908 = scalar_lea.sflag [#allocation5], %s8907
        %s8909 = sand.u32 %s329, 1
        %s8910 = scalar_lea.vmem [#allocation8], %s8909
        // Predicated region
        $region89: #{tpu_custom_call.1} parent=71 // pred_check
          %p8911 = pneg %p339
        $region90: #{tpu_custom_call.1} parent=71 // pred_check_branch
          %8913 = sbr.rel (%p8911) target = $region92
        $region91: #{tpu_custom_call.1} parent=71 // pred_region
          %8915 = vsyncadd %s8908, 0
          %s8916 = scalar_lea.hbm %s13, %s33
          %s8918 = sshll.u32 %s8910, 4
          %s8919 = int_to_ptr.vmem [resolvable:$true] %s8918
          %s8920 = sshll.u32 %s8916, 4
          %s8921 = int_to_ptr.hbm [resolvable:$true] %s8920
          %8923 = dma.vmem_to_hbm [thread:$0]  %s8919, 16, %s8921, %s8908
        $region92: #{tpu_custom_call.1} parent=71 // pred_fallthru
          _
      $region72: #{tpu_custom_call.1} parent=5 // pred_fallthru
        _
      %p8924 = scmp.le.s32.totalorder 2, %s24
      // Predicated region
      $region93: #{tpu_custom_call.1} parent=5 // pred_check
        %p8925 = pneg %p8924
      $region94: #{tpu_custom_call.1} parent=5 // pred_check_branch
        %8927 = sbr.rel (%p8925) target = $region96
      $region95: #{tpu_custom_call.1} parent=5 // pred_region
        %s8928 = ssub.s32 %s24, 2
        // Predicated region
        $region97: #{tpu_custom_call.1} parent=95 // pred_check
          %p8929 = pneg %p345
        $region98: #{tpu_custom_call.1} parent=95 // pred_check_branch
          %8931 = sbr.rel (%p8929) target = $region100
        $region99: #{tpu_custom_call.1} parent=95 // pred_region
          %s8932 = sand.u32 %s330, 1
          %s8933 = scalar_lea.sflag [#allocation5], %s8932
          %s8934 = sand.u32 %s330, 1
          %s8935 = scalar_lea.vmem [#allocation8], %s8934
          %8937 = dma.done %s8933, 16
        $region100: #{tpu_custom_call.1} parent=95 // pred_fallthru
          _
      $region96: #{tpu_custom_call.1} parent=5 // pred_fallthru
        _
    $region6: #{tpu_custom_call.1} parent=1 // loop_footer
      %s28 = sadd.s32 1, %s24
    $region7: #{tpu_custom_call.1} parent=1 // loop_footer_branch
      %23 = sbr.rel target = $region3
    $region8: #{tpu_custom_call.1} parent=1 // loop_exit
      _
    %8938 = vsyncpa [#allocation4], 1
    %s8939 = scalar_lea.sflag [#allocation4], 1
    %8940 = vsyncpa %s8939, 1
    %8941 = vsyncpa [#allocation7], 1
    %8942 = vsyncpa [#allocation5], 1
    %s8943 = scalar_lea.sflag [#allocation5], 1
    %8944 = vsyncpa %s8943, 1

</llo_original>
